<compile_context>
chip_gen: v6e
topology: v6e:2x2x1
jax: 0.10.0
libtpu: 0.0.40
codegen_flags: <defaults>
</compile_context>

<pallas_src>
import functools

import numpy as np

import jax
import jax.numpy as jnp
from jax.experimental import pallas as pl
from jax.experimental.pallas import tpu as pltpu

HID = 2  # hidden_dim of the VAE


# ----------------------------- static geometry ----------------------------- #

def _mc(P, cos):   # number of flat (stride-P) lanes holding the conv output
    return (cos - 1) * P + cos


def _mm(P, pool):  # number of flat lanes needed by the 2x2-max stage
    return 2 * (pool - 1) * (P + 1) + 1


# encoder stages: (padded size P, conv output spatial, pooled spatial)
ENC = [(30, 28, 14),   # conv(1->16,  pad 1) on 28x28
       (16, 14, 7),    # conv(16->8,  pad 1) on 14x14
       (11, 9, 4)]     # conv(8->8,   pad 2) on 7x7
# decoder stages: (padded size P, conv output spatial)
DEC = [(6, 4),         # conv(8->8,   pad 1) on 4x4,  upsample -> 8
       (10, 8),        # conv(8->16,  pad 1) on 8x8,  upsample -> 16
       (16, 14)]       # conv(16->32, pad 0) on 16x16, upsample -> 28


def _pool_place(P, pool, P_next, pad_next):
    """(Mm, R) 0/1 matrix: decimate the 2x2-max output (stride-P flat) and
    scatter it into the next stage's zero-padded flat grid (or the 4x4 emb)."""
    Mm = _mm(P, pool)
    R = pool * pool if P_next is None else P_next * P_next
    D = np.zeros((Mm, R), np.float32)
    for y in range(pool):
        for x in range(pool):
            m = 2 * y * P + 2 * x
            r = (y * pool + x) if P_next is None else \
                (pad_next + y) * P_next + (pad_next + x)
            D[m, r] = 1.0
    return D


def _upsample_place(P, cos, P_next, pad_next):
    """(Mc, R) 0/1 matrix: nearest 2x upsample of a conv output (stride-P flat)
    scattered into the next stage's zero-padded flat grid."""
    Mc = _mc(P, cos)
    U = np.zeros((Mc, P_next * P_next), np.float32)
    for Y in range(2 * cos):
        for X in range(2 * cos):
            U[(Y // 2) * P + (X // 2), (pad_next + Y) * P_next + (pad_next + X)] = 1.0
    return U


_D1 = _pool_place(30, 14, 16, 1)      # (807, 256)
_D2 = _pool_place(16, 7, 11, 2)       # (205, 121)
_D3 = _pool_place(11, 4, None, 0)     # (73, 16)
_U1 = _upsample_place(6, 4, 10, 1)    # (22, 100)
_U2 = _upsample_place(10, 8, 16, 0)   # (78, 256)
_U3 = _upsample_place(16, 14, 28, 0)  # (222, 784)


# ------------------------------ Pallas kernel ------------------------------ #

def _leaky(v):
    return jnp.where(v > 0, v, 0.01 * v)


def _vae_kernel(tb,
                x_ref, eps_ref,
                w1_ref, w2_ref, w3_ref, wd1_ref, wd2_ref, wd3_ref, wo_ref,
                cb_ref, mlw_ref, mlb_ref, dlw_ref, dlb_ref,
                d1_ref, d2_ref, d3_ref, u1_ref, u2_ref, u3_ref,
                recon_ref, mulv_ref,
                tap_s, a1_s, a2_s, d_s, u1_s, u2_s, rec_s, mv_s):
    f32, bf16 = jnp.float32, jnp.bfloat16

    def conv_mxu(a, w_ref, cin, boff, bcnt, P, cos):
        """Tap-stacked 3x3 conv (+bias +LeakyReLU) on a lane-batched slab.
        a: (cin, tb*P*P) f32 value;  w_ref: (cout, 9*cin) bf16."""
        PP = P * P
        Mtot = (tb - 1) * PP + _mc(P, cos)
        for t in range(9):
            off = (t // 3) * P + (t % 3)
            tap_s[t * cin:(t + 1) * cin, 0:Mtot] = a[:, off:off + Mtot]
        stacked = tap_s[0:9 * cin, 0:Mtot].astype(bf16)        # (9*cin, Mtot)
        z = jnp.dot(w_ref[...], stacked, preferred_element_type=f32)
        return _leaky(z + cb_ref[boff:boff + bcnt])

    def pool_bf16(z, P, pool):
        PP = P * P
        Mtot = (tb - 1) * PP + _mm(P, pool)
        m = jnp.maximum(jnp.maximum(z[:, 0:Mtot], z[:, 1:Mtot + 1]),
                        jnp.maximum(z[:, P:P + Mtot], z[:, P + 1:P + 1 + Mtot]))
        return m.astype(bf16)

    # ------------------- encoder stage 1 (Cin=1 -> VPU taps) ------------------- #
    P, cos, pool = ENC[0]
    PP = P * P
    Mt = (tb - 1) * PP + _mc(P, cos)
    x = x_ref[0]                                            # (1, tb*900) f32
    w1 = w1_ref[...]                                        # (16, 9) f32
    acc = None
    for t in range(9):
        off = (t // 3) * P + (t % 3)
        part = w1[:, t:t + 1] * x[:, off:off + Mt]          # (16,1)*(1,Mt)
        acc = part if acc is None else acc + part
    z = _leaky(acc + cb_ref[0:16])
    pooled = pool_bf16(z, P, pool)
    Mm = _mm(P, pool)
    d1 = d1_ref[...]
    for b in range(tb):
        a1_s[:, b * 256:(b + 1) * 256] = jnp.dot(
            pooled[:, b * PP:b * PP + Mm], d1, preferred_element_type=f32)

    # ------------------------------ encoder stage 2 ----------------------------- #
    P, cos, pool = ENC[1]
    PP = P * P
    z = conv_mxu(a1_s[...], w2_ref, 16, 16, 8, P, cos)      # (8, (tb-1)*256+222)
    pooled = pool_bf16(z, P, pool)
    Mm = _mm(P, pool)
    d2 = d2_ref[...]
    for b in range(tb):
        a2_s[:, b * 121:(b + 1) * 121] = jnp.dot(
            pooled[:, b * PP:b * PP + Mm], d2, preferred_element_type=f32)

    # ------------------- encoder stage 3 -> per-sample embeddings ---------------- #
    P, cos, pool = ENC[2]
    PP = P * P
    z = conv_mxu(a2_s[...], w3_ref, 8, 24, 8, P, cos)       # (8, (tb-1)*121+97)
    pooled = pool_bf16(z, P, pool)
    Mm = _mm(P, pool)
    d3 = d3_ref[...]
    embs = [jnp.dot(pooled[:, b * PP:b * PP + Mm], d3, preferred_element_type=f32)
            for b in range(tb)]                             # tb x (8, 16) f32

    # ------- mu / log_var, reparameterization, decoder Linear (all in f32) ------- #
    eps = eps_ref[0]                                        # (1, tb*HID)
    mlb = mlb_ref[...]                                      # (1, 2*HID)
    dlb = dlb_ref[...]                                      # (8, 36)
    mlws = [mlw_ref[j] for j in range(2 * HID)]             # (8,16) each
    dlws = [dlw_ref[k] for k in range(HID)]                 # (8,36) each
    for b in range(tb):
        emb = embs[b]
        d_act = dlb
        for k in range(HID):
            mu_k = jnp.sum(jnp.sum(emb * mlws[k], axis=1, keepdims=True),
                           axis=0, keepdims=True) + mlb[:, k:k + 1]           # (1,1)
            lv_k = jnp.sum(jnp.sum(emb * mlws[HID + k], axis=1, keepdims=True),
                           axis=0, keepdims=True) + mlb[:, HID + k:HID + k + 1]
            mv_s[:, b * 2 * HID + k:b * 2 * HID + k + 1] = mu_k
            mv_s[:, b * 2 * HID + HID + k:b * 2 * HID + HID + k + 1] = lv_k
            h_k = (eps[:, b * HID + k:b * HID + k + 1]
                   * jnp.exp(0.5 * lv_k) + mu_k)                              # (1,1)
            d_act = d_act + h_k * dlws[k]                                     # (8,36)
        d_s[:, b * 36:(b + 1) * 36] = d_act
    mulv_ref[0] = mv_s[...]

    # ------------------------------- decoder stage 1 ---------------------------- #
    P, cos = DEC[0]
    PP = P * P
    Mc = _mc(P, cos)
    z = conv_mxu(d_s[...], wd1_ref, 8, 32, 8, P, cos).astype(bf16)
    u1 = u1_ref[...]
    for b in range(tb):
        u1_s[:, b * 100:(b + 1) * 100] = jnp.dot(
            z[:, b * PP:b * PP + Mc], u1, preferred_element_type=f32)

    # ------------------------------- decoder stage 2 ---------------------------- #
    P, cos = DEC[1]
    PP = P * P
    Mc = _mc(P, cos)
    z = conv_mxu(u1_s[...], wd2_ref, 8, 40, 16, P, cos).astype(bf16)
    u2 = u2_ref[...]
    for b in range(tb):
        u2_s[:, b * 256:(b + 1) * 256] = jnp.dot(
            z[:, b * PP:b * PP + Mc], u2, preferred_element_type=f32)

    # -------- decoder stage 3 with the 1x1 output conv folded BEFORE U3 -------- #
    P, cos = DEC[2]
    PP = P * P
    Mc = _mc(P, cos)
    z = conv_mxu(u2_s[...], wd3_ref, 16, 56, 32, P, cos)    # (32, (tb-1)*256+222) f32
    s = jnp.dot(wo_ref[...], z.astype(bf16),
                preferred_element_type=f32).astype(bf16)    # (1, slab)  1x1 conv fold
    u3 = u3_ref[...]
    ob = cb_ref[88:89]                                      # (1,1)
    for b in range(tb):
        pre = jnp.dot(s[:, b * PP:b * PP + Mc], u3,
                      preferred_element_type=f32) + ob      # (1, 784)
        rec_s[:, b * 784:(b + 1) * 784] = 1.0 / (1.0 + jnp.exp(-pre))  # exact sigmoid
    recon_ref[0] = rec_s[...]


# ------------------------------ JAX-side glue ------------------------------ #

def _prep_conv(w):
    # (3, 3, cin, cout) -> (cout, 9*cin) bf16, column index = tap*cin + cin_idx
    cin, cout = w.shape[2], w.shape[3]
    return (jnp.transpose(w.reshape(9, cin, cout), (2, 0, 1))
            .reshape(cout, 9 * cin).astype(jnp.bfloat16))


def _batched_spec(arr):
    nd = arr.ndim
    return pl.BlockSpec((1,) + tuple(arr.shape[1:]),
                        lambda i, _nd=nd: (i,) + (0,) * (_nd - 1))


def _const_spec(arr):
    nd = arr.ndim
    return pl.BlockSpec(tuple(arr.shape), lambda i, _nd=nd: (0,) * _nd)


def vae_forward(params, x_nchw, eps, *, batch_tile=8):
    """Equivalent of Vae.forward: returns (reconstruction NCHW, mu, log_var).
    batch_tile samples are processed per grid step (on v7x keep the number of
    batch tiles a multiple of 2 so both TensorCores stay busy)."""
    n = x_nchw.shape[0]
    hd = HID
    p = params
    bf = jnp.bfloat16

    tb = max(1, min(batch_tile, n))
    nblocks = -(-n // tb)
    n_pad = nblocks * tb

    # inputs: per-sample zero-padded 30x30 grids, tb samples concatenated on lanes
    xp = jnp.pad(x_nchw, ((0, n_pad - n), (0, 0), (1, 1), (1, 1)))
    xp = xp.reshape(n_pad, 30 * 30).reshape(nblocks, 1, tb * 900)
    ep = jnp.pad(eps, ((0, n_pad - n), (0, 0))).reshape(nblocks, 1, tb * hd)

    # packed biases: [enc1(16), enc2(8), enc3(8), dec1(8), dec2(16), dec3(32), out(1)]
    cbias = jnp.concatenate([p["enc1_b"], p["enc2_b"], p["enc3_b"],
                             p["dec1_b"], p["dec2_b"], p["dec3_b"],
                             p["out_b"]]).reshape(-1, 1).astype(jnp.float32)

    # mu / log_var weights stacked as (2*hd, C, 4*4) spatial maps (f32)
    mlw = jnp.concatenate([
        jnp.transpose(p["mu_w"].reshape(8, 16, hd), (2, 0, 1)),
        jnp.transpose(p["lv_w"].reshape(8, 16, hd), (2, 0, 1))], axis=0)
    mlb = jnp.concatenate([p["mu_b"], p["lv_b"]]).reshape(1, 2 * hd)

    # decoder Linear pre-permuted to the padded channels-first layout (f32)
    dlw = jnp.pad(p["dec_lin_w"].reshape(hd, 8, 4, 4),
                  ((0, 0), (0, 0), (1, 1), (1, 1))).reshape(hd, 8, 36)
    dlb = jnp.pad(p["dec_lin_b"].reshape(8, 4, 4),
                  ((0, 0), (1, 1), (1, 1))).reshape(8, 36)

    operands = [
        xp, ep,
        p["enc1_w"].reshape(9, 16).T,                       # f32 (16,9) VPU taps
        _prep_conv(p["enc2_w"]), _prep_conv(p["enc3_w"]),
        _prep_conv(p["dec1_w"]), _prep_conv(p["dec2_w"]), _prep_conv(p["dec3_w"]),
        p["out_w"].reshape(1, 32).astype(bf),               # folded 1x1 conv weight
        cbias, mlw, mlb, dlw, dlb,
        jnp.asarray(_D1, bf), jnp.asarray(_D2, bf), jnp.asarray(_D3, bf),
        jnp.asarray(_U1, bf), jnp.asarray(_U2, bf), jnp.asarray(_U3, bf),
    ]

    in_specs = [_batched_spec(operands[0]), _batched_spec(operands[1])]
    in_specs += [_const_spec(a) for a in operands[2:]]

    out_shapes = (
        jax.ShapeDtypeStruct((nblocks, 1, tb * 784), jnp.float32),
        jax.ShapeDtypeStruct((nblocks, 1, tb * 2 * hd), jnp.float32),
    )
    out_specs = (
        pl.BlockSpec((1, 1, tb * 784), lambda i: (i, 0, 0)),
        pl.BlockSpec((1, 1, tb * 2 * hd), lambda i: (i, 0, 0)),
    )

    scratch_shapes = [
        pltpu.VMEM((144, (tb - 1) * 256 + 222), jnp.float32),  # tap-stacking scratch
        pltpu.VMEM((16, tb * 256), jnp.float32),               # a1 (enc stage-2 input)
        pltpu.VMEM((8, tb * 121), jnp.float32),                # a2 (enc stage-3 input)
        pltpu.VMEM((8, tb * 36), jnp.float32),                 # decoder Linear output
        pltpu.VMEM((8, tb * 100), jnp.float32),                # dec stage-2 input
        pltpu.VMEM((16, tb * 256), jnp.float32),               # dec stage-3 input
        pltpu.VMEM((1, tb * 784), jnp.float32),                # recon assembly
        pltpu.VMEM((1, tb * 2 * hd), jnp.float32),             # mu/log_var assembly
    ]

    recon_flat, mulv = pl.pallas_call(
        functools.partial(_vae_kernel, tb),
        out_shape=out_shapes,
        grid=(nblocks,),
        in_specs=in_specs,
        out_specs=out_specs,
        scratch_shapes=scratch_shapes,
        compiler_params=pltpu.CompilerParams(
            dimension_semantics=("parallel",)),
    )(*operands)

    recon = recon_flat.reshape(n_pad, 784)[:n].reshape(n, 1, 28, 28)
    mulv = mulv.reshape(n_pad, 2 * hd)[:n]
    return recon, mulv[:, :hd], mulv[:, hd:]


# ------------------------------ params / ref -------------------------------- #

def init_params(key, hidden_dim=HID):
    ks = jax.random.split(key, 10)

    def conv(k, cin, cout):
        return jax.random.normal(k, (3, 3, cin, cout), jnp.float32) / jnp.sqrt(9.0 * cin)

    def lin(k, din, dout):
        return jax.random.normal(k, (din, dout), jnp.float32) / jnp.sqrt(float(din))

    return {
        "enc1_w": conv(ks[0], 1, 16), "enc1_b": jnp.zeros((16,), jnp.float32),
        "enc2_w": conv(ks[1], 16, 8), "enc2_b": jnp.zeros((8,), jnp.float32),
        "enc3_w": conv(ks[2], 8, 8),  "enc3_b": jnp.zeros((8,), jnp.float32),
        "mu_w": lin(ks[3], 8 * 4 * 4, hidden_dim),
        "mu_b": jnp.zeros((hidden_dim,), jnp.float32),
        "lv_w": lin(ks[4], 8 * 4 * 4, hidden_dim),
        "lv_b": jnp.zeros((hidden_dim,), jnp.float32),
        "dec_lin_w": lin(ks[5], hidden_dim, 8 * 4 * 4),
        "dec_lin_b": jnp.zeros((8 * 4 * 4,), jnp.float32),
        "dec1_w": conv(ks[6], 8, 8),   "dec1_b": jnp.zeros((8,), jnp.float32),
        "dec2_w": conv(ks[7], 8, 16),  "dec2_b": jnp.zeros((16,), jnp.float32),
        "dec3_w": conv(ks[8], 16, 32), "dec3_b": jnp.zeros((32,), jnp.float32),
        "out_w": lin(ks[9], 32, 1),    "out_b": jnp.zeros((1,), jnp.float32),
    }


def _reference_forward(params, x_nchw, eps):
    """Pure-XLA reference of the same module (for correctness checking)."""
    prec = jax.lax.Precision.HIGHEST

    def conv(x, w, b, pad):
        y = jax.lax.conv_general_dilated(
            x, w, (1, 1), [(pad, pad), (pad, pad)],
            dimension_numbers=("NHWC", "HWIO", "NHWC"), precision=prec)
        return y + b

    def lrelu(v):
        return jnp.where(v > 0, v, 0.01 * v)

    def pool(v):
        return jax.lax.reduce_window(v, -jnp.inf, jax.lax.max,
                                     (1, 2, 2, 1), (1, 2, 2, 1), "VALID")

    def up2(v):
        n_, h_, w_, c_ = v.shape
        return jnp.broadcast_to(v[:, :, None, :, None, :],
                                (n_, h_, 2, w_, 2, c_)).reshape(n_, 2 * h_, 2 * w_, c_)

    n = x_nchw.shape[0]
    x = jnp.transpose(x_nchw, (0, 2, 3, 1))
    e = pool(lrelu(conv(x, params["enc1_w"], params["enc1_b"], 1)))
    e = pool(lrelu(conv(e, params["enc2_w"], params["enc2_b"], 1)))
    e = pool(lrelu(conv(e, params["enc3_w"], params["enc3_b"], 2)))
    emb = jnp.transpose(e, (0, 3, 1, 2)).reshape(n, 128)
    mu = jnp.dot(emb, params["mu_w"], precision=prec) + params["mu_b"]
    lv = jnp.dot(emb, params["lv_w"], precision=prec) + params["lv_b"]
    h = eps * jnp.exp(0.5 * lv) + mu
    d = (jnp.dot(h, params["dec_lin_w"], precision=prec) + params["dec_lin_b"])
    d = jnp.transpose(d.reshape(n, 8, 4, 4), (0, 2, 3, 1))
    d = up2(lrelu(conv(d, params["dec1_w"], params["dec1_b"], 1)))
    d = up2(lrelu(conv(d, params["dec2_w"], params["dec2_b"], 1)))
    d = up2(lrelu(conv(d, params["dec3_w"], params["dec3_b"], 0)))
    y = jax.nn.sigmoid(jnp.einsum("nhwc,co->nhwo", d, params["out_w"],
                                  precision=prec) + params["out_b"])
    return jnp.transpose(y, (0, 3, 1, 2)), mu, lv


# ---------------------------------- main ------------------------------------ #

if __name__ == "__main__":
    key = jax.random.PRNGKey(0)
    pkey, xkey, ekey = jax.random.split(key, 3)

    params = init_params(pkey, hidden_dim=HID)
    # Input size 28x28 is implied by the module (8*4*4 flattened features).
    x = jax.random.normal(xkey, (2, 1, 28, 28), jnp.float32)
    # TODO(synk): torch.randn-in-forward is modeled as an explicit eps input.
    eps = jax.random.normal(ekey, (2, HID), jnp.float32)

    recon, mu, log_var = jax.jit(vae_forward)(params, x, eps)
    jax.block_until_ready((recon, mu, log_var))

    assert recon.shape == (2, 1, 28, 28)
    assert mu.shape == (2, HID) and log_var.shape == (2, HID)
    assert bool(jnp.all(jnp.isfinite(recon)))

    # Correctness check against a pure-XLA reference of the same module.
    ref_recon, ref_mu, ref_lv = jax.jit(_reference_forward)(params, x, eps)
    np.testing.assert_allclose(np.asarray(mu), np.asarray(ref_mu),
                               rtol=2e-2, atol=2e-2)
    np.testing.assert_allclose(np.asarray(log_var), np.asarray(ref_lv),
                               rtol=2e-2, atol=2e-2)
    np.testing.assert_allclose(np.asarray(recon), np.asarray(ref_recon),
                               rtol=0, atol=3e-2)

    print("KERNEL_OK")
</pallas_src>

<mosaic_0001>
module attributes {stable_mosaic.version = 11 : i64} {
  func.func @_vae_kernel(%arg0: i32, %arg1: memref<1x1x1800xf32, #tpu.memory_space<vmem>>, %arg2: memref<1x1x4xf32, #tpu.memory_space<vmem>>, %arg3: memref<16x9xf32, #tpu.memory_space<vmem>>, %arg4: memref<8x144xbf16, #tpu.memory_space<vmem>>, %arg5: memref<8x72xbf16, #tpu.memory_space<vmem>>, %arg6: memref<8x72xbf16, #tpu.memory_space<vmem>>, %arg7: memref<16x72xbf16, #tpu.memory_space<vmem>>, %arg8: memref<32x144xbf16, #tpu.memory_space<vmem>>, %arg9: memref<1x32xbf16, #tpu.memory_space<vmem>>, %arg10: memref<89x1xf32, #tpu.memory_space<vmem>>, %arg11: memref<4x8x16xf32, #tpu.memory_space<vmem>>, %arg12: memref<1x4xf32, #tpu.memory_space<vmem>>, %arg13: memref<2x8x36xf32, #tpu.memory_space<vmem>>, %arg14: memref<8x36xf32, #tpu.memory_space<vmem>>, %arg15: memref<807x256xbf16, #tpu.memory_space<vmem>>, %arg16: memref<205x121xbf16, #tpu.memory_space<vmem>>, %arg17: memref<73x16xbf16, #tpu.memory_space<vmem>>, %arg18: memref<22x100xbf16, #tpu.memory_space<vmem>>, %arg19: memref<78x256xbf16, #tpu.memory_space<vmem>>, %arg20: memref<222x784xbf16, #tpu.memory_space<vmem>>, %arg21: memref<1x1x1568xf32, #tpu.memory_space<vmem>>, %arg22: memref<1x1x8xf32, #tpu.memory_space<vmem>>, %arg23: memref<144x478xf32, #tpu.memory_space<vmem>>, %arg24: memref<16x512xf32, #tpu.memory_space<vmem>>, %arg25: memref<8x242xf32, #tpu.memory_space<vmem>>, %arg26: memref<8x72xf32, #tpu.memory_space<vmem>>, %arg27: memref<8x200xf32, #tpu.memory_space<vmem>>, %arg28: memref<16x512xf32, #tpu.memory_space<vmem>>, %arg29: memref<1x1568xf32, #tpu.memory_space<vmem>>, %arg30: memref<1x8xf32, #tpu.memory_space<vmem>>) attributes {dimension_semantics = [#tpu.dimension_semantics<parallel>], iteration_bounds = array<i64: 1>, scalar_prefetch = 0 : i64, scratch_operands = 8 : i64, tpu.core_type = #tpu.core_type<tc>, window_params = [{transform_indices = @transform_0, window_bounds = array<i64: 1, 1, 1800>}, {transform_indices = @transform_1, window_bounds = array<i64: 1, 1, 4>}, {pipeline_mode = #tpu.pipeline_mode<synchronous>, transform_indices = @transform_2, window_bounds = array<i64: 16, 9>}, {pipeline_mode = #tpu.pipeline_mode<synchronous>, transform_indices = @transform_3, window_bounds = array<i64: 8, 144>}, {pipeline_mode = #tpu.pipeline_mode<synchronous>, transform_indices = @transform_4, window_bounds = array<i64: 8, 72>}, {pipeline_mode = #tpu.pipeline_mode<synchronous>, transform_indices = @transform_5, window_bounds = array<i64: 8, 72>}, {pipeline_mode = #tpu.pipeline_mode<synchronous>, transform_indices = @transform_6, window_bounds = array<i64: 16, 72>}, {pipeline_mode = #tpu.pipeline_mode<synchronous>, transform_indices = @transform_7, window_bounds = array<i64: 32, 144>}, {pipeline_mode = #tpu.pipeline_mode<synchronous>, transform_indices = @transform_8, window_bounds = array<i64: 1, 32>}, {pipeline_mode = #tpu.pipeline_mode<synchronous>, transform_indices = @transform_9, window_bounds = array<i64: 89, 1>}, {pipeline_mode = #tpu.pipeline_mode<synchronous>, transform_indices = @transform_10, window_bounds = array<i64: 4, 8, 16>}, {pipeline_mode = #tpu.pipeline_mode<synchronous>, transform_indices = @transform_11, window_bounds = array<i64: 1, 4>}, {pipeline_mode = #tpu.pipeline_mode<synchronous>, transform_indices = @transform_12, window_bounds = array<i64: 2, 8, 36>}, {pipeline_mode = #tpu.pipeline_mode<synchronous>, transform_indices = @transform_13, window_bounds = array<i64: 8, 36>}, {pipeline_mode = #tpu.pipeline_mode<synchronous>, transform_indices = @transform_14, window_bounds = array<i64: 807, 256>}, {pipeline_mode = #tpu.pipeline_mode<synchronous>, transform_indices = @transform_15, window_bounds = array<i64: 205, 121>}, {pipeline_mode = #tpu.pipeline_mode<synchronous>, transform_indices = @transform_16, window_bounds = array<i64: 73, 16>}, {pipeline_mode = #tpu.pipeline_mode<synchronous>, transform_indices = @transform_17, window_bounds = array<i64: 22, 100>}, {pipeline_mode = #tpu.pipeline_mode<synchronous>, transform_indices = @transform_18, window_bounds = array<i64: 78, 256>}, {pipeline_mode = #tpu.pipeline_mode<synchronous>, transform_indices = @transform_19, window_bounds = array<i64: 222, 784>}, {transform_indices = @transform_20, window_bounds = array<i64: 1, 1, 1568>}, {transform_indices = @transform_21, window_bounds = array<i64: 1, 1, 8>}]} {
    %c0 = arith.constant 0 : index
    %c0_0 = arith.constant 0 : index
    %c0_1 = arith.constant 0 : index
    %0 = vector.load %arg1[%c0, %c0_0, %c0_1] : memref<1x1x1800xf32, #tpu.memory_space<vmem>>, vector<1x1x1800xf32>
    %1 = vector.shape_cast %0 : vector<1x1x1800xf32> to vector<1x1800xf32>
    %c0_2 = arith.constant 0 : index
    %c0_3 = arith.constant 0 : index
    %2 = vector.load %arg3[%c0_2, %c0_3] : memref<16x9xf32, #tpu.memory_space<vmem>>, vector<16x9xf32>
    %3 = vector.extract_strided_slice %2 {offsets = [0, 0], sizes = [16, 1], strides = [1, 1]} : vector<16x9xf32> to vector<16x1xf32>
    %4 = vector.extract_strided_slice %1 {offsets = [0, 0], sizes = [1, 1738], strides = [1, 1]} : vector<1x1800xf32> to vector<1x1738xf32>
    %5 = vector.broadcast %3 : vector<16x1xf32> to vector<16x1738xf32>
    %6 = vector.broadcast %4 : vector<1x1738xf32> to vector<16x1738xf32>
    %7 = arith.mulf %5, %6 : vector<16x1738xf32>
    %8 = vector.extract_strided_slice %2 {offsets = [0, 1], sizes = [16, 1], strides = [1, 1]} : vector<16x9xf32> to vector<16x1xf32>
    %9 = vector.extract_strided_slice %1 {offsets = [0, 1], sizes = [1, 1738], strides = [1, 1]} : vector<1x1800xf32> to vector<1x1738xf32>
    %10 = vector.broadcast %8 : vector<16x1xf32> to vector<16x1738xf32>
    %11 = vector.broadcast %9 : vector<1x1738xf32> to vector<16x1738xf32>
    %12 = arith.mulf %10, %11 : vector<16x1738xf32>
    %13 = arith.addf %7, %12 : vector<16x1738xf32>
    %14 = vector.extract_strided_slice %2 {offsets = [0, 2], sizes = [16, 1], strides = [1, 1]} : vector<16x9xf32> to vector<16x1xf32>
    %15 = vector.extract_strided_slice %1 {offsets = [0, 2], sizes = [1, 1738], strides = [1, 1]} : vector<1x1800xf32> to vector<1x1738xf32>
    %16 = vector.broadcast %14 : vector<16x1xf32> to vector<16x1738xf32>
    %17 = vector.broadcast %15 : vector<1x1738xf32> to vector<16x1738xf32>
    %18 = arith.mulf %16, %17 : vector<16x1738xf32>
    %19 = arith.addf %13, %18 : vector<16x1738xf32>
    %20 = vector.extract_strided_slice %2 {offsets = [0, 3], sizes = [16, 1], strides = [1, 1]} : vector<16x9xf32> to vector<16x1xf32>
    %21 = vector.extract_strided_slice %1 {offsets = [0, 30], sizes = [1, 1738], strides = [1, 1]} : vector<1x1800xf32> to vector<1x1738xf32>
    %22 = vector.broadcast %20 : vector<16x1xf32> to vector<16x1738xf32>
    %23 = vector.broadcast %21 : vector<1x1738xf32> to vector<16x1738xf32>
    %24 = arith.mulf %22, %23 : vector<16x1738xf32>
    %25 = arith.addf %19, %24 : vector<16x1738xf32>
    %26 = vector.extract_strided_slice %2 {offsets = [0, 4], sizes = [16, 1], strides = [1, 1]} : vector<16x9xf32> to vector<16x1xf32>
    %27 = vector.extract_strided_slice %1 {offsets = [0, 31], sizes = [1, 1738], strides = [1, 1]} : vector<1x1800xf32> to vector<1x1738xf32>
    %28 = vector.broadcast %26 : vector<16x1xf32> to vector<16x1738xf32>
    %29 = vector.broadcast %27 : vector<1x1738xf32> to vector<16x1738xf32>
    %30 = arith.mulf %28, %29 : vector<16x1738xf32>
    %31 = arith.addf %25, %30 : vector<16x1738xf32>
    %32 = vector.extract_strided_slice %2 {offsets = [0, 5], sizes = [16, 1], strides = [1, 1]} : vector<16x9xf32> to vector<16x1xf32>
    %33 = vector.extract_strided_slice %1 {offsets = [0, 32], sizes = [1, 1738], strides = [1, 1]} : vector<1x1800xf32> to vector<1x1738xf32>
    %34 = vector.broadcast %32 : vector<16x1xf32> to vector<16x1738xf32>
    %35 = vector.broadcast %33 : vector<1x1738xf32> to vector<16x1738xf32>
    %36 = arith.mulf %34, %35 : vector<16x1738xf32>
    %37 = arith.addf %31, %36 : vector<16x1738xf32>
    %38 = vector.extract_strided_slice %2 {offsets = [0, 6], sizes = [16, 1], strides = [1, 1]} : vector<16x9xf32> to vector<16x1xf32>
    %39 = vector.extract_strided_slice %1 {offsets = [0, 60], sizes = [1, 1738], strides = [1, 1]} : vector<1x1800xf32> to vector<1x1738xf32>
    %40 = vector.broadcast %38 : vector<16x1xf32> to vector<16x1738xf32>
    %41 = vector.broadcast %39 : vector<1x1738xf32> to vector<16x1738xf32>
    %42 = arith.mulf %40, %41 : vector<16x1738xf32>
    %43 = arith.addf %37, %42 : vector<16x1738xf32>
    %44 = vector.extract_strided_slice %2 {offsets = [0, 7], sizes = [16, 1], strides = [1, 1]} : vector<16x9xf32> to vector<16x1xf32>
    %45 = vector.extract_strided_slice %1 {offsets = [0, 61], sizes = [1, 1738], strides = [1, 1]} : vector<1x1800xf32> to vector<1x1738xf32>
    %46 = vector.broadcast %44 : vector<16x1xf32> to vector<16x1738xf32>
    %47 = vector.broadcast %45 : vector<1x1738xf32> to vector<16x1738xf32>
    %48 = arith.mulf %46, %47 : vector<16x1738xf32>
    %49 = arith.addf %43, %48 : vector<16x1738xf32>
    %50 = vector.extract_strided_slice %2 {offsets = [0, 8], sizes = [16, 1], strides = [1, 1]} : vector<16x9xf32> to vector<16x1xf32>
    %51 = vector.extract_strided_slice %1 {offsets = [0, 62], sizes = [1, 1738], strides = [1, 1]} : vector<1x1800xf32> to vector<1x1738xf32>
    %52 = vector.broadcast %50 : vector<16x1xf32> to vector<16x1738xf32>
    %53 = vector.broadcast %51 : vector<1x1738xf32> to vector<16x1738xf32>
    %54 = arith.mulf %52, %53 : vector<16x1738xf32>
    %55 = arith.addf %49, %54 : vector<16x1738xf32>
    %c0_4 = arith.constant 0 : index
    %c0_5 = arith.constant 0 : index
    %56 = vector.load %arg10[%c0_4, %c0_5] : memref<89x1xf32, #tpu.memory_space<vmem>>, vector<16x1xf32>
    %57 = vector.broadcast %56 : vector<16x1xf32> to vector<16x1738xf32>
    %58 = arith.addf %55, %57 : vector<16x1738xf32>
    %cst = arith.constant 0.000000e+00 : f32
    %59 = vector.broadcast %cst : f32 to vector<16x1738xf32>
    %60 = arith.cmpf ogt, %58, %59 : vector<16x1738xf32>
    %cst_6 = arith.constant 0.00999999977 : f32
    %61 = vector.broadcast %cst_6 : f32 to vector<16x1738xf32>
    %62 = arith.mulf %61, %58 : vector<16x1738xf32>
    %63 = arith.select %60, %58, %62 : vector<16x1738xi1>, vector<16x1738xf32>
    %64 = vector.extract_strided_slice %63 {offsets = [0, 0], sizes = [16, 1707], strides = [1, 1]} : vector<16x1738xf32> to vector<16x1707xf32>
    %65 = vector.extract_strided_slice %63 {offsets = [0, 1], sizes = [16, 1707], strides = [1, 1]} : vector<16x1738xf32> to vector<16x1707xf32>
    %66 = arith.maximumf %64, %65 : vector<16x1707xf32>
    %67 = vector.extract_strided_slice %63 {offsets = [0, 30], sizes = [16, 1707], strides = [1, 1]} : vector<16x1738xf32> to vector<16x1707xf32>
    %68 = vector.extract_strided_slice %63 {offsets = [0, 31], sizes = [16, 1707], strides = [1, 1]} : vector<16x1738xf32> to vector<16x1707xf32>
    %69 = arith.maximumf %67, %68 : vector<16x1707xf32>
    %70 = arith.maximumf %66, %69 : vector<16x1707xf32>
    %71 = arith.truncf %70 : vector<16x1707xf32> to vector<16x1707xbf16>
    %c0_7 = arith.constant 0 : index
    %c0_8 = arith.constant 0 : index
    %72 = vector.load %arg15[%c0_7, %c0_8] : memref<807x256xbf16, #tpu.memory_space<vmem>>, vector<807x256xbf16>
    %73 = vector.extract_strided_slice %71 {offsets = [0, 0], sizes = [16, 807], strides = [1, 1]} : vector<16x1707xbf16> to vector<16x807xbf16>
    %cst_9 = arith.constant dense<0.000000e+00> : vector<16x256xf32>
    %74 = tpu.matmul %73, %72, %cst_9 {dimension_numbers = #tpu.dot_dimension_numbers<[1], [0], [0], [1], [0, 0, 1, 1], [], []>} : vector<16x807xbf16>, vector<807x256xbf16>, vector<16x256xf32> -> vector<16x256xf32>
    %c0_10 = arith.constant 0 : index
    %c0_11 = arith.constant 0 : index
    %75 = vector.load %arg24[%c0_10, %c0_11] : memref<16x512xf32, #tpu.memory_space<vmem>>, vector<16x256xf32>
    tpu.vector_store %arg24[%c0_10, %c0_11], %74 {strides = array<i32>} : memref<16x512xf32, #tpu.memory_space<vmem>>, vector<16x256xf32>,
    %76 = vector.extract_strided_slice %71 {offsets = [0, 900], sizes = [16, 807], strides = [1, 1]} : vector<16x1707xbf16> to vector<16x807xbf16>
    %cst_12 = arith.constant dense<0.000000e+00> : vector<16x256xf32>
    %77 = tpu.matmul %76, %72, %cst_12 {dimension_numbers = #tpu.dot_dimension_numbers<[1], [0], [0], [1], [0, 0, 1, 1], [], []>} : vector<16x807xbf16>, vector<807x256xbf16>, vector<16x256xf32> -> vector<16x256xf32>
    %c0_13 = arith.constant 0 : index
    %c256 = arith.constant 256 : index
    %78 = vector.load %arg24[%c0_13, %c256] : memref<16x512xf32, #tpu.memory_space<vmem>>, vector<16x256xf32>
    tpu.vector_store %arg24[%c0_13, %c256], %77 {strides = array<i32>} : memref<16x512xf32, #tpu.memory_space<vmem>>, vector<16x256xf32>,
    %c0_14 = arith.constant 0 : index
    %c0_15 = arith.constant 0 : index
    %79 = vector.load %arg24[%c0_14, %c0_15] : memref<16x512xf32, #tpu.memory_space<vmem>>, vector<16x512xf32>
    %80 = vector.extract_strided_slice %79 {offsets = [0, 0], sizes = [16, 478], strides = [1, 1]} : vector<16x512xf32> to vector<16x478xf32>
    %c0_16 = arith.constant 0 : index
    %c0_17 = arith.constant 0 : index
    %81 = vector.load %arg23[%c0_16, %c0_17] : memref<144x478xf32, #tpu.memory_space<vmem>>, vector<16x478xf32>
    tpu.vector_store %arg23[%c0_16, %c0_17], %80 {strides = array<i32>} : memref<144x478xf32, #tpu.memory_space<vmem>>, vector<16x478xf32>,
    %82 = vector.extract_strided_slice %79 {offsets = [0, 1], sizes = [16, 478], strides = [1, 1]} : vector<16x512xf32> to vector<16x478xf32>
    %c16 = arith.constant 16 : index
    %c0_18 = arith.constant 0 : index
    %83 = vector.load %arg23[%c16, %c0_18] : memref<144x478xf32, #tpu.memory_space<vmem>>, vector<16x478xf32>
    tpu.vector_store %arg23[%c16, %c0_18], %82 {strides = array<i32>} : memref<144x478xf32, #tpu.memory_space<vmem>>, vector<16x478xf32>,
    %84 = vector.extract_strided_slice %79 {offsets = [0, 2], sizes = [16, 478], strides = [1, 1]} : vector<16x512xf32> to vector<16x478xf32>
    %c32 = arith.constant 32 : index
    %c0_19 = arith.constant 0 : index
    %85 = vector.load %arg23[%c32, %c0_19] : memref<144x478xf32, #tpu.memory_space<vmem>>, vector<16x478xf32>
    tpu.vector_store %arg23[%c32, %c0_19], %84 {strides = array<i32>} : memref<144x478xf32, #tpu.memory_space<vmem>>, vector<16x478xf32>,
    %86 = vector.extract_strided_slice %79 {offsets = [0, 16], sizes = [16, 478], strides = [1, 1]} : vector<16x512xf32> to vector<16x478xf32>
    %c48 = arith.constant 48 : index
    %c0_20 = arith.constant 0 : index
    %87 = vector.load %arg23[%c48, %c0_20] : memref<144x478xf32, #tpu.memory_space<vmem>>, vector<16x478xf32>
    tpu.vector_store %arg23[%c48, %c0_20], %86 {strides = array<i32>} : memref<144x478xf32, #tpu.memory_space<vmem>>, vector<16x478xf32>,
    %88 = vector.extract_strided_slice %79 {offsets = [0, 17], sizes = [16, 478], strides = [1, 1]} : vector<16x512xf32> to vector<16x478xf32>
    %c64 = arith.constant 64 : index
    %c0_21 = arith.constant 0 : index
    %89 = vector.load %arg23[%c64, %c0_21] : memref<144x478xf32, #tpu.memory_space<vmem>>, vector<16x478xf32>
    tpu.vector_store %arg23[%c64, %c0_21], %88 {strides = array<i32>} : memref<144x478xf32, #tpu.memory_space<vmem>>, vector<16x478xf32>,
    %90 = vector.extract_strided_slice %79 {offsets = [0, 18], sizes = [16, 478], strides = [1, 1]} : vector<16x512xf32> to vector<16x478xf32>
    %c80 = arith.constant 80 : index
    %c0_22 = arith.constant 0 : index
    %91 = vector.load %arg23[%c80, %c0_22] : memref<144x478xf32, #tpu.memory_space<vmem>>, vector<16x478xf32>
    tpu.vector_store %arg23[%c80, %c0_22], %90 {strides = array<i32>} : memref<144x478xf32, #tpu.memory_space<vmem>>, vector<16x478xf32>,
    %92 = vector.extract_strided_slice %79 {offsets = [0, 32], sizes = [16, 478], strides = [1, 1]} : vector<16x512xf32> to vector<16x478xf32>
    %c96 = arith.constant 96 : index
    %c0_23 = arith.constant 0 : index
    %93 = vector.load %arg23[%c96, %c0_23] : memref<144x478xf32, #tpu.memory_space<vmem>>, vector<16x478xf32>
    tpu.vector_store %arg23[%c96, %c0_23], %92 {strides = array<i32>} : memref<144x478xf32, #tpu.memory_space<vmem>>, vector<16x478xf32>,
    %94 = vector.extract_strided_slice %79 {offsets = [0, 33], sizes = [16, 478], strides = [1, 1]} : vector<16x512xf32> to vector<16x478xf32>
    %c112 = arith.constant 112 : index
    %c0_24 = arith.constant 0 : index
    %95 = vector.load %arg23[%c112, %c0_24] : memref<144x478xf32, #tpu.memory_space<vmem>>, vector<16x478xf32>
    tpu.vector_store %arg23[%c112, %c0_24], %94 {strides = array<i32>} : memref<144x478xf32, #tpu.memory_space<vmem>>, vector<16x478xf32>,
    %96 = vector.extract_strided_slice %79 {offsets = [0, 34], sizes = [16, 478], strides = [1, 1]} : vector<16x512xf32> to vector<16x478xf32>
    %c128 = arith.constant 128 : index
    %c0_25 = arith.constant 0 : index
    %97 = vector.load %arg23[%c128, %c0_25] : memref<144x478xf32, #tpu.memory_space<vmem>>, vector<16x478xf32>
    tpu.vector_store %arg23[%c128, %c0_25], %96 {strides = array<i32>} : memref<144x478xf32, #tpu.memory_space<vmem>>, vector<16x478xf32>,
    %c0_26 = arith.constant 0 : index
    %c0_27 = arith.constant 0 : index
    %98 = vector.load %arg23[%c0_26, %c0_27] : memref<144x478xf32, #tpu.memory_space<vmem>>, vector<144x478xf32>
    %99 = arith.truncf %98 : vector<144x478xf32> to vector<144x478xbf16>
    %c0_28 = arith.constant 0 : index
    %c0_29 = arith.constant 0 : index
    %100 = vector.load %arg4[%c0_28, %c0_29] : memref<8x144xbf16, #tpu.memory_space<vmem>>, vector<8x144xbf16>
    %cst_30 = arith.constant dense<0.000000e+00> : vector<8x478xf32>
    %101 = tpu.matmul %100, %99, %cst_30 {dimension_numbers = #tpu.dot_dimension_numbers<[1], [0], [0], [1], [0, 0, 1, 1], [], []>} : vector<8x144xbf16>, vector<144x478xbf16>, vector<8x478xf32> -> vector<8x478xf32>
    %c16_31 = arith.constant 16 : index
    %c0_32 = arith.constant 0 : index
    %102 = vector.load %arg10[%c16_31, %c0_32] : memref<89x1xf32, #tpu.memory_space<vmem>>, vector<8x1xf32>
    %103 = vector.broadcast %102 : vector<8x1xf32> to vector<8x478xf32>
    %104 = arith.addf %101, %103 : vector<8x478xf32>
    %cst_33 = arith.constant 0.000000e+00 : f32
    %105 = vector.broadcast %cst_33 : f32 to vector<8x478xf32>
    %106 = arith.cmpf ogt, %104, %105 : vector<8x478xf32>
    %cst_34 = arith.constant 0.00999999977 : f32
    %107 = vector.broadcast %cst_34 : f32 to vector<8x478xf32>
    %108 = arith.mulf %107, %104 : vector<8x478xf32>
    %109 = arith.select %106, %104, %108 : vector<8x478xi1>, vector<8x478xf32>
    %110 = vector.extract_strided_slice %109 {offsets = [0, 0], sizes = [8, 461], strides = [1, 1]} : vector<8x478xf32> to vector<8x461xf32>
    %111 = vector.extract_strided_slice %109 {offsets = [0, 1], sizes = [8, 461], strides = [1, 1]} : vector<8x478xf32> to vector<8x461xf32>
    %112 = arith.maximumf %110, %111 : vector<8x461xf32>
    %113 = vector.extract_strided_slice %109 {offsets = [0, 16], sizes = [8, 461], strides = [1, 1]} : vector<8x478xf32> to vector<8x461xf32>
    %114 = vector.extract_strided_slice %109 {offsets = [0, 17], sizes = [8, 461], strides = [1, 1]} : vector<8x478xf32> to vector<8x461xf32>
    %115 = arith.maximumf %113, %114 : vector<8x461xf32>
    %116 = arith.maximumf %112, %115 : vector<8x461xf32>
    %117 = arith.truncf %116 : vector<8x461xf32> to vector<8x461xbf16>
    %c0_35 = arith.constant 0 : index
    %c0_36 = arith.constant 0 : index
    %118 = vector.load %arg16[%c0_35, %c0_36] : memref<205x121xbf16, #tpu.memory_space<vmem>>, vector<205x121xbf16>
    %119 = vector.extract_strided_slice %117 {offsets = [0, 0], sizes = [8, 205], strides = [1, 1]} : vector<8x461xbf16> to vector<8x205xbf16>
    %cst_37 = arith.constant dense<0.000000e+00> : vector<8x121xf32>
    %120 = tpu.matmul %119, %118, %cst_37 {dimension_numbers = #tpu.dot_dimension_numbers<[1], [0], [0], [1], [0, 0, 1, 1], [], []>} : vector<8x205xbf16>, vector<205x121xbf16>, vector<8x121xf32> -> vector<8x121xf32>
    %c0_38 = arith.constant 0 : index
    %c0_39 = arith.constant 0 : index
    %121 = vector.load %arg25[%c0_38, %c0_39] : memref<8x242xf32, #tpu.memory_space<vmem>>, vector<8x121xf32>
    tpu.vector_store %arg25[%c0_38, %c0_39], %120 {strides = array<i32>} : memref<8x242xf32, #tpu.memory_space<vmem>>, vector<8x121xf32>,
    %122 = vector.extract_strided_slice %117 {offsets = [0, 256], sizes = [8, 205], strides = [1, 1]} : vector<8x461xbf16> to vector<8x205xbf16>
    %cst_40 = arith.constant dense<0.000000e+00> : vector<8x121xf32>
    %123 = tpu.matmul %122, %118, %cst_40 {dimension_numbers = #tpu.dot_dimension_numbers<[1], [0], [0], [1], [0, 0, 1, 1], [], []>} : vector<8x205xbf16>, vector<205x121xbf16>, vector<8x121xf32> -> vector<8x121xf32>
    %c0_41 = arith.constant 0 : index
    %c121 = arith.constant 121 : index
    %124 = vector.load %arg25[%c0_41, %c121] : memref<8x242xf32, #tpu.memory_space<vmem>>, vector<8x121xf32>
    tpu.vector_store %arg25[%c0_41, %c121], %123 {strides = array<i32>} : memref<8x242xf32, #tpu.memory_space<vmem>>, vector<8x121xf32>,
    %c0_42 = arith.constant 0 : index
    %c0_43 = arith.constant 0 : index
    %125 = vector.load %arg25[%c0_42, %c0_43] : memref<8x242xf32, #tpu.memory_space<vmem>>, vector<8x242xf32>
    %126 = vector.extract_strided_slice %125 {offsets = [0, 0], sizes = [8, 218], strides = [1, 1]} : vector<8x242xf32> to vector<8x218xf32>
    %c0_44 = arith.constant 0 : index
    %c0_45 = arith.constant 0 : index
    %127 = vector.load %arg23[%c0_44, %c0_45] : memref<144x478xf32, #tpu.memory_space<vmem>>, vector<8x218xf32>
    tpu.vector_store %arg23[%c0_44, %c0_45], %126 {strides = array<i32>} : memref<144x478xf32, #tpu.memory_space<vmem>>, vector<8x218xf32>,
    %128 = vector.extract_strided_slice %125 {offsets = [0, 1], sizes = [8, 218], strides = [1, 1]} : vector<8x242xf32> to vector<8x218xf32>
    %c8 = arith.constant 8 : index
    %c0_46 = arith.constant 0 : index
    %129 = vector.load %arg23[%c8, %c0_46] : memref<144x478xf32, #tpu.memory_space<vmem>>, vector<8x218xf32>
    tpu.vector_store %arg23[%c8, %c0_46], %128 {strides = array<i32>} : memref<144x478xf32, #tpu.memory_space<vmem>>, vector<8x218xf32>,
    %130 = vector.extract_strided_slice %125 {offsets = [0, 2], sizes = [8, 218], strides = [1, 1]} : vector<8x242xf32> to vector<8x218xf32>
    %c16_47 = arith.constant 16 : index
    %c0_48 = arith.constant 0 : index
    %131 = vector.load %arg23[%c16_47, %c0_48] : memref<144x478xf32, #tpu.memory_space<vmem>>, vector<8x218xf32>
    tpu.vector_store %arg23[%c16_47, %c0_48], %130 {strides = array<i32>} : memref<144x478xf32, #tpu.memory_space<vmem>>, vector<8x218xf32>,
    %132 = vector.extract_strided_slice %125 {offsets = [0, 11], sizes = [8, 218], strides = [1, 1]} : vector<8x242xf32> to vector<8x218xf32>
    %c24 = arith.constant 24 : index
    %c0_49 = arith.constant 0 : index
    %133 = vector.load %arg23[%c24, %c0_49] : memref<144x478xf32, #tpu.memory_space<vmem>>, vector<8x218xf32>
    tpu.vector_store %arg23[%c24, %c0_49], %132 {strides = array<i32>} : memref<144x478xf32, #tpu.memory_space<vmem>>, vector<8x218xf32>,
    %134 = vector.extract_strided_slice %125 {offsets = [0, 12], sizes = [8, 218], strides = [1, 1]} : vector<8x242xf32> to vector<8x218xf32>
    %c32_50 = arith.constant 32 : index
    %c0_51 = arith.constant 0 : index
    %135 = vector.load %arg23[%c32_50, %c0_51] : memref<144x478xf32, #tpu.memory_space<vmem>>, vector<8x218xf32>
    tpu.vector_store %arg23[%c32_50, %c0_51], %134 {strides = array<i32>} : memref<144x478xf32, #tpu.memory_space<vmem>>, vector<8x218xf32>,
    %136 = vector.extract_strided_slice %125 {offsets = [0, 13], sizes = [8, 218], strides = [1, 1]} : vector<8x242xf32> to vector<8x218xf32>
    %c40 = arith.constant 40 : index
    %c0_52 = arith.constant 0 : index
    %137 = vector.load %arg23[%c40, %c0_52] : memref<144x478xf32, #tpu.memory_space<vmem>>, vector<8x218xf32>
    tpu.vector_store %arg23[%c40, %c0_52], %136 {strides = array<i32>} : memref<144x478xf32, #tpu.memory_space<vmem>>, vector<8x218xf32>,
    %138 = vector.extract_strided_slice %125 {offsets = [0, 22], sizes = [8, 218], strides = [1, 1]} : vector<8x242xf32> to vector<8x218xf32>
    %c48_53 = arith.constant 48 : index
    %c0_54 = arith.constant 0 : index
    %139 = vector.load %arg23[%c48_53, %c0_54] : memref<144x478xf32, #tpu.memory_space<vmem>>, vector<8x218xf32>
    tpu.vector_store %arg23[%c48_53, %c0_54], %138 {strides = array<i32>} : memref<144x478xf32, #tpu.memory_space<vmem>>, vector<8x218xf32>,
    %140 = vector.extract_strided_slice %125 {offsets = [0, 23], sizes = [8, 218], strides = [1, 1]} : vector<8x242xf32> to vector<8x218xf32>
    %c56 = arith.constant 56 : index
    %c0_55 = arith.constant 0 : index
    %141 = vector.load %arg23[%c56, %c0_55] : memref<144x478xf32, #tpu.memory_space<vmem>>, vector<8x218xf32>
    tpu.vector_store %arg23[%c56, %c0_55], %140 {strides = array<i32>} : memref<144x478xf32, #tpu.memory_space<vmem>>, vector<8x218xf32>,
    %142 = vector.extract_strided_slice %125 {offsets = [0, 24], sizes = [8, 218], strides = [1, 1]} : vector<8x242xf32> to vector<8x218xf32>
    %c64_56 = arith.constant 64 : index
    %c0_57 = arith.constant 0 : index
    %143 = vector.load %arg23[%c64_56, %c0_57] : memref<144x478xf32, #tpu.memory_space<vmem>>, vector<8x218xf32>
    tpu.vector_store %arg23[%c64_56, %c0_57], %142 {strides = array<i32>} : memref<144x478xf32, #tpu.memory_space<vmem>>, vector<8x218xf32>,
    %c0_58 = arith.constant 0 : index
    %c0_59 = arith.constant 0 : index
    %144 = vector.load %arg23[%c0_58, %c0_59] : memref<144x478xf32, #tpu.memory_space<vmem>>, vector<72x218xf32>
    %145 = arith.truncf %144 : vector<72x218xf32> to vector<72x218xbf16>
    %c0_60 = arith.constant 0 : index
    %c0_61 = arith.constant 0 : index
    %146 = vector.load %arg5[%c0_60, %c0_61] : memref<8x72xbf16, #tpu.memory_space<vmem>>, vector<8x72xbf16>
    %cst_62 = arith.constant dense<0.000000e+00> : vector<8x218xf32>
    %147 = tpu.matmul %146, %145, %cst_62 {dimension_numbers = #tpu.dot_dimension_numbers<[1], [0], [0], [1], [0, 0, 1, 1], [], []>} : vector<8x72xbf16>, vector<72x218xbf16>, vector<8x218xf32> -> vector<8x218xf32>
    %c24_63 = arith.constant 24 : index
    %c0_64 = arith.constant 0 : index
    %148 = vector.load %arg10[%c24_63, %c0_64] : memref<89x1xf32, #tpu.memory_space<vmem>>, vector<8x1xf32>
    %149 = vector.broadcast %148 : vector<8x1xf32> to vector<8x218xf32>
    %150 = arith.addf %147, %149 : vector<8x218xf32>
    %cst_65 = arith.constant 0.000000e+00 : f32
    %151 = vector.broadcast %cst_65 : f32 to vector<8x218xf32>
    %152 = arith.cmpf ogt, %150, %151 : vector<8x218xf32>
    %cst_66 = arith.constant 0.00999999977 : f32
    %153 = vector.broadcast %cst_66 : f32 to vector<8x218xf32>
    %154 = arith.mulf %153, %150 : vector<8x218xf32>
    %155 = arith.select %152, %150, %154 : vector<8x218xi1>, vector<8x218xf32>
    %156 = vector.extract_strided_slice %155 {offsets = [0, 0], sizes = [8, 194], strides = [1, 1]} : vector<8x218xf32> to vector<8x194xf32>
    %157 = vector.extract_strided_slice %155 {offsets = [0, 1], sizes = [8, 194], strides = [1, 1]} : vector<8x218xf32> to vector<8x194xf32>
    %158 = arith.maximumf %156, %157 : vector<8x194xf32>
    %159 = vector.extract_strided_slice %155 {offsets = [0, 11], sizes = [8, 194], strides = [1, 1]} : vector<8x218xf32> to vector<8x194xf32>
    %160 = vector.extract_strided_slice %155 {offsets = [0, 12], sizes = [8, 194], strides = [1, 1]} : vector<8x218xf32> to vector<8x194xf32>
    %161 = arith.maximumf %159, %160 : vector<8x194xf32>
    %162 = arith.maximumf %158, %161 : vector<8x194xf32>
    %163 = arith.truncf %162 : vector<8x194xf32> to vector<8x194xbf16>
    %c0_67 = arith.constant 0 : index
    %c0_68 = arith.constant 0 : index
    %164 = vector.load %arg17[%c0_67, %c0_68] : memref<73x16xbf16, #tpu.memory_space<vmem>>, vector<73x16xbf16>
    %165 = vector.extract_strided_slice %163 {offsets = [0, 0], sizes = [8, 73], strides = [1, 1]} : vector<8x194xbf16> to vector<8x73xbf16>
    %cst_69 = arith.constant dense<0.000000e+00> : vector<8x16xf32>
    %166 = tpu.matmul %165, %164, %cst_69 {dimension_numbers = #tpu.dot_dimension_numbers<[1], [0], [0], [1], [0, 0, 1, 1], [], []>} : vector<8x73xbf16>, vector<73x16xbf16>, vector<8x16xf32> -> vector<8x16xf32>
    %167 = vector.extract_strided_slice %163 {offsets = [0, 121], sizes = [8, 73], strides = [1, 1]} : vector<8x194xbf16> to vector<8x73xbf16>
    %cst_70 = arith.constant dense<0.000000e+00> : vector<8x16xf32>
    %168 = tpu.matmul %167, %164, %cst_70 {dimension_numbers = #tpu.dot_dimension_numbers<[1], [0], [0], [1], [0, 0, 1, 1], [], []>} : vector<8x73xbf16>, vector<73x16xbf16>, vector<8x16xf32> -> vector<8x16xf32>
    %c0_71 = arith.constant 0 : index
    %c0_72 = arith.constant 0 : index
    %c0_73 = arith.constant 0 : index
    %169 = vector.load %arg2[%c0_71, %c0_72, %c0_73] : memref<1x1x4xf32, #tpu.memory_space<vmem>>, vector<1x1x4xf32>
    %170 = vector.shape_cast %169 : vector<1x1x4xf32> to vector<1x4xf32>
    %c0_74 = arith.constant 0 : index
    %c0_75 = arith.constant 0 : index
    %171 = vector.load %arg12[%c0_74, %c0_75] : memref<1x4xf32, #tpu.memory_space<vmem>>, vector<1x4xf32>
    %c0_76 = arith.constant 0 : index
    %c0_77 = arith.constant 0 : index
    %172 = vector.load %arg14[%c0_76, %c0_77] : memref<8x36xf32, #tpu.memory_space<vmem>>, vector<8x36xf32>
    %c0_78 = arith.constant 0 : index
    %c0_79 = arith.constant 0 : index
    %c0_80 = arith.constant 0 : index
    %173 = vector.load %arg11[%c0_78, %c0_79, %c0_80] : memref<4x8x16xf32, #tpu.memory_space<vmem>>, vector<1x8x16xf32>
    %174 = vector.shape_cast %173 : vector<1x8x16xf32> to vector<8x16xf32>
    %c1 = arith.constant 1 : index
    %c0_81 = arith.constant 0 : index
    %c0_82 = arith.constant 0 : index
    %175 = vector.load %arg11[%c1, %c0_81, %c0_82] : memref<4x8x16xf32, #tpu.memory_space<vmem>>, vector<1x8x16xf32>
    %176 = vector.shape_cast %175 : vector<1x8x16xf32> to vector<8x16xf32>
    %c2 = arith.constant 2 : index
    %c0_83 = arith.constant 0 : index
    %c0_84 = arith.constant 0 : index
    %177 = vector.load %arg11[%c2, %c0_83, %c0_84] : memref<4x8x16xf32, #tpu.memory_space<vmem>>, vector<1x8x16xf32>
    %178 = vector.shape_cast %177 : vector<1x8x16xf32> to vector<8x16xf32>
    %c3 = arith.constant 3 : index
    %c0_85 = arith.constant 0 : index
    %c0_86 = arith.constant 0 : index
    %179 = vector.load %arg11[%c3, %c0_85, %c0_86] : memref<4x8x16xf32, #tpu.memory_space<vmem>>, vector<1x8x16xf32>
    %180 = vector.shape_cast %179 : vector<1x8x16xf32> to vector<8x16xf32>
    %c0_87 = arith.constant 0 : index
    %c0_88 = arith.constant 0 : index
    %c0_89 = arith.constant 0 : index
    %181 = vector.load %arg13[%c0_87, %c0_88, %c0_89] : memref<2x8x36xf32, #tpu.memory_space<vmem>>, vector<1x8x36xf32>
    %182 = vector.shape_cast %181 : vector<1x8x36xf32> to vector<8x36xf32>
    %c1_90 = arith.constant 1 : index
    %c0_91 = arith.constant 0 : index
    %c0_92 = arith.constant 0 : index
    %183 = vector.load %arg13[%c1_90, %c0_91, %c0_92] : memref<2x8x36xf32, #tpu.memory_space<vmem>>, vector<1x8x36xf32>
    %184 = vector.shape_cast %183 : vector<1x8x36xf32> to vector<8x36xf32>
    %185 = arith.mulf %166, %174 : vector<8x16xf32>
    %cst_93 = arith.constant dense<0.000000e+00> : vector<8xf32>
    %186 = vector.multi_reduction <add>, %185, %cst_93 [1] : vector<8x16xf32> to vector<8xf32>
    %187 = vector.shape_cast %186 : vector<8xf32> to vector<8x1xf32>
    %cst_94 = arith.constant dense<0.000000e+00> : vector<1xf32>
    %188 = vector.multi_reduction <add>, %187, %cst_94 [0] : vector<8x1xf32> to vector<1xf32>
    %189 = vector.shape_cast %188 : vector<1xf32> to vector<1x1xf32>
    %190 = vector.extract_strided_slice %171 {offsets = [0, 0], sizes = [1, 1], strides = [1, 1]} : vector<1x4xf32> to vector<1x1xf32>
    %191 = arith.addf %189, %190 : vector<1x1xf32>
    %192 = arith.mulf %166, %178 : vector<8x16xf32>
    %cst_95 = arith.constant dense<0.000000e+00> : vector<8xf32>
    %193 = vector.multi_reduction <add>, %192, %cst_95 [1] : vector<8x16xf32> to vector<8xf32>
    %194 = vector.shape_cast %193 : vector<8xf32> to vector<8x1xf32>
    %cst_96 = arith.constant dense<0.000000e+00> : vector<1xf32>
    %195 = vector.multi_reduction <add>, %194, %cst_96 [0] : vector<8x1xf32> to vector<1xf32>
    %196 = vector.shape_cast %195 : vector<1xf32> to vector<1x1xf32>
    %197 = vector.extract_strided_slice %171 {offsets = [0, 2], sizes = [1, 1], strides = [1, 1]} : vector<1x4xf32> to vector<1x1xf32>
    %198 = arith.addf %196, %197 : vector<1x1xf32>
    %c0_97 = arith.constant 0 : index
    %c0_98 = arith.constant 0 : index
    %199 = vector.load %arg30[%c0_97, %c0_98] : memref<1x8xf32, #tpu.memory_space<vmem>>, vector<1x1xf32>
    tpu.vector_store %arg30[%c0_97, %c0_98], %191 {strides = array<i32>} : memref<1x8xf32, #tpu.memory_space<vmem>>, vector<1x1xf32>,
    %c0_99 = arith.constant 0 : index
    %c2_100 = arith.constant 2 : index
    %200 = vector.load %arg30[%c0_99, %c2_100] : memref<1x8xf32, #tpu.memory_space<vmem>>, vector<1x1xf32>
    tpu.vector_store %arg30[%c0_99, %c2_100], %198 {strides = array<i32>} : memref<1x8xf32, #tpu.memory_space<vmem>>, vector<1x1xf32>,
    %201 = vector.extract_strided_slice %170 {offsets = [0, 0], sizes = [1, 1], strides = [1, 1]} : vector<1x4xf32> to vector<1x1xf32>
    %cst_101 = arith.constant 5.000000e-01 : f32
    %202 = vector.broadcast %cst_101 : f32 to vector<1x1xf32>
    %203 = arith.mulf %202, %198 : vector<1x1xf32>
    %204 = math.exp %203 : vector<1x1xf32>
    %205 = arith.mulf %201, %204 : vector<1x1xf32>
    %206 = arith.addf %205, %191 : vector<1x1xf32>
    %207 = vector.broadcast %206 : vector<1x1xf32> to vector<8x36xf32>
    %208 = arith.mulf %207, %182 : vector<8x36xf32>
    %209 = arith.addf %172, %208 : vector<8x36xf32>
    %210 = arith.mulf %166, %176 : vector<8x16xf32>
    %cst_102 = arith.constant dense<0.000000e+00> : vector<8xf32>
    %211 = vector.multi_reduction <add>, %210, %cst_102 [1] : vector<8x16xf32> to vector<8xf32>
    %212 = vector.shape_cast %211 : vector<8xf32> to vector<8x1xf32>
    %cst_103 = arith.constant dense<0.000000e+00> : vector<1xf32>
    %213 = vector.multi_reduction <add>, %212, %cst_103 [0] : vector<8x1xf32> to vector<1xf32>
    %214 = vector.shape_cast %213 : vector<1xf32> to vector<1x1xf32>
    %215 = vector.extract_strided_slice %171 {offsets = [0, 1], sizes = [1, 1], strides = [1, 1]} : vector<1x4xf32> to vector<1x1xf32>
    %216 = arith.addf %214, %215 : vector<1x1xf32>
    %217 = arith.mulf %166, %180 : vector<8x16xf32>
    %cst_104 = arith.constant dense<0.000000e+00> : vector<8xf32>
    %218 = vector.multi_reduction <add>, %217, %cst_104 [1] : vector<8x16xf32> to vector<8xf32>
    %219 = vector.shape_cast %218 : vector<8xf32> to vector<8x1xf32>
    %cst_105 = arith.constant dense<0.000000e+00> : vector<1xf32>
    %220 = vector.multi_reduction <add>, %219, %cst_105 [0] : vector<8x1xf32> to vector<1xf32>
    %221 = vector.shape_cast %220 : vector<1xf32> to vector<1x1xf32>
    %222 = vector.extract_strided_slice %171 {offsets = [0, 3], sizes = [1, 1], strides = [1, 1]} : vector<1x4xf32> to vector<1x1xf32>
    %223 = arith.addf %221, %222 : vector<1x1xf32>
    %c0_106 = arith.constant 0 : index
    %c1_107 = arith.constant 1 : index
    %224 = vector.load %arg30[%c0_106, %c1_107] : memref<1x8xf32, #tpu.memory_space<vmem>>, vector<1x1xf32>
    tpu.vector_store %arg30[%c0_106, %c1_107], %216 {strides = array<i32>} : memref<1x8xf32, #tpu.memory_space<vmem>>, vector<1x1xf32>,
    %c0_108 = arith.constant 0 : index
    %c3_109 = arith.constant 3 : index
    %225 = vector.load %arg30[%c0_108, %c3_109] : memref<1x8xf32, #tpu.memory_space<vmem>>, vector<1x1xf32>
    tpu.vector_store %arg30[%c0_108, %c3_109], %223 {strides = array<i32>} : memref<1x8xf32, #tpu.memory_space<vmem>>, vector<1x1xf32>,
    %226 = vector.extract_strided_slice %170 {offsets = [0, 1], sizes = [1, 1], strides = [1, 1]} : vector<1x4xf32> to vector<1x1xf32>
    %cst_110 = arith.constant 5.000000e-01 : f32
    %227 = vector.broadcast %cst_110 : f32 to vector<1x1xf32>
    %228 = arith.mulf %227, %223 : vector<1x1xf32>
    %229 = math.exp %228 : vector<1x1xf32>
    %230 = arith.mulf %226, %229 : vector<1x1xf32>
    %231 = arith.addf %230, %216 : vector<1x1xf32>
    %232 = vector.broadcast %231 : vector<1x1xf32> to vector<8x36xf32>
    %233 = arith.mulf %232, %184 : vector<8x36xf32>
    %234 = arith.addf %209, %233 : vector<8x36xf32>
    %c0_111 = arith.constant 0 : index
    %c0_112 = arith.constant 0 : index
    %235 = vector.load %arg26[%c0_111, %c0_112] : memref<8x72xf32, #tpu.memory_space<vmem>>, vector<8x36xf32>
    tpu.vector_store %arg26[%c0_111, %c0_112], %234 {strides = array<i32>} : memref<8x72xf32, #tpu.memory_space<vmem>>, vector<8x36xf32>,
    %236 = arith.mulf %168, %174 : vector<8x16xf32>
    %cst_113 = arith.constant dense<0.000000e+00> : vector<8xf32>
    %237 = vector.multi_reduction <add>, %236, %cst_113 [1] : vector<8x16xf32> to vector<8xf32>
    %238 = vector.shape_cast %237 : vector<8xf32> to vector<8x1xf32>
    %cst_114 = arith.constant dense<0.000000e+00> : vector<1xf32>
    %239 = vector.multi_reduction <add>, %238, %cst_114 [0] : vector<8x1xf32> to vector<1xf32>
    %240 = vector.shape_cast %239 : vector<1xf32> to vector<1x1xf32>
    %241 = vector.extract_strided_slice %171 {offsets = [0, 0], sizes = [1, 1], strides = [1, 1]} : vector<1x4xf32> to vector<1x1xf32>
    %242 = arith.addf %240, %241 : vector<1x1xf32>
    %243 = arith.mulf %168, %178 : vector<8x16xf32>
    %cst_115 = arith.constant dense<0.000000e+00> : vector<8xf32>
    %244 = vector.multi_reduction <add>, %243, %cst_115 [1] : vector<8x16xf32> to vector<8xf32>
    %245 = vector.shape_cast %244 : vector<8xf32> to vector<8x1xf32>
    %cst_116 = arith.constant dense<0.000000e+00> : vector<1xf32>
    %246 = vector.multi_reduction <add>, %245, %cst_116 [0] : vector<8x1xf32> to vector<1xf32>
    %247 = vector.shape_cast %246 : vector<1xf32> to vector<1x1xf32>
    %248 = vector.extract_strided_slice %171 {offsets = [0, 2], sizes = [1, 1], strides = [1, 1]} : vector<1x4xf32> to vector<1x1xf32>
    %249 = arith.addf %247, %248 : vector<1x1xf32>
    %c0_117 = arith.constant 0 : index
    %c4 = arith.constant 4 : index
    %250 = vector.load %arg30[%c0_117, %c4] : memref<1x8xf32, #tpu.memory_space<vmem>>, vector<1x1xf32>
    tpu.vector_store %arg30[%c0_117, %c4], %242 {strides = array<i32>} : memref<1x8xf32, #tpu.memory_space<vmem>>, vector<1x1xf32>,
    %c0_118 = arith.constant 0 : index
    %c6 = arith.constant 6 : index
    %251 = vector.load %arg30[%c0_118, %c6] : memref<1x8xf32, #tpu.memory_space<vmem>>, vector<1x1xf32>
    tpu.vector_store %arg30[%c0_118, %c6], %249 {strides = array<i32>} : memref<1x8xf32, #tpu.memory_space<vmem>>, vector<1x1xf32>,
    %252 = vector.extract_strided_slice %170 {offsets = [0, 2], sizes = [1, 1], strides = [1, 1]} : vector<1x4xf32> to vector<1x1xf32>
    %cst_119 = arith.constant 5.000000e-01 : f32
    %253 = vector.broadcast %cst_119 : f32 to vector<1x1xf32>
    %254 = arith.mulf %253, %249 : vector<1x1xf32>
    %255 = math.exp %254 : vector<1x1xf32>
    %256 = arith.mulf %252, %255 : vector<1x1xf32>
    %257 = arith.addf %256, %242 : vector<1x1xf32>
    %258 = vector.broadcast %257 : vector<1x1xf32> to vector<8x36xf32>
    %259 = arith.mulf %258, %182 : vector<8x36xf32>
    %260 = arith.addf %172, %259 : vector<8x36xf32>
    %261 = arith.mulf %168, %176 : vector<8x16xf32>
    %cst_120 = arith.constant dense<0.000000e+00> : vector<8xf32>
    %262 = vector.multi_reduction <add>, %261, %cst_120 [1] : vector<8x16xf32> to vector<8xf32>
    %263 = vector.shape_cast %262 : vector<8xf32> to vector<8x1xf32>
    %cst_121 = arith.constant dense<0.000000e+00> : vector<1xf32>
    %264 = vector.multi_reduction <add>, %263, %cst_121 [0] : vector<8x1xf32> to vector<1xf32>
    %265 = vector.shape_cast %264 : vector<1xf32> to vector<1x1xf32>
    %266 = vector.extract_strided_slice %171 {offsets = [0, 1], sizes = [1, 1], strides = [1, 1]} : vector<1x4xf32> to vector<1x1xf32>
    %267 = arith.addf %265, %266 : vector<1x1xf32>
    %268 = arith.mulf %168, %180 : vector<8x16xf32>
    %cst_122 = arith.constant dense<0.000000e+00> : vector<8xf32>
    %269 = vector.multi_reduction <add>, %268, %cst_122 [1] : vector<8x16xf32> to vector<8xf32>
    %270 = vector.shape_cast %269 : vector<8xf32> to vector<8x1xf32>
    %cst_123 = arith.constant dense<0.000000e+00> : vector<1xf32>
    %271 = vector.multi_reduction <add>, %270, %cst_123 [0] : vector<8x1xf32> to vector<1xf32>
    %272 = vector.shape_cast %271 : vector<1xf32> to vector<1x1xf32>
    %273 = vector.extract_strided_slice %171 {offsets = [0, 3], sizes = [1, 1], strides = [1, 1]} : vector<1x4xf32> to vector<1x1xf32>
    %274 = arith.addf %272, %273 : vector<1x1xf32>
    %c0_124 = arith.constant 0 : index
    %c5 = arith.constant 5 : index
    %275 = vector.load %arg30[%c0_124, %c5] : memref<1x8xf32, #tpu.memory_space<vmem>>, vector<1x1xf32>
    tpu.vector_store %arg30[%c0_124, %c5], %267 {strides = array<i32>} : memref<1x8xf32, #tpu.memory_space<vmem>>, vector<1x1xf32>,
    %c0_125 = arith.constant 0 : index
    %c7 = arith.constant 7 : index
    %276 = vector.load %arg30[%c0_125, %c7] : memref<1x8xf32, #tpu.memory_space<vmem>>, vector<1x1xf32>
    tpu.vector_store %arg30[%c0_125, %c7], %274 {strides = array<i32>} : memref<1x8xf32, #tpu.memory_space<vmem>>, vector<1x1xf32>,
    %277 = vector.extract_strided_slice %170 {offsets = [0, 3], sizes = [1, 1], strides = [1, 1]} : vector<1x4xf32> to vector<1x1xf32>
    %cst_126 = arith.constant 5.000000e-01 : f32
    %278 = vector.broadcast %cst_126 : f32 to vector<1x1xf32>
    %279 = arith.mulf %278, %274 : vector<1x1xf32>
    %280 = math.exp %279 : vector<1x1xf32>
    %281 = arith.mulf %277, %280 : vector<1x1xf32>
    %282 = arith.addf %281, %267 : vector<1x1xf32>
    %283 = vector.broadcast %282 : vector<1x1xf32> to vector<8x36xf32>
    %284 = arith.mulf %283, %184 : vector<8x36xf32>
    %285 = arith.addf %260, %284 : vector<8x36xf32>
    %c0_127 = arith.constant 0 : index
    %c36 = arith.constant 36 : index
    %286 = vector.load %arg26[%c0_127, %c36] : memref<8x72xf32, #tpu.memory_space<vmem>>, vector<8x36xf32>
    tpu.vector_store %arg26[%c0_127, %c36], %285 {strides = array<i32>} : memref<8x72xf32, #tpu.memory_space<vmem>>, vector<8x36xf32>,
    %c0_128 = arith.constant 0 : index
    %c0_129 = arith.constant 0 : index
    %287 = vector.load %arg30[%c0_128, %c0_129] : memref<1x8xf32, #tpu.memory_space<vmem>>, vector<1x8xf32>
    %c0_130 = arith.constant 0 : index
    %c0_131 = arith.constant 0 : index
    %c0_132 = arith.constant 0 : index
    %288 = vector.load %arg22[%c0_130, %c0_131, %c0_132] : memref<1x1x8xf32, #tpu.memory_space<vmem>>, vector<1x1x8xf32>
    %289 = vector.shape_cast %288 : vector<1x1x8xf32> to vector<1x8xf32>
    %290 = vector.shape_cast %287 : vector<1x8xf32> to vector<1x1x8xf32>
    tpu.vector_store %arg22[%c0_130, %c0_131, %c0_132], %290 {strides = array<i32>} : memref<1x1x8xf32, #tpu.memory_space<vmem>>, vector<1x1x8xf32>,
    %c0_133 = arith.constant 0 : index
    %c0_134 = arith.constant 0 : index
    %291 = vector.load %arg26[%c0_133, %c0_134] : memref<8x72xf32, #tpu.memory_space<vmem>>, vector<8x72xf32>
    %292 = vector.extract_strided_slice %291 {offsets = [0, 0], sizes = [8, 58], strides = [1, 1]} : vector<8x72xf32> to vector<8x58xf32>
    %c0_135 = arith.constant 0 : index
    %c0_136 = arith.constant 0 : index
    %293 = vector.load %arg23[%c0_135, %c0_136] : memref<144x478xf32, #tpu.memory_space<vmem>>, vector<8x58xf32>
    tpu.vector_store %arg23[%c0_135, %c0_136], %292 {strides = array<i32>} : memref<144x478xf32, #tpu.memory_space<vmem>>, vector<8x58xf32>,
    %294 = vector.extract_strided_slice %291 {offsets = [0, 1], sizes = [8, 58], strides = [1, 1]} : vector<8x72xf32> to vector<8x58xf32>
    %c8_137 = arith.constant 8 : index
    %c0_138 = arith.constant 0 : index
    %295 = vector.load %arg23[%c8_137, %c0_138] : memref<144x478xf32, #tpu.memory_space<vmem>>, vector<8x58xf32>
    tpu.vector_store %arg23[%c8_137, %c0_138], %294 {strides = array<i32>} : memref<144x478xf32, #tpu.memory_space<vmem>>, vector<8x58xf32>,
    %296 = vector.extract_strided_slice %291 {offsets = [0, 2], sizes = [8, 58], strides = [1, 1]} : vector<8x72xf32> to vector<8x58xf32>
    %c16_139 = arith.constant 16 : index
    %c0_140 = arith.constant 0 : index
    %297 = vector.load %arg23[%c16_139, %c0_140] : memref<144x478xf32, #tpu.memory_space<vmem>>, vector<8x58xf32>
    tpu.vector_store %arg23[%c16_139, %c0_140], %296 {strides = array<i32>} : memref<144x478xf32, #tpu.memory_space<vmem>>, vector<8x58xf32>,
    %298 = vector.extract_strided_slice %291 {offsets = [0, 6], sizes = [8, 58], strides = [1, 1]} : vector<8x72xf32> to vector<8x58xf32>
    %c24_141 = arith.constant 24 : index
    %c0_142 = arith.constant 0 : index
    %299 = vector.load %arg23[%c24_141, %c0_142] : memref<144x478xf32, #tpu.memory_space<vmem>>, vector<8x58xf32>
    tpu.vector_store %arg23[%c24_141, %c0_142], %298 {strides = array<i32>} : memref<144x478xf32, #tpu.memory_space<vmem>>, vector<8x58xf32>,
    %300 = vector.extract_strided_slice %291 {offsets = [0, 7], sizes = [8, 58], strides = [1, 1]} : vector<8x72xf32> to vector<8x58xf32>
    %c32_143 = arith.constant 32 : index
    %c0_144 = arith.constant 0 : index
    %301 = vector.load %arg23[%c32_143, %c0_144] : memref<144x478xf32, #tpu.memory_space<vmem>>, vector<8x58xf32>
    tpu.vector_store %arg23[%c32_143, %c0_144], %300 {strides = array<i32>} : memref<144x478xf32, #tpu.memory_space<vmem>>, vector<8x58xf32>,
    %302 = vector.extract_strided_slice %291 {offsets = [0, 8], sizes = [8, 58], strides = [1, 1]} : vector<8x72xf32> to vector<8x58xf32>
    %c40_145 = arith.constant 40 : index
    %c0_146 = arith.constant 0 : index
    %303 = vector.load %arg23[%c40_145, %c0_146] : memref<144x478xf32, #tpu.memory_space<vmem>>, vector<8x58xf32>
    tpu.vector_store %arg23[%c40_145, %c0_146], %302 {strides = array<i32>} : memref<144x478xf32, #tpu.memory_space<vmem>>, vector<8x58xf32>,
    %304 = vector.extract_strided_slice %291 {offsets = [0, 12], sizes = [8, 58], strides = [1, 1]} : vector<8x72xf32> to vector<8x58xf32>
    %c48_147 = arith.constant 48 : index
    %c0_148 = arith.constant 0 : index
    %305 = vector.load %arg23[%c48_147, %c0_148] : memref<144x478xf32, #tpu.memory_space<vmem>>, vector<8x58xf32>
    tpu.vector_store %arg23[%c48_147, %c0_148], %304 {strides = array<i32>} : memref<144x478xf32, #tpu.memory_space<vmem>>, vector<8x58xf32>,
    %306 = vector.extract_strided_slice %291 {offsets = [0, 13], sizes = [8, 58], strides = [1, 1]} : vector<8x72xf32> to vector<8x58xf32>
    %c56_149 = arith.constant 56 : index
    %c0_150 = arith.constant 0 : index
    %307 = vector.load %arg23[%c56_149, %c0_150] : memref<144x478xf32, #tpu.memory_space<vmem>>, vector<8x58xf32>
    tpu.vector_store %arg23[%c56_149, %c0_150], %306 {strides = array<i32>} : memref<144x478xf32, #tpu.memory_space<vmem>>, vector<8x58xf32>,
    %308 = vector.extract_strided_slice %291 {offsets = [0, 14], sizes = [8, 58], strides = [1, 1]} : vector<8x72xf32> to vector<8x58xf32>
    %c64_151 = arith.constant 64 : index
    %c0_152 = arith.constant 0 : index
    %309 = vector.load %arg23[%c64_151, %c0_152] : memref<144x478xf32, #tpu.memory_space<vmem>>, vector<8x58xf32>
    tpu.vector_store %arg23[%c64_151, %c0_152], %308 {strides = array<i32>} : memref<144x478xf32, #tpu.memory_space<vmem>>, vector<8x58xf32>,
    %c0_153 = arith.constant 0 : index
    %c0_154 = arith.constant 0 : index
    %310 = vector.load %arg23[%c0_153, %c0_154] : memref<144x478xf32, #tpu.memory_space<vmem>>, vector<72x58xf32>
    %311 = arith.truncf %310 : vector<72x58xf32> to vector<72x58xbf16>
    %c0_155 = arith.constant 0 : index
    %c0_156 = arith.constant 0 : index
    %312 = vector.load %arg6[%c0_155, %c0_156] : memref<8x72xbf16, #tpu.memory_space<vmem>>, vector<8x72xbf16>
    %cst_157 = arith.constant dense<0.000000e+00> : vector<8x58xf32>
    %313 = tpu.matmul %312, %311, %cst_157 {dimension_numbers = #tpu.dot_dimension_numbers<[1], [0], [0], [1], [0, 0, 1, 1], [], []>} : vector<8x72xbf16>, vector<72x58xbf16>, vector<8x58xf32> -> vector<8x58xf32>
    %c32_158 = arith.constant 32 : index
    %c0_159 = arith.constant 0 : index
    %314 = vector.load %arg10[%c32_158, %c0_159] : memref<89x1xf32, #tpu.memory_space<vmem>>, vector<8x1xf32>
    %315 = vector.broadcast %314 : vector<8x1xf32> to vector<8x58xf32>
    %316 = arith.addf %313, %315 : vector<8x58xf32>
    %cst_160 = arith.constant 0.000000e+00 : f32
    %317 = vector.broadcast %cst_160 : f32 to vector<8x58xf32>
    %318 = arith.cmpf ogt, %316, %317 : vector<8x58xf32>
    %cst_161 = arith.constant 0.00999999977 : f32
    %319 = vector.broadcast %cst_161 : f32 to vector<8x58xf32>
    %320 = arith.mulf %319, %316 : vector<8x58xf32>
    %321 = arith.select %318, %316, %320 : vector<8x58xi1>, vector<8x58xf32>
    %322 = arith.truncf %321 : vector<8x58xf32> to vector<8x58xbf16>
    %c0_162 = arith.constant 0 : index
    %c0_163 = arith.constant 0 : index
    %323 = vector.load %arg18[%c0_162, %c0_163] : memref<22x100xbf16, #tpu.memory_space<vmem>>, vector<22x100xbf16>
    %324 = vector.extract_strided_slice %322 {offsets = [0, 0], sizes = [8, 22], strides = [1, 1]} : vector<8x58xbf16> to vector<8x22xbf16>
    %cst_164 = arith.constant dense<0.000000e+00> : vector<8x100xf32>
    %325 = tpu.matmul %324, %323, %cst_164 {dimension_numbers = #tpu.dot_dimension_numbers<[1], [0], [0], [1], [0, 0, 1, 1], [], []>} : vector<8x22xbf16>, vector<22x100xbf16>, vector<8x100xf32> -> vector<8x100xf32>
    %c0_165 = arith.constant 0 : index
    %c0_166 = arith.constant 0 : index
    %326 = vector.load %arg27[%c0_165, %c0_166] : memref<8x200xf32, #tpu.memory_space<vmem>>, vector<8x100xf32>
    tpu.vector_store %arg27[%c0_165, %c0_166], %325 {strides = array<i32>} : memref<8x200xf32, #tpu.memory_space<vmem>>, vector<8x100xf32>,
    %327 = vector.extract_strided_slice %322 {offsets = [0, 36], sizes = [8, 22], strides = [1, 1]} : vector<8x58xbf16> to vector<8x22xbf16>
    %cst_167 = arith.constant dense<0.000000e+00> : vector<8x100xf32>
    %328 = tpu.matmul %327, %323, %cst_167 {dimension_numbers = #tpu.dot_dimension_numbers<[1], [0], [0], [1], [0, 0, 1, 1], [], []>} : vector<8x22xbf16>, vector<22x100xbf16>, vector<8x100xf32> -> vector<8x100xf32>
    %c0_168 = arith.constant 0 : index
    %c100 = arith.constant 100 : index
    %329 = vector.load %arg27[%c0_168, %c100] : memref<8x200xf32, #tpu.memory_space<vmem>>, vector<8x100xf32>
    tpu.vector_store %arg27[%c0_168, %c100], %328 {strides = array<i32>} : memref<8x200xf32, #tpu.memory_space<vmem>>, vector<8x100xf32>,
    %c0_169 = arith.constant 0 : index
    %c0_170 = arith.constant 0 : index
    %330 = vector.load %arg27[%c0_169, %c0_170] : memref<8x200xf32, #tpu.memory_space<vmem>>, vector<8x200xf32>
    %331 = vector.extract_strided_slice %330 {offsets = [0, 0], sizes = [8, 178], strides = [1, 1]} : vector<8x200xf32> to vector<8x178xf32>
    %c0_171 = arith.constant 0 : index
    %c0_172 = arith.constant 0 : index
    %332 = vector.load %arg23[%c0_171, %c0_172] : memref<144x478xf32, #tpu.memory_space<vmem>>, vector<8x178xf32>
    tpu.vector_store %arg23[%c0_171, %c0_172], %331 {strides = array<i32>} : memref<144x478xf32, #tpu.memory_space<vmem>>, vector<8x178xf32>,
    %333 = vector.extract_strided_slice %330 {offsets = [0, 1], sizes = [8, 178], strides = [1, 1]} : vector<8x200xf32> to vector<8x178xf32>
    %c8_173 = arith.constant 8 : index
    %c0_174 = arith.constant 0 : index
    %334 = vector.load %arg23[%c8_173, %c0_174] : memref<144x478xf32, #tpu.memory_space<vmem>>, vector<8x178xf32>
    tpu.vector_store %arg23[%c8_173, %c0_174], %333 {strides = array<i32>} : memref<144x478xf32, #tpu.memory_space<vmem>>, vector<8x178xf32>,
    %335 = vector.extract_strided_slice %330 {offsets = [0, 2], sizes = [8, 178], strides = [1, 1]} : vector<8x200xf32> to vector<8x178xf32>
    %c16_175 = arith.constant 16 : index
    %c0_176 = arith.constant 0 : index
    %336 = vector.load %arg23[%c16_175, %c0_176] : memref<144x478xf32, #tpu.memory_space<vmem>>, vector<8x178xf32>
    tpu.vector_store %arg23[%c16_175, %c0_176], %335 {strides = array<i32>} : memref<144x478xf32, #tpu.memory_space<vmem>>, vector<8x178xf32>,
    %337 = vector.extract_strided_slice %330 {offsets = [0, 10], sizes = [8, 178], strides = [1, 1]} : vector<8x200xf32> to vector<8x178xf32>
    %c24_177 = arith.constant 24 : index
    %c0_178 = arith.constant 0 : index
    %338 = vector.load %arg23[%c24_177, %c0_178] : memref<144x478xf32, #tpu.memory_space<vmem>>, vector<8x178xf32>
    tpu.vector_store %arg23[%c24_177, %c0_178], %337 {strides = array<i32>} : memref<144x478xf32, #tpu.memory_space<vmem>>, vector<8x178xf32>,
    %339 = vector.extract_strided_slice %330 {offsets = [0, 11], sizes = [8, 178], strides = [1, 1]} : vector<8x200xf32> to vector<8x178xf32>
    %c32_179 = arith.constant 32 : index
    %c0_180 = arith.constant 0 : index
    %340 = vector.load %arg23[%c32_179, %c0_180] : memref<144x478xf32, #tpu.memory_space<vmem>>, vector<8x178xf32>
    tpu.vector_store %arg23[%c32_179, %c0_180], %339 {strides = array<i32>} : memref<144x478xf32, #tpu.memory_space<vmem>>, vector<8x178xf32>,
    %341 = vector.extract_strided_slice %330 {offsets = [0, 12], sizes = [8, 178], strides = [1, 1]} : vector<8x200xf32> to vector<8x178xf32>
    %c40_181 = arith.constant 40 : index
    %c0_182 = arith.constant 0 : index
    %342 = vector.load %arg23[%c40_181, %c0_182] : memref<144x478xf32, #tpu.memory_space<vmem>>, vector<8x178xf32>
    tpu.vector_store %arg23[%c40_181, %c0_182], %341 {strides = array<i32>} : memref<144x478xf32, #tpu.memory_space<vmem>>, vector<8x178xf32>,
    %343 = vector.extract_strided_slice %330 {offsets = [0, 20], sizes = [8, 178], strides = [1, 1]} : vector<8x200xf32> to vector<8x178xf32>
    %c48_183 = arith.constant 48 : index
    %c0_184 = arith.constant 0 : index
    %344 = vector.load %arg23[%c48_183, %c0_184] : memref<144x478xf32, #tpu.memory_space<vmem>>, vector<8x178xf32>
    tpu.vector_store %arg23[%c48_183, %c0_184], %343 {strides = array<i32>} : memref<144x478xf32, #tpu.memory_space<vmem>>, vector<8x178xf32>,
    %345 = vector.extract_strided_slice %330 {offsets = [0, 21], sizes = [8, 178], strides = [1, 1]} : vector<8x200xf32> to vector<8x178xf32>
    %c56_185 = arith.constant 56 : index
    %c0_186 = arith.constant 0 : index
    %346 = vector.load %arg23[%c56_185, %c0_186] : memref<144x478xf32, #tpu.memory_space<vmem>>, vector<8x178xf32>
    tpu.vector_store %arg23[%c56_185, %c0_186], %345 {strides = array<i32>} : memref<144x478xf32, #tpu.memory_space<vmem>>, vector<8x178xf32>,
    %347 = vector.extract_strided_slice %330 {offsets = [0, 22], sizes = [8, 178], strides = [1, 1]} : vector<8x200xf32> to vector<8x178xf32>
    %c64_187 = arith.constant 64 : index
    %c0_188 = arith.constant 0 : index
    %348 = vector.load %arg23[%c64_187, %c0_188] : memref<144x478xf32, #tpu.memory_space<vmem>>, vector<8x178xf32>
    tpu.vector_store %arg23[%c64_187, %c0_188], %347 {strides = array<i32>} : memref<144x478xf32, #tpu.memory_space<vmem>>, vector<8x178xf32>,
    %c0_189 = arith.constant 0 : index
    %c0_190 = arith.constant 0 : index
    %349 = vector.load %arg23[%c0_189, %c0_190] : memref<144x478xf32, #tpu.memory_space<vmem>>, vector<72x178xf32>
    %350 = arith.truncf %349 : vector<72x178xf32> to vector<72x178xbf16>
    %c0_191 = arith.constant 0 : index
    %c0_192 = arith.constant 0 : index
    %351 = vector.load %arg7[%c0_191, %c0_192] : memref<16x72xbf16, #tpu.memory_space<vmem>>, vector<16x72xbf16>
    %cst_193 = arith.constant dense<0.000000e+00> : vector<16x178xf32>
    %352 = tpu.matmul %351, %350, %cst_193 {dimension_numbers = #tpu.dot_dimension_numbers<[1], [0], [0], [1], [0, 0, 1, 1], [], []>} : vector<16x72xbf16>, vector<72x178xbf16>, vector<16x178xf32> -> vector<16x178xf32>
    %c40_194 = arith.constant 40 : index
    %c0_195 = arith.constant 0 : index
    %353 = vector.load %arg10[%c40_194, %c0_195] : memref<89x1xf32, #tpu.memory_space<vmem>>, vector<16x1xf32>
    %354 = vector.broadcast %353 : vector<16x1xf32> to vector<16x178xf32>
    %355 = arith.addf %352, %354 : vector<16x178xf32>
    %cst_196 = arith.constant 0.000000e+00 : f32
    %356 = vector.broadcast %cst_196 : f32 to vector<16x178xf32>
    %357 = arith.cmpf ogt, %355, %356 : vector<16x178xf32>
    %cst_197 = arith.constant 0.00999999977 : f32
    %358 = vector.broadcast %cst_197 : f32 to vector<16x178xf32>
    %359 = arith.mulf %358, %355 : vector<16x178xf32>
    %360 = arith.select %357, %355, %359 : vector<16x178xi1>, vector<16x178xf32>
    %361 = arith.truncf %360 : vector<16x178xf32> to vector<16x178xbf16>
    %c0_198 = arith.constant 0 : index
    %c0_199 = arith.constant 0 : index
    %362 = vector.load %arg19[%c0_198, %c0_199] : memref<78x256xbf16, #tpu.memory_space<vmem>>, vector<78x256xbf16>
    %363 = vector.extract_strided_slice %361 {offsets = [0, 0], sizes = [16, 78], strides = [1, 1]} : vector<16x178xbf16> to vector<16x78xbf16>
    %cst_200 = arith.constant dense<0.000000e+00> : vector<16x256xf32>
    %364 = tpu.matmul %363, %362, %cst_200 {dimension_numbers = #tpu.dot_dimension_numbers<[1], [0], [0], [1], [0, 0, 1, 1], [], []>} : vector<16x78xbf16>, vector<78x256xbf16>, vector<16x256xf32> -> vector<16x256xf32>
    %c0_201 = arith.constant 0 : index
    %c0_202 = arith.constant 0 : index
    %365 = vector.load %arg28[%c0_201, %c0_202] : memref<16x512xf32, #tpu.memory_space<vmem>>, vector<16x256xf32>
    tpu.vector_store %arg28[%c0_201, %c0_202], %364 {strides = array<i32>} : memref<16x512xf32, #tpu.memory_space<vmem>>, vector<16x256xf32>,
    %366 = vector.extract_strided_slice %361 {offsets = [0, 100], sizes = [16, 78], strides = [1, 1]} : vector<16x178xbf16> to vector<16x78xbf16>
    %cst_203 = arith.constant dense<0.000000e+00> : vector<16x256xf32>
    %367 = tpu.matmul %366, %362, %cst_203 {dimension_numbers = #tpu.dot_dimension_numbers<[1], [0], [0], [1], [0, 0, 1, 1], [], []>} : vector<16x78xbf16>, vector<78x256xbf16>, vector<16x256xf32> -> vector<16x256xf32>
    %c0_204 = arith.constant 0 : index
    %c256_205 = arith.constant 256 : index
    %368 = vector.load %arg28[%c0_204, %c256_205] : memref<16x512xf32, #tpu.memory_space<vmem>>, vector<16x256xf32>
    tpu.vector_store %arg28[%c0_204, %c256_205], %367 {strides = array<i32>} : memref<16x512xf32, #tpu.memory_space<vmem>>, vector<16x256xf32>,
    %c0_206 = arith.constant 0 : index
    %c0_207 = arith.constant 0 : index
    %369 = vector.load %arg28[%c0_206, %c0_207] : memref<16x512xf32, #tpu.memory_space<vmem>>, vector<16x512xf32>
    %370 = vector.extract_strided_slice %369 {offsets = [0, 0], sizes = [16, 478], strides = [1, 1]} : vector<16x512xf32> to vector<16x478xf32>
    %c0_208 = arith.constant 0 : index
    %c0_209 = arith.constant 0 : index
    %371 = vector.load %arg23[%c0_208, %c0_209] : memref<144x478xf32, #tpu.memory_space<vmem>>, vector<16x478xf32>
    tpu.vector_store %arg23[%c0_208, %c0_209], %370 {strides = array<i32>} : memref<144x478xf32, #tpu.memory_space<vmem>>, vector<16x478xf32>,
    %372 = vector.extract_strided_slice %369 {offsets = [0, 1], sizes = [16, 478], strides = [1, 1]} : vector<16x512xf32> to vector<16x478xf32>
    %c16_210 = arith.constant 16 : index
    %c0_211 = arith.constant 0 : index
    %373 = vector.load %arg23[%c16_210, %c0_211] : memref<144x478xf32, #tpu.memory_space<vmem>>, vector<16x478xf32>
    tpu.vector_store %arg23[%c16_210, %c0_211], %372 {strides = array<i32>} : memref<144x478xf32, #tpu.memory_space<vmem>>, vector<16x478xf32>,
    %374 = vector.extract_strided_slice %369 {offsets = [0, 2], sizes = [16, 478], strides = [1, 1]} : vector<16x512xf32> to vector<16x478xf32>
    %c32_212 = arith.constant 32 : index
    %c0_213 = arith.constant 0 : index
    %375 = vector.load %arg23[%c32_212, %c0_213] : memref<144x478xf32, #tpu.memory_space<vmem>>, vector<16x478xf32>
    tpu.vector_store %arg23[%c32_212, %c0_213], %374 {strides = array<i32>} : memref<144x478xf32, #tpu.memory_space<vmem>>, vector<16x478xf32>,
    %376 = vector.extract_strided_slice %369 {offsets = [0, 16], sizes = [16, 478], strides = [1, 1]} : vector<16x512xf32> to vector<16x478xf32>
    %c48_214 = arith.constant 48 : index
    %c0_215 = arith.constant 0 : index
    %377 = vector.load %arg23[%c48_214, %c0_215] : memref<144x478xf32, #tpu.memory_space<vmem>>, vector<16x478xf32>
    tpu.vector_store %arg23[%c48_214, %c0_215], %376 {strides = array<i32>} : memref<144x478xf32, #tpu.memory_space<vmem>>, vector<16x478xf32>,
    %378 = vector.extract_strided_slice %369 {offsets = [0, 17], sizes = [16, 478], strides = [1, 1]} : vector<16x512xf32> to vector<16x478xf32>
    %c64_216 = arith.constant 64 : index
    %c0_217 = arith.constant 0 : index
    %379 = vector.load %arg23[%c64_216, %c0_217] : memref<144x478xf32, #tpu.memory_space<vmem>>, vector<16x478xf32>
    tpu.vector_store %arg23[%c64_216, %c0_217], %378 {strides = array<i32>} : memref<144x478xf32, #tpu.memory_space<vmem>>, vector<16x478xf32>,
    %380 = vector.extract_strided_slice %369 {offsets = [0, 18], sizes = [16, 478], strides = [1, 1]} : vector<16x512xf32> to vector<16x478xf32>
    %c80_218 = arith.constant 80 : index
    %c0_219 = arith.constant 0 : index
    %381 = vector.load %arg23[%c80_218, %c0_219] : memref<144x478xf32, #tpu.memory_space<vmem>>, vector<16x478xf32>
    tpu.vector_store %arg23[%c80_218, %c0_219], %380 {strides = array<i32>} : memref<144x478xf32, #tpu.memory_space<vmem>>, vector<16x478xf32>,
    %382 = vector.extract_strided_slice %369 {offsets = [0, 32], sizes = [16, 478], strides = [1, 1]} : vector<16x512xf32> to vector<16x478xf32>
    %c96_220 = arith.constant 96 : index
    %c0_221 = arith.constant 0 : index
    %383 = vector.load %arg23[%c96_220, %c0_221] : memref<144x478xf32, #tpu.memory_space<vmem>>, vector<16x478xf32>
    tpu.vector_store %arg23[%c96_220, %c0_221], %382 {strides = array<i32>} : memref<144x478xf32, #tpu.memory_space<vmem>>, vector<16x478xf32>,
    %384 = vector.extract_strided_slice %369 {offsets = [0, 33], sizes = [16, 478], strides = [1, 1]} : vector<16x512xf32> to vector<16x478xf32>
    %c112_222 = arith.constant 112 : index
    %c0_223 = arith.constant 0 : index
    %385 = vector.load %arg23[%c112_222, %c0_223] : memref<144x478xf32, #tpu.memory_space<vmem>>, vector<16x478xf32>
    tpu.vector_store %arg23[%c112_222, %c0_223], %384 {strides = array<i32>} : memref<144x478xf32, #tpu.memory_space<vmem>>, vector<16x478xf32>,
    %386 = vector.extract_strided_slice %369 {offsets = [0, 34], sizes = [16, 478], strides = [1, 1]} : vector<16x512xf32> to vector<16x478xf32>
    %c128_224 = arith.constant 128 : index
    %c0_225 = arith.constant 0 : index
    %387 = vector.load %arg23[%c128_224, %c0_225] : memref<144x478xf32, #tpu.memory_space<vmem>>, vector<16x478xf32>
    tpu.vector_store %arg23[%c128_224, %c0_225], %386 {strides = array<i32>} : memref<144x478xf32, #tpu.memory_space<vmem>>, vector<16x478xf32>,
    %c0_226 = arith.constant 0 : index
    %c0_227 = arith.constant 0 : index
    %388 = vector.load %arg23[%c0_226, %c0_227] : memref<144x478xf32, #tpu.memory_space<vmem>>, vector<144x478xf32>
    %389 = arith.truncf %388 : vector<144x478xf32> to vector<144x478xbf16>
    %c0_228 = arith.constant 0 : index
    %c0_229 = arith.constant 0 : index
    %390 = vector.load %arg8[%c0_228, %c0_229] : memref<32x144xbf16, #tpu.memory_space<vmem>>, vector<32x144xbf16>
    %cst_230 = arith.constant dense<0.000000e+00> : vector<32x478xf32>
    %391 = tpu.matmul %390, %389, %cst_230 {dimension_numbers = #tpu.dot_dimension_numbers<[1], [0], [0], [1], [0, 0, 1, 1], [], []>} : vector<32x144xbf16>, vector<144x478xbf16>, vector<32x478xf32> -> vector<32x478xf32>
    %c56_231 = arith.constant 56 : index
    %c0_232 = arith.constant 0 : index
    %392 = vector.load %arg10[%c56_231, %c0_232] : memref<89x1xf32, #tpu.memory_space<vmem>>, vector<32x1xf32>
    %393 = vector.broadcast %392 : vector<32x1xf32> to vector<32x478xf32>
    %394 = arith.addf %391, %393 : vector<32x478xf32>
    %cst_233 = arith.constant 0.000000e+00 : f32
    %395 = vector.broadcast %cst_233 : f32 to vector<32x478xf32>
    %396 = arith.cmpf ogt, %394, %395 : vector<32x478xf32>
    %cst_234 = arith.constant 0.00999999977 : f32
    %397 = vector.broadcast %cst_234 : f32 to vector<32x478xf32>
    %398 = arith.mulf %397, %394 : vector<32x478xf32>
    %399 = arith.select %396, %394, %398 : vector<32x478xi1>, vector<32x478xf32>
    %c0_235 = arith.constant 0 : index
    %c0_236 = arith.constant 0 : index
    %400 = vector.load %arg9[%c0_235, %c0_236] : memref<1x32xbf16, #tpu.memory_space<vmem>>, vector<1x32xbf16>
    %401 = arith.truncf %399 : vector<32x478xf32> to vector<32x478xbf16>
    %cst_237 = arith.constant dense<0.000000e+00> : vector<1x478xf32>
    %402 = tpu.matmul %400, %401, %cst_237 {dimension_numbers = #tpu.dot_dimension_numbers<[1], [0], [0], [1], [0, 0, 1, 1], [], []>} : vector<1x32xbf16>, vector<32x478xbf16>, vector<1x478xf32> -> vector<1x478xf32>
    %403 = arith.truncf %402 : vector<1x478xf32> to vector<1x478xbf16>
    %c0_238 = arith.constant 0 : index
    %c0_239 = arith.constant 0 : index
    %404 = vector.load %arg20[%c0_238, %c0_239] : memref<222x784xbf16, #tpu.memory_space<vmem>>, vector<222x784xbf16>
    %c88 = arith.constant 88 : index
    %c0_240 = arith.constant 0 : index
    %405 = vector.load %arg10[%c88, %c0_240] : memref<89x1xf32, #tpu.memory_space<vmem>>, vector<1x1xf32>
    %406 = vector.extract_strided_slice %403 {offsets = [0, 0], sizes = [1, 222], strides = [1, 1]} : vector<1x478xbf16> to vector<1x222xbf16>
    %cst_241 = arith.constant dense<0.000000e+00> : vector<1x784xf32>
    %407 = tpu.matmul %406, %404, %cst_241 {dimension_numbers = #tpu.dot_dimension_numbers<[1], [0], [0], [1], [0, 0, 1, 1], [], []>} : vector<1x222xbf16>, vector<222x784xbf16>, vector<1x784xf32> -> vector<1x784xf32>
    %408 = vector.broadcast %405 : vector<1x1xf32> to vector<1x784xf32>
    %409 = arith.addf %407, %408 : vector<1x784xf32>
    %cst_242 = arith.constant 0.000000e+00 : f32
    %410 = vector.broadcast %cst_242 : f32 to vector<1x784xf32>
    %411 = arith.subf %410, %409 : vector<1x784xf32>
    %412 = math.exp %411 : vector<1x784xf32>
    %cst_243 = arith.constant 1.000000e+00 : f32
    %413 = vector.broadcast %cst_243 : f32 to vector<1x784xf32>
    %414 = arith.addf %413, %412 : vector<1x784xf32>
    %cst_244 = arith.constant 1.000000e+00 : f32
    %415 = vector.broadcast %cst_244 : f32 to vector<1x784xf32>
    %416 = arith.divf %415, %414 : vector<1x784xf32>
    %c0_245 = arith.constant 0 : index
    %c0_246 = arith.constant 0 : index
    %417 = vector.load %arg29[%c0_245, %c0_246] : memref<1x1568xf32, #tpu.memory_space<vmem>>, vector<1x784xf32>
    tpu.vector_store %arg29[%c0_245, %c0_246], %416 {strides = array<i32>} : memref<1x1568xf32, #tpu.memory_space<vmem>>, vector<1x784xf32>,
    %418 = vector.extract_strided_slice %403 {offsets = [0, 256], sizes = [1, 222], strides = [1, 1]} : vector<1x478xbf16> to vector<1x222xbf16>
    %cst_247 = arith.constant dense<0.000000e+00> : vector<1x784xf32>
    %419 = tpu.matmul %418, %404, %cst_247 {dimension_numbers = #tpu.dot_dimension_numbers<[1], [0], [0], [1], [0, 0, 1, 1], [], []>} : vector<1x222xbf16>, vector<222x784xbf16>, vector<1x784xf32> -> vector<1x784xf32>
    %420 = vector.broadcast %405 : vector<1x1xf32> to vector<1x784xf32>
    %421 = arith.addf %419, %420 : vector<1x784xf32>
    %cst_248 = arith.constant 0.000000e+00 : f32
    %422 = vector.broadcast %cst_248 : f32 to vector<1x784xf32>
    %423 = arith.subf %422, %421 : vector<1x784xf32>
    %424 = math.exp %423 : vector<1x784xf32>
    %cst_249 = arith.constant 1.000000e+00 : f32
    %425 = vector.broadcast %cst_249 : f32 to vector<1x784xf32>
    %426 = arith.addf %425, %424 : vector<1x784xf32>
    %cst_250 = arith.constant 1.000000e+00 : f32
    %427 = vector.broadcast %cst_250 : f32 to vector<1x784xf32>
    %428 = arith.divf %427, %426 : vector<1x784xf32>
    %c0_251 = arith.constant 0 : index
    %c784 = arith.constant 784 : index
    %429 = vector.load %arg29[%c0_251, %c784] : memref<1x1568xf32, #tpu.memory_space<vmem>>, vector<1x784xf32>
    tpu.vector_store %arg29[%c0_251, %c784], %428 {strides = array<i32>} : memref<1x1568xf32, #tpu.memory_space<vmem>>, vector<1x784xf32>,
    %c0_252 = arith.constant 0 : index
    %c0_253 = arith.constant 0 : index
    %430 = vector.load %arg29[%c0_252, %c0_253] : memref<1x1568xf32, #tpu.memory_space<vmem>>, vector<1x1568xf32>
    %c0_254 = arith.constant 0 : index
    %c0_255 = arith.constant 0 : index
    %c0_256 = arith.constant 0 : index
    %431 = vector.load %arg21[%c0_254, %c0_255, %c0_256] : memref<1x1x1568xf32, #tpu.memory_space<vmem>>, vector<1x1x1568xf32>
    %432 = vector.shape_cast %431 : vector<1x1x1568xf32> to vector<1x1568xf32>
    %433 = vector.shape_cast %430 : vector<1x1568xf32> to vector<1x1x1568xf32>
    tpu.vector_store %arg21[%c0_254, %c0_255, %c0_256], %433 {strides = array<i32>} : memref<1x1x1568xf32, #tpu.memory_space<vmem>>, vector<1x1x1568xf32>,
    return
  }
  func.func @transform_0(%arg0: i32) -> (i32, i32, i32) {
    %c0_i32 = arith.constant 0 : i32
    %c0_i32_0 = arith.constant 0 : i32
    %c0_i32_1 = arith.constant 0 : i32
    return %arg0, %c0_i32, %c0_i32_0 : i32, i32, i32
  }
  func.func @transform_1(%arg0: i32) -> (i32, i32, i32) {
    %c0_i32 = arith.constant 0 : i32
    %c0_i32_0 = arith.constant 0 : i32
    %c0_i32_1 = arith.constant 0 : i32
    return %arg0, %c0_i32, %c0_i32_0 : i32, i32, i32
  }
  func.func @transform_2(%arg0: i32) -> (i32, i32) {
    %c0_i32 = arith.constant 0 : i32
    %c0_i32_0 = arith.constant 0 : i32
    %c0_i32_1 = arith.constant 0 : i32
    return %c0_i32, %c0_i32_0 : i32, i32
  }
  func.func @transform_3(%arg0: i32) -> (i32, i32) {
    %c0_i32 = arith.constant 0 : i32
    %c0_i32_0 = arith.constant 0 : i32
    %c0_i32_1 = arith.constant 0 : i32
    return %c0_i32, %c0_i32_0 : i32, i32
  }
  func.func @transform_4(%arg0: i32) -> (i32, i32) {
    %c0_i32 = arith.constant 0 : i32
    %c0_i32_0 = arith.constant 0 : i32
    %c0_i32_1 = arith.constant 0 : i32
    return %c0_i32, %c0_i32_0 : i32, i32
  }
  func.func @transform_5(%arg0: i32) -> (i32, i32) {
    %c0_i32 = arith.constant 0 : i32
    %c0_i32_0 = arith.constant 0 : i32
    %c0_i32_1 = arith.constant 0 : i32
    return %c0_i32, %c0_i32_0 : i32, i32
  }
  func.func @transform_6(%arg0: i32) -> (i32, i32) {
    %c0_i32 = arith.constant 0 : i32
    %c0_i32_0 = arith.constant 0 : i32
    %c0_i32_1 = arith.constant 0 : i32
    return %c0_i32, %c0_i32_0 : i32, i32
  }
  func.func @transform_7(%arg0: i32) -> (i32, i32) {
    %c0_i32 = arith.constant 0 : i32
    %c0_i32_0 = arith.constant 0 : i32
    %c0_i32_1 = arith.constant 0 : i32
    return %c0_i32, %c0_i32_0 : i32, i32
  }
  func.func @transform_8(%arg0: i32) -> (i32, i32) {
    %c0_i32 = arith.constant 0 : i32
    %c0_i32_0 = arith.constant 0 : i32
    %c0_i32_1 = arith.constant 0 : i32
    return %c0_i32, %c0_i32_0 : i32, i32
  }
  func.func @transform_9(%arg0: i32) -> (i32, i32) {
    %c0_i32 = arith.constant 0 : i32
    %c0_i32_0 = arith.constant 0 : i32
    %c0_i32_1 = arith.constant 0 : i32
    return %c0_i32, %c0_i32_0 : i32, i32
  }
  func.func @transform_10(%arg0: i32) -> (i32, i32, i32) {
    %c0_i32 = arith.constant 0 : i32
    %c0_i32_0 = arith.constant 0 : i32
    %c0_i32_1 = arith.constant 0 : i32
    %c0_i32_2 = arith.constant 0 : i32
    return %c0_i32, %c0_i32_0, %c0_i32_1 : i32, i32, i32
  }
  func.func @transform_11(%arg0: i32) -> (i32, i32) {
    %c0_i32 = arith.constant 0 : i32
    %c0_i32_0 = arith.constant 0 : i32
    %c0_i32_1 = arith.constant 0 : i32
    return %c0_i32, %c0_i32_0 : i32, i32
  }
  func.func @transform_12(%arg0: i32) -> (i32, i32, i32) {
    %c0_i32 = arith.constant 0 : i32
    %c0_i32_0 = arith.constant 0 : i32
    %c0_i32_1 = arith.constant 0 : i32
    %c0_i32_2 = arith.constant 0 : i32
    return %c0_i32, %c0_i32_0, %c0_i32_1 : i32, i32, i32
  }
  func.func @transform_13(%arg0: i32) -> (i32, i32) {
    %c0_i32 = arith.constant 0 : i32
    %c0_i32_0 = arith.constant 0 : i32
    %c0_i32_1 = arith.constant 0 : i32
    return %c0_i32, %c0_i32_0 : i32, i32
  }
  func.func @transform_14(%arg0: i32) -> (i32, i32) {
    %c0_i32 = arith.constant 0 : i32
    %c0_i32_0 = arith.constant 0 : i32
    %c0_i32_1 = arith.constant 0 : i32
    return %c0_i32, %c0_i32_0 : i32, i32
  }
  func.func @transform_15(%arg0: i32) -> (i32, i32) {
    %c0_i32 = arith.constant 0 : i32
    %c0_i32_0 = arith.constant 0 : i32
    %c0_i32_1 = arith.constant 0 : i32
    return %c0_i32, %c0_i32_0 : i32, i32
  }
  func.func @transform_16(%arg0: i32) -> (i32, i32) {
    %c0_i32 = arith.constant 0 : i32
    %c0_i32_0 = arith.constant 0 : i32
    %c0_i32_1 = arith.constant 0 : i32
    return %c0_i32, %c0_i32_0 : i32, i32
  }
  func.func @transform_17(%arg0: i32) -> (i32, i32) {
    %c0_i32 = arith.constant 0 : i32
    %c0_i32_0 = arith.constant 0 : i32
    %c0_i32_1 = arith.constant 0 : i32
    return %c0_i32, %c0_i32_0 : i32, i32
  }
  func.func @transform_18(%arg0: i32) -> (i32, i32) {
    %c0_i32 = arith.constant 0 : i32
    %c0_i32_0 = arith.constant 0 : i32
    %c0_i32_1 = arith.constant 0 : i32
    return %c0_i32, %c0_i32_0 : i32, i32
  }
  func.func @transform_19(%arg0: i32) -> (i32, i32) {
    %c0_i32 = arith.constant 0 : i32
    %c0_i32_0 = arith.constant 0 : i32
    %c0_i32_1 = arith.constant 0 : i32
    return %c0_i32, %c0_i32_0 : i32, i32
  }
  func.func @transform_20(%arg0: i32) -> (i32, i32, i32) {
    %c0_i32 = arith.constant 0 : i32
    %c0_i32_0 = arith.constant 0 : i32
    %c0_i32_1 = arith.constant 0 : i32
    return %arg0, %c0_i32, %c0_i32_0 : i32, i32, i32
  }
  func.func @transform_21(%arg0: i32) -> (i32, i32, i32) {
    %c0_i32 = arith.constant 0 : i32
    %c0_i32_0 = arith.constant 0 : i32
    %c0_i32_1 = arith.constant 0 : i32
    return %arg0, %c0_i32, %c0_i32_0 : i32, i32, i32
  }
}

</mosaic_0001>

<llo_original>
// kernel: vae_forward.1
$region0: #{vae_forward.1}
  #allocation0 [shape = 'u32[]', space=smem, size = 0x4, offset = 0x4, fixed_abs, tag = 'smem constant byte address 0x4 - core index']
  #allocation1 [shape = 'u32[144,128]{1,0:T(1,128)}', space=vmem, size = 0x12000, scoped, tag = 'internal scratch']
  #allocation2 [shape = 'f32[144,478]{1,0:T(8,128)}', space=vmem, size = 0x48000, scoped, tag = 'scratch operand']
  #allocation3 [shape = 'f32[16,512]{1,0:T(8,128)}', space=vmem, size = 0x8000, scoped, tag = 'scratch operand']
  #allocation4 [shape = 'f32[8,242]{1,0:T(8,128)}', space=vmem, size = 0x2000, scoped, tag = 'scratch operand']
  #allocation5 [shape = 'f32[8,72]{1,0:T(8,128)}', space=vmem, size = 0x1000, scoped, tag = 'scratch operand']
  #allocation6 [shape = 'f32[8,200]{1,0:T(8,128)}', space=vmem, size = 0x2000, scoped, tag = 'scratch operand']
  #allocation7 [shape = 'f32[16,512]{1,0:T(8,128)}', space=vmem, size = 0x8000, scoped, tag = 'scratch operand']
  #allocation8 [shape = 'f32[1,1568]{1,0:T(1,128)}', space=vmem, size = 0x1a00, scoped, tag = 'scratch operand']
  #allocation9 [shape = 'f32[1,8]{1,0:T(1,128)}', space=vmem, size = 0x200, scoped, tag = 'scratch operand']
  %s0 = inlined_call_operand.vmem [shape: f32[1,1,1800], index: 0, kind: input, shape index: {}]
  %s1 = inlined_call_operand.vmem [shape: f32[1,1,4], index: 1, kind: input, shape index: {}]
  %s2 = inlined_call_operand.vmem [shape: f32[16,9], index: 2, kind: input, shape index: {}]
  %s3 = inlined_call_operand.vmem [shape: bf16[8,144], index: 3, kind: input, shape index: {}]
  %s4 = inlined_call_operand.vmem [shape: bf16[8,72], index: 4, kind: input, shape index: {}]
  %s5 = inlined_call_operand.vmem [shape: bf16[8,72], index: 5, kind: input, shape index: {}]
  %s6 = inlined_call_operand.vmem [shape: bf16[16,72], index: 6, kind: input, shape index: {}]
  %s7 = inlined_call_operand.vmem [shape: bf16[32,144], index: 7, kind: input, shape index: {}]
  %s8 = inlined_call_operand.vmem [shape: bf16[1,32], index: 8, kind: input, shape index: {}]
  %s9 = inlined_call_operand.vmem [shape: f32[89,1], index: 9, kind: input, shape index: {}]
  %s10 = inlined_call_operand.vmem [shape: f32[4,8,16], index: 10, kind: input, shape index: {}]
  %s11 = inlined_call_operand.vmem [shape: f32[1,4], index: 11, kind: input, shape index: {}]
  %s12 = inlined_call_operand.vmem [shape: f32[2,8,36], index: 12, kind: input, shape index: {}]
  %s13 = inlined_call_operand.vmem [shape: f32[8,36], index: 13, kind: input, shape index: {}]
  %s14 = inlined_call_operand.vmem [shape: bf16[807,256], index: 14, kind: input, shape index: {}]
  %s15 = inlined_call_operand.vmem [shape: bf16[205,121], index: 15, kind: input, shape index: {}]
  %s16 = inlined_call_operand.vmem [shape: bf16[73,16], index: 16, kind: input, shape index: {}]
  %s17 = inlined_call_operand.vmem [shape: bf16[22,100], index: 17, kind: input, shape index: {}]
  %s18 = inlined_call_operand.vmem [shape: bf16[78,256], index: 18, kind: input, shape index: {}]
  %s19 = inlined_call_operand.vmem [shape: bf16[222,784], index: 19, kind: input, shape index: {}]
  %s20 = inlined_call_operand.vmem [shape: f32[1,1,1568], index: 20, kind: output, shape index: {0}]
  %s21 = inlined_call_operand.vmem [shape: f32[1,1,8], index: 21, kind: output, shape index: {1}]
  %22 = xla_tuple %s20, %s21
  %s23 = sld [smem:[#allocation0]]
  $region98: #{vae_forward.1} parent=0
    _
  %s25 = ssub.s32 1, %s23
  %s26 = scalar_select 0, %s25, %s23
  // Predicated region
  $region2: #{vae_forward.1} parent=0 // pred_check
    _
  $region3: #{vae_forward.1} parent=0 // pred_check_branch
    %28 = sbr.rel (0) target = $region5
  $region4: #{vae_forward.1} parent=0 // pred_region
    _
  $region5: #{vae_forward.1} parent=0 // pred_fallthru
    _
  // Predicated region
  $region6: #{vae_forward.1} parent=0 // pred_check
    _
  $region7: #{vae_forward.1} parent=0 // pred_check_branch
    %30 = sbr.rel (0) target = $region9
  $region8: #{vae_forward.1} parent=0 // pred_region
    _
  $region9: #{vae_forward.1} parent=0 // pred_fallthru
    _
  // Predicated region
  $region10: #{vae_forward.1} parent=0 // pred_check
    _
  $region11: #{vae_forward.1} parent=0 // pred_check_branch
    %32 = sbr.rel (0) target = $region13
  $region12: #{vae_forward.1} parent=0 // pred_region
    _
  $region13: #{vae_forward.1} parent=0 // pred_fallthru
    _
  // Predicated region
  $region14: #{vae_forward.1} parent=0 // pred_check
    _
  $region15: #{vae_forward.1} parent=0 // pred_check_branch
    %34 = sbr.rel (0) target = $region17
  $region16: #{vae_forward.1} parent=0 // pred_region
    _
  $region17: #{vae_forward.1} parent=0 // pred_fallthru
    _
  // Predicated region
  $region18: #{vae_forward.1} parent=0 // pred_check
    _
  $region19: #{vae_forward.1} parent=0 // pred_check_branch
    %36 = sbr.rel (0) target = $region21
  $region20: #{vae_forward.1} parent=0 // pred_region
    _
  $region21: #{vae_forward.1} parent=0 // pred_fallthru
    _
  // Predicated region
  $region22: #{vae_forward.1} parent=0 // pred_check
    _
  $region23: #{vae_forward.1} parent=0 // pred_check_branch
    %38 = sbr.rel (0) target = $region25
  $region24: #{vae_forward.1} parent=0 // pred_region
    _
  $region25: #{vae_forward.1} parent=0 // pred_fallthru
    _
  // Predicated region
  $region26: #{vae_forward.1} parent=0 // pred_check
    _
  $region27: #{vae_forward.1} parent=0 // pred_check_branch
    %40 = sbr.rel (0) target = $region29
  $region28: #{vae_forward.1} parent=0 // pred_region
    _
  $region29: #{vae_forward.1} parent=0 // pred_fallthru
    _
  // Predicated region
  $region30: #{vae_forward.1} parent=0 // pred_check
    _
  $region31: #{vae_forward.1} parent=0 // pred_check_branch
    %42 = sbr.rel (0) target = $region33
  $region32: #{vae_forward.1} parent=0 // pred_region
    _
  $region33: #{vae_forward.1} parent=0 // pred_fallthru
    _
  // Predicated region
  $region34: #{vae_forward.1} parent=0 // pred_check
    _
  $region35: #{vae_forward.1} parent=0 // pred_check_branch
    %44 = sbr.rel (0) target = $region37
  $region36: #{vae_forward.1} parent=0 // pred_region
    _
  $region37: #{vae_forward.1} parent=0 // pred_fallthru
    _
  // Predicated region
  $region38: #{vae_forward.1} parent=0 // pred_check
    _
  $region39: #{vae_forward.1} parent=0 // pred_check_branch
    %46 = sbr.rel (0) target = $region41
  $region40: #{vae_forward.1} parent=0 // pred_region
    _
  $region41: #{vae_forward.1} parent=0 // pred_fallthru
    _
  // Predicated region
  $region42: #{vae_forward.1} parent=0 // pred_check
    _
  $region43: #{vae_forward.1} parent=0 // pred_check_branch
    %48 = sbr.rel (0) target = $region45
  $region44: #{vae_forward.1} parent=0 // pred_region
    _
  $region45: #{vae_forward.1} parent=0 // pred_fallthru
    _
  // Predicated region
  $region46: #{vae_forward.1} parent=0 // pred_check
    _
  $region47: #{vae_forward.1} parent=0 // pred_check_branch
    %50 = sbr.rel (0) target = $region49
  $region48: #{vae_forward.1} parent=0 // pred_region
    _
  $region49: #{vae_forward.1} parent=0 // pred_fallthru
    _
  // Predicated region
  $region50: #{vae_forward.1} parent=0 // pred_check
    _
  $region51: #{vae_forward.1} parent=0 // pred_check_branch
    %52 = sbr.rel (0) target = $region53
  $region52: #{vae_forward.1} parent=0 // pred_region
    _
  $region53: #{vae_forward.1} parent=0 // pred_fallthru
    _
  // Predicated region
  $region54: #{vae_forward.1} parent=0 // pred_check
    _
  $region55: #{vae_forward.1} parent=0 // pred_check_branch
    %54 = sbr.rel (0) target = $region57
  $region56: #{vae_forward.1} parent=0 // pred_region
    _
  $region57: #{vae_forward.1} parent=0 // pred_fallthru
    _
  // Predicated region
  $region58: #{vae_forward.1} parent=0 // pred_check
    _
  $region59: #{vae_forward.1} parent=0 // pred_check_branch
    %56 = sbr.rel (0) target = $region61
  $region60: #{vae_forward.1} parent=0 // pred_region
    _
  $region61: #{vae_forward.1} parent=0 // pred_fallthru
    _
  // Predicated region
  $region62: #{vae_forward.1} parent=0 // pred_check
    _
  $region63: #{vae_forward.1} parent=0 // pred_check_branch
    %58 = sbr.rel (0) target = $region65
  $region64: #{vae_forward.1} parent=0 // pred_region
    _
  $region65: #{vae_forward.1} parent=0 // pred_fallthru
    _
  // Predicated region
  $region66: #{vae_forward.1} parent=0 // pred_check
    _
  $region67: #{vae_forward.1} parent=0 // pred_check_branch
    %60 = sbr.rel (0) target = $region69
  $region68: #{vae_forward.1} parent=0 // pred_region
    _
  $region69: #{vae_forward.1} parent=0 // pred_fallthru
    _
  // Predicated region
  $region70: #{vae_forward.1} parent=0 // pred_check
    _
  $region71: #{vae_forward.1} parent=0 // pred_check_branch
    %62 = sbr.rel (0) target = $region73
  $region72: #{vae_forward.1} parent=0 // pred_region
    _
  $region73: #{vae_forward.1} parent=0 // pred_fallthru
    _
  // Predicated region
  $region74: #{vae_forward.1} parent=0 // pred_check
    _
  $region75: #{vae_forward.1} parent=0 // pred_check_branch
    %64 = sbr.rel (0) target = $region77
  $region76: #{vae_forward.1} parent=0 // pred_region
    _
  $region77: #{vae_forward.1} parent=0 // pred_fallthru
    _
  // Predicated region
  $region78: #{vae_forward.1} parent=0 // pred_check
    _
  $region79: #{vae_forward.1} parent=0 // pred_check_branch
    %66 = sbr.rel (0) target = $region81
  $region80: #{vae_forward.1} parent=0 // pred_region
    _
  $region81: #{vae_forward.1} parent=0 // pred_fallthru
    _
  %v68 = vld [vmem:[%s0] sm:$0xff]
  %v69 = vld [vmem:[%s0 + $0x8] sm:$0x7f]
  %v70 = vld [vmem:[%s2] sm:$0xff]
  %v71 = vld [vmem:[%s2 + $0x8] sm:$0xff]
  %73 = vset.pattern.permute.xlu0 0
  %74 = vperm.xlu0 %73, %v70
  %v75 = vpop.permute.xlu0 %74
  %78 = vset.pattern.permute.xlu0 0
  %79 = vperm.xlu0 %78, %v71
  %v80 = vpop.permute.xlu0 %79
  %v84 = vlaneseq
  %v85 = vshrl.u32 %v84, 7
  %v86 = vsub.s32 0, %v85
  %v87 = vrot.slane %v68, %v86
  %v88 = vlaneseq
  %v89 = vshrl.u32 %v88, 7
  %v90 = vsub.s32 1, %v89
  %v91 = vrot.slane %v68, %v90
  %v92 = vlaneseq
  %v93 = vshrl.u32 %v92, 7
  %v94 = vsub.s32 2, %v93
  %v95 = vrot.slane %v68, %v94
  %v96 = vlaneseq
  %v97 = vshrl.u32 %v96, 7
  %v98 = vsub.s32 3, %v97
  %v99 = vrot.slane %v68, %v98
  %v100 = vlaneseq
  %v101 = vshrl.u32 %v100, 7
  %v102 = vsub.s32 4, %v101
  %v103 = vrot.slane %v68, %v102
  %v104 = vlaneseq
  %v105 = vshrl.u32 %v104, 7
  %v106 = vsub.s32 5, %v105
  %v107 = vrot.slane %v68, %v106
  %v108 = vlaneseq
  %v109 = vshrl.u32 %v108, 7
  %v110 = vsub.s32 6, %v109
  %v111 = vrot.slane %v68, %v110
  %v112 = vlaneseq
  %v113 = vshrl.u32 %v112, 7
  %v114 = vsub.s32 7, %v113
  %v115 = vrot.slane %v68, %v114
  %v116 = vlaneseq
  %v117 = vshrl.u32 %v116, 7
  %v118 = vsub.s32 0, %v117
  %v119 = vrot.slane %v69, %v118
  %v120 = vlaneseq
  %v121 = vshrl.u32 %v120, 7
  %v122 = vsub.s32 1, %v121
  %v123 = vrot.slane %v69, %v122
  %v124 = vlaneseq
  %v125 = vshrl.u32 %v124, 7
  %v126 = vsub.s32 2, %v125
  %v127 = vrot.slane %v69, %v126
  %v128 = vlaneseq
  %v129 = vshrl.u32 %v128, 7
  %v130 = vsub.s32 3, %v129
  %v131 = vrot.slane %v69, %v130
  %v132 = vlaneseq
  %v133 = vshrl.u32 %v132, 7
  %v134 = vsub.s32 4, %v133
  %v135 = vrot.slane %v69, %v134
  %v136 = vlaneseq
  %v137 = vshrl.u32 %v136, 7
  %v138 = vsub.s32 5, %v137
  %v139 = vrot.slane %v69, %v138
  %v154 = vmul.f32 %v75, %v87
  %v155 = vmul.f32 %v75, %v91
  %v156 = vmul.f32 %v75, %v95
  %v157 = vmul.f32 %v75, %v99
  %v158 = vmul.f32 %v75, %v103
  %v159 = vmul.f32 %v75, %v107
  %v160 = vmul.f32 %v75, %v111
  %v161 = vmul.f32 %v75, %v115
  %v162 = vmul.f32 %v75, %v119
  %v163 = vmul.f32 %v75, %v123
  %v164 = vmul.f32 %v75, %v127
  %v165 = vmul.f32 %v75, %v131
  %v166 = vmul.f32 %v75, %v135
  %v167 = vmul.f32 %v75, %v139
  %v168 = vmul.f32 %v80, %v87
  %v169 = vmul.f32 %v80, %v91
  %v170 = vmul.f32 %v80, %v95
  %v171 = vmul.f32 %v80, %v99
  %v172 = vmul.f32 %v80, %v103
  %v173 = vmul.f32 %v80, %v107
  %v174 = vmul.f32 %v80, %v111
  %v175 = vmul.f32 %v80, %v115
  %v176 = vmul.f32 %v80, %v119
  %v177 = vmul.f32 %v80, %v123
  %v178 = vmul.f32 %v80, %v127
  %v179 = vmul.f32 %v80, %v131
  %v180 = vmul.f32 %v80, %v135
  %v181 = vmul.f32 %v80, %v139
  %182 = vset.pattern.permute.xlu0 1
  %183 = vperm.xlu0 %182, %v70
  %v184 = vpop.permute.xlu0 %183
  %186 = vset.pattern.permute.xlu0 1
  %187 = vperm.xlu0 %186, %v71
  %v188 = vpop.permute.xlu0 %187
  %v190 = vmul.f32 %v184, %v87
  %v191 = vmul.f32 %v184, %v91
  %v192 = vmul.f32 %v184, %v95
  %v193 = vmul.f32 %v184, %v99
  %v194 = vmul.f32 %v184, %v103
  %v195 = vmul.f32 %v184, %v107
  %v196 = vmul.f32 %v184, %v111
  %v197 = vmul.f32 %v184, %v115
  %v198 = vmul.f32 %v184, %v119
  %v199 = vmul.f32 %v184, %v123
  %v200 = vmul.f32 %v184, %v127
  %v201 = vmul.f32 %v184, %v131
  %v202 = vmul.f32 %v184, %v135
  %v203 = vmul.f32 %v184, %v139
  %v204 = vmul.f32 %v188, %v87
  %v205 = vmul.f32 %v188, %v91
  %v206 = vmul.f32 %v188, %v95
  %v207 = vmul.f32 %v188, %v99
  %v208 = vmul.f32 %v188, %v103
  %v209 = vmul.f32 %v188, %v107
  %v210 = vmul.f32 %v188, %v111
  %v211 = vmul.f32 %v188, %v115
  %v212 = vmul.f32 %v188, %v119
  %v213 = vmul.f32 %v188, %v123
  %v214 = vmul.f32 %v188, %v127
  %v215 = vmul.f32 %v188, %v131
  %v216 = vmul.f32 %v188, %v135
  %v217 = vmul.f32 %v188, %v139
  %246 = vrot.lane.b32.xlu0 %v190, 127
  %v247 = vpop.permute.xlu0 %246
  %248 = vrot.lane.b32.xlu0 %v191, 127
  %v249 = vpop.permute.xlu0 %248
  %250 = vrot.lane.b32.xlu0 %v192, 127
  %v251 = vpop.permute.xlu0 %250
  %252 = vrot.lane.b32.xlu0 %v193, 127
  %v253 = vpop.permute.xlu0 %252
  %254 = vrot.lane.b32.xlu0 %v194, 127
  %v255 = vpop.permute.xlu0 %254
  %256 = vrot.lane.b32.xlu0 %v195, 127
  %v257 = vpop.permute.xlu0 %256
  %258 = vrot.lane.b32.xlu0 %v196, 127
  %v259 = vpop.permute.xlu0 %258
  %260 = vrot.lane.b32.xlu0 %v197, 127
  %v261 = vpop.permute.xlu0 %260
  %262 = vrot.lane.b32.xlu0 %v198, 127
  %v263 = vpop.permute.xlu0 %262
  %264 = vrot.lane.b32.xlu0 %v199, 127
  %v265 = vpop.permute.xlu0 %264
  %266 = vrot.lane.b32.xlu0 %v200, 127
  %v267 = vpop.permute.xlu0 %266
  %268 = vrot.lane.b32.xlu0 %v201, 127
  %v269 = vpop.permute.xlu0 %268
  %270 = vrot.lane.b32.xlu0 %v202, 127
  %v271 = vpop.permute.xlu0 %270
  %272 = vrot.lane.b32.xlu0 %v203, 127
  %v273 = vpop.permute.xlu0 %272
  %274 = vrot.lane.b32.xlu0 %v204, 127
  %v275 = vpop.permute.xlu0 %274
  %276 = vrot.lane.b32.xlu0 %v205, 127
  %v277 = vpop.permute.xlu0 %276
  %278 = vrot.lane.b32.xlu0 %v206, 127
  %v279 = vpop.permute.xlu0 %278
  %280 = vrot.lane.b32.xlu0 %v207, 127
  %v281 = vpop.permute.xlu0 %280
  %282 = vrot.lane.b32.xlu0 %v208, 127
  %v283 = vpop.permute.xlu0 %282
  %284 = vrot.lane.b32.xlu0 %v209, 127
  %v285 = vpop.permute.xlu0 %284
  %286 = vrot.lane.b32.xlu0 %v210, 127
  %v287 = vpop.permute.xlu0 %286
  %288 = vrot.lane.b32.xlu0 %v211, 127
  %v289 = vpop.permute.xlu0 %288
  %290 = vrot.lane.b32.xlu0 %v212, 127
  %v291 = vpop.permute.xlu0 %290
  %292 = vrot.lane.b32.xlu0 %v213, 127
  %v293 = vpop.permute.xlu0 %292
  %294 = vrot.lane.b32.xlu0 %v214, 127
  %v295 = vpop.permute.xlu0 %294
  %296 = vrot.lane.b32.xlu0 %v215, 127
  %v297 = vpop.permute.xlu0 %296
  %298 = vrot.lane.b32.xlu0 %v216, 127
  %v299 = vpop.permute.xlu0 %298
  %300 = vrot.lane.b32.xlu0 %v217, 127
  %v301 = vpop.permute.xlu0 %300
  %vm302 = vcmask 1039360
  %v303 = vsel %vm302, %v247, %v249
  %v304 = vsel %vm302, %v249, %v251
  %v305 = vsel %vm302, %v251, %v253
  %v306 = vsel %vm302, %v253, %v255
  %v307 = vsel %vm302, %v255, %v257
  %v308 = vsel %vm302, %v257, %v259
  %v309 = vsel %vm302, %v259, %v261
  %v310 = vsel %vm302, %v261, %v263
  %v311 = vsel %vm302, %v263, %v265
  %v312 = vsel %vm302, %v265, %v267
  %v313 = vsel %vm302, %v267, %v269
  %v314 = vsel %vm302, %v269, %v271
  %v315 = vsel %vm302, %v271, %v273
  %v316 = vsel %vm302, %v275, %v277
  %v317 = vsel %vm302, %v277, %v279
  %v318 = vsel %vm302, %v279, %v281
  %v319 = vsel %vm302, %v281, %v283
  %v320 = vsel %vm302, %v283, %v285
  %v321 = vsel %vm302, %v285, %v287
  %v322 = vsel %vm302, %v287, %v289
  %v323 = vsel %vm302, %v289, %v291
  %v324 = vsel %vm302, %v291, %v293
  %v325 = vsel %vm302, %v293, %v295
  %v326 = vsel %vm302, %v295, %v297
  %v327 = vsel %vm302, %v297, %v299
  %v328 = vsel %vm302, %v299, %v301
  %v357 = vadd.f32 %v154, %v303
  %v358 = vadd.f32 %v155, %v304
  %v359 = vadd.f32 %v156, %v305
  %v360 = vadd.f32 %v157, %v306
  %v361 = vadd.f32 %v158, %v307
  %v362 = vadd.f32 %v159, %v308
  %v363 = vadd.f32 %v160, %v309
  %v364 = vadd.f32 %v161, %v310
  %v365 = vadd.f32 %v162, %v311
  %v366 = vadd.f32 %v163, %v312
  %v367 = vadd.f32 %v164, %v313
  %v368 = vadd.f32 %v165, %v314
  %v369 = vadd.f32 %v166, %v315
  %v370 = vadd.f32 %v167, %v273
  %v371 = vadd.f32 %v168, %v316
  %v372 = vadd.f32 %v169, %v317
  %v373 = vadd.f32 %v170, %v318
  %v374 = vadd.f32 %v171, %v319
  %v375 = vadd.f32 %v172, %v320
  %v376 = vadd.f32 %v173, %v321
  %v377 = vadd.f32 %v174, %v322
  %v378 = vadd.f32 %v175, %v323
  %v379 = vadd.f32 %v176, %v324
  %v380 = vadd.f32 %v177, %v325
  %v381 = vadd.f32 %v178, %v326
  %v382 = vadd.f32 %v179, %v327
  %v383 = vadd.f32 %v180, %v328
  %v384 = vadd.f32 %v181, %v301
  %385 = vset.pattern.permute.xlu0 2
  %386 = vperm.xlu0 %385, %v70
  %v387 = vpop.permute.xlu0 %386
  %389 = vset.pattern.permute.xlu0 2
  %390 = vperm.xlu0 %389, %v71
  %v391 = vpop.permute.xlu0 %390
  %v393 = vmul.f32 %v387, %v87
  %v394 = vmul.f32 %v387, %v91
  %v395 = vmul.f32 %v387, %v95
  %v396 = vmul.f32 %v387, %v99
  %v397 = vmul.f32 %v387, %v103
  %v398 = vmul.f32 %v387, %v107
  %v399 = vmul.f32 %v387, %v111
  %v400 = vmul.f32 %v387, %v115
  %v401 = vmul.f32 %v387, %v119
  %v402 = vmul.f32 %v387, %v123
  %v403 = vmul.f32 %v387, %v127
  %v404 = vmul.f32 %v387, %v131
  %v405 = vmul.f32 %v387, %v135
  %v406 = vmul.f32 %v387, %v139
  %v407 = vmul.f32 %v391, %v87
  %v408 = vmul.f32 %v391, %v91
  %v409 = vmul.f32 %v391, %v95
  %v410 = vmul.f32 %v391, %v99
  %v411 = vmul.f32 %v391, %v103
  %v412 = vmul.f32 %v391, %v107
  %v413 = vmul.f32 %v391, %v111
  %v414 = vmul.f32 %v391, %v115
  %v415 = vmul.f32 %v391, %v119
  %v416 = vmul.f32 %v391, %v123
  %v417 = vmul.f32 %v391, %v127
  %v418 = vmul.f32 %v391, %v131
  %v419 = vmul.f32 %v391, %v135
  %v420 = vmul.f32 %v391, %v139
  %449 = vrot.lane.b32.xlu0 %v393, 126
  %v450 = vpop.permute.xlu0 %449
  %451 = vrot.lane.b32.xlu0 %v394, 126
  %v452 = vpop.permute.xlu0 %451
  %453 = vrot.lane.b32.xlu0 %v395, 126
  %v454 = vpop.permute.xlu0 %453
  %455 = vrot.lane.b32.xlu0 %v396, 126
  %v456 = vpop.permute.xlu0 %455
  %457 = vrot.lane.b32.xlu0 %v397, 126
  %v458 = vpop.permute.xlu0 %457
  %459 = vrot.lane.b32.xlu0 %v398, 126
  %v460 = vpop.permute.xlu0 %459
  %461 = vrot.lane.b32.xlu0 %v399, 126
  %v462 = vpop.permute.xlu0 %461
  %463 = vrot.lane.b32.xlu0 %v400, 126
  %v464 = vpop.permute.xlu0 %463
  %465 = vrot.lane.b32.xlu0 %v401, 126
  %v466 = vpop.permute.xlu0 %465
  %467 = vrot.lane.b32.xlu0 %v402, 126
  %v468 = vpop.permute.xlu0 %467
  %469 = vrot.lane.b32.xlu0 %v403, 126
  %v470 = vpop.permute.xlu0 %469
  %471 = vrot.lane.b32.xlu0 %v404, 126
  %v472 = vpop.permute.xlu0 %471
  %473 = vrot.lane.b32.xlu0 %v405, 126
  %v474 = vpop.permute.xlu0 %473
  %475 = vrot.lane.b32.xlu0 %v406, 126
  %v476 = vpop.permute.xlu0 %475
  %477 = vrot.lane.b32.xlu0 %v407, 126
  %v478 = vpop.permute.xlu0 %477
  %479 = vrot.lane.b32.xlu0 %v408, 126
  %v480 = vpop.permute.xlu0 %479
  %481 = vrot.lane.b32.xlu0 %v409, 126
  %v482 = vpop.permute.xlu0 %481
  %483 = vrot.lane.b32.xlu0 %v410, 126
  %v484 = vpop.permute.xlu0 %483
  %485 = vrot.lane.b32.xlu0 %v411, 126
  %v486 = vpop.permute.xlu0 %485
  %487 = vrot.lane.b32.xlu0 %v412, 126
  %v488 = vpop.permute.xlu0 %487
  %489 = vrot.lane.b32.xlu0 %v413, 126
  %v490 = vpop.permute.xlu0 %489
  %491 = vrot.lane.b32.xlu0 %v414, 126
  %v492 = vpop.permute.xlu0 %491
  %493 = vrot.lane.b32.xlu0 %v415, 126
  %v494 = vpop.permute.xlu0 %493
  %495 = vrot.lane.b32.xlu0 %v416, 126
  %v496 = vpop.permute.xlu0 %495
  %497 = vrot.lane.b32.xlu0 %v417, 126
  %v498 = vpop.permute.xlu0 %497
  %499 = vrot.lane.b32.xlu0 %v418, 126
  %v500 = vpop.permute.xlu0 %499
  %501 = vrot.lane.b32.xlu0 %v419, 126
  %v502 = vpop.permute.xlu0 %501
  %503 = vrot.lane.b32.xlu0 %v420, 126
  %v504 = vpop.permute.xlu0 %503
  %vm505 = vcmask 1031168
  %v506 = vsel %vm505, %v450, %v452
  %v507 = vsel %vm505, %v452, %v454
  %v508 = vsel %vm505, %v454, %v456
  %v509 = vsel %vm505, %v456, %v458
  %v510 = vsel %vm505, %v458, %v460
  %v511 = vsel %vm505, %v460, %v462
  %v512 = vsel %vm505, %v462, %v464
  %v513 = vsel %vm505, %v464, %v466
  %v514 = vsel %vm505, %v466, %v468
  %v515 = vsel %vm505, %v468, %v470
  %v516 = vsel %vm505, %v470, %v472
  %v517 = vsel %vm505, %v472, %v474
  %v518 = vsel %vm505, %v474, %v476
  %v519 = vsel %vm505, %v478, %v480
  %v520 = vsel %vm505, %v480, %v482
  %v521 = vsel %vm505, %v482, %v484
  %v522 = vsel %vm505, %v484, %v486
  %v523 = vsel %vm505, %v486, %v488
  %v524 = vsel %vm505, %v488, %v490
  %v525 = vsel %vm505, %v490, %v492
  %v526 = vsel %vm505, %v492, %v494
  %v527 = vsel %vm505, %v494, %v496
  %v528 = vsel %vm505, %v496, %v498
  %v529 = vsel %vm505, %v498, %v500
  %v530 = vsel %vm505, %v500, %v502
  %v531 = vsel %vm505, %v502, %v504
  %v560 = vadd.f32 %v357, %v506
  %v561 = vadd.f32 %v358, %v507
  %v562 = vadd.f32 %v359, %v508
  %v563 = vadd.f32 %v360, %v509
  %v564 = vadd.f32 %v361, %v510
  %v565 = vadd.f32 %v362, %v511
  %v566 = vadd.f32 %v363, %v512
  %v567 = vadd.f32 %v364, %v513
  %v568 = vadd.f32 %v365, %v514
  %v569 = vadd.f32 %v366, %v515
  %v570 = vadd.f32 %v367, %v516
  %v571 = vadd.f32 %v368, %v517
  %v572 = vadd.f32 %v369, %v518
  %v573 = vadd.f32 %v370, %v476
  %v574 = vadd.f32 %v371, %v519
  %v575 = vadd.f32 %v372, %v520
  %v576 = vadd.f32 %v373, %v521
  %v577 = vadd.f32 %v374, %v522
  %v578 = vadd.f32 %v375, %v523
  %v579 = vadd.f32 %v376, %v524
  %v580 = vadd.f32 %v377, %v525
  %v581 = vadd.f32 %v378, %v526
  %v582 = vadd.f32 %v379, %v527
  %v583 = vadd.f32 %v380, %v528
  %v584 = vadd.f32 %v381, %v529
  %v585 = vadd.f32 %v382, %v530
  %v586 = vadd.f32 %v383, %v531
  %v587 = vadd.f32 %v384, %v504
  %588 = vset.pattern.permute.xlu0 3
  %589 = vperm.xlu0 %588, %v70
  %v590 = vpop.permute.xlu0 %589
  %592 = vset.pattern.permute.xlu0 3
  %593 = vperm.xlu0 %592, %v71
  %v594 = vpop.permute.xlu0 %593
  %v596 = vmul.f32 %v590, %v87
  %v597 = vmul.f32 %v590, %v91
  %v598 = vmul.f32 %v590, %v95
  %v599 = vmul.f32 %v590, %v99
  %v600 = vmul.f32 %v590, %v103
  %v601 = vmul.f32 %v590, %v107
  %v602 = vmul.f32 %v590, %v111
  %v603 = vmul.f32 %v590, %v115
  %v604 = vmul.f32 %v590, %v119
  %v605 = vmul.f32 %v590, %v123
  %v606 = vmul.f32 %v590, %v127
  %v607 = vmul.f32 %v590, %v131
  %v608 = vmul.f32 %v590, %v135
  %v609 = vmul.f32 %v590, %v139
  %v610 = vmul.f32 %v594, %v87
  %v611 = vmul.f32 %v594, %v91
  %v612 = vmul.f32 %v594, %v95
  %v613 = vmul.f32 %v594, %v99
  %v614 = vmul.f32 %v594, %v103
  %v615 = vmul.f32 %v594, %v107
  %v616 = vmul.f32 %v594, %v111
  %v617 = vmul.f32 %v594, %v115
  %v618 = vmul.f32 %v594, %v119
  %v619 = vmul.f32 %v594, %v123
  %v620 = vmul.f32 %v594, %v127
  %v621 = vmul.f32 %v594, %v131
  %v622 = vmul.f32 %v594, %v135
  %v623 = vmul.f32 %v594, %v139
  %652 = vrot.lane.b32.xlu0 %v596, 98
  %v653 = vpop.permute.xlu0 %652
  %654 = vrot.lane.b32.xlu0 %v597, 98
  %v655 = vpop.permute.xlu0 %654
  %656 = vrot.lane.b32.xlu0 %v598, 98
  %v657 = vpop.permute.xlu0 %656
  %658 = vrot.lane.b32.xlu0 %v599, 98
  %v659 = vpop.permute.xlu0 %658
  %660 = vrot.lane.b32.xlu0 %v600, 98
  %v661 = vpop.permute.xlu0 %660
  %662 = vrot.lane.b32.xlu0 %v601, 98
  %v663 = vpop.permute.xlu0 %662
  %664 = vrot.lane.b32.xlu0 %v602, 98
  %v665 = vpop.permute.xlu0 %664
  %666 = vrot.lane.b32.xlu0 %v603, 98
  %v667 = vpop.permute.xlu0 %666
  %668 = vrot.lane.b32.xlu0 %v604, 98
  %v669 = vpop.permute.xlu0 %668
  %670 = vrot.lane.b32.xlu0 %v605, 98
  %v671 = vpop.permute.xlu0 %670
  %672 = vrot.lane.b32.xlu0 %v606, 98
  %v673 = vpop.permute.xlu0 %672
  %674 = vrot.lane.b32.xlu0 %v607, 98
  %v675 = vpop.permute.xlu0 %674
  %676 = vrot.lane.b32.xlu0 %v608, 98
  %v677 = vpop.permute.xlu0 %676
  %678 = vrot.lane.b32.xlu0 %v609, 98
  %v679 = vpop.permute.xlu0 %678
  %680 = vrot.lane.b32.xlu0 %v610, 98
  %v681 = vpop.permute.xlu0 %680
  %682 = vrot.lane.b32.xlu0 %v611, 98
  %v683 = vpop.permute.xlu0 %682
  %684 = vrot.lane.b32.xlu0 %v612, 98
  %v685 = vpop.permute.xlu0 %684
  %686 = vrot.lane.b32.xlu0 %v613, 98
  %v687 = vpop.permute.xlu0 %686
  %688 = vrot.lane.b32.xlu0 %v614, 98
  %v689 = vpop.permute.xlu0 %688
  %690 = vrot.lane.b32.xlu0 %v615, 98
  %v691 = vpop.permute.xlu0 %690
  %692 = vrot.lane.b32.xlu0 %v616, 98
  %v693 = vpop.permute.xlu0 %692
  %694 = vrot.lane.b32.xlu0 %v617, 98
  %v695 = vpop.permute.xlu0 %694
  %696 = vrot.lane.b32.xlu0 %v618, 98
  %v697 = vpop.permute.xlu0 %696
  %698 = vrot.lane.b32.xlu0 %v619, 98
  %v699 = vpop.permute.xlu0 %698
  %700 = vrot.lane.b32.xlu0 %v620, 98
  %v701 = vpop.permute.xlu0 %700
  %702 = vrot.lane.b32.xlu0 %v621, 98
  %v703 = vpop.permute.xlu0 %702
  %704 = vrot.lane.b32.xlu0 %v622, 98
  %v705 = vpop.permute.xlu0 %704
  %706 = vrot.lane.b32.xlu0 %v623, 98
  %v707 = vpop.permute.xlu0 %706
  %vm708 = vcmask 801792
  %v709 = vsel %vm708, %v653, %v655
  %v710 = vsel %vm708, %v655, %v657
  %v711 = vsel %vm708, %v657, %v659
  %v712 = vsel %vm708, %v659, %v661
  %v713 = vsel %vm708, %v661, %v663
  %v714 = vsel %vm708, %v663, %v665
  %v715 = vsel %vm708, %v665, %v667
  %v716 = vsel %vm708, %v667, %v669
  %v717 = vsel %vm708, %v669, %v671
  %v718 = vsel %vm708, %v671, %v673
  %v719 = vsel %vm708, %v673, %v675
  %v720 = vsel %vm708, %v675, %v677
  %v721 = vsel %vm708, %v677, %v679
  %v722 = vsel %vm708, %v681, %v683
  %v723 = vsel %vm708, %v683, %v685
  %v724 = vsel %vm708, %v685, %v687
  %v725 = vsel %vm708, %v687, %v689
  %v726 = vsel %vm708, %v689, %v691
  %v727 = vsel %vm708, %v691, %v693
  %v728 = vsel %vm708, %v693, %v695
  %v729 = vsel %vm708, %v695, %v697
  %v730 = vsel %vm708, %v697, %v699
  %v731 = vsel %vm708, %v699, %v701
  %v732 = vsel %vm708, %v701, %v703
  %v733 = vsel %vm708, %v703, %v705
  %v734 = vsel %vm708, %v705, %v707
  %v763 = vadd.f32 %v560, %v709
  %v764 = vadd.f32 %v561, %v710
  %v765 = vadd.f32 %v562, %v711
  %v766 = vadd.f32 %v563, %v712
  %v767 = vadd.f32 %v564, %v713
  %v768 = vadd.f32 %v565, %v714
  %v769 = vadd.f32 %v566, %v715
  %v770 = vadd.f32 %v567, %v716
  %v771 = vadd.f32 %v568, %v717
  %v772 = vadd.f32 %v569, %v718
  %v773 = vadd.f32 %v570, %v719
  %v774 = vadd.f32 %v571, %v720
  %v775 = vadd.f32 %v572, %v721
  %v776 = vadd.f32 %v573, %v679
  %v777 = vadd.f32 %v574, %v722
  %v778 = vadd.f32 %v575, %v723
  %v779 = vadd.f32 %v576, %v724
  %v780 = vadd.f32 %v577, %v725
  %v781 = vadd.f32 %v578, %v726
  %v782 = vadd.f32 %v579, %v727
  %v783 = vadd.f32 %v580, %v728
  %v784 = vadd.f32 %v581, %v729
  %v785 = vadd.f32 %v582, %v730
  %v786 = vadd.f32 %v583, %v731
  %v787 = vadd.f32 %v584, %v732
  %v788 = vadd.f32 %v585, %v733
  %v789 = vadd.f32 %v586, %v734
  %v790 = vadd.f32 %v587, %v707
  %791 = vset.pattern.permute.xlu0 4
  %792 = vperm.xlu0 %791, %v70
  %v793 = vpop.permute.xlu0 %792
  %795 = vset.pattern.permute.xlu0 4
  %796 = vperm.xlu0 %795, %v71
  %v797 = vpop.permute.xlu0 %796
  %v799 = vmul.f32 %v793, %v87
  %v800 = vmul.f32 %v793, %v91
  %v801 = vmul.f32 %v793, %v95
  %v802 = vmul.f32 %v793, %v99
  %v803 = vmul.f32 %v793, %v103
  %v804 = vmul.f32 %v793, %v107
  %v805 = vmul.f32 %v793, %v111
  %v806 = vmul.f32 %v793, %v115
  %v807 = vmul.f32 %v793, %v119
  %v808 = vmul.f32 %v793, %v123
  %v809 = vmul.f32 %v793, %v127
  %v810 = vmul.f32 %v793, %v131
  %v811 = vmul.f32 %v793, %v135
  %v812 = vmul.f32 %v793, %v139
  %v813 = vmul.f32 %v797, %v87
  %v814 = vmul.f32 %v797, %v91
  %v815 = vmul.f32 %v797, %v95
  %v816 = vmul.f32 %v797, %v99
  %v817 = vmul.f32 %v797, %v103
  %v818 = vmul.f32 %v797, %v107
  %v819 = vmul.f32 %v797, %v111
  %v820 = vmul.f32 %v797, %v115
  %v821 = vmul.f32 %v797, %v119
  %v822 = vmul.f32 %v797, %v123
  %v823 = vmul.f32 %v797, %v127
  %v824 = vmul.f32 %v797, %v131
  %v825 = vmul.f32 %v797, %v135
  %v826 = vmul.f32 %v797, %v139
  %855 = vrot.lane.b32.xlu0 %v799, 97
  %v856 = vpop.permute.xlu0 %855
  %857 = vrot.lane.b32.xlu0 %v800, 97
  %v858 = vpop.permute.xlu0 %857
  %859 = vrot.lane.b32.xlu0 %v801, 97
  %v860 = vpop.permute.xlu0 %859
  %861 = vrot.lane.b32.xlu0 %v802, 97
  %v862 = vpop.permute.xlu0 %861
  %863 = vrot.lane.b32.xlu0 %v803, 97
  %v864 = vpop.permute.xlu0 %863
  %865 = vrot.lane.b32.xlu0 %v804, 97
  %v866 = vpop.permute.xlu0 %865
  %867 = vrot.lane.b32.xlu0 %v805, 97
  %v868 = vpop.permute.xlu0 %867
  %869 = vrot.lane.b32.xlu0 %v806, 97
  %v870 = vpop.permute.xlu0 %869
  %871 = vrot.lane.b32.xlu0 %v807, 97
  %v872 = vpop.permute.xlu0 %871
  %873 = vrot.lane.b32.xlu0 %v808, 97
  %v874 = vpop.permute.xlu0 %873
  %875 = vrot.lane.b32.xlu0 %v809, 97
  %v876 = vpop.permute.xlu0 %875
  %877 = vrot.lane.b32.xlu0 %v810, 97
  %v878 = vpop.permute.xlu0 %877
  %879 = vrot.lane.b32.xlu0 %v811, 97
  %v880 = vpop.permute.xlu0 %879
  %881 = vrot.lane.b32.xlu0 %v812, 97
  %v882 = vpop.permute.xlu0 %881
  %883 = vrot.lane.b32.xlu0 %v813, 97
  %v884 = vpop.permute.xlu0 %883
  %885 = vrot.lane.b32.xlu0 %v814, 97
  %v886 = vpop.permute.xlu0 %885
  %887 = vrot.lane.b32.xlu0 %v815, 97
  %v888 = vpop.permute.xlu0 %887
  %889 = vrot.lane.b32.xlu0 %v816, 97
  %v890 = vpop.permute.xlu0 %889
  %891 = vrot.lane.b32.xlu0 %v817, 97
  %v892 = vpop.permute.xlu0 %891
  %893 = vrot.lane.b32.xlu0 %v818, 97
  %v894 = vpop.permute.xlu0 %893
  %895 = vrot.lane.b32.xlu0 %v819, 97
  %v896 = vpop.permute.xlu0 %895
  %897 = vrot.lane.b32.xlu0 %v820, 97
  %v898 = vpop.permute.xlu0 %897
  %899 = vrot.lane.b32.xlu0 %v821, 97
  %v900 = vpop.permute.xlu0 %899
  %901 = vrot.lane.b32.xlu0 %v822, 97
  %v902 = vpop.permute.xlu0 %901
  %903 = vrot.lane.b32.xlu0 %v823, 97
  %v904 = vpop.permute.xlu0 %903
  %905 = vrot.lane.b32.xlu0 %v824, 97
  %v906 = vpop.permute.xlu0 %905
  %907 = vrot.lane.b32.xlu0 %v825, 97
  %v908 = vpop.permute.xlu0 %907
  %909 = vrot.lane.b32.xlu0 %v826, 97
  %v910 = vpop.permute.xlu0 %909
  %vm911 = vcmask 793600
  %v912 = vsel %vm911, %v856, %v858
  %v913 = vsel %vm911, %v858, %v860
  %v914 = vsel %vm911, %v860, %v862
  %v915 = vsel %vm911, %v862, %v864
  %v916 = vsel %vm911, %v864, %v866
  %v917 = vsel %vm911, %v866, %v868
  %v918 = vsel %vm911, %v868, %v870
  %v919 = vsel %vm911, %v870, %v872
  %v920 = vsel %vm911, %v872, %v874
  %v921 = vsel %vm911, %v874, %v876
  %v922 = vsel %vm911, %v876, %v878
  %v923 = vsel %vm911, %v878, %v880
  %v924 = vsel %vm911, %v880, %v882
  %v925 = vsel %vm911, %v884, %v886
  %v926 = vsel %vm911, %v886, %v888
  %v927 = vsel %vm911, %v888, %v890
  %v928 = vsel %vm911, %v890, %v892
  %v929 = vsel %vm911, %v892, %v894
  %v930 = vsel %vm911, %v894, %v896
  %v931 = vsel %vm911, %v896, %v898
  %v932 = vsel %vm911, %v898, %v900
  %v933 = vsel %vm911, %v900, %v902
  %v934 = vsel %vm911, %v902, %v904
  %v935 = vsel %vm911, %v904, %v906
  %v936 = vsel %vm911, %v906, %v908
  %v937 = vsel %vm911, %v908, %v910
  %v966 = vadd.f32 %v763, %v912
  %v967 = vadd.f32 %v764, %v913
  %v968 = vadd.f32 %v765, %v914
  %v969 = vadd.f32 %v766, %v915
  %v970 = vadd.f32 %v767, %v916
  %v971 = vadd.f32 %v768, %v917
  %v972 = vadd.f32 %v769, %v918
  %v973 = vadd.f32 %v770, %v919
  %v974 = vadd.f32 %v771, %v920
  %v975 = vadd.f32 %v772, %v921
  %v976 = vadd.f32 %v773, %v922
  %v977 = vadd.f32 %v774, %v923
  %v978 = vadd.f32 %v775, %v924
  %v979 = vadd.f32 %v776, %v882
  %v980 = vadd.f32 %v777, %v925
  %v981 = vadd.f32 %v778, %v926
  %v982 = vadd.f32 %v779, %v927
  %v983 = vadd.f32 %v780, %v928
  %v984 = vadd.f32 %v781, %v929
  %v985 = vadd.f32 %v782, %v930
  %v986 = vadd.f32 %v783, %v931
  %v987 = vadd.f32 %v784, %v932
  %v988 = vadd.f32 %v785, %v933
  %v989 = vadd.f32 %v786, %v934
  %v990 = vadd.f32 %v787, %v935
  %v991 = vadd.f32 %v788, %v936
  %v992 = vadd.f32 %v789, %v937
  %v993 = vadd.f32 %v790, %v910
  %994 = vset.pattern.permute.xlu0 5
  %995 = vperm.xlu0 %994, %v70
  %v996 = vpop.permute.xlu0 %995
  %998 = vset.pattern.permute.xlu0 5
  %999 = vperm.xlu0 %998, %v71
  %v1000 = vpop.permute.xlu0 %999
  %v1002 = vmul.f32 %v996, %v87
  %v1003 = vmul.f32 %v996, %v91
  %v1004 = vmul.f32 %v996, %v95
  %v1005 = vmul.f32 %v996, %v99
  %v1006 = vmul.f32 %v996, %v103
  %v1007 = vmul.f32 %v996, %v107
  %v1008 = vmul.f32 %v996, %v111
  %v1009 = vmul.f32 %v996, %v115
  %v1010 = vmul.f32 %v996, %v119
  %v1011 = vmul.f32 %v996, %v123
  %v1012 = vmul.f32 %v996, %v127
  %v1013 = vmul.f32 %v996, %v131
  %v1014 = vmul.f32 %v996, %v135
  %v1015 = vmul.f32 %v996, %v139
  %v1016 = vmul.f32 %v1000, %v87
  %v1017 = vmul.f32 %v1000, %v91
  %v1018 = vmul.f32 %v1000, %v95
  %v1019 = vmul.f32 %v1000, %v99
  %v1020 = vmul.f32 %v1000, %v103
  %v1021 = vmul.f32 %v1000, %v107
  %v1022 = vmul.f32 %v1000, %v111
  %v1023 = vmul.f32 %v1000, %v115
  %v1024 = vmul.f32 %v1000, %v119
  %v1025 = vmul.f32 %v1000, %v123
  %v1026 = vmul.f32 %v1000, %v127
  %v1027 = vmul.f32 %v1000, %v131
  %v1028 = vmul.f32 %v1000, %v135
  %v1029 = vmul.f32 %v1000, %v139
  %1058 = vrot.lane.b32.xlu0 %v1002, 96
  %v1059 = vpop.permute.xlu0 %1058
  %1060 = vrot.lane.b32.xlu0 %v1003, 96
  %v1061 = vpop.permute.xlu0 %1060
  %1062 = vrot.lane.b32.xlu0 %v1004, 96
  %v1063 = vpop.permute.xlu0 %1062
  %1064 = vrot.lane.b32.xlu0 %v1005, 96
  %v1065 = vpop.permute.xlu0 %1064
  %1066 = vrot.lane.b32.xlu0 %v1006, 96
  %v1067 = vpop.permute.xlu0 %1066
  %1068 = vrot.lane.b32.xlu0 %v1007, 96
  %v1069 = vpop.permute.xlu0 %1068
  %1070 = vrot.lane.b32.xlu0 %v1008, 96
  %v1071 = vpop.permute.xlu0 %1070
  %1072 = vrot.lane.b32.xlu0 %v1009, 96
  %v1073 = vpop.permute.xlu0 %1072
  %1074 = vrot.lane.b32.xlu0 %v1010, 96
  %v1075 = vpop.permute.xlu0 %1074
  %1076 = vrot.lane.b32.xlu0 %v1011, 96
  %v1077 = vpop.permute.xlu0 %1076
  %1078 = vrot.lane.b32.xlu0 %v1012, 96
  %v1079 = vpop.permute.xlu0 %1078
  %1080 = vrot.lane.b32.xlu0 %v1013, 96
  %v1081 = vpop.permute.xlu0 %1080
  %1082 = vrot.lane.b32.xlu0 %v1014, 96
  %v1083 = vpop.permute.xlu0 %1082
  %1084 = vrot.lane.b32.xlu0 %v1015, 96
  %v1085 = vpop.permute.xlu0 %1084
  %1086 = vrot.lane.b32.xlu0 %v1016, 96
  %v1087 = vpop.permute.xlu0 %1086
  %1088 = vrot.lane.b32.xlu0 %v1017, 96
  %v1089 = vpop.permute.xlu0 %1088
  %1090 = vrot.lane.b32.xlu0 %v1018, 96
  %v1091 = vpop.permute.xlu0 %1090
  %1092 = vrot.lane.b32.xlu0 %v1019, 96
  %v1093 = vpop.permute.xlu0 %1092
  %1094 = vrot.lane.b32.xlu0 %v1020, 96
  %v1095 = vpop.permute.xlu0 %1094
  %1096 = vrot.lane.b32.xlu0 %v1021, 96
  %v1097 = vpop.permute.xlu0 %1096
  %1098 = vrot.lane.b32.xlu0 %v1022, 96
  %v1099 = vpop.permute.xlu0 %1098
  %1100 = vrot.lane.b32.xlu0 %v1023, 96
  %v1101 = vpop.permute.xlu0 %1100
  %1102 = vrot.lane.b32.xlu0 %v1024, 96
  %v1103 = vpop.permute.xlu0 %1102
  %1104 = vrot.lane.b32.xlu0 %v1025, 96
  %v1105 = vpop.permute.xlu0 %1104
  %1106 = vrot.lane.b32.xlu0 %v1026, 96
  %v1107 = vpop.permute.xlu0 %1106
  %1108 = vrot.lane.b32.xlu0 %v1027, 96
  %v1109 = vpop.permute.xlu0 %1108
  %1110 = vrot.lane.b32.xlu0 %v1028, 96
  %v1111 = vpop.permute.xlu0 %1110
  %1112 = vrot.lane.b32.xlu0 %v1029, 96
  %v1113 = vpop.permute.xlu0 %1112
  %vm1114 = vcmask 785408
  %v1115 = vsel %vm1114, %v1059, %v1061
  %v1116 = vsel %vm1114, %v1061, %v1063
  %v1117 = vsel %vm1114, %v1063, %v1065
  %v1118 = vsel %vm1114, %v1065, %v1067
  %v1119 = vsel %vm1114, %v1067, %v1069
  %v1120 = vsel %vm1114, %v1069, %v1071
  %v1121 = vsel %vm1114, %v1071, %v1073
  %v1122 = vsel %vm1114, %v1073, %v1075
  %v1123 = vsel %vm1114, %v1075, %v1077
  %v1124 = vsel %vm1114, %v1077, %v1079
  %v1125 = vsel %vm1114, %v1079, %v1081
  %v1126 = vsel %vm1114, %v1081, %v1083
  %v1127 = vsel %vm1114, %v1083, %v1085
  %v1128 = vsel %vm1114, %v1087, %v1089
  %v1129 = vsel %vm1114, %v1089, %v1091
  %v1130 = vsel %vm1114, %v1091, %v1093
  %v1131 = vsel %vm1114, %v1093, %v1095
  %v1132 = vsel %vm1114, %v1095, %v1097
  %v1133 = vsel %vm1114, %v1097, %v1099
  %v1134 = vsel %vm1114, %v1099, %v1101
  %v1135 = vsel %vm1114, %v1101, %v1103
  %v1136 = vsel %vm1114, %v1103, %v1105
  %v1137 = vsel %vm1114, %v1105, %v1107
  %v1138 = vsel %vm1114, %v1107, %v1109
  %v1139 = vsel %vm1114, %v1109, %v1111
  %v1140 = vsel %vm1114, %v1111, %v1113
  %v1169 = vadd.f32 %v966, %v1115
  %v1170 = vadd.f32 %v967, %v1116
  %v1171 = vadd.f32 %v968, %v1117
  %v1172 = vadd.f32 %v969, %v1118
  %v1173 = vadd.f32 %v970, %v1119
  %v1174 = vadd.f32 %v971, %v1120
  %v1175 = vadd.f32 %v972, %v1121
  %v1176 = vadd.f32 %v973, %v1122
  %v1177 = vadd.f32 %v974, %v1123
  %v1178 = vadd.f32 %v975, %v1124
  %v1179 = vadd.f32 %v976, %v1125
  %v1180 = vadd.f32 %v977, %v1126
  %v1181 = vadd.f32 %v978, %v1127
  %v1182 = vadd.f32 %v979, %v1085
  %v1183 = vadd.f32 %v980, %v1128
  %v1184 = vadd.f32 %v981, %v1129
  %v1185 = vadd.f32 %v982, %v1130
  %v1186 = vadd.f32 %v983, %v1131
  %v1187 = vadd.f32 %v984, %v1132
  %v1188 = vadd.f32 %v985, %v1133
  %v1189 = vadd.f32 %v986, %v1134
  %v1190 = vadd.f32 %v987, %v1135
  %v1191 = vadd.f32 %v988, %v1136
  %v1192 = vadd.f32 %v989, %v1137
  %v1193 = vadd.f32 %v990, %v1138
  %v1194 = vadd.f32 %v991, %v1139
  %v1195 = vadd.f32 %v992, %v1140
  %v1196 = vadd.f32 %v993, %v1113
  %1197 = vset.pattern.permute.xlu0 6
  %1198 = vperm.xlu0 %1197, %v70
  %v1199 = vpop.permute.xlu0 %1198
  %1201 = vset.pattern.permute.xlu0 6
  %1202 = vperm.xlu0 %1201, %v71
  %v1203 = vpop.permute.xlu0 %1202
  %v1205 = vlaneseq
  %v1206 = vshrl.u32 %v1205, 7
  %v1207 = vsub.s32 6, %v1206
  %v1208 = vrot.slane %v69, %v1207
  %v1210 = vmul.f32 %v1199, %v87
  %v1211 = vmul.f32 %v1199, %v91
  %v1212 = vmul.f32 %v1199, %v95
  %v1213 = vmul.f32 %v1199, %v99
  %v1214 = vmul.f32 %v1199, %v103
  %v1215 = vmul.f32 %v1199, %v107
  %v1216 = vmul.f32 %v1199, %v111
  %v1217 = vmul.f32 %v1199, %v115
  %v1218 = vmul.f32 %v1199, %v119
  %v1219 = vmul.f32 %v1199, %v123
  %v1220 = vmul.f32 %v1199, %v127
  %v1221 = vmul.f32 %v1199, %v131
  %v1222 = vmul.f32 %v1199, %v135
  %v1223 = vmul.f32 %v1199, %v139
  %v1224 = vmul.f32 %v1199, %v1208
  %v1225 = vmul.f32 %v1203, %v87
  %v1226 = vmul.f32 %v1203, %v91
  %v1227 = vmul.f32 %v1203, %v95
  %v1228 = vmul.f32 %v1203, %v99
  %v1229 = vmul.f32 %v1203, %v103
  %v1230 = vmul.f32 %v1203, %v107
  %v1231 = vmul.f32 %v1203, %v111
  %v1232 = vmul.f32 %v1203, %v115
  %v1233 = vmul.f32 %v1203, %v119
  %v1234 = vmul.f32 %v1203, %v123
  %v1235 = vmul.f32 %v1203, %v127
  %v1236 = vmul.f32 %v1203, %v131
  %v1237 = vmul.f32 %v1203, %v135
  %v1238 = vmul.f32 %v1203, %v139
  %v1239 = vmul.f32 %v1203, %v1208
  %1270 = vrot.lane.b32.xlu0 %v1210, 68
  %v1271 = vpop.permute.xlu0 %1270
  %1272 = vrot.lane.b32.xlu0 %v1211, 68
  %v1273 = vpop.permute.xlu0 %1272
  %1274 = vrot.lane.b32.xlu0 %v1212, 68
  %v1275 = vpop.permute.xlu0 %1274
  %1276 = vrot.lane.b32.xlu0 %v1213, 68
  %v1277 = vpop.permute.xlu0 %1276
  %1278 = vrot.lane.b32.xlu0 %v1214, 68
  %v1279 = vpop.permute.xlu0 %1278
  %1280 = vrot.lane.b32.xlu0 %v1215, 68
  %v1281 = vpop.permute.xlu0 %1280
  %1282 = vrot.lane.b32.xlu0 %v1216, 68
  %v1283 = vpop.permute.xlu0 %1282
  %1284 = vrot.lane.b32.xlu0 %v1217, 68
  %v1285 = vpop.permute.xlu0 %1284
  %1286 = vrot.lane.b32.xlu0 %v1218, 68
  %v1287 = vpop.permute.xlu0 %1286
  %1288 = vrot.lane.b32.xlu0 %v1219, 68
  %v1289 = vpop.permute.xlu0 %1288
  %1290 = vrot.lane.b32.xlu0 %v1220, 68
  %v1291 = vpop.permute.xlu0 %1290
  %1292 = vrot.lane.b32.xlu0 %v1221, 68
  %v1293 = vpop.permute.xlu0 %1292
  %1294 = vrot.lane.b32.xlu0 %v1222, 68
  %v1295 = vpop.permute.xlu0 %1294
  %1296 = vrot.lane.b32.xlu0 %v1223, 68
  %v1297 = vpop.permute.xlu0 %1296
  %1298 = vrot.lane.b32.xlu0 %v1224, 68
  %v1299 = vpop.permute.xlu0 %1298
  %1300 = vrot.lane.b32.xlu0 %v1225, 68
  %v1301 = vpop.permute.xlu0 %1300
  %1302 = vrot.lane.b32.xlu0 %v1226, 68
  %v1303 = vpop.permute.xlu0 %1302
  %1304 = vrot.lane.b32.xlu0 %v1227, 68
  %v1305 = vpop.permute.xlu0 %1304
  %1306 = vrot.lane.b32.xlu0 %v1228, 68
  %v1307 = vpop.permute.xlu0 %1306
  %1308 = vrot.lane.b32.xlu0 %v1229, 68
  %v1309 = vpop.permute.xlu0 %1308
  %1310 = vrot.lane.b32.xlu0 %v1230, 68
  %v1311 = vpop.permute.xlu0 %1310
  %1312 = vrot.lane.b32.xlu0 %v1231, 68
  %v1313 = vpop.permute.xlu0 %1312
  %1314 = vrot.lane.b32.xlu0 %v1232, 68
  %v1315 = vpop.permute.xlu0 %1314
  %1316 = vrot.lane.b32.xlu0 %v1233, 68
  %v1317 = vpop.permute.xlu0 %1316
  %1318 = vrot.lane.b32.xlu0 %v1234, 68
  %v1319 = vpop.permute.xlu0 %1318
  %1320 = vrot.lane.b32.xlu0 %v1235, 68
  %v1321 = vpop.permute.xlu0 %1320
  %1322 = vrot.lane.b32.xlu0 %v1236, 68
  %v1323 = vpop.permute.xlu0 %1322
  %1324 = vrot.lane.b32.xlu0 %v1237, 68
  %v1325 = vpop.permute.xlu0 %1324
  %1326 = vrot.lane.b32.xlu0 %v1238, 68
  %v1327 = vpop.permute.xlu0 %1326
  %1328 = vrot.lane.b32.xlu0 %v1239, 68
  %v1329 = vpop.permute.xlu0 %1328
  %vm1330 = vcmask 556032
  %v1331 = vsel %vm1330, %v1271, %v1273
  %v1332 = vsel %vm1330, %v1273, %v1275
  %v1333 = vsel %vm1330, %v1275, %v1277
  %v1334 = vsel %vm1330, %v1277, %v1279
  %v1335 = vsel %vm1330, %v1279, %v1281
  %v1336 = vsel %vm1330, %v1281, %v1283
  %v1337 = vsel %vm1330, %v1283, %v1285
  %v1338 = vsel %vm1330, %v1285, %v1287
  %v1339 = vsel %vm1330, %v1287, %v1289
  %v1340 = vsel %vm1330, %v1289, %v1291
  %v1341 = vsel %vm1330, %v1291, %v1293
  %v1342 = vsel %vm1330, %v1293, %v1295
  %v1343 = vsel %vm1330, %v1295, %v1297
  %v1344 = vsel %vm1330, %v1297, %v1299
  %v1345 = vsel %vm1330, %v1301, %v1303
  %v1346 = vsel %vm1330, %v1303, %v1305
  %v1347 = vsel %vm1330, %v1305, %v1307
  %v1348 = vsel %vm1330, %v1307, %v1309
  %v1349 = vsel %vm1330, %v1309, %v1311
  %v1350 = vsel %vm1330, %v1311, %v1313
  %v1351 = vsel %vm1330, %v1313, %v1315
  %v1352 = vsel %vm1330, %v1315, %v1317
  %v1353 = vsel %vm1330, %v1317, %v1319
  %v1354 = vsel %vm1330, %v1319, %v1321
  %v1355 = vsel %vm1330, %v1321, %v1323
  %v1356 = vsel %vm1330, %v1323, %v1325
  %v1357 = vsel %vm1330, %v1325, %v1327
  %v1358 = vsel %vm1330, %v1327, %v1329
  %v1387 = vadd.f32 %v1169, %v1331
  %v1388 = vadd.f32 %v1170, %v1332
  %v1389 = vadd.f32 %v1171, %v1333
  %v1390 = vadd.f32 %v1172, %v1334
  %v1391 = vadd.f32 %v1173, %v1335
  %v1392 = vadd.f32 %v1174, %v1336
  %v1393 = vadd.f32 %v1175, %v1337
  %v1394 = vadd.f32 %v1176, %v1338
  %v1395 = vadd.f32 %v1177, %v1339
  %v1396 = vadd.f32 %v1178, %v1340
  %v1397 = vadd.f32 %v1179, %v1341
  %v1398 = vadd.f32 %v1180, %v1342
  %v1399 = vadd.f32 %v1181, %v1343
  %v1400 = vadd.f32 %v1182, %v1344
  %v1401 = vadd.f32 %v1183, %v1345
  %v1402 = vadd.f32 %v1184, %v1346
  %v1403 = vadd.f32 %v1185, %v1347
  %v1404 = vadd.f32 %v1186, %v1348
  %v1405 = vadd.f32 %v1187, %v1349
  %v1406 = vadd.f32 %v1188, %v1350
  %v1407 = vadd.f32 %v1189, %v1351
  %v1408 = vadd.f32 %v1190, %v1352
  %v1409 = vadd.f32 %v1191, %v1353
  %v1410 = vadd.f32 %v1192, %v1354
  %v1411 = vadd.f32 %v1193, %v1355
  %v1412 = vadd.f32 %v1194, %v1356
  %v1413 = vadd.f32 %v1195, %v1357
  %v1414 = vadd.f32 %v1196, %v1358
  %1415 = vset.pattern.permute.xlu0 7
  %1416 = vperm.xlu0 %1415, %v70
  %v1417 = vpop.permute.xlu0 %1416
  %1419 = vset.pattern.permute.xlu0 7
  %1420 = vperm.xlu0 %1419, %v71
  %v1421 = vpop.permute.xlu0 %1420
  %v1423 = vmul.f32 %v1417, %v87
  %v1424 = vmul.f32 %v1417, %v91
  %v1425 = vmul.f32 %v1417, %v95
  %v1426 = vmul.f32 %v1417, %v99
  %v1427 = vmul.f32 %v1417, %v103
  %v1428 = vmul.f32 %v1417, %v107
  %v1429 = vmul.f32 %v1417, %v111
  %v1430 = vmul.f32 %v1417, %v115
  %v1431 = vmul.f32 %v1417, %v119
  %v1432 = vmul.f32 %v1417, %v123
  %v1433 = vmul.f32 %v1417, %v127
  %v1434 = vmul.f32 %v1417, %v131
  %v1435 = vmul.f32 %v1417, %v135
  %v1436 = vmul.f32 %v1417, %v139
  %v1437 = vmul.f32 %v1417, %v1208
  %v1438 = vmul.f32 %v1421, %v87
  %v1439 = vmul.f32 %v1421, %v91
  %v1440 = vmul.f32 %v1421, %v95
  %v1441 = vmul.f32 %v1421, %v99
  %v1442 = vmul.f32 %v1421, %v103
  %v1443 = vmul.f32 %v1421, %v107
  %v1444 = vmul.f32 %v1421, %v111
  %v1445 = vmul.f32 %v1421, %v115
  %v1446 = vmul.f32 %v1421, %v119
  %v1447 = vmul.f32 %v1421, %v123
  %v1448 = vmul.f32 %v1421, %v127
  %v1449 = vmul.f32 %v1421, %v131
  %v1450 = vmul.f32 %v1421, %v135
  %v1451 = vmul.f32 %v1421, %v139
  %v1452 = vmul.f32 %v1421, %v1208
  %1483 = vrot.lane.b32.xlu0 %v1423, 67
  %v1484 = vpop.permute.xlu0 %1483
  %1485 = vrot.lane.b32.xlu0 %v1424, 67
  %v1486 = vpop.permute.xlu0 %1485
  %1487 = vrot.lane.b32.xlu0 %v1425, 67
  %v1488 = vpop.permute.xlu0 %1487
  %1489 = vrot.lane.b32.xlu0 %v1426, 67
  %v1490 = vpop.permute.xlu0 %1489
  %1491 = vrot.lane.b32.xlu0 %v1427, 67
  %v1492 = vpop.permute.xlu0 %1491
  %1493 = vrot.lane.b32.xlu0 %v1428, 67
  %v1494 = vpop.permute.xlu0 %1493
  %1495 = vrot.lane.b32.xlu0 %v1429, 67
  %v1496 = vpop.permute.xlu0 %1495
  %1497 = vrot.lane.b32.xlu0 %v1430, 67
  %v1498 = vpop.permute.xlu0 %1497
  %1499 = vrot.lane.b32.xlu0 %v1431, 67
  %v1500 = vpop.permute.xlu0 %1499
  %1501 = vrot.lane.b32.xlu0 %v1432, 67
  %v1502 = vpop.permute.xlu0 %1501
  %1503 = vrot.lane.b32.xlu0 %v1433, 67
  %v1504 = vpop.permute.xlu0 %1503
  %1505 = vrot.lane.b32.xlu0 %v1434, 67
  %v1506 = vpop.permute.xlu0 %1505
  %1507 = vrot.lane.b32.xlu0 %v1435, 67
  %v1508 = vpop.permute.xlu0 %1507
  %1509 = vrot.lane.b32.xlu0 %v1436, 67
  %v1510 = vpop.permute.xlu0 %1509
  %1511 = vrot.lane.b32.xlu0 %v1437, 67
  %v1512 = vpop.permute.xlu0 %1511
  %1513 = vrot.lane.b32.xlu0 %v1438, 67
  %v1514 = vpop.permute.xlu0 %1513
  %1515 = vrot.lane.b32.xlu0 %v1439, 67
  %v1516 = vpop.permute.xlu0 %1515
  %1517 = vrot.lane.b32.xlu0 %v1440, 67
  %v1518 = vpop.permute.xlu0 %1517
  %1519 = vrot.lane.b32.xlu0 %v1441, 67
  %v1520 = vpop.permute.xlu0 %1519
  %1521 = vrot.lane.b32.xlu0 %v1442, 67
  %v1522 = vpop.permute.xlu0 %1521
  %1523 = vrot.lane.b32.xlu0 %v1443, 67
  %v1524 = vpop.permute.xlu0 %1523
  %1525 = vrot.lane.b32.xlu0 %v1444, 67
  %v1526 = vpop.permute.xlu0 %1525
  %1527 = vrot.lane.b32.xlu0 %v1445, 67
  %v1528 = vpop.permute.xlu0 %1527
  %1529 = vrot.lane.b32.xlu0 %v1446, 67
  %v1530 = vpop.permute.xlu0 %1529
  %1531 = vrot.lane.b32.xlu0 %v1447, 67
  %v1532 = vpop.permute.xlu0 %1531
  %1533 = vrot.lane.b32.xlu0 %v1448, 67
  %v1534 = vpop.permute.xlu0 %1533
  %1535 = vrot.lane.b32.xlu0 %v1449, 67
  %v1536 = vpop.permute.xlu0 %1535
  %1537 = vrot.lane.b32.xlu0 %v1450, 67
  %v1538 = vpop.permute.xlu0 %1537
  %1539 = vrot.lane.b32.xlu0 %v1451, 67
  %v1540 = vpop.permute.xlu0 %1539
  %1541 = vrot.lane.b32.xlu0 %v1452, 67
  %v1542 = vpop.permute.xlu0 %1541
  %vm1543 = vcmask 547840
  %v1544 = vsel %vm1543, %v1484, %v1486
  %v1545 = vsel %vm1543, %v1486, %v1488
  %v1546 = vsel %vm1543, %v1488, %v1490
  %v1547 = vsel %vm1543, %v1490, %v1492
  %v1548 = vsel %vm1543, %v1492, %v1494
  %v1549 = vsel %vm1543, %v1494, %v1496
  %v1550 = vsel %vm1543, %v1496, %v1498
  %v1551 = vsel %vm1543, %v1498, %v1500
  %v1552 = vsel %vm1543, %v1500, %v1502
  %v1553 = vsel %vm1543, %v1502, %v1504
  %v1554 = vsel %vm1543, %v1504, %v1506
  %v1555 = vsel %vm1543, %v1506, %v1508
  %v1556 = vsel %vm1543, %v1508, %v1510
  %v1557 = vsel %vm1543, %v1510, %v1512
  %v1558 = vsel %vm1543, %v1514, %v1516
  %v1559 = vsel %vm1543, %v1516, %v1518
  %v1560 = vsel %vm1543, %v1518, %v1520
  %v1561 = vsel %vm1543, %v1520, %v1522
  %v1562 = vsel %vm1543, %v1522, %v1524
  %v1563 = vsel %vm1543, %v1524, %v1526
  %v1564 = vsel %vm1543, %v1526, %v1528
  %v1565 = vsel %vm1543, %v1528, %v1530
  %v1566 = vsel %vm1543, %v1530, %v1532
  %v1567 = vsel %vm1543, %v1532, %v1534
  %v1568 = vsel %vm1543, %v1534, %v1536
  %v1569 = vsel %vm1543, %v1536, %v1538
  %v1570 = vsel %vm1543, %v1538, %v1540
  %v1571 = vsel %vm1543, %v1540, %v1542
  %v1600 = vadd.f32 %v1387, %v1544
  %v1601 = vadd.f32 %v1388, %v1545
  %v1602 = vadd.f32 %v1389, %v1546
  %v1603 = vadd.f32 %v1390, %v1547
  %v1604 = vadd.f32 %v1391, %v1548
  %v1605 = vadd.f32 %v1392, %v1549
  %v1606 = vadd.f32 %v1393, %v1550
  %v1607 = vadd.f32 %v1394, %v1551
  %v1608 = vadd.f32 %v1395, %v1552
  %v1609 = vadd.f32 %v1396, %v1553
  %v1610 = vadd.f32 %v1397, %v1554
  %v1611 = vadd.f32 %v1398, %v1555
  %v1612 = vadd.f32 %v1399, %v1556
  %v1613 = vadd.f32 %v1400, %v1557
  %v1614 = vadd.f32 %v1401, %v1558
  %v1615 = vadd.f32 %v1402, %v1559
  %v1616 = vadd.f32 %v1403, %v1560
  %v1617 = vadd.f32 %v1404, %v1561
  %v1618 = vadd.f32 %v1405, %v1562
  %v1619 = vadd.f32 %v1406, %v1563
  %v1620 = vadd.f32 %v1407, %v1564
  %v1621 = vadd.f32 %v1408, %v1565
  %v1622 = vadd.f32 %v1409, %v1566
  %v1623 = vadd.f32 %v1410, %v1567
  %v1624 = vadd.f32 %v1411, %v1568
  %v1625 = vadd.f32 %v1412, %v1569
  %v1626 = vadd.f32 %v1413, %v1570
  %v1627 = vadd.f32 %v1414, %v1571
  %1628 = vset.pattern.permute.xlu0 8
  %1629 = vperm.xlu0 %1628, %v70
  %v1630 = vpop.permute.xlu0 %1629
  %1632 = vset.pattern.permute.xlu0 8
  %1633 = vperm.xlu0 %1632, %v71
  %v1634 = vpop.permute.xlu0 %1633
  %v1636 = vmul.f32 %v1630, %v87
  %v1637 = vmul.f32 %v1630, %v91
  %v1638 = vmul.f32 %v1630, %v95
  %v1639 = vmul.f32 %v1630, %v99
  %v1640 = vmul.f32 %v1630, %v103
  %v1641 = vmul.f32 %v1630, %v107
  %v1642 = vmul.f32 %v1630, %v111
  %v1643 = vmul.f32 %v1630, %v115
  %v1644 = vmul.f32 %v1630, %v119
  %v1645 = vmul.f32 %v1630, %v123
  %v1646 = vmul.f32 %v1630, %v127
  %v1647 = vmul.f32 %v1630, %v131
  %v1648 = vmul.f32 %v1630, %v135
  %v1649 = vmul.f32 %v1630, %v139
  %v1650 = vmul.f32 %v1630, %v1208
  %v1651 = vmul.f32 %v1634, %v87
  %v1652 = vmul.f32 %v1634, %v91
  %v1653 = vmul.f32 %v1634, %v95
  %v1654 = vmul.f32 %v1634, %v99
  %v1655 = vmul.f32 %v1634, %v103
  %v1656 = vmul.f32 %v1634, %v107
  %v1657 = vmul.f32 %v1634, %v111
  %v1658 = vmul.f32 %v1634, %v115
  %v1659 = vmul.f32 %v1634, %v119
  %v1660 = vmul.f32 %v1634, %v123
  %v1661 = vmul.f32 %v1634, %v127
  %v1662 = vmul.f32 %v1634, %v131
  %v1663 = vmul.f32 %v1634, %v135
  %v1664 = vmul.f32 %v1634, %v139
  %v1665 = vmul.f32 %v1634, %v1208
  %1696 = vrot.lane.b32.xlu0 %v1636, 66
  %v1697 = vpop.permute.xlu0 %1696
  %1698 = vrot.lane.b32.xlu0 %v1637, 66
  %v1699 = vpop.permute.xlu0 %1698
  %1700 = vrot.lane.b32.xlu0 %v1638, 66
  %v1701 = vpop.permute.xlu0 %1700
  %1702 = vrot.lane.b32.xlu0 %v1639, 66
  %v1703 = vpop.permute.xlu0 %1702
  %1704 = vrot.lane.b32.xlu0 %v1640, 66
  %v1705 = vpop.permute.xlu0 %1704
  %1706 = vrot.lane.b32.xlu0 %v1641, 66
  %v1707 = vpop.permute.xlu0 %1706
  %1708 = vrot.lane.b32.xlu0 %v1642, 66
  %v1709 = vpop.permute.xlu0 %1708
  %1710 = vrot.lane.b32.xlu0 %v1643, 66
  %v1711 = vpop.permute.xlu0 %1710
  %1712 = vrot.lane.b32.xlu0 %v1644, 66
  %v1713 = vpop.permute.xlu0 %1712
  %1714 = vrot.lane.b32.xlu0 %v1645, 66
  %v1715 = vpop.permute.xlu0 %1714
  %1716 = vrot.lane.b32.xlu0 %v1646, 66
  %v1717 = vpop.permute.xlu0 %1716
  %1718 = vrot.lane.b32.xlu0 %v1647, 66
  %v1719 = vpop.permute.xlu0 %1718
  %1720 = vrot.lane.b32.xlu0 %v1648, 66
  %v1721 = vpop.permute.xlu0 %1720
  %1722 = vrot.lane.b32.xlu0 %v1649, 66
  %v1723 = vpop.permute.xlu0 %1722
  %1724 = vrot.lane.b32.xlu0 %v1650, 66
  %v1725 = vpop.permute.xlu0 %1724
  %1726 = vrot.lane.b32.xlu0 %v1651, 66
  %v1727 = vpop.permute.xlu0 %1726
  %1728 = vrot.lane.b32.xlu0 %v1652, 66
  %v1729 = vpop.permute.xlu0 %1728
  %1730 = vrot.lane.b32.xlu0 %v1653, 66
  %v1731 = vpop.permute.xlu0 %1730
  %1732 = vrot.lane.b32.xlu0 %v1654, 66
  %v1733 = vpop.permute.xlu0 %1732
  %1734 = vrot.lane.b32.xlu0 %v1655, 66
  %v1735 = vpop.permute.xlu0 %1734
  %1736 = vrot.lane.b32.xlu0 %v1656, 66
  %v1737 = vpop.permute.xlu0 %1736
  %1738 = vrot.lane.b32.xlu0 %v1657, 66
  %v1739 = vpop.permute.xlu0 %1738
  %1740 = vrot.lane.b32.xlu0 %v1658, 66
  %v1741 = vpop.permute.xlu0 %1740
  %1742 = vrot.lane.b32.xlu0 %v1659, 66
  %v1743 = vpop.permute.xlu0 %1742
  %1744 = vrot.lane.b32.xlu0 %v1660, 66
  %v1745 = vpop.permute.xlu0 %1744
  %1746 = vrot.lane.b32.xlu0 %v1661, 66
  %v1747 = vpop.permute.xlu0 %1746
  %1748 = vrot.lane.b32.xlu0 %v1662, 66
  %v1749 = vpop.permute.xlu0 %1748
  %1750 = vrot.lane.b32.xlu0 %v1663, 66
  %v1751 = vpop.permute.xlu0 %1750
  %1752 = vrot.lane.b32.xlu0 %v1664, 66
  %v1753 = vpop.permute.xlu0 %1752
  %1754 = vrot.lane.b32.xlu0 %v1665, 66
  %v1755 = vpop.permute.xlu0 %1754
  %vm1756 = vcmask 539648
  %v1757 = vsel %vm1756, %v1697, %v1699
  %v1758 = vsel %vm1756, %v1699, %v1701
  %v1759 = vsel %vm1756, %v1701, %v1703
  %v1760 = vsel %vm1756, %v1703, %v1705
  %v1761 = vsel %vm1756, %v1705, %v1707
  %v1762 = vsel %vm1756, %v1707, %v1709
  %v1763 = vsel %vm1756, %v1709, %v1711
  %v1764 = vsel %vm1756, %v1711, %v1713
  %v1765 = vsel %vm1756, %v1713, %v1715
  %v1766 = vsel %vm1756, %v1715, %v1717
  %v1767 = vsel %vm1756, %v1717, %v1719
  %v1768 = vsel %vm1756, %v1719, %v1721
  %v1769 = vsel %vm1756, %v1721, %v1723
  %v1770 = vsel %vm1756, %v1723, %v1725
  %v1771 = vsel %vm1756, %v1727, %v1729
  %v1772 = vsel %vm1756, %v1729, %v1731
  %v1773 = vsel %vm1756, %v1731, %v1733
  %v1774 = vsel %vm1756, %v1733, %v1735
  %v1775 = vsel %vm1756, %v1735, %v1737
  %v1776 = vsel %vm1756, %v1737, %v1739
  %v1777 = vsel %vm1756, %v1739, %v1741
  %v1778 = vsel %vm1756, %v1741, %v1743
  %v1779 = vsel %vm1756, %v1743, %v1745
  %v1780 = vsel %vm1756, %v1745, %v1747
  %v1781 = vsel %vm1756, %v1747, %v1749
  %v1782 = vsel %vm1756, %v1749, %v1751
  %v1783 = vsel %vm1756, %v1751, %v1753
  %v1784 = vsel %vm1756, %v1753, %v1755
  %v1813 = vadd.f32 %v1600, %v1757
  %v1814 = vadd.f32 %v1601, %v1758
  %v1815 = vadd.f32 %v1602, %v1759
  %v1816 = vadd.f32 %v1603, %v1760
  %v1817 = vadd.f32 %v1604, %v1761
  %v1818 = vadd.f32 %v1605, %v1762
  %v1819 = vadd.f32 %v1606, %v1763
  %v1820 = vadd.f32 %v1607, %v1764
  %v1821 = vadd.f32 %v1608, %v1765
  %v1822 = vadd.f32 %v1609, %v1766
  %v1823 = vadd.f32 %v1610, %v1767
  %v1824 = vadd.f32 %v1611, %v1768
  %v1825 = vadd.f32 %v1612, %v1769
  %v1826 = vadd.f32 %v1613, %v1770
  %v1827 = vadd.f32 %v1614, %v1771
  %v1828 = vadd.f32 %v1615, %v1772
  %v1829 = vadd.f32 %v1616, %v1773
  %v1830 = vadd.f32 %v1617, %v1774
  %v1831 = vadd.f32 %v1618, %v1775
  %v1832 = vadd.f32 %v1619, %v1776
  %v1833 = vadd.f32 %v1620, %v1777
  %v1834 = vadd.f32 %v1621, %v1778
  %v1835 = vadd.f32 %v1622, %v1779
  %v1836 = vadd.f32 %v1623, %v1780
  %v1837 = vadd.f32 %v1624, %v1781
  %v1838 = vadd.f32 %v1625, %v1782
  %v1839 = vadd.f32 %v1626, %v1783
  %v1840 = vadd.f32 %v1627, %v1784
  %v1841 = vld [vmem:[%s9] sm:$0xff]
  %v1842 = vld [vmem:[%s9 + $0x8] sm:$0xff]
  %1844 = vset.pattern.permute.xlu0 0
  %1845 = vperm.xlu0 %1844, %v1841
  %v1846 = vpop.permute.xlu0 %1845
  %1849 = vset.pattern.permute.xlu0 0
  %1850 = vperm.xlu0 %1849, %v1842
  %v1851 = vpop.permute.xlu0 %1850
  %v1853 = vadd.f32 %v1813, %v1846
  %v1854 = vadd.f32 %v1814, %v1846
  %v1855 = vadd.f32 %v1815, %v1846
  %v1856 = vadd.f32 %v1816, %v1846
  %v1857 = vadd.f32 %v1817, %v1846
  %v1858 = vadd.f32 %v1818, %v1846
  %v1859 = vadd.f32 %v1819, %v1846
  %v1860 = vadd.f32 %v1820, %v1846
  %v1861 = vadd.f32 %v1821, %v1846
  %v1862 = vadd.f32 %v1822, %v1846
  %v1863 = vadd.f32 %v1823, %v1846
  %v1864 = vadd.f32 %v1824, %v1846
  %v1865 = vadd.f32 %v1825, %v1846
  %v1866 = vadd.f32 %v1826, %v1846
  %v1867 = vadd.f32 %v1827, %v1851
  %v1868 = vadd.f32 %v1828, %v1851
  %v1869 = vadd.f32 %v1829, %v1851
  %v1870 = vadd.f32 %v1830, %v1851
  %v1871 = vadd.f32 %v1831, %v1851
  %v1872 = vadd.f32 %v1832, %v1851
  %v1873 = vadd.f32 %v1833, %v1851
  %v1874 = vadd.f32 %v1834, %v1851
  %v1875 = vadd.f32 %v1835, %v1851
  %v1876 = vadd.f32 %v1836, %v1851
  %v1877 = vadd.f32 %v1837, %v1851
  %v1878 = vadd.f32 %v1838, %v1851
  %v1879 = vadd.f32 %v1839, %v1851
  %v1880 = vadd.f32 %v1840, %v1851
  %vm1881 = vcmp.gt.f32.partialorder %v1853, 0.0
  %vm1882 = vcmp.gt.f32.partialorder %v1854, 0.0
  %vm1883 = vcmp.gt.f32.partialorder %v1855, 0.0
  %vm1884 = vcmp.gt.f32.partialorder %v1856, 0.0
  %vm1885 = vcmp.gt.f32.partialorder %v1857, 0.0
  %vm1886 = vcmp.gt.f32.partialorder %v1858, 0.0
  %vm1887 = vcmp.gt.f32.partialorder %v1859, 0.0
  %vm1888 = vcmp.gt.f32.partialorder %v1860, 0.0
  %vm1889 = vcmp.gt.f32.partialorder %v1861, 0.0
  %vm1890 = vcmp.gt.f32.partialorder %v1862, 0.0
  %vm1891 = vcmp.gt.f32.partialorder %v1863, 0.0
  %vm1892 = vcmp.gt.f32.partialorder %v1864, 0.0
  %vm1893 = vcmp.gt.f32.partialorder %v1865, 0.0
  %vm1894 = vcmp.gt.f32.partialorder %v1866, 0.0
  %vm1895 = vcmp.gt.f32.partialorder %v1867, 0.0
  %vm1896 = vcmp.gt.f32.partialorder %v1868, 0.0
  %vm1897 = vcmp.gt.f32.partialorder %v1869, 0.0
  %vm1898 = vcmp.gt.f32.partialorder %v1870, 0.0
  %vm1899 = vcmp.gt.f32.partialorder %v1871, 0.0
  %vm1900 = vcmp.gt.f32.partialorder %v1872, 0.0
  %vm1901 = vcmp.gt.f32.partialorder %v1873, 0.0
  %vm1902 = vcmp.gt.f32.partialorder %v1874, 0.0
  %vm1903 = vcmp.gt.f32.partialorder %v1875, 0.0
  %vm1904 = vcmp.gt.f32.partialorder %v1876, 0.0
  %vm1905 = vcmp.gt.f32.partialorder %v1877, 0.0
  %vm1906 = vcmp.gt.f32.partialorder %v1878, 0.0
  %vm1907 = vcmp.gt.f32.partialorder %v1879, 0.0
  %vm1908 = vcmp.gt.f32.partialorder %v1880, 0.0
  %v1909 = vmul.f32 %v1853, 0.01
  %v1910 = vmul.f32 %v1854, 0.01
  %v1911 = vmul.f32 %v1855, 0.01
  %v1912 = vmul.f32 %v1856, 0.01
  %v1913 = vmul.f32 %v1857, 0.01
  %v1914 = vmul.f32 %v1858, 0.01
  %v1915 = vmul.f32 %v1859, 0.01
  %v1916 = vmul.f32 %v1860, 0.01
  %v1917 = vmul.f32 %v1861, 0.01
  %v1918 = vmul.f32 %v1862, 0.01
  %v1919 = vmul.f32 %v1863, 0.01
  %v1920 = vmul.f32 %v1864, 0.01
  %v1921 = vmul.f32 %v1865, 0.01
  %v1922 = vmul.f32 %v1866, 0.01
  %v1923 = vmul.f32 %v1867, 0.01
  %v1924 = vmul.f32 %v1868, 0.01
  %v1925 = vmul.f32 %v1869, 0.01
  %v1926 = vmul.f32 %v1870, 0.01
  %v1927 = vmul.f32 %v1871, 0.01
  %v1928 = vmul.f32 %v1872, 0.01
  %v1929 = vmul.f32 %v1873, 0.01
  %v1930 = vmul.f32 %v1874, 0.01
  %v1931 = vmul.f32 %v1875, 0.01
  %v1932 = vmul.f32 %v1876, 0.01
  %v1933 = vmul.f32 %v1877, 0.01
  %v1934 = vmul.f32 %v1878, 0.01
  %v1935 = vmul.f32 %v1879, 0.01
  %v1936 = vmul.f32 %v1880, 0.01
  %v1937 = vsel %vm1881, %v1853, %v1909
  %v1938 = vsel %vm1882, %v1854, %v1910
  %v1939 = vsel %vm1883, %v1855, %v1911
  %v1940 = vsel %vm1884, %v1856, %v1912
  %v1941 = vsel %vm1885, %v1857, %v1913
  %v1942 = vsel %vm1886, %v1858, %v1914
  %v1943 = vsel %vm1887, %v1859, %v1915
  %v1944 = vsel %vm1888, %v1860, %v1916
  %v1945 = vsel %vm1889, %v1861, %v1917
  %v1946 = vsel %vm1890, %v1862, %v1918
  %v1947 = vsel %vm1891, %v1863, %v1919
  %v1948 = vsel %vm1892, %v1864, %v1920
  %v1949 = vsel %vm1893, %v1865, %v1921
  %v1950 = vsel %vm1894, %v1866, %v1922
  %v1951 = vsel %vm1895, %v1867, %v1923
  %v1952 = vsel %vm1896, %v1868, %v1924
  %v1953 = vsel %vm1897, %v1869, %v1925
  %v1954 = vsel %vm1898, %v1870, %v1926
  %v1955 = vsel %vm1899, %v1871, %v1927
  %v1956 = vsel %vm1900, %v1872, %v1928
  %v1957 = vsel %vm1901, %v1873, %v1929
  %v1958 = vsel %vm1902, %v1874, %v1930
  %v1959 = vsel %vm1903, %v1875, %v1931
  %v1960 = vsel %vm1904, %v1876, %v1932
  %v1961 = vsel %vm1905, %v1877, %v1933
  %v1962 = vsel %vm1906, %v1878, %v1934
  %v1963 = vsel %vm1907, %v1879, %v1935
  %v1964 = vsel %vm1908, %v1880, %v1936
  %1993 = vrot.lane.b32.xlu0 %v1937, 127
  %v1994 = vpop.permute.xlu0 %1993
  %1995 = vrot.lane.b32.xlu0 %v1938, 127
  %v1996 = vpop.permute.xlu0 %1995
  %1997 = vrot.lane.b32.xlu0 %v1939, 127
  %v1998 = vpop.permute.xlu0 %1997
  %1999 = vrot.lane.b32.xlu0 %v1940, 127
  %v2000 = vpop.permute.xlu0 %1999
  %2001 = vrot.lane.b32.xlu0 %v1941, 127
  %v2002 = vpop.permute.xlu0 %2001
  %2003 = vrot.lane.b32.xlu0 %v1942, 127
  %v2004 = vpop.permute.xlu0 %2003
  %2005 = vrot.lane.b32.xlu0 %v1943, 127
  %v2006 = vpop.permute.xlu0 %2005
  %2007 = vrot.lane.b32.xlu0 %v1944, 127
  %v2008 = vpop.permute.xlu0 %2007
  %2009 = vrot.lane.b32.xlu0 %v1945, 127
  %v2010 = vpop.permute.xlu0 %2009
  %2011 = vrot.lane.b32.xlu0 %v1946, 127
  %v2012 = vpop.permute.xlu0 %2011
  %2013 = vrot.lane.b32.xlu0 %v1947, 127
  %v2014 = vpop.permute.xlu0 %2013
  %2015 = vrot.lane.b32.xlu0 %v1948, 127
  %v2016 = vpop.permute.xlu0 %2015
  %2017 = vrot.lane.b32.xlu0 %v1949, 127
  %v2018 = vpop.permute.xlu0 %2017
  %2019 = vrot.lane.b32.xlu0 %v1950, 127
  %v2020 = vpop.permute.xlu0 %2019
  %2021 = vrot.lane.b32.xlu0 %v1951, 127
  %v2022 = vpop.permute.xlu0 %2021
  %2023 = vrot.lane.b32.xlu0 %v1952, 127
  %v2024 = vpop.permute.xlu0 %2023
  %2025 = vrot.lane.b32.xlu0 %v1953, 127
  %v2026 = vpop.permute.xlu0 %2025
  %2027 = vrot.lane.b32.xlu0 %v1954, 127
  %v2028 = vpop.permute.xlu0 %2027
  %2029 = vrot.lane.b32.xlu0 %v1955, 127
  %v2030 = vpop.permute.xlu0 %2029
  %2031 = vrot.lane.b32.xlu0 %v1956, 127
  %v2032 = vpop.permute.xlu0 %2031
  %2033 = vrot.lane.b32.xlu0 %v1957, 127
  %v2034 = vpop.permute.xlu0 %2033
  %2035 = vrot.lane.b32.xlu0 %v1958, 127
  %v2036 = vpop.permute.xlu0 %2035
  %2037 = vrot.lane.b32.xlu0 %v1959, 127
  %v2038 = vpop.permute.xlu0 %2037
  %2039 = vrot.lane.b32.xlu0 %v1960, 127
  %v2040 = vpop.permute.xlu0 %2039
  %2041 = vrot.lane.b32.xlu0 %v1961, 127
  %v2042 = vpop.permute.xlu0 %2041
  %2043 = vrot.lane.b32.xlu0 %v1962, 127
  %v2044 = vpop.permute.xlu0 %2043
  %2045 = vrot.lane.b32.xlu0 %v1963, 127
  %v2046 = vpop.permute.xlu0 %2045
  %2047 = vrot.lane.b32.xlu0 %v1964, 127
  %v2048 = vpop.permute.xlu0 %2047
  %v2049 = vsel %vm302, %v1994, %v1996
  %v2050 = vsel %vm302, %v1996, %v1998
  %v2051 = vsel %vm302, %v1998, %v2000
  %v2052 = vsel %vm302, %v2000, %v2002
  %v2053 = vsel %vm302, %v2002, %v2004
  %v2054 = vsel %vm302, %v2004, %v2006
  %v2055 = vsel %vm302, %v2006, %v2008
  %v2056 = vsel %vm302, %v2008, %v2010
  %v2057 = vsel %vm302, %v2010, %v2012
  %v2058 = vsel %vm302, %v2012, %v2014
  %v2059 = vsel %vm302, %v2014, %v2016
  %v2060 = vsel %vm302, %v2016, %v2018
  %v2061 = vsel %vm302, %v2018, %v2020
  %v2062 = vsel %vm302, %v2022, %v2024
  %v2063 = vsel %vm302, %v2024, %v2026
  %v2064 = vsel %vm302, %v2026, %v2028
  %v2065 = vsel %vm302, %v2028, %v2030
  %v2066 = vsel %vm302, %v2030, %v2032
  %v2067 = vsel %vm302, %v2032, %v2034
  %v2068 = vsel %vm302, %v2034, %v2036
  %v2069 = vsel %vm302, %v2036, %v2038
  %v2070 = vsel %vm302, %v2038, %v2040
  %v2071 = vsel %vm302, %v2040, %v2042
  %v2072 = vsel %vm302, %v2042, %v2044
  %v2073 = vsel %vm302, %v2044, %v2046
  %v2074 = vsel %vm302, %v2046, %v2048
  %v2103 = vmax.f32 %v1937, %v2049
  %v2104 = vmax.f32 %v1938, %v2050
  %v2105 = vmax.f32 %v1939, %v2051
  %v2106 = vmax.f32 %v1940, %v2052
  %v2107 = vmax.f32 %v1941, %v2053
  %v2108 = vmax.f32 %v1942, %v2054
  %v2109 = vmax.f32 %v1943, %v2055
  %v2110 = vmax.f32 %v1944, %v2056
  %v2111 = vmax.f32 %v1945, %v2057
  %v2112 = vmax.f32 %v1946, %v2058
  %v2113 = vmax.f32 %v1947, %v2059
  %v2114 = vmax.f32 %v1948, %v2060
  %v2115 = vmax.f32 %v1949, %v2061
  %v2116 = vmax.f32 %v1950, %v2020
  %v2117 = vmax.f32 %v1951, %v2062
  %v2118 = vmax.f32 %v1952, %v2063
  %v2119 = vmax.f32 %v1953, %v2064
  %v2120 = vmax.f32 %v1954, %v2065
  %v2121 = vmax.f32 %v1955, %v2066
  %v2122 = vmax.f32 %v1956, %v2067
  %v2123 = vmax.f32 %v1957, %v2068
  %v2124 = vmax.f32 %v1958, %v2069
  %v2125 = vmax.f32 %v1959, %v2070
  %v2126 = vmax.f32 %v1960, %v2071
  %v2127 = vmax.f32 %v1961, %v2072
  %v2128 = vmax.f32 %v1962, %v2073
  %v2129 = vmax.f32 %v1963, %v2074
  %v2130 = vmax.f32 %v1964, %v2048
  %2159 = vrot.lane.b32.xlu0 %v2103, 98
  %v2160 = vpop.permute.xlu0 %2159
  %2161 = vrot.lane.b32.xlu0 %v2104, 98
  %v2162 = vpop.permute.xlu0 %2161
  %2163 = vrot.lane.b32.xlu0 %v2105, 98
  %v2164 = vpop.permute.xlu0 %2163
  %2165 = vrot.lane.b32.xlu0 %v2106, 98
  %v2166 = vpop.permute.xlu0 %2165
  %2167 = vrot.lane.b32.xlu0 %v2107, 98
  %v2168 = vpop.permute.xlu0 %2167
  %2169 = vrot.lane.b32.xlu0 %v2108, 98
  %v2170 = vpop.permute.xlu0 %2169
  %2171 = vrot.lane.b32.xlu0 %v2109, 98
  %v2172 = vpop.permute.xlu0 %2171
  %2173 = vrot.lane.b32.xlu0 %v2110, 98
  %v2174 = vpop.permute.xlu0 %2173
  %2175 = vrot.lane.b32.xlu0 %v2111, 98
  %v2176 = vpop.permute.xlu0 %2175
  %2177 = vrot.lane.b32.xlu0 %v2112, 98
  %v2178 = vpop.permute.xlu0 %2177
  %2179 = vrot.lane.b32.xlu0 %v2113, 98
  %v2180 = vpop.permute.xlu0 %2179
  %2181 = vrot.lane.b32.xlu0 %v2114, 98
  %v2182 = vpop.permute.xlu0 %2181
  %2183 = vrot.lane.b32.xlu0 %v2115, 98
  %v2184 = vpop.permute.xlu0 %2183
  %2185 = vrot.lane.b32.xlu0 %v2116, 98
  %v2186 = vpop.permute.xlu0 %2185
  %2187 = vrot.lane.b32.xlu0 %v2117, 98
  %v2188 = vpop.permute.xlu0 %2187
  %2189 = vrot.lane.b32.xlu0 %v2118, 98
  %v2190 = vpop.permute.xlu0 %2189
  %2191 = vrot.lane.b32.xlu0 %v2119, 98
  %v2192 = vpop.permute.xlu0 %2191
  %2193 = vrot.lane.b32.xlu0 %v2120, 98
  %v2194 = vpop.permute.xlu0 %2193
  %2195 = vrot.lane.b32.xlu0 %v2121, 98
  %v2196 = vpop.permute.xlu0 %2195
  %2197 = vrot.lane.b32.xlu0 %v2122, 98
  %v2198 = vpop.permute.xlu0 %2197
  %2199 = vrot.lane.b32.xlu0 %v2123, 98
  %v2200 = vpop.permute.xlu0 %2199
  %2201 = vrot.lane.b32.xlu0 %v2124, 98
  %v2202 = vpop.permute.xlu0 %2201
  %2203 = vrot.lane.b32.xlu0 %v2125, 98
  %v2204 = vpop.permute.xlu0 %2203
  %2205 = vrot.lane.b32.xlu0 %v2126, 98
  %v2206 = vpop.permute.xlu0 %2205
  %2207 = vrot.lane.b32.xlu0 %v2127, 98
  %v2208 = vpop.permute.xlu0 %2207
  %2209 = vrot.lane.b32.xlu0 %v2128, 98
  %v2210 = vpop.permute.xlu0 %2209
  %2211 = vrot.lane.b32.xlu0 %v2129, 98
  %v2212 = vpop.permute.xlu0 %2211
  %2213 = vrot.lane.b32.xlu0 %v2130, 98
  %v2214 = vpop.permute.xlu0 %2213
  %v2215 = vsel %vm708, %v2160, %v2162
  %v2216 = vsel %vm708, %v2162, %v2164
  %v2217 = vsel %vm708, %v2164, %v2166
  %v2218 = vsel %vm708, %v2166, %v2168
  %v2219 = vsel %vm708, %v2168, %v2170
  %v2220 = vsel %vm708, %v2170, %v2172
  %v2221 = vsel %vm708, %v2172, %v2174
  %v2222 = vsel %vm708, %v2174, %v2176
  %v2223 = vsel %vm708, %v2176, %v2178
  %v2224 = vsel %vm708, %v2178, %v2180
  %v2225 = vsel %vm708, %v2180, %v2182
  %v2226 = vsel %vm708, %v2182, %v2184
  %v2227 = vsel %vm708, %v2184, %v2186
  %v2228 = vsel %vm708, %v2188, %v2190
  %v2229 = vsel %vm708, %v2190, %v2192
  %v2230 = vsel %vm708, %v2192, %v2194
  %v2231 = vsel %vm708, %v2194, %v2196
  %v2232 = vsel %vm708, %v2196, %v2198
  %v2233 = vsel %vm708, %v2198, %v2200
  %v2234 = vsel %vm708, %v2200, %v2202
  %v2235 = vsel %vm708, %v2202, %v2204
  %v2236 = vsel %vm708, %v2204, %v2206
  %v2237 = vsel %vm708, %v2206, %v2208
  %v2238 = vsel %vm708, %v2208, %v2210
  %v2239 = vsel %vm708, %v2210, %v2212
  %v2240 = vsel %vm708, %v2212, %v2214
  %v2269 = vmax.f32 %v2103, %v2215
  %v2270 = vmax.f32 %v2104, %v2216
  %v2271 = vmax.f32 %v2105, %v2217
  %v2272 = vmax.f32 %v2106, %v2218
  %v2273 = vmax.f32 %v2107, %v2219
  %v2274 = vmax.f32 %v2108, %v2220
  %v2275 = vmax.f32 %v2109, %v2221
  %v2276 = vmax.f32 %v2110, %v2222
  %v2277 = vmax.f32 %v2111, %v2223
  %v2278 = vmax.f32 %v2112, %v2224
  %v2279 = vmax.f32 %v2113, %v2225
  %v2280 = vmax.f32 %v2114, %v2226
  %v2281 = vmax.f32 %v2115, %v2227
  %v2282 = vmax.f32 %v2116, %v2186
  %v2283 = vmax.f32 %v2117, %v2228
  %v2284 = vmax.f32 %v2118, %v2229
  %v2285 = vmax.f32 %v2119, %v2230
  %v2286 = vmax.f32 %v2120, %v2231
  %v2287 = vmax.f32 %v2121, %v2232
  %v2288 = vmax.f32 %v2122, %v2233
  %v2289 = vmax.f32 %v2123, %v2234
  %v2290 = vmax.f32 %v2124, %v2235
  %v2291 = vmax.f32 %v2125, %v2236
  %v2292 = vmax.f32 %v2126, %v2237
  %v2293 = vmax.f32 %v2127, %v2238
  %v2294 = vmax.f32 %v2128, %v2239
  %v2295 = vmax.f32 %v2129, %v2240
  %v2296 = vmax.f32 %v2130, %v2214
  %v2297 = vpack.c.bf16 %v2283, %v2269
  %v2298 = vpack.c.bf16 %v2284, %v2270
  %v2299 = vpack.c.bf16 %v2285, %v2271
  %v2300 = vpack.c.bf16 %v2286, %v2272
  %v2301 = vpack.c.bf16 %v2287, %v2273
  %v2302 = vpack.c.bf16 %v2288, %v2274
  %v2303 = vpack.c.bf16 %v2289, %v2275
  %v2304 = vpack.c.bf16 %v2290, %v2276
  %v2305 = vpack.c.bf16 %v2291, %v2277
  %v2306 = vpack.c.bf16 %v2292, %v2278
  %v2307 = vpack.c.bf16 %v2293, %v2279
  %v2308 = vpack.c.bf16 %v2294, %v2280
  %v2309 = vpack.c.bf16 %v2295, %v2281
  %v2310 = vpack.c.bf16 %v2296, %v2282
  %v2311 = vld [vmem:[%s14] sm:$0xff]
  %v2312 = vld [vmem:[%s14 + $0x8] sm:$0xff]
  %v2313 = vld [vmem:[%s14 + $0x10] sm:$0xff]
  %v2314 = vld [vmem:[%s14 + $0x18] sm:$0xff]
  %v2315 = vld [vmem:[%s14 + $0x20] sm:$0xff]
  %v2316 = vld [vmem:[%s14 + $0x28] sm:$0xff]
  %v2317 = vld [vmem:[%s14 + $0x30] sm:$0xff]
  %v2318 = vld [vmem:[%s14 + $0x38] sm:$0xff]
  %v2319 = vld [vmem:[%s14 + $0x40] sm:$0xff]
  %v2320 = vld [vmem:[%s14 + $0x48] sm:$0xff]
  %v2321 = vld [vmem:[%s14 + $0x50] sm:$0xff]
  %v2322 = vld [vmem:[%s14 + $0x58] sm:$0xff]
  %v2323 = vld [vmem:[%s14 + $0x60] sm:$0xff]
  %v2324 = vld [vmem:[%s14 + $0x68] sm:$0xff]
  %v2325 = vld [vmem:[%s14 + $0x70] sm:$0xff]
  %v2326 = vld [vmem:[%s14 + $0x78] sm:$0xff]
  %v2327 = vld [vmem:[%s14 + $0x80] sm:$0xff]
  %v2328 = vld [vmem:[%s14 + $0x88] sm:$0xff]
  %v2329 = vld [vmem:[%s14 + $0x90] sm:$0xff]
  %v2330 = vld [vmem:[%s14 + $0x98] sm:$0xff]
  %v2331 = vld [vmem:[%s14 + $0xa0] sm:$0xff]
  %v2332 = vld [vmem:[%s14 + $0xa8] sm:$0xff]
  %v2333 = vld [vmem:[%s14 + $0xb0] sm:$0xff]
  %v2334 = vld [vmem:[%s14 + $0xb8] sm:$0xff]
  %v2335 = vld [vmem:[%s14 + $0xc0] sm:$0xff]
  %v2336 = vld [vmem:[%s14 + $0xc8] sm:$0xff]
  %v2337 = vld [vmem:[%s14 + $0xd0] sm:$0xff]
  %v2338 = vld [vmem:[%s14 + $0xd8] sm:$0xff]
  %v2339 = vld [vmem:[%s14 + $0xe0] sm:$0xff]
  %v2340 = vld [vmem:[%s14 + $0xe8] sm:$0xff]
  %v2341 = vld [vmem:[%s14 + $0xf0] sm:$0xff]
  %v2342 = vld [vmem:[%s14 + $0xf8] sm:$0xff]
  %v2343 = vld [vmem:[%s14 + $0x100] sm:$0xff]
  %v2344 = vld [vmem:[%s14 + $0x108] sm:$0xff]
  %v2345 = vld [vmem:[%s14 + $0x110] sm:$0xff]
  %v2346 = vld [vmem:[%s14 + $0x118] sm:$0xff]
  %v2347 = vld [vmem:[%s14 + $0x120] sm:$0xff]
  %v2348 = vld [vmem:[%s14 + $0x128] sm:$0xff]
  %v2349 = vld [vmem:[%s14 + $0x130] sm:$0xff]
  %v2350 = vld [vmem:[%s14 + $0x138] sm:$0xff]
  %v2351 = vld [vmem:[%s14 + $0x140] sm:$0xff]
  %v2352 = vld [vmem:[%s14 + $0x148] sm:$0xff]
  %v2353 = vld [vmem:[%s14 + $0x150] sm:$0xff]
  %v2354 = vld [vmem:[%s14 + $0x158] sm:$0xff]
  %v2355 = vld [vmem:[%s14 + $0x160] sm:$0xff]
  %v2356 = vld [vmem:[%s14 + $0x168] sm:$0xff]
  %v2357 = vld [vmem:[%s14 + $0x170] sm:$0xff]
  %v2358 = vld [vmem:[%s14 + $0x178] sm:$0xff]
  %v2359 = vld [vmem:[%s14 + $0x180] sm:$0xff]
  %v2360 = vld [vmem:[%s14 + $0x188] sm:$0xff]
  %v2361 = vld [vmem:[%s14 + $0x190] sm:$0xff]
  %v2362 = vld [vmem:[%s14 + $0x198] sm:$0xff]
  %v2363 = vld [vmem:[%s14 + $0x1a0] sm:$0xff]
  %v2364 = vld [vmem:[%s14 + $0x1a8] sm:$0xff]
  %v2365 = vld [vmem:[%s14 + $0x1b0] sm:$0xff]
  %v2366 = vld [vmem:[%s14 + $0x1b8] sm:$0xff]
  %v2367 = vld [vmem:[%s14 + $0x1c0] sm:$0xff]
  %v2368 = vld [vmem:[%s14 + $0x1c8] sm:$0xff]
  %v2369 = vld [vmem:[%s14 + $0x1d0] sm:$0xff]
  %v2370 = vld [vmem:[%s14 + $0x1d8] sm:$0xff]
  %v2371 = vld [vmem:[%s14 + $0x1e0] sm:$0xff]
  %v2372 = vld [vmem:[%s14 + $0x1e8] sm:$0xff]
  %v2373 = vld [vmem:[%s14 + $0x1f0] sm:$0xff]
  %v2374 = vld [vmem:[%s14 + $0x1f8] sm:$0xff]
  %v2375 = vld [vmem:[%s14 + $0x200] sm:$0xff]
  %v2376 = vld [vmem:[%s14 + $0x208] sm:$0xff]
  %v2377 = vld [vmem:[%s14 + $0x210] sm:$0xff]
  %v2378 = vld [vmem:[%s14 + $0x218] sm:$0xff]
  %v2379 = vld [vmem:[%s14 + $0x220] sm:$0xff]
  %v2380 = vld [vmem:[%s14 + $0x228] sm:$0xff]
  %v2381 = vld [vmem:[%s14 + $0x230] sm:$0xff]
  %v2382 = vld [vmem:[%s14 + $0x238] sm:$0xff]
  %v2383 = vld [vmem:[%s14 + $0x240] sm:$0xff]
  %v2384 = vld [vmem:[%s14 + $0x248] sm:$0xff]
  %v2385 = vld [vmem:[%s14 + $0x250] sm:$0xff]
  %v2386 = vld [vmem:[%s14 + $0x258] sm:$0xff]
  %v2387 = vld [vmem:[%s14 + $0x260] sm:$0xff]
  %v2388 = vld [vmem:[%s14 + $0x268] sm:$0xff]
  %v2389 = vld [vmem:[%s14 + $0x270] sm:$0xff]
  %v2390 = vld [vmem:[%s14 + $0x278] sm:$0xff]
  %v2391 = vld [vmem:[%s14 + $0x280] sm:$0xff]
  %v2392 = vld [vmem:[%s14 + $0x288] sm:$0xff]
  %v2393 = vld [vmem:[%s14 + $0x290] sm:$0xff]
  %v2394 = vld [vmem:[%s14 + $0x298] sm:$0xff]
  %v2395 = vld [vmem:[%s14 + $0x2a0] sm:$0xff]
  %v2396 = vld [vmem:[%s14 + $0x2a8] sm:$0xff]
  %v2397 = vld [vmem:[%s14 + $0x2b0] sm:$0xff]
  %v2398 = vld [vmem:[%s14 + $0x2b8] sm:$0xff]
  %v2399 = vld [vmem:[%s14 + $0x2c0] sm:$0xff]
  %v2400 = vld [vmem:[%s14 + $0x2c8] sm:$0xff]
  %v2401 = vld [vmem:[%s14 + $0x2d0] sm:$0xff]
  %v2402 = vld [vmem:[%s14 + $0x2d8] sm:$0xff]
  %v2403 = vld [vmem:[%s14 + $0x2e0] sm:$0xff]
  %v2404 = vld [vmem:[%s14 + $0x2e8] sm:$0xff]
  %v2405 = vld [vmem:[%s14 + $0x2f0] sm:$0xff]
  %v2406 = vld [vmem:[%s14 + $0x2f8] sm:$0xff]
  %v2407 = vld [vmem:[%s14 + $0x300] sm:$0xff]
  %v2408 = vld [vmem:[%s14 + $0x308] sm:$0xff]
  %v2409 = vld [vmem:[%s14 + $0x310] sm:$0xff]
  %v2410 = vld [vmem:[%s14 + $0x318] sm:$0xff]
  %v2411 = vld [vmem:[%s14 + $0x320] sm:$0xff]
  %v2513 = vunpack.c.l.b16 %v2311
  %v2514 = vunpack.c.h.b16 %v2311
  %v2515 = vunpack.c.l.b16 %v2312
  %v2516 = vunpack.c.h.b16 %v2312
  %v2517 = vunpack.c.l.b16 %v2313
  %v2518 = vunpack.c.h.b16 %v2313
  %v2519 = vunpack.c.l.b16 %v2314
  %v2520 = vunpack.c.h.b16 %v2314
  %v2521 = vunpack.c.l.b16 %v2315
  %v2522 = vunpack.c.h.b16 %v2315
  %v2523 = vunpack.c.l.b16 %v2316
  %v2524 = vunpack.c.h.b16 %v2316
  %v2525 = vunpack.c.l.b16 %v2317
  %v2526 = vunpack.c.h.b16 %v2317
  %v2527 = vunpack.c.l.b16 %v2318
  %v2528 = vunpack.c.h.b16 %v2318
  %v2529 = vunpack.c.l.b16 %v2319
  %v2530 = vunpack.c.h.b16 %v2319
  %v2531 = vunpack.c.l.b16 %v2320
  %v2532 = vunpack.c.h.b16 %v2320
  %v2533 = vunpack.c.l.b16 %v2321
  %v2534 = vunpack.c.h.b16 %v2321
  %v2535 = vunpack.c.l.b16 %v2322
  %v2536 = vunpack.c.h.b16 %v2322
  %v2537 = vunpack.c.l.b16 %v2323
  %v2538 = vunpack.c.h.b16 %v2323
  %v2539 = vunpack.c.l.b16 %v2324
  %v2540 = vunpack.c.h.b16 %v2324
  %v2541 = vunpack.c.l.b16 %v2325
  %v2542 = vunpack.c.h.b16 %v2325
  %v2543 = vunpack.c.l.b16 %v2326
  %v2544 = vunpack.c.h.b16 %v2326
  %v2545 = vunpack.c.l.b16 %v2327
  %v2546 = vunpack.c.h.b16 %v2327
  %v2547 = vunpack.c.l.b16 %v2328
  %v2548 = vunpack.c.h.b16 %v2328
  %v2549 = vunpack.c.l.b16 %v2329
  %v2550 = vunpack.c.h.b16 %v2329
  %v2551 = vunpack.c.l.b16 %v2330
  %v2552 = vunpack.c.h.b16 %v2330
  %v2553 = vunpack.c.l.b16 %v2331
  %v2554 = vunpack.c.h.b16 %v2331
  %v2555 = vunpack.c.l.b16 %v2332
  %v2556 = vunpack.c.h.b16 %v2332
  %v2557 = vunpack.c.l.b16 %v2333
  %v2558 = vunpack.c.h.b16 %v2333
  %v2559 = vunpack.c.l.b16 %v2334
  %v2560 = vunpack.c.h.b16 %v2334
  %v2561 = vunpack.c.l.b16 %v2335
  %v2562 = vunpack.c.h.b16 %v2335
  %v2563 = vunpack.c.l.b16 %v2336
  %v2564 = vunpack.c.h.b16 %v2336
  %v2565 = vunpack.c.l.b16 %v2337
  %v2566 = vunpack.c.h.b16 %v2337
  %v2567 = vunpack.c.l.b16 %v2338
  %v2568 = vunpack.c.h.b16 %v2338
  %v2569 = vunpack.c.l.b16 %v2339
  %v2570 = vunpack.c.h.b16 %v2339
  %v2571 = vunpack.c.l.b16 %v2340
  %v2572 = vunpack.c.h.b16 %v2340
  %v2573 = vunpack.c.l.b16 %v2341
  %v2574 = vunpack.c.h.b16 %v2341
  %v2575 = vunpack.c.l.b16 %v2342
  %v2576 = vunpack.c.h.b16 %v2342
  %v2577 = vunpack.c.l.b16 %v2343
  %v2578 = vunpack.c.h.b16 %v2343
  %v2579 = vunpack.c.l.b16 %v2344
  %v2580 = vunpack.c.h.b16 %v2344
  %v2581 = vunpack.c.l.b16 %v2345
  %v2582 = vunpack.c.h.b16 %v2345
  %v2583 = vunpack.c.l.b16 %v2346
  %v2584 = vunpack.c.h.b16 %v2346
  %v2585 = vunpack.c.l.b16 %v2347
  %v2586 = vunpack.c.h.b16 %v2347
  %v2587 = vunpack.c.l.b16 %v2348
  %v2588 = vunpack.c.h.b16 %v2348
  %v2589 = vunpack.c.l.b16 %v2349
  %v2590 = vunpack.c.h.b16 %v2349
  %v2591 = vunpack.c.l.b16 %v2350
  %v2592 = vunpack.c.h.b16 %v2350
  %v2593 = vunpack.c.l.b16 %v2351
  %v2594 = vunpack.c.h.b16 %v2351
  %v2595 = vunpack.c.l.b16 %v2352
  %v2596 = vunpack.c.h.b16 %v2352
  %v2597 = vunpack.c.l.b16 %v2353
  %v2598 = vunpack.c.h.b16 %v2353
  %v2599 = vunpack.c.l.b16 %v2354
  %v2600 = vunpack.c.h.b16 %v2354
  %v2601 = vunpack.c.l.b16 %v2355
  %v2602 = vunpack.c.h.b16 %v2355
  %v2603 = vunpack.c.l.b16 %v2356
  %v2604 = vunpack.c.h.b16 %v2356
  %v2605 = vunpack.c.l.b16 %v2357
  %v2606 = vunpack.c.h.b16 %v2357
  %v2607 = vunpack.c.l.b16 %v2358
  %v2608 = vunpack.c.h.b16 %v2358
  %v2609 = vunpack.c.l.b16 %v2359
  %v2610 = vunpack.c.h.b16 %v2359
  %v2611 = vunpack.c.l.b16 %v2360
  %v2612 = vunpack.c.h.b16 %v2360
  %v2613 = vunpack.c.l.b16 %v2361
  %v2614 = vunpack.c.h.b16 %v2361
  %v2615 = vunpack.c.l.b16 %v2362
  %v2616 = vunpack.c.h.b16 %v2362
  %v2617 = vunpack.c.l.b16 %v2363
  %v2618 = vunpack.c.h.b16 %v2363
  %v2619 = vunpack.c.l.b16 %v2364
  %v2620 = vunpack.c.h.b16 %v2364
  %v2621 = vunpack.c.l.b16 %v2365
  %v2622 = vunpack.c.h.b16 %v2365
  %v2623 = vunpack.c.l.b16 %v2366
  %v2624 = vunpack.c.h.b16 %v2366
  %v2625 = vunpack.c.l.b16 %v2367
  %v2626 = vunpack.c.h.b16 %v2367
  %v2627 = vunpack.c.l.b16 %v2368
  %v2628 = vunpack.c.h.b16 %v2368
  %v2629 = vunpack.c.l.b16 %v2369
  %v2630 = vunpack.c.h.b16 %v2369
  %v2631 = vunpack.c.l.b16 %v2370
  %v2632 = vunpack.c.h.b16 %v2370
  %v2633 = vunpack.c.l.b16 %v2371
  %v2634 = vunpack.c.h.b16 %v2371
  %v2635 = vunpack.c.l.b16 %v2372
  %v2636 = vunpack.c.h.b16 %v2372
  %v2637 = vunpack.c.l.b16 %v2373
  %v2638 = vunpack.c.h.b16 %v2373
  %v2639 = vunpack.c.l.b16 %v2374
  %v2640 = vunpack.c.h.b16 %v2374
  %v2641 = vunpack.c.l.b16 %v2375
  %v2642 = vunpack.c.h.b16 %v2375
  %v2643 = vunpack.c.l.b16 %v2376
  %v2644 = vunpack.c.h.b16 %v2376
  %v2645 = vunpack.c.l.b16 %v2377
  %v2646 = vunpack.c.h.b16 %v2377
  %v2647 = vunpack.c.l.b16 %v2378
  %v2648 = vunpack.c.h.b16 %v2378
  %v2649 = vunpack.c.l.b16 %v2379
  %v2650 = vunpack.c.h.b16 %v2379
  %v2651 = vunpack.c.l.b16 %v2380
  %v2652 = vunpack.c.h.b16 %v2380
  %v2653 = vunpack.c.l.b16 %v2381
  %v2654 = vunpack.c.h.b16 %v2381
  %v2655 = vunpack.c.l.b16 %v2382
  %v2656 = vunpack.c.h.b16 %v2382
  %v2657 = vunpack.c.l.b16 %v2383
  %v2658 = vunpack.c.h.b16 %v2383
  %v2659 = vunpack.c.l.b16 %v2384
  %v2660 = vunpack.c.h.b16 %v2384
  %v2661 = vunpack.c.l.b16 %v2385
  %v2662 = vunpack.c.h.b16 %v2385
  %v2663 = vunpack.c.l.b16 %v2386
  %v2664 = vunpack.c.h.b16 %v2386
  %v2665 = vunpack.c.l.b16 %v2387
  %v2666 = vunpack.c.h.b16 %v2387
  %v2667 = vunpack.c.l.b16 %v2388
  %v2668 = vunpack.c.h.b16 %v2388
  %v2669 = vunpack.c.l.b16 %v2389
  %v2670 = vunpack.c.h.b16 %v2389
  %v2671 = vunpack.c.l.b16 %v2390
  %v2672 = vunpack.c.h.b16 %v2390
  %v2673 = vunpack.c.l.b16 %v2391
  %v2674 = vunpack.c.h.b16 %v2391
  %v2675 = vunpack.c.l.b16 %v2392
  %v2676 = vunpack.c.h.b16 %v2392
  %v2677 = vunpack.c.l.b16 %v2393
  %v2678 = vunpack.c.h.b16 %v2393
  %v2679 = vunpack.c.l.b16 %v2394
  %v2680 = vunpack.c.h.b16 %v2394
  %v2681 = vunpack.c.l.b16 %v2395
  %v2682 = vunpack.c.h.b16 %v2395
  %v2683 = vunpack.c.l.b16 %v2396
  %v2684 = vunpack.c.h.b16 %v2396
  %v2685 = vunpack.c.l.b16 %v2397
  %v2686 = vunpack.c.h.b16 %v2397
  %v2687 = vunpack.c.l.b16 %v2398
  %v2688 = vunpack.c.h.b16 %v2398
  %v2689 = vunpack.c.l.b16 %v2399
  %v2690 = vunpack.c.h.b16 %v2399
  %v2691 = vunpack.c.l.b16 %v2400
  %v2692 = vunpack.c.h.b16 %v2400
  %v2693 = vunpack.c.l.b16 %v2401
  %v2694 = vunpack.c.h.b16 %v2401
  %v2695 = vunpack.c.l.b16 %v2402
  %v2696 = vunpack.c.h.b16 %v2402
  %v2697 = vunpack.c.l.b16 %v2403
  %v2698 = vunpack.c.h.b16 %v2403
  %v2699 = vunpack.c.l.b16 %v2404
  %v2700 = vunpack.c.h.b16 %v2404
  %v2701 = vunpack.c.l.b16 %v2405
  %v2702 = vunpack.c.h.b16 %v2405
  %v2703 = vunpack.c.l.b16 %v2406
  %v2704 = vunpack.c.h.b16 %v2406
  %v2705 = vunpack.c.l.b16 %v2407
  %v2706 = vunpack.c.h.b16 %v2407
  %v2707 = vunpack.c.l.b16 %v2408
  %v2708 = vunpack.c.h.b16 %v2408
  %v2709 = vunpack.c.l.b16 %v2409
  %v2710 = vunpack.c.h.b16 %v2409
  %v2711 = vunpack.c.l.b16 %v2410
  %v2712 = vunpack.c.h.b16 %v2410
  %v2713 = vunpack.c.l.b16 %v2411
  %v2714 = vunpack.c.h.b16 %v2411
  %v2715 = vpack.c.b16 %v2515, %v2513
  %v2716 = vpack.c.b16 %v2516, %v2514
  %v2717 = vpack.c.b16 %v2519, %v2517
  %v2718 = vpack.c.b16 %v2520, %v2518
  %v2719 = vpack.c.b16 %v2523, %v2521
  %v2720 = vpack.c.b16 %v2524, %v2522
  %v2721 = vpack.c.b16 %v2527, %v2525
  %v2722 = vpack.c.b16 %v2528, %v2526
  %v2723 = vpack.c.b16 %v2531, %v2529
  %v2724 = vpack.c.b16 %v2532, %v2530
  %v2725 = vpack.c.b16 %v2535, %v2533
  %v2726 = vpack.c.b16 %v2536, %v2534
  %v2727 = vpack.c.b16 %v2539, %v2537
  %v2728 = vpack.c.b16 %v2540, %v2538
  %v2729 = vpack.c.b16 %v2543, %v2541
  %v2730 = vpack.c.b16 %v2544, %v2542
  %v2731 = vpack.c.b16 %v2547, %v2545
  %v2732 = vpack.c.b16 %v2548, %v2546
  %v2733 = vpack.c.b16 %v2551, %v2549
  %v2734 = vpack.c.b16 %v2552, %v2550
  %v2735 = vpack.c.b16 %v2555, %v2553
  %v2736 = vpack.c.b16 %v2556, %v2554
  %v2737 = vpack.c.b16 %v2559, %v2557
  %v2738 = vpack.c.b16 %v2560, %v2558
  %v2739 = vpack.c.b16 %v2563, %v2561
  %v2740 = vpack.c.b16 %v2564, %v2562
  %v2741 = vpack.c.b16 %v2567, %v2565
  %v2742 = vpack.c.b16 %v2568, %v2566
  %v2743 = vpack.c.b16 %v2571, %v2569
  %v2744 = vpack.c.b16 %v2572, %v2570
  %v2745 = vpack.c.b16 %v2575, %v2573
  %v2746 = vpack.c.b16 %v2576, %v2574
  %v2747 = vpack.c.b16 %v2579, %v2577
  %v2748 = vpack.c.b16 %v2580, %v2578
  %v2749 = vpack.c.b16 %v2583, %v2581
  %v2750 = vpack.c.b16 %v2584, %v2582
  %v2751 = vpack.c.b16 %v2587, %v2585
  %v2752 = vpack.c.b16 %v2588, %v2586
  %v2753 = vpack.c.b16 %v2591, %v2589
  %v2754 = vpack.c.b16 %v2592, %v2590
  %v2755 = vpack.c.b16 %v2595, %v2593
  %v2756 = vpack.c.b16 %v2596, %v2594
  %v2757 = vpack.c.b16 %v2599, %v2597
  %v2758 = vpack.c.b16 %v2600, %v2598
  %v2759 = vpack.c.b16 %v2603, %v2601
  %v2760 = vpack.c.b16 %v2604, %v2602
  %v2761 = vpack.c.b16 %v2607, %v2605
  %v2762 = vpack.c.b16 %v2608, %v2606
  %v2763 = vpack.c.b16 %v2611, %v2609
  %v2764 = vpack.c.b16 %v2612, %v2610
  %v2765 = vpack.c.b16 %v2615, %v2613
  %v2766 = vpack.c.b16 %v2616, %v2614
  %v2767 = vpack.c.b16 %v2619, %v2617
  %v2768 = vpack.c.b16 %v2620, %v2618
  %v2769 = vpack.c.b16 %v2623, %v2621
  %v2770 = vpack.c.b16 %v2624, %v2622
  %v2771 = vpack.c.b16 %v2627, %v2625
  %v2772 = vpack.c.b16 %v2628, %v2626
  %v2773 = vpack.c.b16 %v2631, %v2629
  %v2774 = vpack.c.b16 %v2632, %v2630
  %v2775 = vpack.c.b16 %v2635, %v2633
  %v2776 = vpack.c.b16 %v2636, %v2634
  %v2777 = vpack.c.b16 %v2639, %v2637
  %v2778 = vpack.c.b16 %v2640, %v2638
  %v2779 = vpack.c.b16 %v2643, %v2641
  %v2780 = vpack.c.b16 %v2644, %v2642
  %v2781 = vpack.c.b16 %v2647, %v2645
  %v2782 = vpack.c.b16 %v2648, %v2646
  %v2783 = vpack.c.b16 %v2651, %v2649
  %v2784 = vpack.c.b16 %v2652, %v2650
  %v2785 = vpack.c.b16 %v2655, %v2653
  %v2786 = vpack.c.b16 %v2656, %v2654
  %v2787 = vpack.c.b16 %v2659, %v2657
  %v2788 = vpack.c.b16 %v2660, %v2658
  %v2789 = vpack.c.b16 %v2663, %v2661
  %v2790 = vpack.c.b16 %v2664, %v2662
  %v2791 = vpack.c.b16 %v2667, %v2665
  %v2792 = vpack.c.b16 %v2668, %v2666
  %v2793 = vpack.c.b16 %v2671, %v2669
  %v2794 = vpack.c.b16 %v2672, %v2670
  %v2795 = vpack.c.b16 %v2675, %v2673
  %v2796 = vpack.c.b16 %v2676, %v2674
  %v2797 = vpack.c.b16 %v2679, %v2677
  %v2798 = vpack.c.b16 %v2680, %v2678
  %v2799 = vpack.c.b16 %v2683, %v2681
  %v2800 = vpack.c.b16 %v2684, %v2682
  %v2801 = vpack.c.b16 %v2687, %v2685
  %v2802 = vpack.c.b16 %v2688, %v2686
  %v2803 = vpack.c.b16 %v2691, %v2689
  %v2804 = vpack.c.b16 %v2692, %v2690
  %v2805 = vpack.c.b16 %v2695, %v2693
  %v2806 = vpack.c.b16 %v2696, %v2694
  %v2807 = vpack.c.b16 %v2699, %v2697
  %v2808 = vpack.c.b16 %v2700, %v2698
  %v2809 = vpack.c.b16 %v2703, %v2701
  %v2810 = vpack.c.b16 %v2704, %v2702
  %v2811 = vpack.c.b16 %v2707, %v2705
  %v2812 = vpack.c.b16 %v2708, %v2706
  %v2813 = vpack.c.b16 %v2711, %v2709
  %v2814 = vpack.c.b16 %v2712, %v2710
  %v2815 = vpack.c.b16 %v2713, %v2713
  %v2816 = vpack.c.b16 %v2714, %v2714
  %vm2917 = vcmask 318464
  %v2919 = vsel %vm2917, %v2303, 0
  %vm2921 = vcmask 1042432
  %vm2922 = vcmask 1043456
  %v2923 = vsel %vm2921, 4294967295, 65535
  %v2924 = vsel %vm2922, %v2923, 0
  %v2926 = vand.u32 %v2815, %v2924
  %v2929 = vand.u32 %v2816, %v2924
  %2931 = vmatprep.subr.bf16.mxu0 %v2730
  %2932 = vmatpush1.bf16.msra.mxu0 %v2729
  %2933 = vmatprep.subr.bf16.mxu0 %v2728
  %2934 = vmatpush1.bf16.msra.mxu0 %v2727
  %2935 = vmatprep.subr.bf16.mxu0 %v2726
  %2936 = vmatpush1.bf16.msra.mxu0 %v2725
  %2937 = vmatprep.subr.bf16.mxu0 %v2724
  %2938 = vmatpush1.bf16.msra.mxu0 %v2723
  %2939 = vmatprep.subr.bf16.mxu0 %v2722
  %2940 = vmatpush1.bf16.msra.mxu0 %v2721
  %2941 = vmatprep.subr.bf16.mxu0 %v2720
  %2942 = vmatpush1.bf16.msra.mxu0 %v2719
  %2943 = vmatprep.subr.bf16.mxu0 %v2718
  %2944 = vmatpush1.bf16.msra.mxu0 %v2717
  %2945 = vmatprep.subr.bf16.mxu0 %v2716
  %2946 = vmatpush1.bf16.msra.mxu0 %v2715
  %2947 = vmatprep.subr.bf16.mxu0 %v2746
  %2948 = vmatpush2.bf16.msra.mxu0 %v2745
  %2949 = vmatprep.subr.bf16.mxu0 %v2744
  %2950 = vmatpush2.bf16.msra.mxu0 %v2743
  %2951 = vmatprep.subr.bf16.mxu0 %v2742
  %2952 = vmatpush2.bf16.msra.mxu0 %v2741
  %2953 = vmatprep.subr.bf16.mxu0 %v2740
  %2954 = vmatpush2.bf16.msra.mxu0 %v2739
  %2955 = vmatprep.subr.bf16.mxu0 %v2738
  %2956 = vmatpush2.bf16.msra.mxu0 %v2737
  %2957 = vmatprep.subr.bf16.mxu0 %v2736
  %2958 = vmatpush2.bf16.msra.mxu0 %v2735
  %2959 = vmatprep.subr.bf16.mxu0 %v2734
  %2960 = vmatpush2.bf16.msra.mxu0 %v2733
  %2961 = vmatprep.subr.bf16.mxu0 %v2732
  %2962 = vmatpush2.bf16.msra.mxu0 %v2731
  %2963 = vmatprep.mubr.bf16.mxu0 %v2298
  %2964 = vmatmul.mubr.bf16.gmra.mxu0 %v2297
  %v2965 = vpop.f32.mrf.mxu0
  %v2966 = vadd.f32 0.0, %v2965
  %v2967 = vpop.f32.mrf.mxu0
  %v2968 = vadd.f32 0.0, %v2967
  %v2969 = vpop.f32.mrf.mxu0
  %v2970 = vadd.f32 0.0, %v2969
  %v2971 = vpop.f32.mrf.mxu0
  %v2972 = vadd.f32 0.0, %v2971
  %2973 = vdwg.mxu0
  %2974 = vmatprep.subr.bf16.mxu0 %v2762
  %2975 = vmatpush1.bf16.msra.mxu0 %v2761
  %2976 = vmatprep.subr.bf16.mxu0 %v2760
  %2977 = vmatpush1.bf16.msra.mxu0 %v2759
  %2978 = vmatprep.subr.bf16.mxu0 %v2758
  %2979 = vmatpush1.bf16.msra.mxu0 %v2757
  %2980 = vmatprep.subr.bf16.mxu0 %v2756
  %2981 = vmatpush1.bf16.msra.mxu0 %v2755
  %2982 = vmatprep.subr.bf16.mxu0 %v2754
  %2983 = vmatpush1.bf16.msra.mxu0 %v2753
  %2984 = vmatprep.subr.bf16.mxu0 %v2752
  %2985 = vmatpush1.bf16.msra.mxu0 %v2751
  %2986 = vmatprep.subr.bf16.mxu0 %v2750
  %2987 = vmatpush1.bf16.msra.mxu0 %v2749
  %2988 = vmatprep.subr.bf16.mxu0 %v2748
  %2989 = vmatpush1.bf16.msra.mxu0 %v2747
  %2990 = vmatprep.subr.bf16.mxu0 %v2778
  %2991 = vmatpush2.bf16.msra.mxu0 %v2777
  %2992 = vmatprep.subr.bf16.mxu0 %v2776
  %2993 = vmatpush2.bf16.msra.mxu0 %v2775
  %2994 = vmatprep.subr.bf16.mxu0 %v2774
  %2995 = vmatpush2.bf16.msra.mxu0 %v2773
  %2996 = vmatprep.subr.bf16.mxu0 %v2772
  %2997 = vmatpush2.bf16.msra.mxu0 %v2771
  %2998 = vmatprep.subr.bf16.mxu0 %v2770
  %2999 = vmatpush2.bf16.msra.mxu0 %v2769
  %3000 = vmatprep.subr.bf16.mxu0 %v2768
  %3001 = vmatpush2.bf16.msra.mxu0 %v2767
  %3002 = vmatprep.subr.bf16.mxu0 %v2766
  %3003 = vmatpush2.bf16.msra.mxu0 %v2765
  %3004 = vmatprep.subr.bf16.mxu0 %v2764
  %3005 = vmatpush2.bf16.msra.mxu0 %v2763
  %3006 = vmatprep.mubr.bf16.mxu0 %v2300
  %3007 = vmatmul.mubr.bf16.gmra.mxu0 %v2299
  %v3008 = vpop.f32.mrf.mxu0
  %v3009 = vadd.f32 %v2966, %v3008
  %v3010 = vpop.f32.mrf.mxu0
  %v3011 = vadd.f32 %v2968, %v3010
  %v3012 = vpop.f32.mrf.mxu0
  %v3013 = vadd.f32 %v2970, %v3012
  %v3014 = vpop.f32.mrf.mxu0
  %v3015 = vadd.f32 %v2972, %v3014
  %3016 = vdwg.mxu0
  %3017 = vmatprep.subr.bf16.mxu0 %v2794
  %3018 = vmatpush1.bf16.msra.mxu0 %v2793
  %3019 = vmatprep.subr.bf16.mxu0 %v2792
  %3020 = vmatpush1.bf16.msra.mxu0 %v2791
  %3021 = vmatprep.subr.bf16.mxu0 %v2790
  %3022 = vmatpush1.bf16.msra.mxu0 %v2789
  %3023 = vmatprep.subr.bf16.mxu0 %v2788
  %3024 = vmatpush1.bf16.msra.mxu0 %v2787
  %3025 = vmatprep.subr.bf16.mxu0 %v2786
  %3026 = vmatpush1.bf16.msra.mxu0 %v2785
  %3027 = vmatprep.subr.bf16.mxu0 %v2784
  %3028 = vmatpush1.bf16.msra.mxu0 %v2783
  %3029 = vmatprep.subr.bf16.mxu0 %v2782
  %3030 = vmatpush1.bf16.msra.mxu0 %v2781
  %3031 = vmatprep.subr.bf16.mxu0 %v2780
  %3032 = vmatpush1.bf16.msra.mxu0 %v2779
  %3033 = vmatprep.subr.bf16.mxu0 %v2810
  %3034 = vmatpush2.bf16.msra.mxu0 %v2809
  %3035 = vmatprep.subr.bf16.mxu0 %v2808
  %3036 = vmatpush2.bf16.msra.mxu0 %v2807
  %3037 = vmatprep.subr.bf16.mxu0 %v2806
  %3038 = vmatpush2.bf16.msra.mxu0 %v2805
  %3039 = vmatprep.subr.bf16.mxu0 %v2804
  %3040 = vmatpush2.bf16.msra.mxu0 %v2803
  %3041 = vmatprep.subr.bf16.mxu0 %v2802
  %3042 = vmatpush2.bf16.msra.mxu0 %v2801
  %3043 = vmatprep.subr.bf16.mxu0 %v2800
  %3044 = vmatpush2.bf16.msra.mxu0 %v2799
  %3045 = vmatprep.subr.bf16.mxu0 %v2798
  %3046 = vmatpush2.bf16.msra.mxu0 %v2797
  %3047 = vmatprep.subr.bf16.mxu0 %v2796
  %3048 = vmatpush2.bf16.msra.mxu0 %v2795
  %3049 = vmatprep.mubr.bf16.mxu0 %v2302
  %3050 = vmatmul.mubr.bf16.gmra.mxu0 %v2301
  %v3051 = vpop.f32.mrf.mxu0
  %v3052 = vadd.f32 %v3009, %v3051
  %v3053 = vpop.f32.mrf.mxu0
  %v3054 = vadd.f32 %v3011, %v3053
  %v3055 = vpop.f32.mrf.mxu0
  %v3056 = vadd.f32 %v3013, %v3055
  %v3057 = vpop.f32.mrf.mxu0
  %v3058 = vadd.f32 %v3015, %v3057
  %3059 = vdwg.mxu0
  %3060 = vmatprep.subr.bf16.mxu0 0
  %3061 = vmatpush1.bf16.msra.mxu0 0
  %3062 = vmatprep.subr.bf16.mxu0 0
  %3063 = vmatpush1.bf16.msra.mxu0 0
  %3064 = vmatprep.subr.bf16.mxu0 0
  %3065 = vmatpush1.bf16.msra.mxu0 0
  %3066 = vmatprep.subr.bf16.mxu0 0
  %3067 = vmatpush1.bf16.msra.mxu0 0
  %3068 = vmatprep.subr.bf16.mxu0 0
  %3069 = vmatpush1.bf16.msra.mxu0 0
  %3070 = vmatprep.subr.bf16.mxu0 %v2929
  %3071 = vmatpush1.bf16.msra.mxu0 %v2926
  %3072 = vmatprep.subr.bf16.mxu0 %v2814
  %3073 = vmatpush1.bf16.msra.mxu0 %v2813
  %3074 = vmatprep.subr.bf16.mxu0 %v2812
  %3075 = vmatpush1.bf16.msra.mxu0 %v2811
  %3076 = vmatprep.subr.bf16.mxu0 0
  %3077 = vmatpush2.bf16.msra.mxu0 0
  %3078 = vmatprep.subr.bf16.mxu0 0
  %3079 = vmatpush2.bf16.msra.mxu0 0
  %3080 = vmatprep.subr.bf16.mxu0 0
  %3081 = vmatpush2.bf16.msra.mxu0 0
  %3082 = vmatprep.subr.bf16.mxu0 0
  %3083 = vmatpush2.bf16.msra.mxu0 0
  %3084 = vmatprep.subr.bf16.mxu0 0
  %3085 = vmatpush2.bf16.msra.mxu0 0
  %3086 = vmatprep.subr.bf16.mxu0 0
  %3087 = vmatpush2.bf16.msra.mxu0 0
  %3088 = vmatprep.subr.bf16.mxu0 0
  %3089 = vmatpush2.bf16.msra.mxu0 0
  %3090 = vmatprep.subr.bf16.mxu0 0
  %3091 = vmatpush2.bf16.msra.mxu0 0
  %3092 = vmatprep.mubr.bf16.mxu0 0
  %3093 = vmatmul.mubr.bf16.gmra.mxu0 %v2919
  %v3094 = vpop.f32.mrf.mxu0
  %v3095 = vadd.f32 %v3052, %v3094
  %v3096 = vpop.f32.mrf.mxu0
  %v3097 = vadd.f32 %v3054, %v3096
  %v3098 = vpop.f32.mrf.mxu0
  %v3099 = vadd.f32 %v3056, %v3098
  %v3100 = vpop.f32.mrf.mxu0
  %v3101 = vadd.f32 %v3058, %v3100
  %3102 = vdwg.mxu0
  %3103 = vst [vmem:[#allocation3] sm:$0xff] %v3095
  %3104 = vst [vmem:[#allocation3 + $0x8] sm:$0xff] %v3097
  %3105 = vst [vmem:[#allocation3 + $0x20] sm:$0xff] %v3099
  %3106 = vst [vmem:[#allocation3 + $0x28] sm:$0xff] %v3101
  %3114 = vrot.lane.b32.xlu0 %v2304, 124
  %v3115 = vpop.permute.xlu0 %3114
  %3116 = vrot.lane.b32.xlu0 %v2305, 124
  %v3117 = vpop.permute.xlu0 %3116
  %3118 = vrot.lane.b32.xlu0 %v2306, 124
  %v3119 = vpop.permute.xlu0 %3118
  %3120 = vrot.lane.b32.xlu0 %v2307, 124
  %v3121 = vpop.permute.xlu0 %3120
  %3122 = vrot.lane.b32.xlu0 %v2308, 124
  %v3123 = vpop.permute.xlu0 %3122
  %3124 = vrot.lane.b32.xlu0 %v2309, 124
  %v3125 = vpop.permute.xlu0 %3124
  %3126 = vrot.lane.b32.xlu0 %v2310, 124
  %v3127 = vpop.permute.xlu0 %3126
  %vm3128 = vcmask 1014784
  %v3129 = vsel %vm3128, %v3115, %v3117
  %v3130 = vsel %vm3128, %v3117, %v3119
  %v3131 = vsel %vm3128, %v3119, %v3121
  %v3132 = vsel %vm3128, %v3121, %v3123
  %v3133 = vsel %vm3128, %v3123, %v3125
  %v3134 = vsel %vm3128, %v3125, %v3127
  %v3142 = vsel %vm2917, %v3127, 0
  %3144 = vmatprep.subr.bf16.mxu0 %v2730
  %3145 = vmatpush1.bf16.msra.mxu0 %v2729
  %3146 = vmatprep.subr.bf16.mxu0 %v2728
  %3147 = vmatpush1.bf16.msra.mxu0 %v2727
  %3148 = vmatprep.subr.bf16.mxu0 %v2726
  %3149 = vmatpush1.bf16.msra.mxu0 %v2725
  %3150 = vmatprep.subr.bf16.mxu0 %v2724
  %3151 = vmatpush1.bf16.msra.mxu0 %v2723
  %3152 = vmatprep.subr.bf16.mxu0 %v2722
  %3153 = vmatpush1.bf16.msra.mxu0 %v2721
  %3154 = vmatprep.subr.bf16.mxu0 %v2720
  %3155 = vmatpush1.bf16.msra.mxu0 %v2719
  %3156 = vmatprep.subr.bf16.mxu0 %v2718
  %3157 = vmatpush1.bf16.msra.mxu0 %v2717
  %3158 = vmatprep.subr.bf16.mxu0 %v2716
  %3159 = vmatpush1.bf16.msra.mxu0 %v2715
  %3160 = vmatprep.subr.bf16.mxu0 %v2746
  %3161 = vmatpush2.bf16.msra.mxu0 %v2745
  %3162 = vmatprep.subr.bf16.mxu0 %v2744
  %3163 = vmatpush2.bf16.msra.mxu0 %v2743
  %3164 = vmatprep.subr.bf16.mxu0 %v2742
  %3165 = vmatpush2.bf16.msra.mxu0 %v2741
  %3166 = vmatprep.subr.bf16.mxu0 %v2740
  %3167 = vmatpush2.bf16.msra.mxu0 %v2739
  %3168 = vmatprep.subr.bf16.mxu0 %v2738
  %3169 = vmatpush2.bf16.msra.mxu0 %v2737
  %3170 = vmatprep.subr.bf16.mxu0 %v2736
  %3171 = vmatpush2.bf16.msra.mxu0 %v2735
  %3172 = vmatprep.subr.bf16.mxu0 %v2734
  %3173 = vmatpush2.bf16.msra.mxu0 %v2733
  %3174 = vmatprep.subr.bf16.mxu0 %v2732
  %3175 = vmatpush2.bf16.msra.mxu0 %v2731
  %3176 = vmatprep.mubr.bf16.mxu0 %v3130
  %3177 = vmatmul.mubr.bf16.gmra.mxu0 %v3129
  %v3178 = vpop.f32.mrf.mxu0
  %v3179 = vadd.f32 0.0, %v3178
  %v3180 = vpop.f32.mrf.mxu0
  %v3181 = vadd.f32 0.0, %v3180
  %v3182 = vpop.f32.mrf.mxu0
  %v3183 = vadd.f32 0.0, %v3182
  %v3184 = vpop.f32.mrf.mxu0
  %v3185 = vadd.f32 0.0, %v3184
  %3186 = vdwg.mxu0
  %3187 = vmatprep.subr.bf16.mxu0 %v2762
  %3188 = vmatpush1.bf16.msra.mxu0 %v2761
  %3189 = vmatprep.subr.bf16.mxu0 %v2760
  %3190 = vmatpush1.bf16.msra.mxu0 %v2759
  %3191 = vmatprep.subr.bf16.mxu0 %v2758
  %3192 = vmatpush1.bf16.msra.mxu0 %v2757
  %3193 = vmatprep.subr.bf16.mxu0 %v2756
  %3194 = vmatpush1.bf16.msra.mxu0 %v2755
  %3195 = vmatprep.subr.bf16.mxu0 %v2754
  %3196 = vmatpush1.bf16.msra.mxu0 %v2753
  %3197 = vmatprep.subr.bf16.mxu0 %v2752
  %3198 = vmatpush1.bf16.msra.mxu0 %v2751
  %3199 = vmatprep.subr.bf16.mxu0 %v2750
  %3200 = vmatpush1.bf16.msra.mxu0 %v2749
  %3201 = vmatprep.subr.bf16.mxu0 %v2748
  %3202 = vmatpush1.bf16.msra.mxu0 %v2747
  %3203 = vmatprep.subr.bf16.mxu0 %v2778
  %3204 = vmatpush2.bf16.msra.mxu0 %v2777
  %3205 = vmatprep.subr.bf16.mxu0 %v2776
  %3206 = vmatpush2.bf16.msra.mxu0 %v2775
  %3207 = vmatprep.subr.bf16.mxu0 %v2774
  %3208 = vmatpush2.bf16.msra.mxu0 %v2773
  %3209 = vmatprep.subr.bf16.mxu0 %v2772
  %3210 = vmatpush2.bf16.msra.mxu0 %v2771
  %3211 = vmatprep.subr.bf16.mxu0 %v2770
  %3212 = vmatpush2.bf16.msra.mxu0 %v2769
  %3213 = vmatprep.subr.bf16.mxu0 %v2768
  %3214 = vmatpush2.bf16.msra.mxu0 %v2767
  %3215 = vmatprep.subr.bf16.mxu0 %v2766
  %3216 = vmatpush2.bf16.msra.mxu0 %v2765
  %3217 = vmatprep.subr.bf16.mxu0 %v2764
  %3218 = vmatpush2.bf16.msra.mxu0 %v2763
  %3219 = vmatprep.mubr.bf16.mxu0 %v3132
  %3220 = vmatmul.mubr.bf16.gmra.mxu0 %v3131
  %v3221 = vpop.f32.mrf.mxu0
  %v3222 = vadd.f32 %v3179, %v3221
  %v3223 = vpop.f32.mrf.mxu0
  %v3224 = vadd.f32 %v3181, %v3223
  %v3225 = vpop.f32.mrf.mxu0
  %v3226 = vadd.f32 %v3183, %v3225
  %v3227 = vpop.f32.mrf.mxu0
  %v3228 = vadd.f32 %v3185, %v3227
  %3229 = vdwg.mxu0
  %3230 = vmatprep.subr.bf16.mxu0 %v2794
  %3231 = vmatpush1.bf16.msra.mxu0 %v2793
  %3232 = vmatprep.subr.bf16.mxu0 %v2792
  %3233 = vmatpush1.bf16.msra.mxu0 %v2791
  %3234 = vmatprep.subr.bf16.mxu0 %v2790
  %3235 = vmatpush1.bf16.msra.mxu0 %v2789
  %3236 = vmatprep.subr.bf16.mxu0 %v2788
  %3237 = vmatpush1.bf16.msra.mxu0 %v2787
  %3238 = vmatprep.subr.bf16.mxu0 %v2786
  %3239 = vmatpush1.bf16.msra.mxu0 %v2785
  %3240 = vmatprep.subr.bf16.mxu0 %v2784
  %3241 = vmatpush1.bf16.msra.mxu0 %v2783
  %3242 = vmatprep.subr.bf16.mxu0 %v2782
  %3243 = vmatpush1.bf16.msra.mxu0 %v2781
  %3244 = vmatprep.subr.bf16.mxu0 %v2780
  %3245 = vmatpush1.bf16.msra.mxu0 %v2779
  %3246 = vmatprep.subr.bf16.mxu0 %v2810
  %3247 = vmatpush2.bf16.msra.mxu0 %v2809
  %3248 = vmatprep.subr.bf16.mxu0 %v2808
  %3249 = vmatpush2.bf16.msra.mxu0 %v2807
  %3250 = vmatprep.subr.bf16.mxu0 %v2806
  %3251 = vmatpush2.bf16.msra.mxu0 %v2805
  %3252 = vmatprep.subr.bf16.mxu0 %v2804
  %3253 = vmatpush2.bf16.msra.mxu0 %v2803
  %3254 = vmatprep.subr.bf16.mxu0 %v2802
  %3255 = vmatpush2.bf16.msra.mxu0 %v2801
  %3256 = vmatprep.subr.bf16.mxu0 %v2800
  %3257 = vmatpush2.bf16.msra.mxu0 %v2799
  %3258 = vmatprep.subr.bf16.mxu0 %v2798
  %3259 = vmatpush2.bf16.msra.mxu0 %v2797
  %3260 = vmatprep.subr.bf16.mxu0 %v2796
  %3261 = vmatpush2.bf16.msra.mxu0 %v2795
  %3262 = vmatprep.mubr.bf16.mxu0 %v3134
  %3263 = vmatmul.mubr.bf16.gmra.mxu0 %v3133
  %v3264 = vpop.f32.mrf.mxu0
  %v3265 = vadd.f32 %v3222, %v3264
  %v3266 = vpop.f32.mrf.mxu0
  %v3267 = vadd.f32 %v3224, %v3266
  %v3268 = vpop.f32.mrf.mxu0
  %v3269 = vadd.f32 %v3226, %v3268
  %v3270 = vpop.f32.mrf.mxu0
  %v3271 = vadd.f32 %v3228, %v3270
  %3272 = vdwg.mxu0
  %3273 = vmatprep.subr.bf16.mxu0 0
  %3274 = vmatpush1.bf16.msra.mxu0 0
  %3275 = vmatprep.subr.bf16.mxu0 0
  %3276 = vmatpush1.bf16.msra.mxu0 0
  %3277 = vmatprep.subr.bf16.mxu0 0
  %3278 = vmatpush1.bf16.msra.mxu0 0
  %3279 = vmatprep.subr.bf16.mxu0 0
  %3280 = vmatpush1.bf16.msra.mxu0 0
  %3281 = vmatprep.subr.bf16.mxu0 0
  %3282 = vmatpush1.bf16.msra.mxu0 0
  %3283 = vmatprep.subr.bf16.mxu0 %v2929
  %3284 = vmatpush1.bf16.msra.mxu0 %v2926
  %3285 = vmatprep.subr.bf16.mxu0 %v2814
  %3286 = vmatpush1.bf16.msra.mxu0 %v2813
  %3287 = vmatprep.subr.bf16.mxu0 %v2812
  %3288 = vmatpush1.bf16.msra.mxu0 %v2811
  %3289 = vmatprep.subr.bf16.mxu0 0
  %3290 = vmatpush2.bf16.msra.mxu0 0
  %3291 = vmatprep.subr.bf16.mxu0 0
  %3292 = vmatpush2.bf16.msra.mxu0 0
  %3293 = vmatprep.subr.bf16.mxu0 0
  %3294 = vmatpush2.bf16.msra.mxu0 0
  %3295 = vmatprep.subr.bf16.mxu0 0
  %3296 = vmatpush2.bf16.msra.mxu0 0
  %3297 = vmatprep.subr.bf16.mxu0 0
  %3298 = vmatpush2.bf16.msra.mxu0 0
  %3299 = vmatprep.subr.bf16.mxu0 0
  %3300 = vmatpush2.bf16.msra.mxu0 0
  %3301 = vmatprep.subr.bf16.mxu0 0
  %3302 = vmatpush2.bf16.msra.mxu0 0
  %3303 = vmatprep.subr.bf16.mxu0 0
  %3304 = vmatpush2.bf16.msra.mxu0 0
  %3305 = vmatprep.mubr.bf16.mxu0 0
  %3306 = vmatmul.mubr.bf16.gmra.mxu0 %v3142
  %v3307 = vpop.f32.mrf.mxu0
  %v3308 = vadd.f32 %v3265, %v3307
  %v3309 = vpop.f32.mrf.mxu0
  %v3310 = vadd.f32 %v3267, %v3309
  %v3311 = vpop.f32.mrf.mxu0
  %v3312 = vadd.f32 %v3269, %v3311
  %v3313 = vpop.f32.mrf.mxu0
  %v3314 = vadd.f32 %v3271, %v3313
  %3315 = vdwg.mxu0
  %3316 = vst [vmem:[#allocation3 + $0x10] sm:$0xff] %v3308
  %3317 = vst [vmem:[#allocation3 + $0x18] sm:$0xff] %v3310
  %3318 = vst [vmem:[#allocation3 + $0x30] sm:$0xff] %v3312
  %3319 = vst [vmem:[#allocation3 + $0x38] sm:$0xff] %v3314
  %v3320 = vld [vmem:[#allocation3] sm:$0xff]
  %v3321 = vld [vmem:[#allocation3 + $0x8] sm:$0xff]
  %v3322 = vld [vmem:[#allocation3 + $0x10] sm:$0xff]
  %v3323 = vld [vmem:[#allocation3 + $0x18] sm:$0xff]
  %v3324 = vld [vmem:[#allocation3 + $0x20] sm:$0xff]
  %v3325 = vld [vmem:[#allocation3 + $0x28] sm:$0xff]
  %v3326 = vld [vmem:[#allocation3 + $0x30] sm:$0xff]
  %v3327 = vld [vmem:[#allocation3 + $0x38] sm:$0xff]
  %3328 = vst [vmem:[#allocation2] sm:$0xff] %v3320
  %3329 = vst [vmem:[#allocation2 + $0x8] sm:$0xff] %v3321
  %3330 = vst [vmem:[#allocation2 + $0x10] sm:$0xff] %v3322
  %vm3331 = vcmask 769024
  %3332 = vst.msk [vmem:[#allocation2 + $0x18] sm:$0xff] %vm3331, %v3323
  %3333 = vst [vmem:[#allocation2 + $0x20] sm:$0xff] %v3324
  %3334 = vst [vmem:[#allocation2 + $0x28] sm:$0xff] %v3325
  %3335 = vst [vmem:[#allocation2 + $0x30] sm:$0xff] %v3326
  %3336 = vst.msk [vmem:[#allocation2 + $0x38] sm:$0xff] %vm3331, %v3327
  %3345 = vrot.lane.b32.xlu0 %v3320, 127
  %v3346 = vpop.permute.xlu0 %3345
  %3347 = vrot.lane.b32.xlu0 %v3321, 127
  %v3348 = vpop.permute.xlu0 %3347
  %3349 = vrot.lane.b32.xlu0 %v3322, 127
  %v3350 = vpop.permute.xlu0 %3349
  %3351 = vrot.lane.b32.xlu0 %v3323, 127
  %v3352 = vpop.permute.xlu0 %3351
  %3353 = vrot.lane.b32.xlu0 %v3324, 127
  %v3354 = vpop.permute.xlu0 %3353
  %3355 = vrot.lane.b32.xlu0 %v3325, 127
  %v3356 = vpop.permute.xlu0 %3355
  %3357 = vrot.lane.b32.xlu0 %v3326, 127
  %v3358 = vpop.permute.xlu0 %3357
  %3359 = vrot.lane.b32.xlu0 %v3327, 127
  %v3360 = vpop.permute.xlu0 %3359
  %v3361 = vsel %vm302, %v3346, %v3348
  %v3362 = vsel %vm302, %v3348, %v3350
  %v3363 = vsel %vm302, %v3350, %v3352
  %v3364 = vsel %vm302, %v3354, %v3356
  %v3365 = vsel %vm302, %v3356, %v3358
  %v3366 = vsel %vm302, %v3358, %v3360
  %3375 = vst [vmem:[#allocation2 + $0x40] sm:$0xff] %v3361
  %3376 = vst [vmem:[#allocation2 + $0x48] sm:$0xff] %v3362
  %3377 = vst [vmem:[#allocation2 + $0x50] sm:$0xff] %v3363
  %3378 = vst.msk [vmem:[#allocation2 + $0x58] sm:$0xff] %vm3331, %v3352
  %3379 = vst [vmem:[#allocation2 + $0x60] sm:$0xff] %v3364
  %3380 = vst [vmem:[#allocation2 + $0x68] sm:$0xff] %v3365
  %3381 = vst [vmem:[#allocation2 + $0x70] sm:$0xff] %v3366
  %3382 = vst.msk [vmem:[#allocation2 + $0x78] sm:$0xff] %vm3331, %v3360
  %3383 = vrot.lane.b32.xlu0 %v3320, 126
  %v3384 = vpop.permute.xlu0 %3383
  %3385 = vrot.lane.b32.xlu0 %v3321, 126
  %v3386 = vpop.permute.xlu0 %3385
  %3387 = vrot.lane.b32.xlu0 %v3322, 126
  %v3388 = vpop.permute.xlu0 %3387
  %3389 = vrot.lane.b32.xlu0 %v3323, 126
  %v3390 = vpop.permute.xlu0 %3389
  %3391 = vrot.lane.b32.xlu0 %v3324, 126
  %v3392 = vpop.permute.xlu0 %3391
  %3393 = vrot.lane.b32.xlu0 %v3325, 126
  %v3394 = vpop.permute.xlu0 %3393
  %3395 = vrot.lane.b32.xlu0 %v3326, 126
  %v3396 = vpop.permute.xlu0 %3395
  %3397 = vrot.lane.b32.xlu0 %v3327, 126
  %v3398 = vpop.permute.xlu0 %3397
  %v3399 = vsel %vm505, %v3384, %v3386
  %v3400 = vsel %vm505, %v3386, %v3388
  %v3401 = vsel %vm505, %v3388, %v3390
  %v3402 = vsel %vm505, %v3392, %v3394
  %v3403 = vsel %vm505, %v3394, %v3396
  %v3404 = vsel %vm505, %v3396, %v3398
  %3413 = vst [vmem:[#allocation2 + $0x80] sm:$0xff] %v3399
  %3414 = vst [vmem:[#allocation2 + $0x88] sm:$0xff] %v3400
  %3415 = vst [vmem:[#allocation2 + $0x90] sm:$0xff] %v3401
  %3416 = vst.msk [vmem:[#allocation2 + $0x98] sm:$0xff] %vm3331, %v3390
  %3417 = vst [vmem:[#allocation2 + $0xa0] sm:$0xff] %v3402
  %3418 = vst [vmem:[#allocation2 + $0xa8] sm:$0xff] %v3403
  %3419 = vst [vmem:[#allocation2 + $0xb0] sm:$0xff] %v3404
  %3420 = vst.msk [vmem:[#allocation2 + $0xb8] sm:$0xff] %vm3331, %v3398
  %3421 = vrot.lane.b32.xlu0 %v3320, 112
  %v3422 = vpop.permute.xlu0 %3421
  %3423 = vrot.lane.b32.xlu0 %v3321, 112
  %v3424 = vpop.permute.xlu0 %3423
  %3425 = vrot.lane.b32.xlu0 %v3322, 112
  %v3426 = vpop.permute.xlu0 %3425
  %3427 = vrot.lane.b32.xlu0 %v3323, 112
  %v3428 = vpop.permute.xlu0 %3427
  %3429 = vrot.lane.b32.xlu0 %v3324, 112
  %v3430 = vpop.permute.xlu0 %3429
  %3431 = vrot.lane.b32.xlu0 %v3325, 112
  %v3432 = vpop.permute.xlu0 %3431
  %3433 = vrot.lane.b32.xlu0 %v3326, 112
  %v3434 = vpop.permute.xlu0 %3433
  %3435 = vrot.lane.b32.xlu0 %v3327, 112
  %v3436 = vpop.permute.xlu0 %3435
  %vm3437 = vcmask 916480
  %v3438 = vsel %vm3437, %v3422, %v3424
  %v3439 = vsel %vm3437, %v3424, %v3426
  %v3440 = vsel %vm3437, %v3426, %v3428
  %v3441 = vsel %vm3437, %v3430, %v3432
  %v3442 = vsel %vm3437, %v3432, %v3434
  %v3443 = vsel %vm3437, %v3434, %v3436
  %3452 = vst [vmem:[#allocation2 + $0xc0] sm:$0xff] %v3438
  %3453 = vst [vmem:[#allocation2 + $0xc8] sm:$0xff] %v3439
  %3454 = vst [vmem:[#allocation2 + $0xd0] sm:$0xff] %v3440
  %3455 = vst.msk [vmem:[#allocation2 + $0xd8] sm:$0xff] %vm3331, %v3428
  %3456 = vst [vmem:[#allocation2 + $0xe0] sm:$0xff] %v3441
  %3457 = vst [vmem:[#allocation2 + $0xe8] sm:$0xff] %v3442
  %3458 = vst [vmem:[#allocation2 + $0xf0] sm:$0xff] %v3443
  %3459 = vst.msk [vmem:[#allocation2 + $0xf8] sm:$0xff] %vm3331, %v3436
  %3460 = vrot.lane.b32.xlu0 %v3320, 111
  %v3461 = vpop.permute.xlu0 %3460
  %3462 = vrot.lane.b32.xlu0 %v3321, 111
  %v3463 = vpop.permute.xlu0 %3462
  %3464 = vrot.lane.b32.xlu0 %v3322, 111
  %v3465 = vpop.permute.xlu0 %3464
  %3466 = vrot.lane.b32.xlu0 %v3323, 111
  %v3467 = vpop.permute.xlu0 %3466
  %3468 = vrot.lane.b32.xlu0 %v3324, 111
  %v3469 = vpop.permute.xlu0 %3468
  %3470 = vrot.lane.b32.xlu0 %v3325, 111
  %v3471 = vpop.permute.xlu0 %3470
  %3472 = vrot.lane.b32.xlu0 %v3326, 111
  %v3473 = vpop.permute.xlu0 %3472
  %3474 = vrot.lane.b32.xlu0 %v3327, 111
  %v3475 = vpop.permute.xlu0 %3474
  %vm3476 = vcmask 908288
  %v3477 = vsel %vm3476, %v3461, %v3463
  %v3478 = vsel %vm3476, %v3463, %v3465
  %v3479 = vsel %vm3476, %v3465, %v3467
  %v3480 = vsel %vm3476, %v3469, %v3471
  %v3481 = vsel %vm3476, %v3471, %v3473
  %v3482 = vsel %vm3476, %v3473, %v3475
  %3491 = vst [vmem:[#allocation2 + $0x100] sm:$0xff] %v3477
  %3492 = vst [vmem:[#allocation2 + $0x108] sm:$0xff] %v3478
  %3493 = vst [vmem:[#allocation2 + $0x110] sm:$0xff] %v3479
  %3494 = vst.msk [vmem:[#allocation2 + $0x118] sm:$0xff] %vm3331, %v3467
  %3495 = vst [vmem:[#allocation2 + $0x120] sm:$0xff] %v3480
  %3496 = vst [vmem:[#allocation2 + $0x128] sm:$0xff] %v3481
  %3497 = vst [vmem:[#allocation2 + $0x130] sm:$0xff] %v3482
  %3498 = vst.msk [vmem:[#allocation2 + $0x138] sm:$0xff] %vm3331, %v3475
  %3499 = vrot.lane.b32.xlu0 %v3320, 110
  %v3500 = vpop.permute.xlu0 %3499
  %3501 = vrot.lane.b32.xlu0 %v3321, 110
  %v3502 = vpop.permute.xlu0 %3501
  %3503 = vrot.lane.b32.xlu0 %v3322, 110
  %v3504 = vpop.permute.xlu0 %3503
  %3505 = vrot.lane.b32.xlu0 %v3323, 110
  %v3506 = vpop.permute.xlu0 %3505
  %3507 = vrot.lane.b32.xlu0 %v3324, 110
  %v3508 = vpop.permute.xlu0 %3507
  %3509 = vrot.lane.b32.xlu0 %v3325, 110
  %v3510 = vpop.permute.xlu0 %3509
  %3511 = vrot.lane.b32.xlu0 %v3326, 110
  %v3512 = vpop.permute.xlu0 %3511
  %3513 = vrot.lane.b32.xlu0 %v3327, 110
  %v3514 = vpop.permute.xlu0 %3513
  %vm3515 = vcmask 900096
  %v3516 = vsel %vm3515, %v3500, %v3502
  %v3517 = vsel %vm3515, %v3502, %v3504
  %v3518 = vsel %vm3515, %v3504, %v3506
  %v3519 = vsel %vm3515, %v3508, %v3510
  %v3520 = vsel %vm3515, %v3510, %v3512
  %v3521 = vsel %vm3515, %v3512, %v3514
  %3530 = vst [vmem:[#allocation2 + $0x140] sm:$0xff] %v3516
  %3531 = vst [vmem:[#allocation2 + $0x148] sm:$0xff] %v3517
  %3532 = vst [vmem:[#allocation2 + $0x150] sm:$0xff] %v3518
  %3533 = vst.msk [vmem:[#allocation2 + $0x158] sm:$0xff] %vm3331, %v3506
  %3534 = vst [vmem:[#allocation2 + $0x160] sm:$0xff] %v3519
  %3535 = vst [vmem:[#allocation2 + $0x168] sm:$0xff] %v3520
  %3536 = vst [vmem:[#allocation2 + $0x170] sm:$0xff] %v3521
  %3537 = vst.msk [vmem:[#allocation2 + $0x178] sm:$0xff] %vm3331, %v3514
  %3538 = vrot.lane.b32.xlu0 %v3320, 96
  %v3539 = vpop.permute.xlu0 %3538
  %3540 = vrot.lane.b32.xlu0 %v3321, 96
  %v3541 = vpop.permute.xlu0 %3540
  %3542 = vrot.lane.b32.xlu0 %v3322, 96
  %v3543 = vpop.permute.xlu0 %3542
  %3544 = vrot.lane.b32.xlu0 %v3323, 96
  %v3545 = vpop.permute.xlu0 %3544
  %3546 = vrot.lane.b32.xlu0 %v3324, 96
  %v3547 = vpop.permute.xlu0 %3546
  %3548 = vrot.lane.b32.xlu0 %v3325, 96
  %v3549 = vpop.permute.xlu0 %3548
  %3550 = vrot.lane.b32.xlu0 %v3326, 96
  %v3551 = vpop.permute.xlu0 %3550
  %3552 = vrot.lane.b32.xlu0 %v3327, 96
  %v3553 = vpop.permute.xlu0 %3552
  %v3554 = vsel %vm1114, %v3539, %v3541
  %v3555 = vsel %vm1114, %v3541, %v3543
  %v3556 = vsel %vm1114, %v3543, %v3545
  %v3557 = vsel %vm1114, %v3547, %v3549
  %v3558 = vsel %vm1114, %v3549, %v3551
  %v3559 = vsel %vm1114, %v3551, %v3553
  %3568 = vst [vmem:[#allocation2 + $0x180] sm:$0xff] %v3554
  %3569 = vst [vmem:[#allocation2 + $0x188] sm:$0xff] %v3555
  %3570 = vst [vmem:[#allocation2 + $0x190] sm:$0xff] %v3556
  %3571 = vst.msk [vmem:[#allocation2 + $0x198] sm:$0xff] %vm3331, %v3545
  %3572 = vst [vmem:[#allocation2 + $0x1a0] sm:$0xff] %v3557
  %3573 = vst [vmem:[#allocation2 + $0x1a8] sm:$0xff] %v3558
  %3574 = vst [vmem:[#allocation2 + $0x1b0] sm:$0xff] %v3559
  %3575 = vst.msk [vmem:[#allocation2 + $0x1b8] sm:$0xff] %vm3331, %v3553
  %3576 = vrot.lane.b32.xlu0 %v3320, 95
  %v3577 = vpop.permute.xlu0 %3576
  %3578 = vrot.lane.b32.xlu0 %v3321, 95
  %v3579 = vpop.permute.xlu0 %3578
  %3580 = vrot.lane.b32.xlu0 %v3322, 95
  %v3581 = vpop.permute.xlu0 %3580
  %3582 = vrot.lane.b32.xlu0 %v3323, 95
  %v3583 = vpop.permute.xlu0 %3582
  %3584 = vrot.lane.b32.xlu0 %v3324, 95
  %v3585 = vpop.permute.xlu0 %3584
  %3586 = vrot.lane.b32.xlu0 %v3325, 95
  %v3587 = vpop.permute.xlu0 %3586
  %3588 = vrot.lane.b32.xlu0 %v3326, 95
  %v3589 = vpop.permute.xlu0 %3588
  %3590 = vrot.lane.b32.xlu0 %v3327, 95
  %v3591 = vpop.permute.xlu0 %3590
  %vm3592 = vcmask 777216
  %v3593 = vsel %vm3592, %v3577, %v3579
  %v3594 = vsel %vm3592, %v3579, %v3581
  %v3595 = vsel %vm3592, %v3581, %v3583
  %v3596 = vsel %vm3592, %v3585, %v3587
  %v3597 = vsel %vm3592, %v3587, %v3589
  %v3598 = vsel %vm3592, %v3589, %v3591
  %3607 = vst [vmem:[#allocation2 + $0x1c0] sm:$0xff] %v3593
  %3608 = vst [vmem:[#allocation2 + $0x1c8] sm:$0xff] %v3594
  %3609 = vst [vmem:[#allocation2 + $0x1d0] sm:$0xff] %v3595
  %3610 = vst.msk [vmem:[#allocation2 + $0x1d8] sm:$0xff] %vm3331, %v3583
  %3611 = vst [vmem:[#allocation2 + $0x1e0] sm:$0xff] %v3596
  %3612 = vst [vmem:[#allocation2 + $0x1e8] sm:$0xff] %v3597
  %3613 = vst [vmem:[#allocation2 + $0x1f0] sm:$0xff] %v3598
  %3614 = vst.msk [vmem:[#allocation2 + $0x1f8] sm:$0xff] %vm3331, %v3591
  %3615 = vrot.lane.b32.xlu0 %v3320, 94
  %v3616 = vpop.permute.xlu0 %3615
  %3617 = vrot.lane.b32.xlu0 %v3321, 94
  %v3618 = vpop.permute.xlu0 %3617
  %3619 = vrot.lane.b32.xlu0 %v3322, 94
  %v3620 = vpop.permute.xlu0 %3619
  %3621 = vrot.lane.b32.xlu0 %v3323, 94
  %v3622 = vpop.permute.xlu0 %3621
  %3623 = vrot.lane.b32.xlu0 %v3324, 94
  %v3624 = vpop.permute.xlu0 %3623
  %3625 = vrot.lane.b32.xlu0 %v3325, 94
  %v3626 = vpop.permute.xlu0 %3625
  %3627 = vrot.lane.b32.xlu0 %v3326, 94
  %v3628 = vpop.permute.xlu0 %3627
  %3629 = vrot.lane.b32.xlu0 %v3327, 94
  %v3630 = vpop.permute.xlu0 %3629
  %v3631 = vsel %vm3331, %v3616, %v3618
  %v3632 = vsel %vm3331, %v3618, %v3620
  %v3633 = vsel %vm3331, %v3620, %v3622
  %v3634 = vsel %vm3331, %v3624, %v3626
  %v3635 = vsel %vm3331, %v3626, %v3628
  %v3636 = vsel %vm3331, %v3628, %v3630
  %3645 = vst [vmem:[#allocation2 + $0x200] sm:$0xff] %v3631
  %3646 = vst [vmem:[#allocation2 + $0x208] sm:$0xff] %v3632
  %3647 = vst [vmem:[#allocation2 + $0x210] sm:$0xff] %v3633
  %3648 = vst.msk [vmem:[#allocation2 + $0x218] sm:$0xff] %vm3331, %v3622
  %3649 = vst [vmem:[#allocation2 + $0x220] sm:$0xff] %v3634
  %3650 = vst [vmem:[#allocation2 + $0x228] sm:$0xff] %v3635
  %3651 = vst [vmem:[#allocation2 + $0x230] sm:$0xff] %v3636
  %3652 = vst.msk [vmem:[#allocation2 + $0x238] sm:$0xff] %vm3331, %v3630
  %v3653 = vld [vmem:[#allocation2] sm:$0xff]
  %v3654 = vld [vmem:[#allocation2 + $0x8] sm:$0xff]
  %v3655 = vld [vmem:[#allocation2 + $0x10] sm:$0xff]
  %v3656 = vld [vmem:[#allocation2 + $0x18] sm:$0xff]
  %v3657 = vld [vmem:[#allocation2 + $0x20] sm:$0xff]
  %v3658 = vld [vmem:[#allocation2 + $0x28] sm:$0xff]
  %v3659 = vld [vmem:[#allocation2 + $0x30] sm:$0xff]
  %v3660 = vld [vmem:[#allocation2 + $0x38] sm:$0xff]
  %v3661 = vld [vmem:[#allocation2 + $0x40] sm:$0xff]
  %v3662 = vld [vmem:[#allocation2 + $0x48] sm:$0xff]
  %v3663 = vld [vmem:[#allocation2 + $0x50] sm:$0xff]
  %v3664 = vld [vmem:[#allocation2 + $0x58] sm:$0xff]
  %v3665 = vld [vmem:[#allocation2 + $0x60] sm:$0xff]
  %v3666 = vld [vmem:[#allocation2 + $0x68] sm:$0xff]
  %v3667 = vld [vmem:[#allocation2 + $0x70] sm:$0xff]
  %v3668 = vld [vmem:[#allocation2 + $0x78] sm:$0xff]
  %v3669 = vld [vmem:[#allocation2 + $0x80] sm:$0xff]
  %v3670 = vld [vmem:[#allocation2 + $0x88] sm:$0xff]
  %v3671 = vld [vmem:[#allocation2 + $0x90] sm:$0xff]
  %v3672 = vld [vmem:[#allocation2 + $0x98] sm:$0xff]
  %v3673 = vld [vmem:[#allocation2 + $0xa0] sm:$0xff]
  %v3674 = vld [vmem:[#allocation2 + $0xa8] sm:$0xff]
  %v3675 = vld [vmem:[#allocation2 + $0xb0] sm:$0xff]
  %v3676 = vld [vmem:[#allocation2 + $0xb8] sm:$0xff]
  %v3677 = vld [vmem:[#allocation2 + $0xc0] sm:$0xff]
  %v3678 = vld [vmem:[#allocation2 + $0xc8] sm:$0xff]
  %v3679 = vld [vmem:[#allocation2 + $0xd0] sm:$0xff]
  %v3680 = vld [vmem:[#allocation2 + $0xd8] sm:$0xff]
  %v3681 = vld [vmem:[#allocation2 + $0xe0] sm:$0xff]
  %v3682 = vld [vmem:[#allocation2 + $0xe8] sm:$0xff]
  %v3683 = vld [vmem:[#allocation2 + $0xf0] sm:$0xff]
  %v3684 = vld [vmem:[#allocation2 + $0xf8] sm:$0xff]
  %v3685 = vld [vmem:[#allocation2 + $0x100] sm:$0xff]
  %v3686 = vld [vmem:[#allocation2 + $0x108] sm:$0xff]
  %v3687 = vld [vmem:[#allocation2 + $0x110] sm:$0xff]
  %v3688 = vld [vmem:[#allocation2 + $0x118] sm:$0xff]
  %v3689 = vld [vmem:[#allocation2 + $0x120] sm:$0xff]
  %v3690 = vld [vmem:[#allocation2 + $0x128] sm:$0xff]
  %v3691 = vld [vmem:[#allocation2 + $0x130] sm:$0xff]
  %v3692 = vld [vmem:[#allocation2 + $0x138] sm:$0xff]
  %v3693 = vld [vmem:[#allocation2 + $0x140] sm:$0xff]
  %v3694 = vld [vmem:[#allocation2 + $0x148] sm:$0xff]
  %v3695 = vld [vmem:[#allocation2 + $0x150] sm:$0xff]
  %v3696 = vld [vmem:[#allocation2 + $0x158] sm:$0xff]
  %v3697 = vld [vmem:[#allocation2 + $0x160] sm:$0xff]
  %v3698 = vld [vmem:[#allocation2 + $0x168] sm:$0xff]
  %v3699 = vld [vmem:[#allocation2 + $0x170] sm:$0xff]
  %v3700 = vld [vmem:[#allocation2 + $0x178] sm:$0xff]
  %v3701 = vld [vmem:[#allocation2 + $0x180] sm:$0xff]
  %v3702 = vld [vmem:[#allocation2 + $0x188] sm:$0xff]
  %v3703 = vld [vmem:[#allocation2 + $0x190] sm:$0xff]
  %v3704 = vld [vmem:[#allocation2 + $0x198] sm:$0xff]
  %v3705 = vld [vmem:[#allocation2 + $0x1a0] sm:$0xff]
  %v3706 = vld [vmem:[#allocation2 + $0x1a8] sm:$0xff]
  %v3707 = vld [vmem:[#allocation2 + $0x1b0] sm:$0xff]
  %v3708 = vld [vmem:[#allocation2 + $0x1b8] sm:$0xff]
  %v3709 = vld [vmem:[#allocation2 + $0x1c0] sm:$0xff]
  %v3710 = vld [vmem:[#allocation2 + $0x1c8] sm:$0xff]
  %v3711 = vld [vmem:[#allocation2 + $0x1d0] sm:$0xff]
  %v3712 = vld [vmem:[#allocation2 + $0x1d8] sm:$0xff]
  %v3713 = vld [vmem:[#allocation2 + $0x1e0] sm:$0xff]
  %v3714 = vld [vmem:[#allocation2 + $0x1e8] sm:$0xff]
  %v3715 = vld [vmem:[#allocation2 + $0x1f0] sm:$0xff]
  %v3716 = vld [vmem:[#allocation2 + $0x1f8] sm:$0xff]
  %v3717 = vld [vmem:[#allocation2 + $0x200] sm:$0xff]
  %v3718 = vld [vmem:[#allocation2 + $0x208] sm:$0xff]
  %v3719 = vld [vmem:[#allocation2 + $0x210] sm:$0xff]
  %v3720 = vld [vmem:[#allocation2 + $0x218] sm:$0xff]
  %v3721 = vld [vmem:[#allocation2 + $0x220] sm:$0xff]
  %v3722 = vld [vmem:[#allocation2 + $0x228] sm:$0xff]
  %v3723 = vld [vmem:[#allocation2 + $0x230] sm:$0xff]
  %v3724 = vld [vmem:[#allocation2 + $0x238] sm:$0xff]
  %v3725 = vpack.c.bf16 %v3657, %v3653
  %v3726 = vpack.c.bf16 %v3658, %v3654
  %v3727 = vpack.c.bf16 %v3659, %v3655
  %v3728 = vpack.c.bf16 %v3660, %v3656
  %v3729 = vpack.c.bf16 %v3665, %v3661
  %v3730 = vpack.c.bf16 %v3666, %v3662
  %v3731 = vpack.c.bf16 %v3667, %v3663
  %v3732 = vpack.c.bf16 %v3668, %v3664
  %v3733 = vpack.c.bf16 %v3673, %v3669
  %v3734 = vpack.c.bf16 %v3674, %v3670
  %v3735 = vpack.c.bf16 %v3675, %v3671
  %v3736 = vpack.c.bf16 %v3676, %v3672
  %v3737 = vpack.c.bf16 %v3681, %v3677
  %v3738 = vpack.c.bf16 %v3682, %v3678
  %v3739 = vpack.c.bf16 %v3683, %v3679
  %v3740 = vpack.c.bf16 %v3684, %v3680
  %v3741 = vpack.c.bf16 %v3689, %v3685
  %v3742 = vpack.c.bf16 %v3690, %v3686
  %v3743 = vpack.c.bf16 %v3691, %v3687
  %v3744 = vpack.c.bf16 %v3692, %v3688
  %v3745 = vpack.c.bf16 %v3697, %v3693
  %v3746 = vpack.c.bf16 %v3698, %v3694
  %v3747 = vpack.c.bf16 %v3699, %v3695
  %v3748 = vpack.c.bf16 %v3700, %v3696
  %v3749 = vpack.c.bf16 %v3705, %v3701
  %v3750 = vpack.c.bf16 %v3706, %v3702
  %v3751 = vpack.c.bf16 %v3707, %v3703
  %v3752 = vpack.c.bf16 %v3708, %v3704
  %v3753 = vpack.c.bf16 %v3713, %v3709
  %v3754 = vpack.c.bf16 %v3714, %v3710
  %v3755 = vpack.c.bf16 %v3715, %v3711
  %v3756 = vpack.c.bf16 %v3716, %v3712
  %v3757 = vpack.c.bf16 %v3721, %v3717
  %v3758 = vpack.c.bf16 %v3722, %v3718
  %v3759 = vpack.c.bf16 %v3723, %v3719
  %v3760 = vpack.c.bf16 %v3724, %v3720
  %v3761 = vld [vmem:[%s3] sm:$0xff]
  %v3762 = vld [vmem:[%s9 + $0x10] sm:$0xff]
  %3764 = vset.pattern.permute.xlu0 0
  %3765 = vperm.xlu0 %3764, %v3762
  %v3766 = vpop.permute.xlu0 %3765
  %v3769 = vunpack.c.l.b16 %v3761
  %v3770 = vunpack.c.h.b16 %v3761
  %v3771 = vpack.c.b16 %v3769, %v3769
  %v3772 = vpack.c.b16 %v3770, %v3770
  %vm3774 = vcmask 130048
  %v3776 = vsel %vm3774, %v3772, 0
  %3778 = vmatprep.subr.bf16.mxu0 %v3754
  %3779 = vmatpush1.bf16.msra.mxu0 %v3753
  %3780 = vmatprep.subr.bf16.mxu0 %v3750
  %3781 = vmatpush1.bf16.msra.mxu0 %v3749
  %3782 = vmatprep.subr.bf16.mxu0 %v3746
  %3783 = vmatpush1.bf16.msra.mxu0 %v3745
  %3784 = vmatprep.subr.bf16.mxu0 %v3742
  %3785 = vmatpush1.bf16.msra.mxu0 %v3741
  %3786 = vmatprep.subr.bf16.mxu0 %v3738
  %3787 = vmatpush1.bf16.msra.mxu0 %v3737
  %3788 = vmatprep.subr.bf16.mxu0 %v3734
  %3789 = vmatpush1.bf16.msra.mxu0 %v3733
  %3790 = vmatprep.subr.bf16.mxu0 %v3730
  %3791 = vmatpush1.bf16.msra.mxu0 %v3729
  %3792 = vmatprep.subr.bf16.mxu0 %v3726
  %3793 = vmatpush1.bf16.msra.mxu0 %v3725
  %3794 = vmatprep.subr.bf16.mxu0 0
  %3795 = vmatpush2.bf16.msra.mxu0 0
  %3796 = vmatprep.subr.bf16.mxu0 0
  %3797 = vmatpush2.bf16.msra.mxu0 0
  %3798 = vmatprep.subr.bf16.mxu0 0
  %3799 = vmatpush2.bf16.msra.mxu0 0
  %3800 = vmatprep.subr.bf16.mxu0 0
  %3801 = vmatpush2.bf16.msra.mxu0 0
  %3802 = vmatprep.subr.bf16.mxu0 0
  %3803 = vmatpush2.bf16.msra.mxu0 0
  %3804 = vmatprep.subr.bf16.mxu0 0
  %3805 = vmatpush2.bf16.msra.mxu0 0
  %3806 = vmatprep.subr.bf16.mxu0 0
  %3807 = vmatpush2.bf16.msra.mxu0 0
  %3808 = vmatprep.subr.bf16.mxu0 %v3758
  %3809 = vmatpush2.bf16.msra.mxu0 %v3757
  %3810 = vmatprep.mubr.bf16.mxu0 %v3776
  %3811 = vmatmul.mubr.bf16.gmra.mxu0 %v3771
  %v3812 = vpop.f32.mrf.mxu0
  %v3813 = vadd.f32 %v3766, %v3812
  %v3814 = vpop.f32.mrf.mxu0
  %v3815 = vadd.f32 %v3766, %v3814
  %v3816 = vpop.f32.mrf.mxu0
  %v3817 = vpop.f32.mrf.mxu0
  %3818 = vdwg.mxu0
  %3819 = vmatprep.subr.bf16.mxu0 %v3756
  %3820 = vmatpush1.bf16.msra.mxu0 %v3755
  %3821 = vmatprep.subr.bf16.mxu0 %v3752
  %3822 = vmatpush1.bf16.msra.mxu0 %v3751
  %3823 = vmatprep.subr.bf16.mxu0 %v3748
  %3824 = vmatpush1.bf16.msra.mxu0 %v3747
  %3825 = vmatprep.subr.bf16.mxu0 %v3744
  %3826 = vmatpush1.bf16.msra.mxu0 %v3743
  %3827 = vmatprep.subr.bf16.mxu0 %v3740
  %3828 = vmatpush1.bf16.msra.mxu0 %v3739
  %3829 = vmatprep.subr.bf16.mxu0 %v3736
  %3830 = vmatpush1.bf16.msra.mxu0 %v3735
  %3831 = vmatprep.subr.bf16.mxu0 %v3732
  %3832 = vmatpush1.bf16.msra.mxu0 %v3731
  %3833 = vmatprep.subr.bf16.mxu0 %v3728
  %3834 = vmatpush1.bf16.msra.mxu0 %v3727
  %3835 = vmatprep.subr.bf16.mxu0 0
  %3836 = vmatpush2.bf16.msra.mxu0 0
  %3837 = vmatprep.subr.bf16.mxu0 0
  %3838 = vmatpush2.bf16.msra.mxu0 0
  %3839 = vmatprep.subr.bf16.mxu0 0
  %3840 = vmatpush2.bf16.msra.mxu0 0
  %3841 = vmatprep.subr.bf16.mxu0 0
  %3842 = vmatpush2.bf16.msra.mxu0 0
  %3843 = vmatprep.subr.bf16.mxu0 0
  %3844 = vmatpush2.bf16.msra.mxu0 0
  %3845 = vmatprep.subr.bf16.mxu0 0
  %3846 = vmatpush2.bf16.msra.mxu0 0
  %3847 = vmatprep.subr.bf16.mxu0 0
  %3848 = vmatpush2.bf16.msra.mxu0 0
  %3849 = vmatprep.subr.bf16.mxu0 %v3760
  %3850 = vmatpush2.bf16.msra.mxu0 %v3759
  %3851 = vmatprep.mubr.bf16.mxu0 %v3776
  %3852 = vmatmul.mubr.bf16.gmra.mxu0 %v3771
  %v3853 = vpop.f32.mrf.mxu0
  %v3854 = vadd.f32 %v3766, %v3853
  %v3855 = vpop.f32.mrf.mxu0
  %v3856 = vadd.f32 %v3766, %v3855
  %v3857 = vpop.f32.mrf.mxu0
  %v3858 = vpop.f32.mrf.mxu0
  %3859 = vdwg.mxu0
  %vm3860 = vcmp.gt.f32.partialorder %v3813, 0.0
  %vm3861 = vcmp.gt.f32.partialorder %v3815, 0.0
  %vm3862 = vcmp.gt.f32.partialorder %v3854, 0.0
  %vm3863 = vcmp.gt.f32.partialorder %v3856, 0.0
  %v3864 = vmul.f32 %v3813, 0.01
  %v3865 = vmul.f32 %v3815, 0.01
  %v3866 = vmul.f32 %v3854, 0.01
  %v3867 = vmul.f32 %v3856, 0.01
  %v3868 = vsel %vm3860, %v3813, %v3864
  %v3869 = vsel %vm3861, %v3815, %v3865
  %v3870 = vsel %vm3862, %v3854, %v3866
  %v3871 = vsel %vm3863, %v3856, %v3867
  %3876 = vrot.lane.b32.xlu0 %v3868, 127
  %v3877 = vpop.permute.xlu0 %3876
  %3878 = vrot.lane.b32.xlu0 %v3869, 127
  %v3879 = vpop.permute.xlu0 %3878
  %3880 = vrot.lane.b32.xlu0 %v3870, 127
  %v3881 = vpop.permute.xlu0 %3880
  %3882 = vrot.lane.b32.xlu0 %v3871, 127
  %v3883 = vpop.permute.xlu0 %3882
  %v3884 = vsel %vm302, %v3877, %v3879
  %v3885 = vsel %vm302, %v3879, %v3881
  %v3886 = vsel %vm302, %v3881, %v3883
  %v3891 = vmax.f32 %v3868, %v3884
  %v3892 = vmax.f32 %v3869, %v3885
  %v3893 = vmax.f32 %v3870, %v3886
  %v3894 = vmax.f32 %v3871, %v3883
  %3899 = vrot.lane.b32.xlu0 %v3891, 112
  %v3900 = vpop.permute.xlu0 %3899
  %3901 = vrot.lane.b32.xlu0 %v3892, 112
  %v3902 = vpop.permute.xlu0 %3901
  %3903 = vrot.lane.b32.xlu0 %v3893, 112
  %v3904 = vpop.permute.xlu0 %3903
  %3905 = vrot.lane.b32.xlu0 %v3894, 112
  %v3906 = vpop.permute.xlu0 %3905
  %v3907 = vsel %vm3437, %v3900, %v3902
  %v3908 = vsel %vm3437, %v3902, %v3904
  %v3909 = vsel %vm3437, %v3904, %v3906
  %v3914 = vmax.f32 %v3891, %v3907
  %v3915 = vmax.f32 %v3892, %v3908
  %v3916 = vmax.f32 %v3893, %v3909
  %v3917 = vmax.f32 %v3894, %v3906
  %v3918 = vpack.c.bf16 %v3914, %v3914
  %v3919 = vpack.c.bf16 %v3915, %v3915
  %v3920 = vpack.c.bf16 %v3916, %v3916
  %v3921 = vpack.c.bf16 %v3917, %v3917
  %v3922 = vld [vmem:[%s15] sm:$0xf]
  %v3923 = vld [vmem:[%s15 + $0x4] sm:$0xf]
  %v3924 = vld [vmem:[%s15 + $0x8] sm:$0xf]
  %v3925 = vld [vmem:[%s15 + $0xc] sm:$0xf]
  %v3926 = vld [vmem:[%s15 + $0x10] sm:$0xf]
  %v3927 = vld [vmem:[%s15 + $0x14] sm:$0xf]
  %v3928 = vld [vmem:[%s15 + $0x18] sm:$0xf]
  %v3929 = vld [vmem:[%s15 + $0x1c] sm:$0xf]
  %v3930 = vld [vmem:[%s15 + $0x20] sm:$0xf]
  %v3931 = vld [vmem:[%s15 + $0x24] sm:$0xf]
  %v3932 = vld [vmem:[%s15 + $0x28] sm:$0xf]
  %v3933 = vld [vmem:[%s15 + $0x2c] sm:$0xf]
  %v3934 = vld [vmem:[%s15 + $0x30] sm:$0xf]
  %v3935 = vld [vmem:[%s15 + $0x34] sm:$0xf]
  %v3936 = vld [vmem:[%s15 + $0x38] sm:$0xf]
  %v3937 = vld [vmem:[%s15 + $0x3c] sm:$0xf]
  %v3938 = vld [vmem:[%s15 + $0x40] sm:$0xf]
  %v3939 = vld [vmem:[%s15 + $0x44] sm:$0xf]
  %v3940 = vld [vmem:[%s15 + $0x48] sm:$0xf]
  %v3941 = vld [vmem:[%s15 + $0x4c] sm:$0xf]
  %v3942 = vld [vmem:[%s15 + $0x50] sm:$0xf]
  %v3943 = vld [vmem:[%s15 + $0x54] sm:$0xf]
  %v3944 = vld [vmem:[%s15 + $0x58] sm:$0xf]
  %v3945 = vld [vmem:[%s15 + $0x5c] sm:$0xf]
  %v3946 = vld [vmem:[%s15 + $0x60] sm:$0xf]
  %v3947 = vld [vmem:[%s15 + $0x64] sm:$0x7]
  %v3974 = vunpack.c.l.b16 %v3922
  %v3975 = vunpack.c.l.b16 %v3923
  %v3976 = vunpack.c.l.b16 %v3924
  %v3977 = vunpack.c.l.b16 %v3925
  %v3978 = vunpack.c.l.b16 %v3926
  %v3979 = vunpack.c.l.b16 %v3927
  %v3980 = vunpack.c.l.b16 %v3928
  %v3981 = vunpack.c.l.b16 %v3929
  %v3982 = vunpack.c.l.b16 %v3930
  %v3983 = vunpack.c.l.b16 %v3931
  %v3984 = vunpack.c.l.b16 %v3932
  %v3985 = vunpack.c.l.b16 %v3933
  %v3986 = vunpack.c.l.b16 %v3934
  %v3987 = vunpack.c.l.b16 %v3935
  %v3988 = vunpack.c.l.b16 %v3936
  %v3989 = vunpack.c.l.b16 %v3937
  %v3990 = vunpack.c.l.b16 %v3938
  %v3991 = vunpack.c.l.b16 %v3939
  %v3992 = vunpack.c.l.b16 %v3940
  %v3993 = vunpack.c.l.b16 %v3941
  %v3994 = vunpack.c.l.b16 %v3942
  %v3995 = vunpack.c.l.b16 %v3943
  %v3996 = vunpack.c.l.b16 %v3944
  %v3997 = vunpack.c.l.b16 %v3945
  %v3998 = vunpack.c.l.b16 %v3946
  %v3999 = vunpack.c.l.b16 %v3947
  %v4000 = vpack.c.b16 %v3975, %v3974
  %v4001 = vpack.c.b16 %v3977, %v3976
  %v4002 = vpack.c.b16 %v3979, %v3978
  %v4003 = vpack.c.b16 %v3981, %v3980
  %v4004 = vpack.c.b16 %v3983, %v3982
  %v4005 = vpack.c.b16 %v3985, %v3984
  %v4006 = vpack.c.b16 %v3987, %v3986
  %v4007 = vpack.c.b16 %v3989, %v3988
  %v4008 = vpack.c.b16 %v3991, %v3990
  %v4009 = vpack.c.b16 %v3993, %v3992
  %v4010 = vpack.c.b16 %v3995, %v3994
  %v4011 = vpack.c.b16 %v3997, %v3996
  %v4012 = vpack.c.b16 %v3999, %v3998
  %vm4025 = vcmask 629760
  %v4027 = vsel %vm4025, %v3919, 0
  %vm4029 = vcmask 1045504
  %vm4030 = vcmask 1046528
  %v4031 = vsel %vm4029, 4294967295, 65535
  %v4032 = vsel %vm4030, %v4031, 0
  %v4034 = vand.u32 %v4012, %v4032
  %4036 = vmatprep.subr.bf16.mxu0 0
  %4037 = vmatpush1.bf16.msra.mxu0 %v4007
  %4038 = vmatprep.subr.bf16.mxu0 0
  %4039 = vmatpush1.bf16.msra.mxu0 %v4006
  %4040 = vmatprep.subr.bf16.mxu0 0
  %4041 = vmatpush1.bf16.msra.mxu0 %v4005
  %4042 = vmatprep.subr.bf16.mxu0 0
  %4043 = vmatpush1.bf16.msra.mxu0 %v4004
  %4044 = vmatprep.subr.bf16.mxu0 0
  %4045 = vmatpush1.bf16.msra.mxu0 %v4003
  %4046 = vmatprep.subr.bf16.mxu0 0
  %4047 = vmatpush1.bf16.msra.mxu0 %v4002
  %4048 = vmatprep.subr.bf16.mxu0 0
  %4049 = vmatpush1.bf16.msra.mxu0 %v4001
  %4050 = vmatprep.subr.bf16.mxu0 0
  %4051 = vmatpush1.bf16.msra.mxu0 %v4000
  %4052 = vmatprep.subr.bf16.mxu0 0
  %4053 = vmatpush2.bf16.msra.mxu0 0
  %4054 = vmatprep.subr.bf16.mxu0 0
  %4055 = vmatpush2.bf16.msra.mxu0 0
  %4056 = vmatprep.subr.bf16.mxu0 0
  %4057 = vmatpush2.bf16.msra.mxu0 0
  %4058 = vmatprep.subr.bf16.mxu0 0
  %4059 = vmatpush2.bf16.msra.mxu0 %v4034
  %4060 = vmatprep.subr.bf16.mxu0 0
  %4061 = vmatpush2.bf16.msra.mxu0 %v4011
  %4062 = vmatprep.subr.bf16.mxu0 0
  %4063 = vmatpush2.bf16.msra.mxu0 %v4010
  %4064 = vmatprep.subr.bf16.mxu0 0
  %4065 = vmatpush2.bf16.msra.mxu0 %v4009
  %4066 = vmatprep.subr.bf16.mxu0 0
  %4067 = vmatpush2.bf16.msra.mxu0 %v4008
  %4068 = vmatprep.mubr.bf16.mxu0 %v4027
  %4069 = vmatmul.mubr.bf16.gmra.mxu0 %v3918
  %v4070 = vpop.f32.mrf.mxu0
  %v4071 = vadd.f32 0.0, %v4070
  %v4072 = vpop.f32.mrf.mxu0
  %v4073 = vpop.f32.mrf.mxu0
  %v4074 = vpop.f32.mrf.mxu0
  %4075 = vdwg.mxu0
  %vm4076 = vcmask 990208
  %4077 = vst.msk [vmem:[#allocation4] sm:$0xff] %vm4076, %v4071
  %v4079 = vsel %vm4025, %v3921, 0
  %4081 = vmatprep.subr.bf16.mxu0 0
  %4082 = vmatpush1.bf16.msra.mxu0 %v4007
  %4083 = vmatprep.subr.bf16.mxu0 0
  %4084 = vmatpush1.bf16.msra.mxu0 %v4006
  %4085 = vmatprep.subr.bf16.mxu0 0
  %4086 = vmatpush1.bf16.msra.mxu0 %v4005
  %4087 = vmatprep.subr.bf16.mxu0 0
  %4088 = vmatpush1.bf16.msra.mxu0 %v4004
  %4089 = vmatprep.subr.bf16.mxu0 0
  %4090 = vmatpush1.bf16.msra.mxu0 %v4003
  %4091 = vmatprep.subr.bf16.mxu0 0
  %4092 = vmatpush1.bf16.msra.mxu0 %v4002
  %4093 = vmatprep.subr.bf16.mxu0 0
  %4094 = vmatpush1.bf16.msra.mxu0 %v4001
  %4095 = vmatprep.subr.bf16.mxu0 0
  %4096 = vmatpush1.bf16.msra.mxu0 %v4000
  %4097 = vmatprep.subr.bf16.mxu0 0
  %4098 = vmatpush2.bf16.msra.mxu0 0
  %4099 = vmatprep.subr.bf16.mxu0 0
  %4100 = vmatpush2.bf16.msra.mxu0 0
  %4101 = vmatprep.subr.bf16.mxu0 0
  %4102 = vmatpush2.bf16.msra.mxu0 0
  %4103 = vmatprep.subr.bf16.mxu0 0
  %4104 = vmatpush2.bf16.msra.mxu0 %v4034
  %4105 = vmatprep.subr.bf16.mxu0 0
  %4106 = vmatpush2.bf16.msra.mxu0 %v4011
  %4107 = vmatprep.subr.bf16.mxu0 0
  %4108 = vmatpush2.bf16.msra.mxu0 %v4010
  %4109 = vmatprep.subr.bf16.mxu0 0
  %4110 = vmatpush2.bf16.msra.mxu0 %v4009
  %4111 = vmatprep.subr.bf16.mxu0 0
  %4112 = vmatpush2.bf16.msra.mxu0 %v4008
  %4113 = vmatprep.mubr.bf16.mxu0 %v4079
  %4114 = vmatmul.mubr.bf16.gmra.mxu0 %v3920
  %v4115 = vpop.f32.mrf.mxu0
  %v4116 = vadd.f32 0.0, %v4115
  %v4117 = vpop.f32.mrf.mxu0
  %v4118 = vpop.f32.mrf.mxu0
  %v4119 = vpop.f32.mrf.mxu0
  %4120 = vdwg.mxu0
  %4122 = vrot.lane.b32.xlu0 %v4116, 121
  %v4123 = vpop.permute.xlu0 %4122
  %vm4125 = vcmask 1048520
  %4126 = vst.msk [vmem:[#allocation4] sm:$0xff] %vm4125, %v4123
  %vm4127 = vcmask 932864
  %4128 = vst.msk [vmem:[#allocation4 + $0x8] sm:$0xff] %vm4127, %v4123
  %v4129 = vld [vmem:[#allocation4] sm:$0xff]
  %v4130 = vld [vmem:[#allocation4 + $0x8] sm:$0xff]
  %4131 = vst [vmem:[#allocation2] sm:$0xff] %v4129
  %vm4132 = vcmask 736256
  %4133 = vst.msk [vmem:[#allocation2 + $0x8] sm:$0xff] %vm4132, %v4130
  %4136 = vrot.lane.b32.xlu0 %v4129, 127
  %v4137 = vpop.permute.xlu0 %4136
  %4138 = vrot.lane.b32.xlu0 %v4130, 127
  %v4139 = vpop.permute.xlu0 %4138
  %v4140 = vsel %vm302, %v4137, %v4139
  %4143 = vst [vmem:[#allocation2 + $0x20] sm:$0xff] %v4140
  %4144 = vst.msk [vmem:[#allocation2 + $0x28] sm:$0xff] %vm4132, %v4139
  %4145 = vrot.lane.b32.xlu0 %v4129, 126
  %v4146 = vpop.permute.xlu0 %4145
  %4147 = vrot.lane.b32.xlu0 %v4130, 126
  %v4148 = vpop.permute.xlu0 %4147
  %v4149 = vsel %vm505, %v4146, %v4148
  %4152 = vst [vmem:[#allocation2 + $0x40] sm:$0xff] %v4149
  %4153 = vst.msk [vmem:[#allocation2 + $0x48] sm:$0xff] %vm4132, %v4148
  %4154 = vrot.lane.b32.xlu0 %v4129, 117
  %v4155 = vpop.permute.xlu0 %4154
  %4156 = vrot.lane.b32.xlu0 %v4130, 117
  %v4157 = vpop.permute.xlu0 %4156
  %vm4158 = vcmask 957440
  %v4159 = vsel %vm4158, %v4155, %v4157
  %4162 = vst [vmem:[#allocation2 + $0x60] sm:$0xff] %v4159
  %4163 = vst.msk [vmem:[#allocation2 + $0x68] sm:$0xff] %vm4132, %v4157
  %4164 = vrot.lane.b32.xlu0 %v4129, 116
  %v4165 = vpop.permute.xlu0 %4164
  %4166 = vrot.lane.b32.xlu0 %v4130, 116
  %v4167 = vpop.permute.xlu0 %4166
  %vm4168 = vcmask 949248
  %v4169 = vsel %vm4168, %v4165, %v4167
  %4172 = vst [vmem:[#allocation2 + $0x80] sm:$0xff] %v4169
  %4173 = vst.msk [vmem:[#allocation2 + $0x88] sm:$0xff] %vm4132, %v4167
  %4174 = vrot.lane.b32.xlu0 %v4129, 115
  %v4175 = vpop.permute.xlu0 %4174
  %4176 = vrot.lane.b32.xlu0 %v4130, 115
  %v4177 = vpop.permute.xlu0 %4176
  %vm4178 = vcmask 941056
  %v4179 = vsel %vm4178, %v4175, %v4177
  %4182 = vst [vmem:[#allocation2 + $0xa0] sm:$0xff] %v4179
  %4183 = vst.msk [vmem:[#allocation2 + $0xa8] sm:$0xff] %vm4132, %v4177
  %4184 = vrot.lane.b32.xlu0 %v4129, 106
  %v4185 = vpop.permute.xlu0 %4184
  %4186 = vrot.lane.b32.xlu0 %v4130, 106
  %v4187 = vpop.permute.xlu0 %4186
  %vm4188 = vcmask 867328
  %v4189 = vsel %vm4188, %v4185, %v4187
  %4192 = vst [vmem:[#allocation2 + $0xc0] sm:$0xff] %v4189
  %4193 = vst.msk [vmem:[#allocation2 + $0xc8] sm:$0xff] %vm4132, %v4187
  %4194 = vrot.lane.b32.xlu0 %v4129, 105
  %v4195 = vpop.permute.xlu0 %4194
  %4196 = vrot.lane.b32.xlu0 %v4130, 105
  %v4197 = vpop.permute.xlu0 %4196
  %vm4198 = vcmask 859136
  %v4199 = vsel %vm4198, %v4195, %v4197
  %4202 = vst [vmem:[#allocation2 + $0xe0] sm:$0xff] %v4199
  %4203 = vst.msk [vmem:[#allocation2 + $0xe8] sm:$0xff] %vm4132, %v4197
  %4204 = vrot.lane.b32.xlu0 %v4129, 104
  %v4205 = vpop.permute.xlu0 %4204
  %4206 = vrot.lane.b32.xlu0 %v4130, 104
  %v4207 = vpop.permute.xlu0 %4206
  %vm4208 = vcmask 850944
  %v4209 = vsel %vm4208, %v4205, %v4207
  %4212 = vst [vmem:[#allocation2 + $0x100] sm:$0xff] %v4209
  %4213 = vst.msk [vmem:[#allocation2 + $0x108] sm:$0xff] %vm4132, %v4207
  %v4214 = vld [vmem:[#allocation2] sm:$0xff]
  %v4215 = vld [vmem:[#allocation2 + $0x8] sm:$0xff]
  %v4216 = vld [vmem:[#allocation2 + $0x20] sm:$0xff]
  %v4217 = vld [vmem:[#allocation2 + $0x28] sm:$0xff]
  %v4218 = vld [vmem:[#allocation2 + $0x40] sm:$0xff]
  %v4219 = vld [vmem:[#allocation2 + $0x48] sm:$0xff]
  %v4220 = vld [vmem:[#allocation2 + $0x60] sm:$0xff]
  %v4221 = vld [vmem:[#allocation2 + $0x68] sm:$0xff]
  %v4222 = vld [vmem:[#allocation2 + $0x80] sm:$0xff]
  %v4223 = vld [vmem:[#allocation2 + $0x88] sm:$0xff]
  %v4224 = vld [vmem:[#allocation2 + $0xa0] sm:$0xff]
  %v4225 = vld [vmem:[#allocation2 + $0xa8] sm:$0xff]
  %v4226 = vld [vmem:[#allocation2 + $0xc0] sm:$0xff]
  %v4227 = vld [vmem:[#allocation2 + $0xc8] sm:$0xff]
  %v4228 = vld [vmem:[#allocation2 + $0xe0] sm:$0xff]
  %v4229 = vld [vmem:[#allocation2 + $0xe8] sm:$0xff]
  %v4230 = vld [vmem:[#allocation2 + $0x100] sm:$0xff]
  %v4231 = vld [vmem:[#allocation2 + $0x108] sm:$0xff]
  %v4232 = vpack.c.bf16 %v4216, %v4214
  %v4233 = vpack.c.bf16 %v4217, %v4215
  %v4234 = vpack.c.bf16 %v4220, %v4218
  %v4235 = vpack.c.bf16 %v4221, %v4219
  %v4236 = vpack.c.bf16 %v4224, %v4222
  %v4237 = vpack.c.bf16 %v4225, %v4223
  %v4238 = vpack.c.bf16 %v4228, %v4226
  %v4239 = vpack.c.bf16 %v4229, %v4227
  %v4240 = vpack.c.bf16 %v4230, %v4230
  %v4241 = vpack.c.bf16 %v4231, %v4231
  %v4242 = vld [vmem:[%s4] sm:$0xf]
  %v4243 = vld [vmem:[%s9 + $0x18] sm:$0xff]
  %4245 = vset.pattern.permute.xlu0 0
  %4246 = vperm.xlu0 %4245, %v4243
  %v4247 = vpop.permute.xlu0 %4246
  %vm4249 = vcmask 588800
  %v4251 = vsel %vm4249, %v4242, 0
  %v4254 = vsel %vm2922, %v4240, 0
  %v4257 = vsel %vm2922, %v4241, 0
  %4259 = vmatprep.subr.bf16.mxu0 0
  %4260 = vmatpush1.bf16.msra.mxu0 0
  %4261 = vmatprep.subr.bf16.mxu0 0
  %4262 = vmatpush1.bf16.msra.mxu0 0
  %4263 = vmatprep.subr.bf16.mxu0 0
  %4264 = vmatpush1.bf16.msra.mxu0 0
  %4265 = vmatprep.subr.bf16.mxu0 %v4257
  %4266 = vmatpush1.bf16.msra.mxu0 %v4254
  %4267 = vmatprep.subr.bf16.mxu0 %v4239
  %4268 = vmatpush1.bf16.msra.mxu0 %v4238
  %4269 = vmatprep.subr.bf16.mxu0 %v4237
  %4270 = vmatpush1.bf16.msra.mxu0 %v4236
  %4271 = vmatprep.subr.bf16.mxu0 %v4235
  %4272 = vmatpush1.bf16.msra.mxu0 %v4234
  %4273 = vmatprep.subr.bf16.mxu0 %v4233
  %4274 = vmatpush1.bf16.msra.mxu0 %v4232
  %4275 = vmatprep.subr.bf16.mxu0 0
  %4276 = vmatpush2.bf16.msra.mxu0 0
  %4277 = vmatprep.subr.bf16.mxu0 0
  %4278 = vmatpush2.bf16.msra.mxu0 0
  %4279 = vmatprep.subr.bf16.mxu0 0
  %4280 = vmatpush2.bf16.msra.mxu0 0
  %4281 = vmatprep.subr.bf16.mxu0 0
  %4282 = vmatpush2.bf16.msra.mxu0 0
  %4283 = vmatprep.subr.bf16.mxu0 0
  %4284 = vmatpush2.bf16.msra.mxu0 0
  %4285 = vmatprep.subr.bf16.mxu0 0
  %4286 = vmatpush2.bf16.msra.mxu0 0
  %4287 = vmatprep.subr.bf16.mxu0 0
  %4288 = vmatpush2.bf16.msra.mxu0 0
  %4289 = vmatprep.subr.bf16.mxu0 0
  %4290 = vmatpush2.bf16.msra.mxu0 0
  %4291 = vmatprep.mubr.bf16.mxu0 0
  %4292 = vmatmul.mubr.bf16.gmra.mxu0 %v4251
  %v4293 = vpop.f32.mrf.mxu0
  %v4294 = vadd.f32 %v4247, %v4293
  %v4295 = vpop.f32.mrf.mxu0
  %v4296 = vadd.f32 %v4247, %v4295
  %v4297 = vpop.f32.mrf.mxu0
  %v4298 = vpop.f32.mrf.mxu0
  %4299 = vdwg.mxu0
  %vm4300 = vcmp.gt.f32.partialorder %v4294, 0.0
  %vm4301 = vcmp.gt.f32.partialorder %v4296, 0.0
  %v4302 = vmul.f32 %v4294, 0.01
  %v4303 = vmul.f32 %v4296, 0.01
  %v4304 = vsel %vm4300, %v4294, %v4302
  %v4305 = vsel %vm4301, %v4296, %v4303
  %4308 = vrot.lane.b32.xlu0 %v4304, 127
  %v4309 = vpop.permute.xlu0 %4308
  %4310 = vrot.lane.b32.xlu0 %v4305, 127
  %v4311 = vpop.permute.xlu0 %4310
  %v4312 = vsel %vm302, %v4309, %v4311
  %v4315 = vmax.f32 %v4304, %v4312
  %v4316 = vmax.f32 %v4305, %v4311
  %4319 = vrot.lane.b32.xlu0 %v4315, 117
  %v4320 = vpop.permute.xlu0 %4319
  %4321 = vrot.lane.b32.xlu0 %v4316, 117
  %v4322 = vpop.permute.xlu0 %4321
  %v4323 = vsel %vm4158, %v4320, %v4322
  %v4326 = vmax.f32 %v4315, %v4323
  %v4327 = vmax.f32 %v4316, %v4322
  %v4328 = vpack.c.bf16 %v4326, %v4326
  %v4329 = vpack.c.bf16 %v4327, %v4327
  %v4330 = vld [vmem:[%s16] sm:$0xf]
  %v4331 = vld [vmem:[%s16 + $0x4] sm:$0xf]
  %v4332 = vld [vmem:[%s16 + $0x8] sm:$0xf]
  %v4333 = vld [vmem:[%s16 + $0xc] sm:$0xf]
  %v4334 = vld [vmem:[%s16 + $0x10] sm:$0xf]
  %v4335 = vld [vmem:[%s16 + $0x14] sm:$0xf]
  %v4336 = vld [vmem:[%s16 + $0x18] sm:$0xf]
  %v4337 = vld [vmem:[%s16 + $0x1c] sm:$0xf]
  %v4338 = vld [vmem:[%s16 + $0x20] sm:$0xf]
  %v4339 = vld [vmem:[%s16 + $0x24] sm:$0x1]
  %v4350 = vunpack.c.l.b16 %v4330
  %v4351 = vunpack.c.l.b16 %v4331
  %v4352 = vunpack.c.l.b16 %v4332
  %v4353 = vunpack.c.l.b16 %v4333
  %v4354 = vunpack.c.l.b16 %v4334
  %v4355 = vunpack.c.l.b16 %v4335
  %v4356 = vunpack.c.l.b16 %v4336
  %v4357 = vunpack.c.l.b16 %v4337
  %v4358 = vunpack.c.l.b16 %v4338
  %v4359 = vunpack.c.l.b16 %v4339
  %v4360 = vpack.c.b16 %v4351, %v4350
  %v4361 = vpack.c.b16 %v4353, %v4352
  %v4362 = vpack.c.b16 %v4355, %v4354
  %v4363 = vpack.c.b16 %v4357, %v4356
  %v4364 = vpack.c.b16 %v4359, %v4358
  %vm4369 = vcmask 596992
  %v4371 = vsel %vm4369, %v4328, 0
  %vm4373 = vcmask 1044480
  %v4374 = vsel %vm2922, 4294967295, 65535
  %v4375 = vsel %vm4373, %v4374, 0
  %v4377 = vand.u32 %v4364, %v4375
  %4379 = vmatprep.subr.bf16.mxu0 0
  %4380 = vmatpush1.bf16.msra.mxu0 0
  %4381 = vmatprep.subr.bf16.mxu0 0
  %4382 = vmatpush1.bf16.msra.mxu0 0
  %4383 = vmatprep.subr.bf16.mxu0 0
  %4384 = vmatpush1.bf16.msra.mxu0 0
  %4385 = vmatprep.subr.bf16.mxu0 0
  %4386 = vmatpush1.bf16.msra.mxu0 %v4377
  %4387 = vmatprep.subr.bf16.mxu0 0
  %4388 = vmatpush1.bf16.msra.mxu0 %v4363
  %4389 = vmatprep.subr.bf16.mxu0 0
  %4390 = vmatpush1.bf16.msra.mxu0 %v4362
  %4391 = vmatprep.subr.bf16.mxu0 0
  %4392 = vmatpush1.bf16.msra.mxu0 %v4361
  %4393 = vmatprep.subr.bf16.mxu0 0
  %4394 = vmatpush1.bf16.msra.mxu0 %v4360
  %4395 = vmatprep.subr.bf16.mxu0 0
  %4396 = vmatpush2.bf16.msra.mxu0 0
  %4397 = vmatprep.subr.bf16.mxu0 0
  %4398 = vmatpush2.bf16.msra.mxu0 0
  %4399 = vmatprep.subr.bf16.mxu0 0
  %4400 = vmatpush2.bf16.msra.mxu0 0
  %4401 = vmatprep.subr.bf16.mxu0 0
  %4402 = vmatpush2.bf16.msra.mxu0 0
  %4403 = vmatprep.subr.bf16.mxu0 0
  %4404 = vmatpush2.bf16.msra.mxu0 0
  %4405 = vmatprep.subr.bf16.mxu0 0
  %4406 = vmatpush2.bf16.msra.mxu0 0
  %4407 = vmatprep.subr.bf16.mxu0 0
  %4408 = vmatpush2.bf16.msra.mxu0 0
  %4409 = vmatprep.subr.bf16.mxu0 0
  %4410 = vmatpush2.bf16.msra.mxu0 0
  %4411 = vmatprep.mubr.bf16.mxu0 0
  %4412 = vmatmul.mubr.bf16.gmra.mxu0 %v4371
  %v4413 = vpop.f32.mrf.mxu0
  %v4414 = vadd.f32 0.0, %v4413
  %v4415 = vpop.f32.mrf.mxu0
  %v4416 = vpop.f32.mrf.mxu0
  %v4417 = vpop.f32.mrf.mxu0
  %4418 = vdwg.mxu0
  %4421 = vrot.lane.b32.xlu0 %v4328, 7
  %v4422 = vpop.permute.xlu0 %4421
  %4423 = vrot.lane.b32.xlu0 %v4329, 7
  %v4424 = vpop.permute.xlu0 %4423
  %vm4425 = vcmask 56320
  %v4426 = vsel %vm4425, %v4422, %v4424
  %v4428 = vsel %vm4369, %v4426, 0
  %4430 = vmatprep.subr.bf16.mxu0 0
  %4431 = vmatpush1.bf16.msra.mxu0 0
  %4432 = vmatprep.subr.bf16.mxu0 0
  %4433 = vmatpush1.bf16.msra.mxu0 0
  %4434 = vmatprep.subr.bf16.mxu0 0
  %4435 = vmatpush1.bf16.msra.mxu0 0
  %4436 = vmatprep.subr.bf16.mxu0 0
  %4437 = vmatpush1.bf16.msra.mxu0 %v4377
  %4438 = vmatprep.subr.bf16.mxu0 0
  %4439 = vmatpush1.bf16.msra.mxu0 %v4363
  %4440 = vmatprep.subr.bf16.mxu0 0
  %4441 = vmatpush1.bf16.msra.mxu0 %v4362
  %4442 = vmatprep.subr.bf16.mxu0 0
  %4443 = vmatpush1.bf16.msra.mxu0 %v4361
  %4444 = vmatprep.subr.bf16.mxu0 0
  %4445 = vmatpush1.bf16.msra.mxu0 %v4360
  %4446 = vmatprep.subr.bf16.mxu0 0
  %4447 = vmatpush2.bf16.msra.mxu0 0
  %4448 = vmatprep.subr.bf16.mxu0 0
  %4449 = vmatpush2.bf16.msra.mxu0 0
  %4450 = vmatprep.subr.bf16.mxu0 0
  %4451 = vmatpush2.bf16.msra.mxu0 0
  %4452 = vmatprep.subr.bf16.mxu0 0
  %4453 = vmatpush2.bf16.msra.mxu0 0
  %4454 = vmatprep.subr.bf16.mxu0 0
  %4455 = vmatpush2.bf16.msra.mxu0 0
  %4456 = vmatprep.subr.bf16.mxu0 0
  %4457 = vmatpush2.bf16.msra.mxu0 0
  %4458 = vmatprep.subr.bf16.mxu0 0
  %4459 = vmatpush2.bf16.msra.mxu0 0
  %4460 = vmatprep.subr.bf16.mxu0 0
  %4461 = vmatpush2.bf16.msra.mxu0 0
  %4462 = vmatprep.mubr.bf16.mxu0 0
  %4463 = vmatmul.mubr.bf16.gmra.mxu0 %v4428
  %v4464 = vpop.f32.mrf.mxu0
  %v4465 = vadd.f32 0.0, %v4464
  %v4466 = vpop.f32.mrf.mxu0
  %v4467 = vpop.f32.mrf.mxu0
  %v4468 = vpop.f32.mrf.mxu0
  %4469 = vdwg.mxu0
  %v4470 = vld [vmem:[%s1] sm:$0x1]
  %v4471 = vld [vmem:[%s11] sm:$0x1]
  %v4472 = vld [vmem:[%s13] sm:$0xff]
  %v4473 = vld [vmem:[%s10] sm:$0xff]
  %s4474 = scalar_lea.vmem %s10, 8
  %v4475 = vld [vmem:[%s4474] sm:$0xff]
  %s4476 = scalar_lea.vmem %s10, 16
  %v4477 = vld [vmem:[%s4476] sm:$0xff]
  %s4478 = scalar_lea.vmem %s10, 24
  %v4479 = vld [vmem:[%s4478] sm:$0xff]
  %v4480 = vld [vmem:[%s12] sm:$0xff]
  %s4481 = scalar_lea.vmem %s12, 8
  %v4482 = vld [vmem:[%s4481] sm:$0xff]
  %v4483 = vmul.f32 %v4414, %v4473
  %v4484 = vsel %vm3774, %v4483, 0.0
  %4485 = vadd.xlane.f32.xlu0 %v4484
  %v4486 = vpop.xlane.xlu0 %4485
  %v4487 = vrot.slane %v4486, 4
  %v4488 = vadd.f32 %v4486, %v4487
  %v4489 = vrot.slane %v4488, 2
  %v4490 = vadd.f32 %v4488, %v4489
  %v4491 = vrot.slane %v4490, 1
  %v4492 = vadd.f32 %v4490, %v4491
  %v4493 = vadd.f32 %v4492, %v4471
  %v4494 = vmul.f32 %v4414, %v4477
  %v4495 = vsel %vm3774, %v4494, 0.0
  %4496 = vadd.xlane.f32.xlu0 %v4495
  %v4497 = vpop.xlane.xlu0 %4496
  %v4498 = vrot.slane %v4497, 4
  %v4499 = vadd.f32 %v4497, %v4498
  %v4500 = vrot.slane %v4499, 2
  %v4501 = vadd.f32 %v4499, %v4500
  %v4502 = vrot.slane %v4501, 1
  %v4503 = vadd.f32 %v4501, %v4502
  %v4504 = vadd.f32 %v4503, %v4471
  %vm4505 = vcmask 0
  %4506 = vst.msk [vmem:[#allocation9] sm:$0x1] %vm4505, %v4493
  %vm4507 = vcmask 16400
  %4508 = vst.msk [vmem:[#allocation9] sm:$0x1] %vm4507, %v4504
  %v4509 = vmul.f32 %v4504, 0.5
  %v4510 = vmul.f32 %v4509, 1.442695
  %v4511 = vpow.pop %v4510
  %4513 = vrot.lane.b32.xlu0 %v4511, 126
  %v4514 = vpop.permute.xlu0 %4513
  %v4516 = vmul.f32 %v4470, %v4514
  %v4517 = vadd.f32 %v4516, %v4493
  %v4519 = vlaneseq
  %v4520 = vshrl.u32 %v4519, 7
  %v4521 = vsub.s32 0, %v4520
  %v4522 = vrot.slane %v4517, %v4521
  %4523 = vset.pattern.permute.xlu0 0
  %4524 = vperm.xlu0 %4523, %v4522
  %v4525 = vpop.permute.xlu0 %4524
  %v4527 = vmul.f32 %v4525, %v4480
  %v4528 = vadd.f32 %v4472, %v4527
  %v4529 = vmul.f32 %v4414, %v4475
  %v4530 = vsel %vm3774, %v4529, 0.0
  %4531 = vadd.xlane.f32.xlu0 %v4530
  %v4532 = vpop.xlane.xlu0 %4531
  %v4533 = vrot.slane %v4532, 4
  %v4534 = vadd.f32 %v4532, %v4533
  %v4535 = vrot.slane %v4534, 2
  %v4536 = vadd.f32 %v4534, %v4535
  %v4537 = vrot.slane %v4536, 1
  %v4538 = vadd.f32 %v4536, %v4537
  %v4539 = vadd.f32 %v4538, %v4471
  %v4540 = vmul.f32 %v4414, %v4479
  %v4541 = vsel %vm3774, %v4540, 0.0
  %4542 = vadd.xlane.f32.xlu0 %v4541
  %v4543 = vpop.xlane.xlu0 %4542
  %v4544 = vrot.slane %v4543, 4
  %v4545 = vadd.f32 %v4543, %v4544
  %v4546 = vrot.slane %v4545, 2
  %v4547 = vadd.f32 %v4545, %v4546
  %v4548 = vrot.slane %v4547, 1
  %v4549 = vadd.f32 %v4547, %v4548
  %v4550 = vadd.f32 %v4549, %v4471
  %vm4551 = vcmask 8200
  %4552 = vst.msk [vmem:[#allocation9] sm:$0x1] %vm4551, %v4539
  %vm4553 = vcmask 24600
  %4554 = vst.msk [vmem:[#allocation9] sm:$0x1] %vm4553, %v4550
  %v4555 = vmul.f32 %v4550, 0.5
  %v4556 = vmul.f32 %v4555, 1.442695
  %v4557 = vpow.pop %v4556
  %4559 = vrot.lane.b32.xlu0 %v4557, 126
  %v4560 = vpop.permute.xlu0 %4559
  %v4562 = vmul.f32 %v4470, %v4560
  %v4563 = vadd.f32 %v4562, %v4539
  %v4565 = vlaneseq
  %v4566 = vshrl.u32 %v4565, 7
  %v4567 = vsub.s32 0, %v4566
  %v4568 = vrot.slane %v4563, %v4567
  %4569 = vset.pattern.permute.xlu0 1
  %4570 = vperm.xlu0 %4569, %v4568
  %v4571 = vpop.permute.xlu0 %4570
  %v4573 = vmul.f32 %v4571, %v4482
  %v4574 = vadd.f32 %v4528, %v4573
  %vm4575 = vcmask 293888
  %4576 = vst.msk [vmem:[#allocation5] sm:$0xff] %vm4575, %v4574
  %v4577 = vmul.f32 %v4465, %v4473
  %v4578 = vsel %vm3774, %v4577, 0.0
  %4579 = vadd.xlane.f32.xlu0 %v4578
  %v4580 = vpop.xlane.xlu0 %4579
  %v4581 = vrot.slane %v4580, 4
  %v4582 = vadd.f32 %v4580, %v4581
  %v4583 = vrot.slane %v4582, 2
  %v4584 = vadd.f32 %v4582, %v4583
  %v4585 = vrot.slane %v4584, 1
  %v4586 = vadd.f32 %v4584, %v4585
  %v4587 = vadd.f32 %v4586, %v4471
  %v4588 = vmul.f32 %v4465, %v4477
  %v4589 = vsel %vm3774, %v4588, 0.0
  %4590 = vadd.xlane.f32.xlu0 %v4589
  %v4591 = vpop.xlane.xlu0 %4590
  %v4592 = vrot.slane %v4591, 4
  %v4593 = vadd.f32 %v4591, %v4592
  %v4594 = vrot.slane %v4593, 2
  %v4595 = vadd.f32 %v4593, %v4594
  %v4596 = vrot.slane %v4595, 1
  %v4597 = vadd.f32 %v4595, %v4596
  %v4598 = vadd.f32 %v4597, %v4471
  %v4600 = vlaneseq
  %v4601 = vshrl.u32 %v4600, 7
  %v4602 = vsub.s32 0, %v4601
  %v4603 = vrot.slane %v4587, %v4602
  %4604 = vrot.lane.b32.xlu0 %v4603, 4
  %v4605 = vpop.permute.xlu0 %4604
  %vm4607 = vcmask 32800
  %4608 = vst.msk [vmem:[#allocation9] sm:$0x1] %vm4607, %v4605
  %v4610 = vlaneseq
  %v4611 = vshrl.u32 %v4610, 7
  %v4612 = vsub.s32 0, %v4611
  %v4613 = vrot.slane %v4598, %v4612
  %4614 = vrot.lane.b32.xlu0 %v4613, 4
  %v4615 = vpop.permute.xlu0 %4614
  %vm4617 = vcmask 49200
  %4618 = vst.msk [vmem:[#allocation9] sm:$0x1] %vm4617, %v4615
  %v4619 = vmul.f32 %v4598, 0.5
  %v4620 = vmul.f32 %v4619, 1.442695
  %v4621 = vpow.pop %v4620
  %v4622 = vmul.f32 %v4470, %v4621
  %4623 = vrot.lane.b32.xlu0 %v4587, 2
  %v4624 = vpop.permute.xlu0 %4623
  %v4626 = vadd.f32 %v4622, %v4624
  %v4628 = vlaneseq
  %v4629 = vshrl.u32 %v4628, 7
  %v4630 = vsub.s32 0, %v4629
  %v4631 = vrot.slane %v4626, %v4630
  %4632 = vset.pattern.permute.xlu0 2
  %4633 = vperm.xlu0 %4632, %v4631
  %v4634 = vpop.permute.xlu0 %4633
  %v4636 = vmul.f32 %v4634, %v4480
  %v4637 = vadd.f32 %v4472, %v4636
  %v4638 = vmul.f32 %v4465, %v4475
  %v4639 = vsel %vm3774, %v4638, 0.0
  %4640 = vadd.xlane.f32.xlu0 %v4639
  %v4641 = vpop.xlane.xlu0 %4640
  %v4642 = vrot.slane %v4641, 4
  %v4643 = vadd.f32 %v4641, %v4642
  %v4644 = vrot.slane %v4643, 2
  %v4645 = vadd.f32 %v4643, %v4644
  %v4646 = vrot.slane %v4645, 1
  %v4647 = vadd.f32 %v4645, %v4646
  %v4648 = vadd.f32 %v4647, %v4471
  %v4649 = vmul.f32 %v4465, %v4479
  %v4650 = vsel %vm3774, %v4649, 0.0
  %4651 = vadd.xlane.f32.xlu0 %v4650
  %v4652 = vpop.xlane.xlu0 %4651
  %v4653 = vrot.slane %v4652, 4
  %v4654 = vadd.f32 %v4652, %v4653
  %v4655 = vrot.slane %v4654, 2
  %v4656 = vadd.f32 %v4654, %v4655
  %v4657 = vrot.slane %v4656, 1
  %v4658 = vadd.f32 %v4656, %v4657
  %v4659 = vadd.f32 %v4658, %v4471
  %v4661 = vlaneseq
  %v4662 = vshrl.u32 %v4661, 7
  %v4663 = vsub.s32 0, %v4662
  %v4664 = vrot.slane %v4648, %v4663
  %4665 = vrot.lane.b32.xlu0 %v4664, 4
  %v4666 = vpop.permute.xlu0 %4665
  %vm4668 = vcmask 41000
  %4669 = vst.msk [vmem:[#allocation9] sm:$0x1] %vm4668, %v4666
  %v4671 = vlaneseq
  %v4672 = vshrl.u32 %v4671, 7
  %v4673 = vsub.s32 0, %v4672
  %v4674 = vrot.slane %v4659, %v4673
  %4675 = vrot.lane.b32.xlu0 %v4674, 4
  %v4676 = vpop.permute.xlu0 %4675
  %vm4678 = vcmask 57400
  %4679 = vst.msk [vmem:[#allocation9] sm:$0x1] %vm4678, %v4676
  %v4680 = vmul.f32 %v4659, 0.5
  %v4681 = vmul.f32 %v4680, 1.442695
  %v4682 = vpow.pop %v4681
  %v4683 = vmul.f32 %v4470, %v4682
  %4684 = vrot.lane.b32.xlu0 %v4648, 2
  %v4685 = vpop.permute.xlu0 %4684
  %v4687 = vadd.f32 %v4683, %v4685
  %v4689 = vlaneseq
  %v4690 = vshrl.u32 %v4689, 7
  %v4691 = vsub.s32 0, %v4690
  %v4692 = vrot.slane %v4687, %v4691
  %4693 = vset.pattern.permute.xlu0 3
  %4694 = vperm.xlu0 %4693, %v4692
  %v4695 = vpop.permute.xlu0 %4694
  %v4697 = vmul.f32 %v4695, %v4482
  %v4698 = vadd.f32 %v4637, %v4697
  %4700 = vrot.lane.b32.xlu0 %v4698, 36
  %v4701 = vpop.permute.xlu0 %4700
  %vm4703 = vcmask 589088
  %4704 = vst.msk [vmem:[#allocation5] sm:$0xff] %vm4703, %v4701
  %v4705 = vld [vmem:[#allocation9] sm:$0x1]
  %vm4706 = vcmask 57344
  %4707 = vst.msk [vmem:[%s21] sm:$0x1] %vm4706, %v4705
  %v4708 = vld [vmem:[#allocation5] sm:$0xff]
  %vm4709 = vcmask 474112
  %4710 = vst.msk [vmem:[#allocation2] sm:$0xff] %vm4709, %v4708
  %4712 = vrot.lane.b32.xlu0 %v4708, 127
  %v4713 = vpop.permute.xlu0 %4712
  %4715 = vst.msk [vmem:[#allocation2 + $0x20] sm:$0xff] %vm4709, %v4713
  %4716 = vrot.lane.b32.xlu0 %v4708, 126
  %v4717 = vpop.permute.xlu0 %4716
  %4719 = vst.msk [vmem:[#allocation2 + $0x40] sm:$0xff] %vm4709, %v4717
  %4720 = vrot.lane.b32.xlu0 %v4708, 122
  %v4721 = vpop.permute.xlu0 %4720
  %4723 = vst.msk [vmem:[#allocation2 + $0x60] sm:$0xff] %vm4709, %v4721
  %4724 = vrot.lane.b32.xlu0 %v4708, 121
  %v4725 = vpop.permute.xlu0 %4724
  %4727 = vst.msk [vmem:[#allocation2 + $0x80] sm:$0xff] %vm4709, %v4725
  %4728 = vrot.lane.b32.xlu0 %v4708, 120
  %v4729 = vpop.permute.xlu0 %4728
  %4731 = vst.msk [vmem:[#allocation2 + $0xa0] sm:$0xff] %vm4709, %v4729
  %4732 = vrot.lane.b32.xlu0 %v4708, 116
  %v4733 = vpop.permute.xlu0 %4732
  %4735 = vst.msk [vmem:[#allocation2 + $0xc0] sm:$0xff] %vm4709, %v4733
  %4736 = vrot.lane.b32.xlu0 %v4708, 115
  %v4737 = vpop.permute.xlu0 %4736
  %4739 = vst.msk [vmem:[#allocation2 + $0xe0] sm:$0xff] %vm4709, %v4737
  %4740 = vrot.lane.b32.xlu0 %v4708, 114
  %v4741 = vpop.permute.xlu0 %4740
  %4743 = vst.msk [vmem:[#allocation2 + $0x100] sm:$0xff] %vm4709, %v4741
  %v4744 = vld [vmem:[#allocation2] sm:$0xff]
  %v4745 = vld [vmem:[#allocation2 + $0x20] sm:$0xff]
  %v4746 = vld [vmem:[#allocation2 + $0x40] sm:$0xff]
  %v4747 = vld [vmem:[#allocation2 + $0x60] sm:$0xff]
  %v4748 = vld [vmem:[#allocation2 + $0x80] sm:$0xff]
  %v4749 = vld [vmem:[#allocation2 + $0xa0] sm:$0xff]
  %v4750 = vld [vmem:[#allocation2 + $0xc0] sm:$0xff]
  %v4751 = vld [vmem:[#allocation2 + $0xe0] sm:$0xff]
  %v4752 = vld [vmem:[#allocation2 + $0x100] sm:$0xff]
  %v4753 = vpack.c.bf16 %v4745, %v4744
  %v4754 = vpack.c.bf16 %v4747, %v4746
  %v4755 = vpack.c.bf16 %v4749, %v4748
  %v4756 = vpack.c.bf16 %v4751, %v4750
  %v4757 = vpack.c.bf16 %v4752, %v4752
  %v4758 = vld [vmem:[%s5] sm:$0xf]
  %v4759 = vld [vmem:[%s9 + $0x20] sm:$0xff]
  %4761 = vset.pattern.permute.xlu0 0
  %4762 = vperm.xlu0 %4761, %v4759
  %v4763 = vpop.permute.xlu0 %4762
  %v4766 = vsel %vm4249, %v4758, 0
  %v4769 = vsel %vm2922, %v4757, 0
  %4771 = vmatprep.subr.bf16.mxu0 0
  %4772 = vmatpush1.bf16.msra.mxu0 0
  %4773 = vmatprep.subr.bf16.mxu0 0
  %4774 = vmatpush1.bf16.msra.mxu0 0
  %4775 = vmatprep.subr.bf16.mxu0 0
  %4776 = vmatpush1.bf16.msra.mxu0 0
  %4777 = vmatprep.subr.bf16.mxu0 0
  %4778 = vmatpush1.bf16.msra.mxu0 %v4769
  %4779 = vmatprep.subr.bf16.mxu0 0
  %4780 = vmatpush1.bf16.msra.mxu0 %v4756
  %4781 = vmatprep.subr.bf16.mxu0 0
  %4782 = vmatpush1.bf16.msra.mxu0 %v4755
  %4783 = vmatprep.subr.bf16.mxu0 0
  %4784 = vmatpush1.bf16.msra.mxu0 %v4754
  %4785 = vmatprep.subr.bf16.mxu0 0
  %4786 = vmatpush1.bf16.msra.mxu0 %v4753
  %4787 = vmatprep.subr.bf16.mxu0 0
  %4788 = vmatpush2.bf16.msra.mxu0 0
  %4789 = vmatprep.subr.bf16.mxu0 0
  %4790 = vmatpush2.bf16.msra.mxu0 0
  %4791 = vmatprep.subr.bf16.mxu0 0
  %4792 = vmatpush2.bf16.msra.mxu0 0
  %4793 = vmatprep.subr.bf16.mxu0 0
  %4794 = vmatpush2.bf16.msra.mxu0 0
  %4795 = vmatprep.subr.bf16.mxu0 0
  %4796 = vmatpush2.bf16.msra.mxu0 0
  %4797 = vmatprep.subr.bf16.mxu0 0
  %4798 = vmatpush2.bf16.msra.mxu0 0
  %4799 = vmatprep.subr.bf16.mxu0 0
  %4800 = vmatpush2.bf16.msra.mxu0 0
  %4801 = vmatprep.subr.bf16.mxu0 0
  %4802 = vmatpush2.bf16.msra.mxu0 0
  %4803 = vmatprep.mubr.bf16.mxu0 0
  %4804 = vmatmul.mubr.bf16.gmra.mxu0 %v4766
  %v4805 = vpop.f32.mrf.mxu0
  %v4806 = vadd.f32 %v4763, %v4805
  %v4807 = vpop.f32.mrf.mxu0
  %v4808 = vpop.f32.mrf.mxu0
  %v4809 = vpop.f32.mrf.mxu0
  %4810 = vdwg.mxu0
  %vm4811 = vcmp.gt.f32.partialorder %v4806, 0.0
  %v4812 = vmul.f32 %v4806, 0.01
  %v4813 = vsel %vm4811, %v4806, %v4812
  %v4814 = vpack.c.bf16 %v4813, %v4813
  %v4815 = vld [vmem:[%s17] sm:$0xf]
  %v4816 = vld [vmem:[%s17 + $0x4] sm:$0xf]
  %v4817 = vld [vmem:[%s17 + $0x8] sm:$0x7]
  %v4821 = vunpack.c.l.b16 %v4815
  %v4822 = vunpack.c.l.b16 %v4816
  %v4823 = vunpack.c.l.b16 %v4817
  %v4824 = vpack.c.b16 %v4822, %v4821
  %v4825 = vpack.c.b16 %v4823, %v4823
  %vm4827 = vcmask 179200
  %v4829 = vsel %vm4827, %v4814, 0
  %v4832 = vsel %vm2921, %v4825, 0
  %4834 = vmatprep.subr.bf16.mxu0 0
  %4835 = vmatpush1.bf16.msra.mxu0 0
  %4836 = vmatprep.subr.bf16.mxu0 0
  %4837 = vmatpush1.bf16.msra.mxu0 0
  %4838 = vmatprep.subr.bf16.mxu0 0
  %4839 = vmatpush1.bf16.msra.mxu0 0
  %4840 = vmatprep.subr.bf16.mxu0 0
  %4841 = vmatpush1.bf16.msra.mxu0 0
  %4842 = vmatprep.subr.bf16.mxu0 0
  %4843 = vmatpush1.bf16.msra.mxu0 0
  %4844 = vmatprep.subr.bf16.mxu0 0
  %4845 = vmatpush1.bf16.msra.mxu0 0
  %4846 = vmatprep.subr.bf16.mxu0 0
  %4847 = vmatpush1.bf16.msra.mxu0 %v4832
  %4848 = vmatprep.subr.bf16.mxu0 0
  %4849 = vmatpush1.bf16.msra.mxu0 %v4824
  %4850 = vmatprep.subr.bf16.mxu0 0
  %4851 = vmatpush2.bf16.msra.mxu0 0
  %4852 = vmatprep.subr.bf16.mxu0 0
  %4853 = vmatpush2.bf16.msra.mxu0 0
  %4854 = vmatprep.subr.bf16.mxu0 0
  %4855 = vmatpush2.bf16.msra.mxu0 0
  %4856 = vmatprep.subr.bf16.mxu0 0
  %4857 = vmatpush2.bf16.msra.mxu0 0
  %4858 = vmatprep.subr.bf16.mxu0 0
  %4859 = vmatpush2.bf16.msra.mxu0 0
  %4860 = vmatprep.subr.bf16.mxu0 0
  %4861 = vmatpush2.bf16.msra.mxu0 0
  %4862 = vmatprep.subr.bf16.mxu0 0
  %4863 = vmatpush2.bf16.msra.mxu0 0
  %4864 = vmatprep.subr.bf16.mxu0 0
  %4865 = vmatpush2.bf16.msra.mxu0 0
  %4866 = vmatprep.mubr.bf16.mxu0 0
  %4867 = vmatmul.mubr.bf16.gmra.mxu0 %v4829
  %v4868 = vpop.f32.mrf.mxu0
  %v4869 = vadd.f32 0.0, %v4868
  %v4870 = vpop.f32.mrf.mxu0
  %v4871 = vpop.f32.mrf.mxu0
  %v4872 = vpop.f32.mrf.mxu0
  %4873 = vdwg.mxu0
  %vm4874 = vcmask 818176
  %4875 = vst.msk [vmem:[#allocation6] sm:$0xff] %vm4874, %v4869
  %4877 = vrot.lane.b32.xlu0 %v4814, 92
  %v4878 = vpop.permute.xlu0 %4877
  %v4880 = vsel %vm4827, %v4878, 0
  %4882 = vmatprep.subr.bf16.mxu0 0
  %4883 = vmatpush1.bf16.msra.mxu0 0
  %4884 = vmatprep.subr.bf16.mxu0 0
  %4885 = vmatpush1.bf16.msra.mxu0 0
  %4886 = vmatprep.subr.bf16.mxu0 0
  %4887 = vmatpush1.bf16.msra.mxu0 0
  %4888 = vmatprep.subr.bf16.mxu0 0
  %4889 = vmatpush1.bf16.msra.mxu0 0
  %4890 = vmatprep.subr.bf16.mxu0 0
  %4891 = vmatpush1.bf16.msra.mxu0 0
  %4892 = vmatprep.subr.bf16.mxu0 0
  %4893 = vmatpush1.bf16.msra.mxu0 0
  %4894 = vmatprep.subr.bf16.mxu0 0
  %4895 = vmatpush1.bf16.msra.mxu0 %v4832
  %4896 = vmatprep.subr.bf16.mxu0 0
  %4897 = vmatpush1.bf16.msra.mxu0 %v4824
  %4898 = vmatprep.subr.bf16.mxu0 0
  %4899 = vmatpush2.bf16.msra.mxu0 0
  %4900 = vmatprep.subr.bf16.mxu0 0
  %4901 = vmatpush2.bf16.msra.mxu0 0
  %4902 = vmatprep.subr.bf16.mxu0 0
  %4903 = vmatpush2.bf16.msra.mxu0 0
  %4904 = vmatprep.subr.bf16.mxu0 0
  %4905 = vmatpush2.bf16.msra.mxu0 0
  %4906 = vmatprep.subr.bf16.mxu0 0
  %4907 = vmatpush2.bf16.msra.mxu0 0
  %4908 = vmatprep.subr.bf16.mxu0 0
  %4909 = vmatpush2.bf16.msra.mxu0 0
  %4910 = vmatprep.subr.bf16.mxu0 0
  %4911 = vmatpush2.bf16.msra.mxu0 0
  %4912 = vmatprep.subr.bf16.mxu0 0
  %4913 = vmatpush2.bf16.msra.mxu0 0
  %4914 = vmatprep.mubr.bf16.mxu0 0
  %4915 = vmatmul.mubr.bf16.gmra.mxu0 %v4880
  %v4916 = vpop.f32.mrf.mxu0
  %v4917 = vadd.f32 0.0, %v4916
  %v4918 = vpop.f32.mrf.mxu0
  %v4919 = vpop.f32.mrf.mxu0
  %v4920 = vpop.f32.mrf.mxu0
  %4921 = vdwg.mxu0
  %4923 = vrot.lane.b32.xlu0 %v4917, 100
  %v4924 = vpop.permute.xlu0 %4923
  %vm4926 = vcmask 1048352
  %4927 = vst.msk [vmem:[#allocation6] sm:$0xff] %vm4926, %v4924
  %4928 = vst.msk [vmem:[#allocation6 + $0x8] sm:$0xff] %vm4249, %v4924
  %v4929 = vld [vmem:[#allocation6] sm:$0xff]
  %v4930 = vld [vmem:[#allocation6 + $0x8] sm:$0xff]
  %4931 = vst [vmem:[#allocation2] sm:$0xff] %v4929
  %vm4932 = vcmask 408576
  %4933 = vst.msk [vmem:[#allocation2 + $0x8] sm:$0xff] %vm4932, %v4930
  %4936 = vrot.lane.b32.xlu0 %v4929, 127
  %v4937 = vpop.permute.xlu0 %4936
  %4938 = vrot.lane.b32.xlu0 %v4930, 127
  %v4939 = vpop.permute.xlu0 %4938
  %v4940 = vsel %vm302, %v4937, %v4939
  %4943 = vst [vmem:[#allocation2 + $0x20] sm:$0xff] %v4940
  %4944 = vst.msk [vmem:[#allocation2 + $0x28] sm:$0xff] %vm4932, %v4939
  %4945 = vrot.lane.b32.xlu0 %v4929, 126
  %v4946 = vpop.permute.xlu0 %4945
  %4947 = vrot.lane.b32.xlu0 %v4930, 126
  %v4948 = vpop.permute.xlu0 %4947
  %v4949 = vsel %vm505, %v4946, %v4948
  %4952 = vst [vmem:[#allocation2 + $0x40] sm:$0xff] %v4949
  %4953 = vst.msk [vmem:[#allocation2 + $0x48] sm:$0xff] %vm4932, %v4948
  %4954 = vrot.lane.b32.xlu0 %v4929, 118
  %v4955 = vpop.permute.xlu0 %4954
  %4956 = vrot.lane.b32.xlu0 %v4930, 118
  %v4957 = vpop.permute.xlu0 %4956
  %vm4958 = vcmask 965632
  %v4959 = vsel %vm4958, %v4955, %v4957
  %4962 = vst [vmem:[#allocation2 + $0x60] sm:$0xff] %v4959
  %4963 = vst.msk [vmem:[#allocation2 + $0x68] sm:$0xff] %vm4932, %v4957
  %4964 = vrot.lane.b32.xlu0 %v4929, 117
  %v4965 = vpop.permute.xlu0 %4964
  %4966 = vrot.lane.b32.xlu0 %v4930, 117
  %v4967 = vpop.permute.xlu0 %4966
  %v4968 = vsel %vm4158, %v4965, %v4967
  %4971 = vst [vmem:[#allocation2 + $0x80] sm:$0xff] %v4968
  %4972 = vst.msk [vmem:[#allocation2 + $0x88] sm:$0xff] %vm4932, %v4967
  %4973 = vrot.lane.b32.xlu0 %v4929, 116
  %v4974 = vpop.permute.xlu0 %4973
  %4975 = vrot.lane.b32.xlu0 %v4930, 116
  %v4976 = vpop.permute.xlu0 %4975
  %v4977 = vsel %vm4168, %v4974, %v4976
  %4980 = vst [vmem:[#allocation2 + $0xa0] sm:$0xff] %v4977
  %4981 = vst.msk [vmem:[#allocation2 + $0xa8] sm:$0xff] %vm4932, %v4976
  %4982 = vrot.lane.b32.xlu0 %v4929, 108
  %v4983 = vpop.permute.xlu0 %4982
  %4984 = vrot.lane.b32.xlu0 %v4930, 108
  %v4985 = vpop.permute.xlu0 %4984
  %vm4986 = vcmask 883712
  %v4987 = vsel %vm4986, %v4983, %v4985
  %4990 = vst [vmem:[#allocation2 + $0xc0] sm:$0xff] %v4987
  %4991 = vst.msk [vmem:[#allocation2 + $0xc8] sm:$0xff] %vm4932, %v4985
  %4992 = vrot.lane.b32.xlu0 %v4929, 107
  %v4993 = vpop.permute.xlu0 %4992
  %4994 = vrot.lane.b32.xlu0 %v4930, 107
  %v4995 = vpop.permute.xlu0 %4994
  %vm4996 = vcmask 875520
  %v4997 = vsel %vm4996, %v4993, %v4995
  %5000 = vst [vmem:[#allocation2 + $0xe0] sm:$0xff] %v4997
  %5001 = vst.msk [vmem:[#allocation2 + $0xe8] sm:$0xff] %vm4932, %v4995
  %5002 = vrot.lane.b32.xlu0 %v4929, 106
  %v5003 = vpop.permute.xlu0 %5002
  %5004 = vrot.lane.b32.xlu0 %v4930, 106
  %v5005 = vpop.permute.xlu0 %5004
  %v5006 = vsel %vm4188, %v5003, %v5005
  %5009 = vst [vmem:[#allocation2 + $0x100] sm:$0xff] %v5006
  %5010 = vst.msk [vmem:[#allocation2 + $0x108] sm:$0xff] %vm4932, %v5005
  %v5011 = vld [vmem:[#allocation2] sm:$0xff]
  %v5012 = vld [vmem:[#allocation2 + $0x8] sm:$0xff]
  %v5013 = vld [vmem:[#allocation2 + $0x20] sm:$0xff]
  %v5014 = vld [vmem:[#allocation2 + $0x28] sm:$0xff]
  %v5015 = vld [vmem:[#allocation2 + $0x40] sm:$0xff]
  %v5016 = vld [vmem:[#allocation2 + $0x48] sm:$0xff]
  %v5017 = vld [vmem:[#allocation2 + $0x60] sm:$0xff]
  %v5018 = vld [vmem:[#allocation2 + $0x68] sm:$0xff]
  %v5019 = vld [vmem:[#allocation2 + $0x80] sm:$0xff]
  %v5020 = vld [vmem:[#allocation2 + $0x88] sm:$0xff]
  %v5021 = vld [vmem:[#allocation2 + $0xa0] sm:$0xff]
  %v5022 = vld [vmem:[#allocation2 + $0xa8] sm:$0xff]
  %v5023 = vld [vmem:[#allocation2 + $0xc0] sm:$0xff]
  %v5024 = vld [vmem:[#allocation2 + $0xc8] sm:$0xff]
  %v5025 = vld [vmem:[#allocation2 + $0xe0] sm:$0xff]
  %v5026 = vld [vmem:[#allocation2 + $0xe8] sm:$0xff]
  %v5027 = vld [vmem:[#allocation2 + $0x100] sm:$0xff]
  %v5028 = vld [vmem:[#allocation2 + $0x108] sm:$0xff]
  %v5029 = vpack.c.bf16 %v5013, %v5011
  %v5030 = vpack.c.bf16 %v5014, %v5012
  %v5031 = vpack.c.bf16 %v5017, %v5015
  %v5032 = vpack.c.bf16 %v5018, %v5016
  %v5033 = vpack.c.bf16 %v5021, %v5019
  %v5034 = vpack.c.bf16 %v5022, %v5020
  %v5035 = vpack.c.bf16 %v5025, %v5023
  %v5036 = vpack.c.bf16 %v5026, %v5024
  %v5037 = vpack.c.bf16 %v5027, %v5027
  %v5038 = vpack.c.bf16 %v5028, %v5028
  %v5039 = vld [vmem:[%s6] sm:$0xf]
  %v5040 = vld [vmem:[%s6 + $0x4] sm:$0xf]
  %v5041 = vld [vmem:[%s9 + $0x28] sm:$0xff]
  %v5042 = vld [vmem:[%s9 + $0x30] sm:$0xff]
  %5044 = vset.pattern.permute.xlu0 0
  %5045 = vperm.xlu0 %5044, %v5041
  %v5046 = vpop.permute.xlu0 %5045
  %5049 = vset.pattern.permute.xlu0 0
  %5050 = vperm.xlu0 %5049, %v5042
  %v5051 = vpop.permute.xlu0 %5050
  %v5055 = vunpack.c.l.b16 %v5039
  %v5056 = vunpack.c.l.b16 %v5040
  %v5057 = vpack.c.b16 %v5056, %v5055
  %v5059 = vsel %vm4249, %v5057, 0
  %v5062 = vsel %vm2922, %v5037, 0
  %v5065 = vsel %vm2922, %v5038, 0
  %5067 = vmatprep.subr.bf16.mxu0 0
  %5068 = vmatpush1.bf16.msra.mxu0 0
  %5069 = vmatprep.subr.bf16.mxu0 0
  %5070 = vmatpush1.bf16.msra.mxu0 0
  %5071 = vmatprep.subr.bf16.mxu0 0
  %5072 = vmatpush1.bf16.msra.mxu0 0
  %5073 = vmatprep.subr.bf16.mxu0 %v5065
  %5074 = vmatpush1.bf16.msra.mxu0 %v5062
  %5075 = vmatprep.subr.bf16.mxu0 %v5036
  %5076 = vmatpush1.bf16.msra.mxu0 %v5035
  %5077 = vmatprep.subr.bf16.mxu0 %v5034
  %5078 = vmatpush1.bf16.msra.mxu0 %v5033
  %5079 = vmatprep.subr.bf16.mxu0 %v5032
  %5080 = vmatpush1.bf16.msra.mxu0 %v5031
  %5081 = vmatprep.subr.bf16.mxu0 %v5030
  %5082 = vmatpush1.bf16.msra.mxu0 %v5029
  %5083 = vmatprep.subr.bf16.mxu0 0
  %5084 = vmatpush2.bf16.msra.mxu0 0
  %5085 = vmatprep.subr.bf16.mxu0 0
  %5086 = vmatpush2.bf16.msra.mxu0 0
  %5087 = vmatprep.subr.bf16.mxu0 0
  %5088 = vmatpush2.bf16.msra.mxu0 0
  %5089 = vmatprep.subr.bf16.mxu0 0
  %5090 = vmatpush2.bf16.msra.mxu0 0
  %5091 = vmatprep.subr.bf16.mxu0 0
  %5092 = vmatpush2.bf16.msra.mxu0 0
  %5093 = vmatprep.subr.bf16.mxu0 0
  %5094 = vmatpush2.bf16.msra.mxu0 0
  %5095 = vmatprep.subr.bf16.mxu0 0
  %5096 = vmatpush2.bf16.msra.mxu0 0
  %5097 = vmatprep.subr.bf16.mxu0 0
  %5098 = vmatpush2.bf16.msra.mxu0 0
  %5099 = vmatprep.mubr.bf16.mxu0 0
  %5100 = vmatmul.mubr.bf16.gmra.mxu0 %v5059
  %v5101 = vpop.f32.mrf.mxu0
  %v5102 = vadd.f32 %v5046, %v5101
  %v5103 = vpop.f32.mrf.mxu0
  %v5104 = vadd.f32 %v5046, %v5103
  %v5105 = vpop.f32.mrf.mxu0
  %v5106 = vadd.f32 %v5051, %v5105
  %v5107 = vpop.f32.mrf.mxu0
  %v5108 = vadd.f32 %v5051, %v5107
  %5109 = vdwg.mxu0
  %vm5110 = vcmp.gt.f32.partialorder %v5102, 0.0
  %vm5111 = vcmp.gt.f32.partialorder %v5104, 0.0
  %vm5112 = vcmp.gt.f32.partialorder %v5106, 0.0
  %vm5113 = vcmp.gt.f32.partialorder %v5108, 0.0
  %v5114 = vmul.f32 %v5102, 0.01
  %v5115 = vmul.f32 %v5104, 0.01
  %v5116 = vmul.f32 %v5106, 0.01
  %v5117 = vmul.f32 %v5108, 0.01
  %v5118 = vsel %vm5110, %v5102, %v5114
  %v5119 = vsel %vm5111, %v5104, %v5115
  %v5120 = vsel %vm5112, %v5106, %v5116
  %v5121 = vsel %vm5113, %v5108, %v5117
  %v5122 = vpack.c.bf16 %v5120, %v5118
  %v5123 = vpack.c.bf16 %v5121, %v5119
  %v5124 = vld [vmem:[%s18] sm:$0xff]
  %v5125 = vld [vmem:[%s18 + $0x8] sm:$0xff]
  %v5126 = vld [vmem:[%s18 + $0x10] sm:$0xff]
  %v5127 = vld [vmem:[%s18 + $0x18] sm:$0xff]
  %v5128 = vld [vmem:[%s18 + $0x20] sm:$0xff]
  %v5129 = vld [vmem:[%s18 + $0x28] sm:$0xff]
  %v5130 = vld [vmem:[%s18 + $0x30] sm:$0xff]
  %v5131 = vld [vmem:[%s18 + $0x38] sm:$0xff]
  %v5132 = vld [vmem:[%s18 + $0x40] sm:$0xff]
  %v5133 = vld [vmem:[%s18 + $0x48] sm:$0x77]
  %v5144 = vunpack.c.l.b16 %v5124
  %v5145 = vunpack.c.h.b16 %v5124
  %v5146 = vunpack.c.l.b16 %v5125
  %v5147 = vunpack.c.h.b16 %v5125
  %v5148 = vunpack.c.l.b16 %v5126
  %v5149 = vunpack.c.h.b16 %v5126
  %v5150 = vunpack.c.l.b16 %v5127
  %v5151 = vunpack.c.h.b16 %v5127
  %v5152 = vunpack.c.l.b16 %v5128
  %v5153 = vunpack.c.h.b16 %v5128
  %v5154 = vunpack.c.l.b16 %v5129
  %v5155 = vunpack.c.h.b16 %v5129
  %v5156 = vunpack.c.l.b16 %v5130
  %v5157 = vunpack.c.h.b16 %v5130
  %v5158 = vunpack.c.l.b16 %v5131
  %v5159 = vunpack.c.h.b16 %v5131
  %v5160 = vunpack.c.l.b16 %v5132
  %v5161 = vunpack.c.h.b16 %v5132
  %v5162 = vunpack.c.l.b16 %v5133
  %v5163 = vunpack.c.h.b16 %v5133
  %v5164 = vpack.c.b16 %v5146, %v5144
  %v5165 = vpack.c.b16 %v5147, %v5145
  %v5166 = vpack.c.b16 %v5150, %v5148
  %v5167 = vpack.c.b16 %v5151, %v5149
  %v5168 = vpack.c.b16 %v5154, %v5152
  %v5169 = vpack.c.b16 %v5155, %v5153
  %v5170 = vpack.c.b16 %v5158, %v5156
  %v5171 = vpack.c.b16 %v5159, %v5157
  %v5172 = vpack.c.b16 %v5162, %v5160
  %v5173 = vpack.c.b16 %v5163, %v5161
  %vm5182 = vcmask 637952
  %v5184 = vsel %vm5182, %v5122, 0
  %v5187 = vsel %vm4030, %v5172, 0
  %v5190 = vsel %vm4030, %v5173, 0
  %5192 = vmatprep.subr.bf16.mxu0 0
  %5193 = vmatpush1.bf16.msra.mxu0 0
  %5194 = vmatprep.subr.bf16.mxu0 0
  %5195 = vmatpush1.bf16.msra.mxu0 0
  %5196 = vmatprep.subr.bf16.mxu0 0
  %5197 = vmatpush1.bf16.msra.mxu0 0
  %5198 = vmatprep.subr.bf16.mxu0 %v5190
  %5199 = vmatpush1.bf16.msra.mxu0 %v5187
  %5200 = vmatprep.subr.bf16.mxu0 %v5171
  %5201 = vmatpush1.bf16.msra.mxu0 %v5170
  %5202 = vmatprep.subr.bf16.mxu0 %v5169
  %5203 = vmatpush1.bf16.msra.mxu0 %v5168
  %5204 = vmatprep.subr.bf16.mxu0 %v5167
  %5205 = vmatpush1.bf16.msra.mxu0 %v5166
  %5206 = vmatprep.subr.bf16.mxu0 %v5165
  %5207 = vmatpush1.bf16.msra.mxu0 %v5164
  %5208 = vmatprep.subr.bf16.mxu0 0
  %5209 = vmatpush2.bf16.msra.mxu0 0
  %5210 = vmatprep.subr.bf16.mxu0 0
  %5211 = vmatpush2.bf16.msra.mxu0 0
  %5212 = vmatprep.subr.bf16.mxu0 0
  %5213 = vmatpush2.bf16.msra.mxu0 0
  %5214 = vmatprep.subr.bf16.mxu0 0
  %5215 = vmatpush2.bf16.msra.mxu0 0
  %5216 = vmatprep.subr.bf16.mxu0 0
  %5217 = vmatpush2.bf16.msra.mxu0 0
  %5218 = vmatprep.subr.bf16.mxu0 0
  %5219 = vmatpush2.bf16.msra.mxu0 0
  %5220 = vmatprep.subr.bf16.mxu0 0
  %5221 = vmatpush2.bf16.msra.mxu0 0
  %5222 = vmatprep.subr.bf16.mxu0 0
  %5223 = vmatpush2.bf16.msra.mxu0 0
  %5224 = vmatprep.mubr.bf16.mxu0 0
  %5225 = vmatmul.mubr.bf16.gmra.mxu0 %v5184
  %v5226 = vpop.f32.mrf.mxu0
  %v5227 = vadd.f32 0.0, %v5226
  %v5228 = vpop.f32.mrf.mxu0
  %v5229 = vadd.f32 0.0, %v5228
  %v5230 = vpop.f32.mrf.mxu0
  %v5231 = vadd.f32 0.0, %v5230
  %v5232 = vpop.f32.mrf.mxu0
  %v5233 = vadd.f32 0.0, %v5232
  %5234 = vdwg.mxu0
  %5235 = vst [vmem:[#allocation7] sm:$0xff] %v5227
  %5236 = vst [vmem:[#allocation7 + $0x8] sm:$0xff] %v5229
  %5237 = vst [vmem:[#allocation7 + $0x20] sm:$0xff] %v5231
  %5238 = vst [vmem:[#allocation7 + $0x28] sm:$0xff] %v5233
  %5241 = vrot.lane.b32.xlu0 %v5122, 28
  %v5242 = vpop.permute.xlu0 %5241
  %5243 = vrot.lane.b32.xlu0 %v5123, 28
  %v5244 = vpop.permute.xlu0 %5243
  %vm5245 = vcmask 228352
  %v5246 = vsel %vm5245, %v5242, %v5244
  %v5248 = vsel %vm5182, %v5246, 0
  %5250 = vmatprep.subr.bf16.mxu0 0
  %5251 = vmatpush1.bf16.msra.mxu0 0
  %5252 = vmatprep.subr.bf16.mxu0 0
  %5253 = vmatpush1.bf16.msra.mxu0 0
  %5254 = vmatprep.subr.bf16.mxu0 0
  %5255 = vmatpush1.bf16.msra.mxu0 0
  %5256 = vmatprep.subr.bf16.mxu0 %v5190
  %5257 = vmatpush1.bf16.msra.mxu0 %v5187
  %5258 = vmatprep.subr.bf16.mxu0 %v5171
  %5259 = vmatpush1.bf16.msra.mxu0 %v5170
  %5260 = vmatprep.subr.bf16.mxu0 %v5169
  %5261 = vmatpush1.bf16.msra.mxu0 %v5168
  %5262 = vmatprep.subr.bf16.mxu0 %v5167
  %5263 = vmatpush1.bf16.msra.mxu0 %v5166
  %5264 = vmatprep.subr.bf16.mxu0 %v5165
  %5265 = vmatpush1.bf16.msra.mxu0 %v5164
  %5266 = vmatprep.subr.bf16.mxu0 0
  %5267 = vmatpush2.bf16.msra.mxu0 0
  %5268 = vmatprep.subr.bf16.mxu0 0
  %5269 = vmatpush2.bf16.msra.mxu0 0
  %5270 = vmatprep.subr.bf16.mxu0 0
  %5271 = vmatpush2.bf16.msra.mxu0 0
  %5272 = vmatprep.subr.bf16.mxu0 0
  %5273 = vmatpush2.bf16.msra.mxu0 0
  %5274 = vmatprep.subr.bf16.mxu0 0
  %5275 = vmatpush2.bf16.msra.mxu0 0
  %5276 = vmatprep.subr.bf16.mxu0 0
  %5277 = vmatpush2.bf16.msra.mxu0 0
  %5278 = vmatprep.subr.bf16.mxu0 0
  %5279 = vmatpush2.bf16.msra.mxu0 0
  %5280 = vmatprep.subr.bf16.mxu0 0
  %5281 = vmatpush2.bf16.msra.mxu0 0
  %5282 = vmatprep.mubr.bf16.mxu0 0
  %5283 = vmatmul.mubr.bf16.gmra.mxu0 %v5248
  %v5284 = vpop.f32.mrf.mxu0
  %v5285 = vadd.f32 0.0, %v5284
  %v5286 = vpop.f32.mrf.mxu0
  %v5287 = vadd.f32 0.0, %v5286
  %v5288 = vpop.f32.mrf.mxu0
  %v5289 = vadd.f32 0.0, %v5288
  %v5290 = vpop.f32.mrf.mxu0
  %v5291 = vadd.f32 0.0, %v5290
  %5292 = vdwg.mxu0
  %5293 = vst [vmem:[#allocation7 + $0x10] sm:$0xff] %v5285
  %5294 = vst [vmem:[#allocation7 + $0x18] sm:$0xff] %v5287
  %5295 = vst [vmem:[#allocation7 + $0x30] sm:$0xff] %v5289
  %5296 = vst [vmem:[#allocation7 + $0x38] sm:$0xff] %v5291
  %v5297 = vld [vmem:[#allocation7] sm:$0xff]
  %v5298 = vld [vmem:[#allocation7 + $0x8] sm:$0xff]
  %v5299 = vld [vmem:[#allocation7 + $0x10] sm:$0xff]
  %v5300 = vld [vmem:[#allocation7 + $0x18] sm:$0xff]
  %v5301 = vld [vmem:[#allocation7 + $0x20] sm:$0xff]
  %v5302 = vld [vmem:[#allocation7 + $0x28] sm:$0xff]
  %v5303 = vld [vmem:[#allocation7 + $0x30] sm:$0xff]
  %v5304 = vld [vmem:[#allocation7 + $0x38] sm:$0xff]
  %5305 = vst [vmem:[#allocation2] sm:$0xff] %v5297
  %5306 = vst [vmem:[#allocation2 + $0x8] sm:$0xff] %v5298
  %5307 = vst [vmem:[#allocation2 + $0x10] sm:$0xff] %v5299
  %5308 = vst.msk [vmem:[#allocation2 + $0x18] sm:$0xff] %vm3331, %v5300
  %5309 = vst [vmem:[#allocation2 + $0x20] sm:$0xff] %v5301
  %5310 = vst [vmem:[#allocation2 + $0x28] sm:$0xff] %v5302
  %5311 = vst [vmem:[#allocation2 + $0x30] sm:$0xff] %v5303
  %5312 = vst.msk [vmem:[#allocation2 + $0x38] sm:$0xff] %vm3331, %v5304
  %5321 = vrot.lane.b32.xlu0 %v5297, 127
  %v5322 = vpop.permute.xlu0 %5321
  %5323 = vrot.lane.b32.xlu0 %v5298, 127
  %v5324 = vpop.permute.xlu0 %5323
  %5325 = vrot.lane.b32.xlu0 %v5299, 127
  %v5326 = vpop.permute.xlu0 %5325
  %5327 = vrot.lane.b32.xlu0 %v5300, 127
  %v5328 = vpop.permute.xlu0 %5327
  %5329 = vrot.lane.b32.xlu0 %v5301, 127
  %v5330 = vpop.permute.xlu0 %5329
  %5331 = vrot.lane.b32.xlu0 %v5302, 127
  %v5332 = vpop.permute.xlu0 %5331
  %5333 = vrot.lane.b32.xlu0 %v5303, 127
  %v5334 = vpop.permute.xlu0 %5333
  %5335 = vrot.lane.b32.xlu0 %v5304, 127
  %v5336 = vpop.permute.xlu0 %5335
  %v5337 = vsel %vm302, %v5322, %v5324
  %v5338 = vsel %vm302, %v5324, %v5326
  %v5339 = vsel %vm302, %v5326, %v5328
  %v5340 = vsel %vm302, %v5330, %v5332
  %v5341 = vsel %vm302, %v5332, %v5334
  %v5342 = vsel %vm302, %v5334, %v5336
  %5351 = vst [vmem:[#allocation2 + $0x40] sm:$0xff] %v5337
  %5352 = vst [vmem:[#allocation2 + $0x48] sm:$0xff] %v5338
  %5353 = vst [vmem:[#allocation2 + $0x50] sm:$0xff] %v5339
  %5354 = vst.msk [vmem:[#allocation2 + $0x58] sm:$0xff] %vm3331, %v5328
  %5355 = vst [vmem:[#allocation2 + $0x60] sm:$0xff] %v5340
  %5356 = vst [vmem:[#allocation2 + $0x68] sm:$0xff] %v5341
  %5357 = vst [vmem:[#allocation2 + $0x70] sm:$0xff] %v5342
  %5358 = vst.msk [vmem:[#allocation2 + $0x78] sm:$0xff] %vm3331, %v5336
  %5359 = vrot.lane.b32.xlu0 %v5297, 126
  %v5360 = vpop.permute.xlu0 %5359
  %5361 = vrot.lane.b32.xlu0 %v5298, 126
  %v5362 = vpop.permute.xlu0 %5361
  %5363 = vrot.lane.b32.xlu0 %v5299, 126
  %v5364 = vpop.permute.xlu0 %5363
  %5365 = vrot.lane.b32.xlu0 %v5300, 126
  %v5366 = vpop.permute.xlu0 %5365
  %5367 = vrot.lane.b32.xlu0 %v5301, 126
  %v5368 = vpop.permute.xlu0 %5367
  %5369 = vrot.lane.b32.xlu0 %v5302, 126
  %v5370 = vpop.permute.xlu0 %5369
  %5371 = vrot.lane.b32.xlu0 %v5303, 126
  %v5372 = vpop.permute.xlu0 %5371
  %5373 = vrot.lane.b32.xlu0 %v5304, 126
  %v5374 = vpop.permute.xlu0 %5373
  %v5375 = vsel %vm505, %v5360, %v5362
  %v5376 = vsel %vm505, %v5362, %v5364
  %v5377 = vsel %vm505, %v5364, %v5366
  %v5378 = vsel %vm505, %v5368, %v5370
  %v5379 = vsel %vm505, %v5370, %v5372
  %v5380 = vsel %vm505, %v5372, %v5374
  %5389 = vst [vmem:[#allocation2 + $0x80] sm:$0xff] %v5375
  %5390 = vst [vmem:[#allocation2 + $0x88] sm:$0xff] %v5376
  %5391 = vst [vmem:[#allocation2 + $0x90] sm:$0xff] %v5377
  %5392 = vst.msk [vmem:[#allocation2 + $0x98] sm:$0xff] %vm3331, %v5366
  %5393 = vst [vmem:[#allocation2 + $0xa0] sm:$0xff] %v5378
  %5394 = vst [vmem:[#allocation2 + $0xa8] sm:$0xff] %v5379
  %5395 = vst [vmem:[#allocation2 + $0xb0] sm:$0xff] %v5380
  %5396 = vst.msk [vmem:[#allocation2 + $0xb8] sm:$0xff] %vm3331, %v5374
  %5397 = vrot.lane.b32.xlu0 %v5297, 112
  %v5398 = vpop.permute.xlu0 %5397
  %5399 = vrot.lane.b32.xlu0 %v5298, 112
  %v5400 = vpop.permute.xlu0 %5399
  %5401 = vrot.lane.b32.xlu0 %v5299, 112
  %v5402 = vpop.permute.xlu0 %5401
  %5403 = vrot.lane.b32.xlu0 %v5300, 112
  %v5404 = vpop.permute.xlu0 %5403
  %5405 = vrot.lane.b32.xlu0 %v5301, 112
  %v5406 = vpop.permute.xlu0 %5405
  %5407 = vrot.lane.b32.xlu0 %v5302, 112
  %v5408 = vpop.permute.xlu0 %5407
  %5409 = vrot.lane.b32.xlu0 %v5303, 112
  %v5410 = vpop.permute.xlu0 %5409
  %5411 = vrot.lane.b32.xlu0 %v5304, 112
  %v5412 = vpop.permute.xlu0 %5411
  %v5413 = vsel %vm3437, %v5398, %v5400
  %v5414 = vsel %vm3437, %v5400, %v5402
  %v5415 = vsel %vm3437, %v5402, %v5404
  %v5416 = vsel %vm3437, %v5406, %v5408
  %v5417 = vsel %vm3437, %v5408, %v5410
  %v5418 = vsel %vm3437, %v5410, %v5412
  %5427 = vst [vmem:[#allocation2 + $0xc0] sm:$0xff] %v5413
  %5428 = vst [vmem:[#allocation2 + $0xc8] sm:$0xff] %v5414
  %5429 = vst [vmem:[#allocation2 + $0xd0] sm:$0xff] %v5415
  %5430 = vst.msk [vmem:[#allocation2 + $0xd8] sm:$0xff] %vm3331, %v5404
  %5431 = vst [vmem:[#allocation2 + $0xe0] sm:$0xff] %v5416
  %5432 = vst [vmem:[#allocation2 + $0xe8] sm:$0xff] %v5417
  %5433 = vst [vmem:[#allocation2 + $0xf0] sm:$0xff] %v5418
  %5434 = vst.msk [vmem:[#allocation2 + $0xf8] sm:$0xff] %vm3331, %v5412
  %5435 = vrot.lane.b32.xlu0 %v5297, 111
  %v5436 = vpop.permute.xlu0 %5435
  %5437 = vrot.lane.b32.xlu0 %v5298, 111
  %v5438 = vpop.permute.xlu0 %5437
  %5439 = vrot.lane.b32.xlu0 %v5299, 111
  %v5440 = vpop.permute.xlu0 %5439
  %5441 = vrot.lane.b32.xlu0 %v5300, 111
  %v5442 = vpop.permute.xlu0 %5441
  %5443 = vrot.lane.b32.xlu0 %v5301, 111
  %v5444 = vpop.permute.xlu0 %5443
  %5445 = vrot.lane.b32.xlu0 %v5302, 111
  %v5446 = vpop.permute.xlu0 %5445
  %5447 = vrot.lane.b32.xlu0 %v5303, 111
  %v5448 = vpop.permute.xlu0 %5447
  %5449 = vrot.lane.b32.xlu0 %v5304, 111
  %v5450 = vpop.permute.xlu0 %5449
  %v5451 = vsel %vm3476, %v5436, %v5438
  %v5452 = vsel %vm3476, %v5438, %v5440
  %v5453 = vsel %vm3476, %v5440, %v5442
  %v5454 = vsel %vm3476, %v5444, %v5446
  %v5455 = vsel %vm3476, %v5446, %v5448
  %v5456 = vsel %vm3476, %v5448, %v5450
  %5465 = vst [vmem:[#allocation2 + $0x100] sm:$0xff] %v5451
  %5466 = vst [vmem:[#allocation2 + $0x108] sm:$0xff] %v5452
  %5467 = vst [vmem:[#allocation2 + $0x110] sm:$0xff] %v5453
  %5468 = vst.msk [vmem:[#allocation2 + $0x118] sm:$0xff] %vm3331, %v5442
  %5469 = vst [vmem:[#allocation2 + $0x120] sm:$0xff] %v5454
  %5470 = vst [vmem:[#allocation2 + $0x128] sm:$0xff] %v5455
  %5471 = vst [vmem:[#allocation2 + $0x130] sm:$0xff] %v5456
  %5472 = vst.msk [vmem:[#allocation2 + $0x138] sm:$0xff] %vm3331, %v5450
  %5473 = vrot.lane.b32.xlu0 %v5297, 110
  %v5474 = vpop.permute.xlu0 %5473
  %5475 = vrot.lane.b32.xlu0 %v5298, 110
  %v5476 = vpop.permute.xlu0 %5475
  %5477 = vrot.lane.b32.xlu0 %v5299, 110
  %v5478 = vpop.permute.xlu0 %5477
  %5479 = vrot.lane.b32.xlu0 %v5300, 110
  %v5480 = vpop.permute.xlu0 %5479
  %5481 = vrot.lane.b32.xlu0 %v5301, 110
  %v5482 = vpop.permute.xlu0 %5481
  %5483 = vrot.lane.b32.xlu0 %v5302, 110
  %v5484 = vpop.permute.xlu0 %5483
  %5485 = vrot.lane.b32.xlu0 %v5303, 110
  %v5486 = vpop.permute.xlu0 %5485
  %5487 = vrot.lane.b32.xlu0 %v5304, 110
  %v5488 = vpop.permute.xlu0 %5487
  %v5489 = vsel %vm3515, %v5474, %v5476
  %v5490 = vsel %vm3515, %v5476, %v5478
  %v5491 = vsel %vm3515, %v5478, %v5480
  %v5492 = vsel %vm3515, %v5482, %v5484
  %v5493 = vsel %vm3515, %v5484, %v5486
  %v5494 = vsel %vm3515, %v5486, %v5488
  %5503 = vst [vmem:[#allocation2 + $0x140] sm:$0xff] %v5489
  %5504 = vst [vmem:[#allocation2 + $0x148] sm:$0xff] %v5490
  %5505 = vst [vmem:[#allocation2 + $0x150] sm:$0xff] %v5491
  %5506 = vst.msk [vmem:[#allocation2 + $0x158] sm:$0xff] %vm3331, %v5480
  %5507 = vst [vmem:[#allocation2 + $0x160] sm:$0xff] %v5492
  %5508 = vst [vmem:[#allocation2 + $0x168] sm:$0xff] %v5493
  %5509 = vst [vmem:[#allocation2 + $0x170] sm:$0xff] %v5494
  %5510 = vst.msk [vmem:[#allocation2 + $0x178] sm:$0xff] %vm3331, %v5488
  %5511 = vrot.lane.b32.xlu0 %v5297, 96
  %v5512 = vpop.permute.xlu0 %5511
  %5513 = vrot.lane.b32.xlu0 %v5298, 96
  %v5514 = vpop.permute.xlu0 %5513
  %5515 = vrot.lane.b32.xlu0 %v5299, 96
  %v5516 = vpop.permute.xlu0 %5515
  %5517 = vrot.lane.b32.xlu0 %v5300, 96
  %v5518 = vpop.permute.xlu0 %5517
  %5519 = vrot.lane.b32.xlu0 %v5301, 96
  %v5520 = vpop.permute.xlu0 %5519
  %5521 = vrot.lane.b32.xlu0 %v5302, 96
  %v5522 = vpop.permute.xlu0 %5521
  %5523 = vrot.lane.b32.xlu0 %v5303, 96
  %v5524 = vpop.permute.xlu0 %5523
  %5525 = vrot.lane.b32.xlu0 %v5304, 96
  %v5526 = vpop.permute.xlu0 %5525
  %v5527 = vsel %vm1114, %v5512, %v5514
  %v5528 = vsel %vm1114, %v5514, %v5516
  %v5529 = vsel %vm1114, %v5516, %v5518
  %v5530 = vsel %vm1114, %v5520, %v5522
  %v5531 = vsel %vm1114, %v5522, %v5524
  %v5532 = vsel %vm1114, %v5524, %v5526
  %5541 = vst [vmem:[#allocation2 + $0x180] sm:$0xff] %v5527
  %5542 = vst [vmem:[#allocation2 + $0x188] sm:$0xff] %v5528
  %5543 = vst [vmem:[#allocation2 + $0x190] sm:$0xff] %v5529
  %5544 = vst.msk [vmem:[#allocation2 + $0x198] sm:$0xff] %vm3331, %v5518
  %5545 = vst [vmem:[#allocation2 + $0x1a0] sm:$0xff] %v5530
  %5546 = vst [vmem:[#allocation2 + $0x1a8] sm:$0xff] %v5531
  %5547 = vst [vmem:[#allocation2 + $0x1b0] sm:$0xff] %v5532
  %5548 = vst.msk [vmem:[#allocation2 + $0x1b8] sm:$0xff] %vm3331, %v5526
  %5549 = vrot.lane.b32.xlu0 %v5297, 95
  %v5550 = vpop.permute.xlu0 %5549
  %5551 = vrot.lane.b32.xlu0 %v5298, 95
  %v5552 = vpop.permute.xlu0 %5551
  %5553 = vrot.lane.b32.xlu0 %v5299, 95
  %v5554 = vpop.permute.xlu0 %5553
  %5555 = vrot.lane.b32.xlu0 %v5300, 95
  %v5556 = vpop.permute.xlu0 %5555
  %5557 = vrot.lane.b32.xlu0 %v5301, 95
  %v5558 = vpop.permute.xlu0 %5557
  %5559 = vrot.lane.b32.xlu0 %v5302, 95
  %v5560 = vpop.permute.xlu0 %5559
  %5561 = vrot.lane.b32.xlu0 %v5303, 95
  %v5562 = vpop.permute.xlu0 %5561
  %5563 = vrot.lane.b32.xlu0 %v5304, 95
  %v5564 = vpop.permute.xlu0 %5563
  %v5565 = vsel %vm3592, %v5550, %v5552
  %v5566 = vsel %vm3592, %v5552, %v5554
  %v5567 = vsel %vm3592, %v5554, %v5556
  %v5568 = vsel %vm3592, %v5558, %v5560
  %v5569 = vsel %vm3592, %v5560, %v5562
  %v5570 = vsel %vm3592, %v5562, %v5564
  %5579 = vst [vmem:[#allocation2 + $0x1c0] sm:$0xff] %v5565
  %5580 = vst [vmem:[#allocation2 + $0x1c8] sm:$0xff] %v5566
  %5581 = vst [vmem:[#allocation2 + $0x1d0] sm:$0xff] %v5567
  %5582 = vst.msk [vmem:[#allocation2 + $0x1d8] sm:$0xff] %vm3331, %v5556
  %5583 = vst [vmem:[#allocation2 + $0x1e0] sm:$0xff] %v5568
  %5584 = vst [vmem:[#allocation2 + $0x1e8] sm:$0xff] %v5569
  %5585 = vst [vmem:[#allocation2 + $0x1f0] sm:$0xff] %v5570
  %5586 = vst.msk [vmem:[#allocation2 + $0x1f8] sm:$0xff] %vm3331, %v5564
  %5587 = vrot.lane.b32.xlu0 %v5297, 94
  %v5588 = vpop.permute.xlu0 %5587
  %5589 = vrot.lane.b32.xlu0 %v5298, 94
  %v5590 = vpop.permute.xlu0 %5589
  %5591 = vrot.lane.b32.xlu0 %v5299, 94
  %v5592 = vpop.permute.xlu0 %5591
  %5593 = vrot.lane.b32.xlu0 %v5300, 94
  %v5594 = vpop.permute.xlu0 %5593
  %5595 = vrot.lane.b32.xlu0 %v5301, 94
  %v5596 = vpop.permute.xlu0 %5595
  %5597 = vrot.lane.b32.xlu0 %v5302, 94
  %v5598 = vpop.permute.xlu0 %5597
  %5599 = vrot.lane.b32.xlu0 %v5303, 94
  %v5600 = vpop.permute.xlu0 %5599
  %5601 = vrot.lane.b32.xlu0 %v5304, 94
  %v5602 = vpop.permute.xlu0 %5601
  %v5603 = vsel %vm3331, %v5588, %v5590
  %v5604 = vsel %vm3331, %v5590, %v5592
  %v5605 = vsel %vm3331, %v5592, %v5594
  %v5606 = vsel %vm3331, %v5596, %v5598
  %v5607 = vsel %vm3331, %v5598, %v5600
  %v5608 = vsel %vm3331, %v5600, %v5602
  %5617 = vst [vmem:[#allocation2 + $0x200] sm:$0xff] %v5603
  %5618 = vst [vmem:[#allocation2 + $0x208] sm:$0xff] %v5604
  %5619 = vst [vmem:[#allocation2 + $0x210] sm:$0xff] %v5605
  %5620 = vst.msk [vmem:[#allocation2 + $0x218] sm:$0xff] %vm3331, %v5594
  %5621 = vst [vmem:[#allocation2 + $0x220] sm:$0xff] %v5606
  %5622 = vst [vmem:[#allocation2 + $0x228] sm:$0xff] %v5607
  %5623 = vst [vmem:[#allocation2 + $0x230] sm:$0xff] %v5608
  %5624 = vst.msk [vmem:[#allocation2 + $0x238] sm:$0xff] %vm3331, %v5602
  %v5625 = vld [vmem:[#allocation2] sm:$0xff]
  %v5626 = vld [vmem:[#allocation2 + $0x8] sm:$0xff]
  %v5627 = vld [vmem:[#allocation2 + $0x10] sm:$0xff]
  %v5628 = vld [vmem:[#allocation2 + $0x18] sm:$0xff]
  %v5629 = vld [vmem:[#allocation2 + $0x20] sm:$0xff]
  %v5630 = vld [vmem:[#allocation2 + $0x28] sm:$0xff]
  %v5631 = vld [vmem:[#allocation2 + $0x30] sm:$0xff]
  %v5632 = vld [vmem:[#allocation2 + $0x38] sm:$0xff]
  %v5633 = vld [vmem:[#allocation2 + $0x40] sm:$0xff]
  %v5634 = vld [vmem:[#allocation2 + $0x48] sm:$0xff]
  %v5635 = vld [vmem:[#allocation2 + $0x50] sm:$0xff]
  %v5636 = vld [vmem:[#allocation2 + $0x58] sm:$0xff]
  %v5637 = vld [vmem:[#allocation2 + $0x60] sm:$0xff]
  %v5638 = vld [vmem:[#allocation2 + $0x68] sm:$0xff]
  %v5639 = vld [vmem:[#allocation2 + $0x70] sm:$0xff]
  %v5640 = vld [vmem:[#allocation2 + $0x78] sm:$0xff]
  %v5641 = vld [vmem:[#allocation2 + $0x80] sm:$0xff]
  %v5642 = vld [vmem:[#allocation2 + $0x88] sm:$0xff]
  %v5643 = vld [vmem:[#allocation2 + $0x90] sm:$0xff]
  %v5644 = vld [vmem:[#allocation2 + $0x98] sm:$0xff]
  %v5645 = vld [vmem:[#allocation2 + $0xa0] sm:$0xff]
  %v5646 = vld [vmem:[#allocation2 + $0xa8] sm:$0xff]
  %v5647 = vld [vmem:[#allocation2 + $0xb0] sm:$0xff]
  %v5648 = vld [vmem:[#allocation2 + $0xb8] sm:$0xff]
  %v5649 = vld [vmem:[#allocation2 + $0xc0] sm:$0xff]
  %v5650 = vld [vmem:[#allocation2 + $0xc8] sm:$0xff]
  %v5651 = vld [vmem:[#allocation2 + $0xd0] sm:$0xff]
  %v5652 = vld [vmem:[#allocation2 + $0xd8] sm:$0xff]
  %v5653 = vld [vmem:[#allocation2 + $0xe0] sm:$0xff]
  %v5654 = vld [vmem:[#allocation2 + $0xe8] sm:$0xff]
  %v5655 = vld [vmem:[#allocation2 + $0xf0] sm:$0xff]
  %v5656 = vld [vmem:[#allocation2 + $0xf8] sm:$0xff]
  %v5657 = vld [vmem:[#allocation2 + $0x100] sm:$0xff]
  %v5658 = vld [vmem:[#allocation2 + $0x108] sm:$0xff]
  %v5659 = vld [vmem:[#allocation2 + $0x110] sm:$0xff]
  %v5660 = vld [vmem:[#allocation2 + $0x118] sm:$0xff]
  %v5661 = vld [vmem:[#allocation2 + $0x120] sm:$0xff]
  %v5662 = vld [vmem:[#allocation2 + $0x128] sm:$0xff]
  %v5663 = vld [vmem:[#allocation2 + $0x130] sm:$0xff]
  %v5664 = vld [vmem:[#allocation2 + $0x138] sm:$0xff]
  %v5665 = vld [vmem:[#allocation2 + $0x140] sm:$0xff]
  %v5666 = vld [vmem:[#allocation2 + $0x148] sm:$0xff]
  %v5667 = vld [vmem:[#allocation2 + $0x150] sm:$0xff]
  %v5668 = vld [vmem:[#allocation2 + $0x158] sm:$0xff]
  %v5669 = vld [vmem:[#allocation2 + $0x160] sm:$0xff]
  %v5670 = vld [vmem:[#allocation2 + $0x168] sm:$0xff]
  %v5671 = vld [vmem:[#allocation2 + $0x170] sm:$0xff]
  %v5672 = vld [vmem:[#allocation2 + $0x178] sm:$0xff]
  %v5673 = vld [vmem:[#allocation2 + $0x180] sm:$0xff]
  %v5674 = vld [vmem:[#allocation2 + $0x188] sm:$0xff]
  %v5675 = vld [vmem:[#allocation2 + $0x190] sm:$0xff]
  %v5676 = vld [vmem:[#allocation2 + $0x198] sm:$0xff]
  %v5677 = vld [vmem:[#allocation2 + $0x1a0] sm:$0xff]
  %v5678 = vld [vmem:[#allocation2 + $0x1a8] sm:$0xff]
  %v5679 = vld [vmem:[#allocation2 + $0x1b0] sm:$0xff]
  %v5680 = vld [vmem:[#allocation2 + $0x1b8] sm:$0xff]
  %v5681 = vld [vmem:[#allocation2 + $0x1c0] sm:$0xff]
  %v5682 = vld [vmem:[#allocation2 + $0x1c8] sm:$0xff]
  %v5683 = vld [vmem:[#allocation2 + $0x1d0] sm:$0xff]
  %v5684 = vld [vmem:[#allocation2 + $0x1d8] sm:$0xff]
  %v5685 = vld [vmem:[#allocation2 + $0x1e0] sm:$0xff]
  %v5686 = vld [vmem:[#allocation2 + $0x1e8] sm:$0xff]
  %v5687 = vld [vmem:[#allocation2 + $0x1f0] sm:$0xff]
  %v5688 = vld [vmem:[#allocation2 + $0x1f8] sm:$0xff]
  %v5689 = vld [vmem:[#allocation2 + $0x200] sm:$0xff]
  %v5690 = vld [vmem:[#allocation2 + $0x208] sm:$0xff]
  %v5691 = vld [vmem:[#allocation2 + $0x210] sm:$0xff]
  %v5692 = vld [vmem:[#allocation2 + $0x218] sm:$0xff]
  %v5693 = vld [vmem:[#allocation2 + $0x220] sm:$0xff]
  %v5694 = vld [vmem:[#allocation2 + $0x228] sm:$0xff]
  %v5695 = vld [vmem:[#allocation2 + $0x230] sm:$0xff]
  %v5696 = vld [vmem:[#allocation2 + $0x238] sm:$0xff]
  %v5697 = vpack.c.bf16 %v5629, %v5625
  %v5698 = vpack.c.bf16 %v5630, %v5626
  %v5699 = vpack.c.bf16 %v5631, %v5627
  %v5700 = vpack.c.bf16 %v5632, %v5628
  %v5701 = vpack.c.bf16 %v5637, %v5633
  %v5702 = vpack.c.bf16 %v5638, %v5634
  %v5703 = vpack.c.bf16 %v5639, %v5635
  %v5704 = vpack.c.bf16 %v5640, %v5636
  %v5705 = vpack.c.bf16 %v5645, %v5641
  %v5706 = vpack.c.bf16 %v5646, %v5642
  %v5707 = vpack.c.bf16 %v5647, %v5643
  %v5708 = vpack.c.bf16 %v5648, %v5644
  %v5709 = vpack.c.bf16 %v5653, %v5649
  %v5710 = vpack.c.bf16 %v5654, %v5650
  %v5711 = vpack.c.bf16 %v5655, %v5651
  %v5712 = vpack.c.bf16 %v5656, %v5652
  %v5713 = vpack.c.bf16 %v5661, %v5657
  %v5714 = vpack.c.bf16 %v5662, %v5658
  %v5715 = vpack.c.bf16 %v5663, %v5659
  %v5716 = vpack.c.bf16 %v5664, %v5660
  %v5717 = vpack.c.bf16 %v5669, %v5665
  %v5718 = vpack.c.bf16 %v5670, %v5666
  %v5719 = vpack.c.bf16 %v5671, %v5667
  %v5720 = vpack.c.bf16 %v5672, %v5668
  %v5721 = vpack.c.bf16 %v5677, %v5673
  %v5722 = vpack.c.bf16 %v5678, %v5674
  %v5723 = vpack.c.bf16 %v5679, %v5675
  %v5724 = vpack.c.bf16 %v5680, %v5676
  %v5725 = vpack.c.bf16 %v5685, %v5681
  %v5726 = vpack.c.bf16 %v5686, %v5682
  %v5727 = vpack.c.bf16 %v5687, %v5683
  %v5728 = vpack.c.bf16 %v5688, %v5684
  %v5729 = vpack.c.bf16 %v5693, %v5689
  %v5730 = vpack.c.bf16 %v5694, %v5690
  %v5731 = vpack.c.bf16 %v5695, %v5691
  %v5732 = vpack.c.bf16 %v5696, %v5692
  %v5733 = vld [vmem:[%s7] sm:$0xff]
  %v5734 = vld [vmem:[%s7 + $0x8] sm:$0xff]
  %v5735 = vld [vmem:[%s7 + $0x10] sm:$0xff]
  %v5736 = vld [vmem:[%s7 + $0x18] sm:$0xff]
  %v5737 = vld [vmem:[%s9 + $0x38] sm:$0xff]
  %v5738 = vld [vmem:[%s9 + $0x40] sm:$0xff]
  %v5739 = vld [vmem:[%s9 + $0x48] sm:$0xff]
  %v5740 = vld [vmem:[%s9 + $0x50] sm:$0xff]
  %5742 = vset.pattern.permute.xlu0 0
  %5743 = vperm.xlu0 %5742, %v5737
  %v5744 = vpop.permute.xlu0 %5743
  %5747 = vset.pattern.permute.xlu0 0
  %5748 = vperm.xlu0 %5747, %v5738
  %v5749 = vpop.permute.xlu0 %5748
  %5752 = vset.pattern.permute.xlu0 0
  %5753 = vperm.xlu0 %5752, %v5739
  %v5754 = vpop.permute.xlu0 %5753
  %5757 = vset.pattern.permute.xlu0 0
  %5758 = vperm.xlu0 %5757, %v5740
  %v5759 = vpop.permute.xlu0 %5758
  %v5765 = vunpack.c.l.b16 %v5733
  %v5766 = vunpack.c.h.b16 %v5733
  %v5767 = vunpack.c.l.b16 %v5734
  %v5768 = vunpack.c.h.b16 %v5734
  %v5769 = vunpack.c.l.b16 %v5735
  %v5770 = vunpack.c.h.b16 %v5735
  %v5771 = vunpack.c.l.b16 %v5736
  %v5772 = vunpack.c.h.b16 %v5736
  %v5773 = vpack.c.b16 %v5767, %v5765
  %v5774 = vpack.c.b16 %v5768, %v5766
  %v5775 = vpack.c.b16 %v5771, %v5769
  %v5776 = vpack.c.b16 %v5772, %v5770
  %v5780 = vsel %vm3774, %v5774, 0
  %v5783 = vsel %vm3774, %v5776, 0
  %5785 = vmatprep.subr.bf16.mxu0 %v5726
  %5786 = vmatpush1.bf16.msra.mxu0 %v5725
  %5787 = vmatprep.subr.bf16.mxu0 %v5722
  %5788 = vmatpush1.bf16.msra.mxu0 %v5721
  %5789 = vmatprep.subr.bf16.mxu0 %v5718
  %5790 = vmatpush1.bf16.msra.mxu0 %v5717
  %5791 = vmatprep.subr.bf16.mxu0 %v5714
  %5792 = vmatpush1.bf16.msra.mxu0 %v5713
  %5793 = vmatprep.subr.bf16.mxu0 %v5710
  %5794 = vmatpush1.bf16.msra.mxu0 %v5709
  %5795 = vmatprep.subr.bf16.mxu0 %v5706
  %5796 = vmatpush1.bf16.msra.mxu0 %v5705
  %5797 = vmatprep.subr.bf16.mxu0 %v5702
  %5798 = vmatpush1.bf16.msra.mxu0 %v5701
  %5799 = vmatprep.subr.bf16.mxu0 %v5698
  %5800 = vmatpush1.bf16.msra.mxu0 %v5697
  %5801 = vmatprep.subr.bf16.mxu0 0
  %5802 = vmatpush2.bf16.msra.mxu0 0
  %5803 = vmatprep.subr.bf16.mxu0 0
  %5804 = vmatpush2.bf16.msra.mxu0 0
  %5805 = vmatprep.subr.bf16.mxu0 0
  %5806 = vmatpush2.bf16.msra.mxu0 0
  %5807 = vmatprep.subr.bf16.mxu0 0
  %5808 = vmatpush2.bf16.msra.mxu0 0
  %5809 = vmatprep.subr.bf16.mxu0 0
  %5810 = vmatpush2.bf16.msra.mxu0 0
  %5811 = vmatprep.subr.bf16.mxu0 0
  %5812 = vmatpush2.bf16.msra.mxu0 0
  %5813 = vmatprep.subr.bf16.mxu0 0
  %5814 = vmatpush2.bf16.msra.mxu0 0
  %5815 = vmatprep.subr.bf16.mxu0 %v5730
  %5816 = vmatpush2.bf16.msra.mxu0 %v5729
  %5817 = vmatprep.mubr.bf16.mxu0 %v5780
  %5818 = vmatmul.mubr.bf16.gmra.mxu0 %v5773
  %v5819 = vpop.f32.mrf.mxu0
  %v5820 = vadd.f32 %v5744, %v5819
  %v5821 = vpop.f32.mrf.mxu0
  %v5822 = vadd.f32 %v5744, %v5821
  %v5823 = vpop.f32.mrf.mxu0
  %v5824 = vadd.f32 %v5749, %v5823
  %v5825 = vpop.f32.mrf.mxu0
  %v5826 = vadd.f32 %v5749, %v5825
  %5827 = vmatprep.mubr.bf16.mxu0 %v5783
  %5828 = vmatmul.mubr.bf16.gmra.mxu0 %v5775
  %v5829 = vpop.f32.mrf.mxu0
  %v5830 = vadd.f32 %v5754, %v5829
  %v5831 = vpop.f32.mrf.mxu0
  %v5832 = vadd.f32 %v5754, %v5831
  %v5833 = vpop.f32.mrf.mxu0
  %v5834 = vadd.f32 %v5759, %v5833
  %v5835 = vpop.f32.mrf.mxu0
  %v5836 = vadd.f32 %v5759, %v5835
  %5837 = vdwg.mxu0
  %5838 = vmatprep.subr.bf16.mxu0 %v5728
  %5839 = vmatpush1.bf16.msra.mxu0 %v5727
  %5840 = vmatprep.subr.bf16.mxu0 %v5724
  %5841 = vmatpush1.bf16.msra.mxu0 %v5723
  %5842 = vmatprep.subr.bf16.mxu0 %v5720
  %5843 = vmatpush1.bf16.msra.mxu0 %v5719
  %5844 = vmatprep.subr.bf16.mxu0 %v5716
  %5845 = vmatpush1.bf16.msra.mxu0 %v5715
  %5846 = vmatprep.subr.bf16.mxu0 %v5712
  %5847 = vmatpush1.bf16.msra.mxu0 %v5711
  %5848 = vmatprep.subr.bf16.mxu0 %v5708
  %5849 = vmatpush1.bf16.msra.mxu0 %v5707
  %5850 = vmatprep.subr.bf16.mxu0 %v5704
  %5851 = vmatpush1.bf16.msra.mxu0 %v5703
  %5852 = vmatprep.subr.bf16.mxu0 %v5700
  %5853 = vmatpush1.bf16.msra.mxu0 %v5699
  %5854 = vmatprep.subr.bf16.mxu0 0
  %5855 = vmatpush2.bf16.msra.mxu0 0
  %5856 = vmatprep.subr.bf16.mxu0 0
  %5857 = vmatpush2.bf16.msra.mxu0 0
  %5858 = vmatprep.subr.bf16.mxu0 0
  %5859 = vmatpush2.bf16.msra.mxu0 0
  %5860 = vmatprep.subr.bf16.mxu0 0
  %5861 = vmatpush2.bf16.msra.mxu0 0
  %5862 = vmatprep.subr.bf16.mxu0 0
  %5863 = vmatpush2.bf16.msra.mxu0 0
  %5864 = vmatprep.subr.bf16.mxu0 0
  %5865 = vmatpush2.bf16.msra.mxu0 0
  %5866 = vmatprep.subr.bf16.mxu0 0
  %5867 = vmatpush2.bf16.msra.mxu0 0
  %5868 = vmatprep.subr.bf16.mxu0 %v5732
  %5869 = vmatpush2.bf16.msra.mxu0 %v5731
  %5870 = vmatprep.mubr.bf16.mxu0 %v5780
  %5871 = vmatmul.mubr.bf16.gmra.mxu0 %v5773
  %v5872 = vpop.f32.mrf.mxu0
  %v5873 = vadd.f32 %v5744, %v5872
  %v5874 = vpop.f32.mrf.mxu0
  %v5875 = vadd.f32 %v5744, %v5874
  %v5876 = vpop.f32.mrf.mxu0
  %v5877 = vadd.f32 %v5749, %v5876
  %v5878 = vpop.f32.mrf.mxu0
  %v5879 = vadd.f32 %v5749, %v5878
  %5880 = vmatprep.mubr.bf16.mxu0 %v5783
  %5881 = vmatmul.mubr.bf16.gmra.mxu0 %v5775
  %v5882 = vpop.f32.mrf.mxu0
  %v5883 = vadd.f32 %v5754, %v5882
  %v5884 = vpop.f32.mrf.mxu0
  %v5885 = vadd.f32 %v5754, %v5884
  %v5886 = vpop.f32.mrf.mxu0
  %v5887 = vadd.f32 %v5759, %v5886
  %v5888 = vpop.f32.mrf.mxu0
  %v5889 = vadd.f32 %v5759, %v5888
  %5890 = vdwg.mxu0
  %vm5891 = vcmp.gt.f32.partialorder %v5820, 0.0
  %vm5892 = vcmp.gt.f32.partialorder %v5822, 0.0
  %vm5893 = vcmp.gt.f32.partialorder %v5873, 0.0
  %vm5894 = vcmp.gt.f32.partialorder %v5875, 0.0
  %vm5895 = vcmp.gt.f32.partialorder %v5824, 0.0
  %vm5896 = vcmp.gt.f32.partialorder %v5826, 0.0
  %vm5897 = vcmp.gt.f32.partialorder %v5877, 0.0
  %vm5898 = vcmp.gt.f32.partialorder %v5879, 0.0
  %vm5899 = vcmp.gt.f32.partialorder %v5830, 0.0
  %vm5900 = vcmp.gt.f32.partialorder %v5832, 0.0
  %vm5901 = vcmp.gt.f32.partialorder %v5883, 0.0
  %vm5902 = vcmp.gt.f32.partialorder %v5885, 0.0
  %vm5903 = vcmp.gt.f32.partialorder %v5834, 0.0
  %vm5904 = vcmp.gt.f32.partialorder %v5836, 0.0
  %vm5905 = vcmp.gt.f32.partialorder %v5887, 0.0
  %vm5906 = vcmp.gt.f32.partialorder %v5889, 0.0
  %v5907 = vmul.f32 %v5820, 0.01
  %v5908 = vmul.f32 %v5822, 0.01
  %v5909 = vmul.f32 %v5873, 0.01
  %v5910 = vmul.f32 %v5875, 0.01
  %v5911 = vmul.f32 %v5824, 0.01
  %v5912 = vmul.f32 %v5826, 0.01
  %v5913 = vmul.f32 %v5877, 0.01
  %v5914 = vmul.f32 %v5879, 0.01
  %v5915 = vmul.f32 %v5830, 0.01
  %v5916 = vmul.f32 %v5832, 0.01
  %v5917 = vmul.f32 %v5883, 0.01
  %v5918 = vmul.f32 %v5885, 0.01
  %v5919 = vmul.f32 %v5834, 0.01
  %v5920 = vmul.f32 %v5836, 0.01
  %v5921 = vmul.f32 %v5887, 0.01
  %v5922 = vmul.f32 %v5889, 0.01
  %v5923 = vsel %vm5891, %v5820, %v5907
  %v5924 = vsel %vm5892, %v5822, %v5908
  %v5925 = vsel %vm5893, %v5873, %v5909
  %v5926 = vsel %vm5894, %v5875, %v5910
  %v5927 = vsel %vm5895, %v5824, %v5911
  %v5928 = vsel %vm5896, %v5826, %v5912
  %v5929 = vsel %vm5897, %v5877, %v5913
  %v5930 = vsel %vm5898, %v5879, %v5914
  %v5931 = vsel %vm5899, %v5830, %v5915
  %v5932 = vsel %vm5900, %v5832, %v5916
  %v5933 = vsel %vm5901, %v5883, %v5917
  %v5934 = vsel %vm5902, %v5885, %v5918
  %v5935 = vsel %vm5903, %v5834, %v5919
  %v5936 = vsel %vm5904, %v5836, %v5920
  %v5937 = vsel %vm5905, %v5887, %v5921
  %v5938 = vsel %vm5906, %v5889, %v5922
  %v5939 = vld [vmem:[%s8] sm:$0x1]
  %v5940 = vpack.c.bf16 %v5927, %v5923
  %v5941 = vpack.c.bf16 %v5928, %v5924
  %v5942 = vpack.c.bf16 %v5929, %v5925
  %v5943 = vpack.c.bf16 %v5930, %v5926
  %v5944 = vpack.c.bf16 %v5935, %v5931
  %v5945 = vpack.c.bf16 %v5936, %v5932
  %v5946 = vpack.c.bf16 %v5937, %v5933
  %v5947 = vpack.c.bf16 %v5938, %v5934
  %vm5948 = vcmask 261120
  %v5950 = vsel %vm5948, %v5939, 0
  %5952 = vmatprep.subr.bf16.mxu0 0
  %5953 = vmatpush1.bf16.msra.mxu0 0
  %5954 = vmatprep.subr.bf16.mxu0 0
  %5955 = vmatpush1.bf16.msra.mxu0 0
  %5956 = vmatprep.subr.bf16.mxu0 0
  %5957 = vmatpush1.bf16.msra.mxu0 0
  %5958 = vmatprep.subr.bf16.mxu0 0
  %5959 = vmatpush1.bf16.msra.mxu0 0
  %5960 = vmatprep.subr.bf16.mxu0 0
  %5961 = vmatpush1.bf16.msra.mxu0 0
  %5962 = vmatprep.subr.bf16.mxu0 0
  %5963 = vmatpush1.bf16.msra.mxu0 0
  %5964 = vmatprep.subr.bf16.mxu0 %v5945
  %5965 = vmatpush1.bf16.msra.mxu0 %v5944
  %5966 = vmatprep.subr.bf16.mxu0 %v5941
  %5967 = vmatpush1.bf16.msra.mxu0 %v5940
  %5968 = vmatprep.subr.bf16.mxu0 0
  %5969 = vmatpush2.bf16.msra.mxu0 0
  %5970 = vmatprep.subr.bf16.mxu0 0
  %5971 = vmatpush2.bf16.msra.mxu0 0
  %5972 = vmatprep.subr.bf16.mxu0 0
  %5973 = vmatpush2.bf16.msra.mxu0 0
  %5974 = vmatprep.subr.bf16.mxu0 0
  %5975 = vmatpush2.bf16.msra.mxu0 0
  %5976 = vmatprep.subr.bf16.mxu0 0
  %5977 = vmatpush2.bf16.msra.mxu0 0
  %5978 = vmatprep.subr.bf16.mxu0 0
  %5979 = vmatpush2.bf16.msra.mxu0 0
  %5980 = vmatprep.subr.bf16.mxu0 0
  %5981 = vmatpush2.bf16.msra.mxu0 0
  %5982 = vmatprep.subr.bf16.mxu0 0
  %5983 = vmatpush2.bf16.msra.mxu0 0
  %5984 = vmatprep.mubr.bf16.mxu0 0
  %5985 = vmatmul.mubr.bf16.gmra.mxu0 %v5950
  %v5986 = vpop.f32.mrf.mxu0
  %v5987 = vadd.f32 0.0, %v5986
  %v5988 = vpop.f32.mrf.mxu0
  %v5989 = vadd.f32 0.0, %v5988
  %v5990 = vpop.f32.mrf.mxu0
  %v5991 = vpop.f32.mrf.mxu0
  %5992 = vdwg.mxu0
  %5993 = vmatprep.subr.bf16.mxu0 0
  %5994 = vmatpush1.bf16.msra.mxu0 0
  %5995 = vmatprep.subr.bf16.mxu0 0
  %5996 = vmatpush1.bf16.msra.mxu0 0
  %5997 = vmatprep.subr.bf16.mxu0 0
  %5998 = vmatpush1.bf16.msra.mxu0 0
  %5999 = vmatprep.subr.bf16.mxu0 0
  %6000 = vmatpush1.bf16.msra.mxu0 0
  %6001 = vmatprep.subr.bf16.mxu0 0
  %6002 = vmatpush1.bf16.msra.mxu0 0
  %6003 = vmatprep.subr.bf16.mxu0 0
  %6004 = vmatpush1.bf16.msra.mxu0 0
  %6005 = vmatprep.subr.bf16.mxu0 %v5947
  %6006 = vmatpush1.bf16.msra.mxu0 %v5946
  %6007 = vmatprep.subr.bf16.mxu0 %v5943
  %6008 = vmatpush1.bf16.msra.mxu0 %v5942
  %6009 = vmatprep.subr.bf16.mxu0 0
  %6010 = vmatpush2.bf16.msra.mxu0 0
  %6011 = vmatprep.subr.bf16.mxu0 0
  %6012 = vmatpush2.bf16.msra.mxu0 0
  %6013 = vmatprep.subr.bf16.mxu0 0
  %6014 = vmatpush2.bf16.msra.mxu0 0
  %6015 = vmatprep.subr.bf16.mxu0 0
  %6016 = vmatpush2.bf16.msra.mxu0 0
  %6017 = vmatprep.subr.bf16.mxu0 0
  %6018 = vmatpush2.bf16.msra.mxu0 0
  %6019 = vmatprep.subr.bf16.mxu0 0
  %6020 = vmatpush2.bf16.msra.mxu0 0
  %6021 = vmatprep.subr.bf16.mxu0 0
  %6022 = vmatpush2.bf16.msra.mxu0 0
  %6023 = vmatprep.subr.bf16.mxu0 0
  %6024 = vmatpush2.bf16.msra.mxu0 0
  %6025 = vmatprep.mubr.bf16.mxu0 0
  %6026 = vmatmul.mubr.bf16.gmra.mxu0 %v5950
  %v6027 = vpop.f32.mrf.mxu0
  %v6028 = vadd.f32 0.0, %v6027
  %v6029 = vpop.f32.mrf.mxu0
  %v6030 = vadd.f32 0.0, %v6029
  %v6031 = vpop.f32.mrf.mxu0
  %v6032 = vpop.f32.mrf.mxu0
  %6033 = vdwg.mxu0
  %v6034 = vpack.c.bf16 %v5987, %v5987
  %v6035 = vpack.c.bf16 %v5989, %v5989
  %v6036 = vpack.c.bf16 %v6028, %v6028
  %v6037 = vpack.c.bf16 %v6030, %v6030
  %v6038 = vld [vmem:[%s19] sm:$0xff]
  %v6039 = vld [vmem:[%s19 + $0x8] sm:$0xff]
  %v6040 = vld [vmem:[%s19 + $0x10] sm:$0xff]
  %v6041 = vld [vmem:[%s19 + $0x18] sm:$0xf]
  %v6042 = vld [vmem:[%s19 + $0x1c] sm:$0xff]
  %v6043 = vld [vmem:[%s19 + $0x24] sm:$0xff]
  %v6044 = vld [vmem:[%s19 + $0x2c] sm:$0xff]
  %v6045 = vld [vmem:[%s19 + $0x34] sm:$0xf]
  %v6046 = vld [vmem:[%s19 + $0x38] sm:$0xff]
  %v6047 = vld [vmem:[%s19 + $0x40] sm:$0xff]
  %v6048 = vld [vmem:[%s19 + $0x48] sm:$0xff]
  %v6049 = vld [vmem:[%s19 + $0x50] sm:$0xf]
  %v6050 = vld [vmem:[%s19 + $0x54] sm:$0xff]
  %v6051 = vld [vmem:[%s19 + $0x5c] sm:$0xff]
  %v6052 = vld [vmem:[%s19 + $0x64] sm:$0xff]
  %v6053 = vld [vmem:[%s19 + $0x6c] sm:$0xf]
  %v6054 = vld [vmem:[%s19 + $0x70] sm:$0xff]
  %v6055 = vld [vmem:[%s19 + $0x78] sm:$0xff]
  %v6056 = vld [vmem:[%s19 + $0x80] sm:$0xff]
  %v6057 = vld [vmem:[%s19 + $0x88] sm:$0xf]
  %v6058 = vld [vmem:[%s19 + $0x8c] sm:$0xff]
  %v6059 = vld [vmem:[%s19 + $0x94] sm:$0xff]
  %v6060 = vld [vmem:[%s19 + $0x9c] sm:$0xff]
  %v6061 = vld [vmem:[%s19 + $0xa4] sm:$0xf]
  %v6062 = vld [vmem:[%s19 + $0xa8] sm:$0xff]
  %v6063 = vld [vmem:[%s19 + $0xb0] sm:$0xff]
  %v6064 = vld [vmem:[%s19 + $0xb8] sm:$0xff]
  %v6065 = vld [vmem:[%s19 + $0xc0] sm:$0xf]
  %v6066 = vld [vmem:[%s19 + $0xc4] sm:$0xff]
  %v6067 = vld [vmem:[%s19 + $0xcc] sm:$0xff]
  %v6068 = vld [vmem:[%s19 + $0xd4] sm:$0xff]
  %v6069 = vld [vmem:[%s19 + $0xdc] sm:$0xf]
  %v6070 = vld [vmem:[%s19 + $0xe0] sm:$0xff]
  %v6071 = vld [vmem:[%s19 + $0xe8] sm:$0xff]
  %v6072 = vld [vmem:[%s19 + $0xf0] sm:$0xff]
  %v6073 = vld [vmem:[%s19 + $0xf8] sm:$0xf]
  %v6074 = vld [vmem:[%s19 + $0xfc] sm:$0xff]
  %v6075 = vld [vmem:[%s19 + $0x104] sm:$0xff]
  %v6076 = vld [vmem:[%s19 + $0x10c] sm:$0xff]
  %v6077 = vld [vmem:[%s19 + $0x114] sm:$0xf]
  %v6078 = vld [vmem:[%s19 + $0x118] sm:$0xff]
  %v6079 = vld [vmem:[%s19 + $0x120] sm:$0xff]
  %v6080 = vld [vmem:[%s19 + $0x128] sm:$0xff]
  %v6081 = vld [vmem:[%s19 + $0x130] sm:$0xf]
  %v6082 = vld [vmem:[%s19 + $0x134] sm:$0xff]
  %v6083 = vld [vmem:[%s19 + $0x13c] sm:$0xff]
  %v6084 = vld [vmem:[%s19 + $0x144] sm:$0xff]
  %v6085 = vld [vmem:[%s19 + $0x14c] sm:$0xf]
  %v6086 = vld [vmem:[%s19 + $0x150] sm:$0xff]
  %v6087 = vld [vmem:[%s19 + $0x158] sm:$0xff]
  %v6088 = vld [vmem:[%s19 + $0x160] sm:$0xff]
  %v6089 = vld [vmem:[%s19 + $0x168] sm:$0xf]
  %v6090 = vld [vmem:[%s19 + $0x16c] sm:$0xff]
  %v6091 = vld [vmem:[%s19 + $0x174] sm:$0xff]
  %v6092 = vld [vmem:[%s19 + $0x17c] sm:$0xff]
  %v6093 = vld [vmem:[%s19 + $0x184] sm:$0xf]
  %v6094 = vld [vmem:[%s19 + $0x188] sm:$0xff]
  %v6095 = vld [vmem:[%s19 + $0x190] sm:$0xff]
  %v6096 = vld [vmem:[%s19 + $0x198] sm:$0xff]
  %v6097 = vld [vmem:[%s19 + $0x1a0] sm:$0xf]
  %v6098 = vld [vmem:[%s19 + $0x1a4] sm:$0xff]
  %v6099 = vld [vmem:[%s19 + $0x1ac] sm:$0xff]
  %v6100 = vld [vmem:[%s19 + $0x1b4] sm:$0xff]
  %v6101 = vld [vmem:[%s19 + $0x1bc] sm:$0xf]
  %v6102 = vld [vmem:[%s19 + $0x1c0] sm:$0xff]
  %v6103 = vld [vmem:[%s19 + $0x1c8] sm:$0xff]
  %v6104 = vld [vmem:[%s19 + $0x1d0] sm:$0xff]
  %v6105 = vld [vmem:[%s19 + $0x1d8] sm:$0xf]
  %v6106 = vld [vmem:[%s19 + $0x1dc] sm:$0xff]
  %v6107 = vld [vmem:[%s19 + $0x1e4] sm:$0xff]
  %v6108 = vld [vmem:[%s19 + $0x1ec] sm:$0xff]
  %v6109 = vld [vmem:[%s19 + $0x1f4] sm:$0xf]
  %v6110 = vld [vmem:[%s19 + $0x1f8] sm:$0xff]
  %v6111 = vld [vmem:[%s19 + $0x200] sm:$0xff]
  %v6112 = vld [vmem:[%s19 + $0x208] sm:$0xff]
  %v6113 = vld [vmem:[%s19 + $0x210] sm:$0xf]
  %v6114 = vld [vmem:[%s19 + $0x214] sm:$0xff]
  %v6115 = vld [vmem:[%s19 + $0x21c] sm:$0xff]
  %v6116 = vld [vmem:[%s19 + $0x224] sm:$0xff]
  %v6117 = vld [vmem:[%s19 + $0x22c] sm:$0xf]
  %v6118 = vld [vmem:[%s19 + $0x230] sm:$0xff]
  %v6119 = vld [vmem:[%s19 + $0x238] sm:$0xff]
  %v6120 = vld [vmem:[%s19 + $0x240] sm:$0xff]
  %v6121 = vld [vmem:[%s19 + $0x248] sm:$0xf]
  %v6122 = vld [vmem:[%s19 + $0x24c] sm:$0xff]
  %v6123 = vld [vmem:[%s19 + $0x254] sm:$0xff]
  %v6124 = vld [vmem:[%s19 + $0x25c] sm:$0xff]
  %v6125 = vld [vmem:[%s19 + $0x264] sm:$0xf]
  %v6126 = vld [vmem:[%s19 + $0x268] sm:$0xff]
  %v6127 = vld [vmem:[%s19 + $0x270] sm:$0xff]
  %v6128 = vld [vmem:[%s19 + $0x278] sm:$0xff]
  %v6129 = vld [vmem:[%s19 + $0x280] sm:$0xf]
  %v6130 = vld [vmem:[%s19 + $0x284] sm:$0xff]
  %v6131 = vld [vmem:[%s19 + $0x28c] sm:$0xff]
  %v6132 = vld [vmem:[%s19 + $0x294] sm:$0xff]
  %v6133 = vld [vmem:[%s19 + $0x29c] sm:$0xf]
  %v6134 = vld [vmem:[%s19 + $0x2a0] sm:$0xff]
  %v6135 = vld [vmem:[%s19 + $0x2a8] sm:$0xff]
  %v6136 = vld [vmem:[%s19 + $0x2b0] sm:$0xff]
  %v6137 = vld [vmem:[%s19 + $0x2b8] sm:$0xf]
  %v6138 = vld [vmem:[%s19 + $0x2bc] sm:$0xff]
  %v6139 = vld [vmem:[%s19 + $0x2c4] sm:$0xff]
  %v6140 = vld [vmem:[%s19 + $0x2cc] sm:$0xff]
  %v6141 = vld [vmem:[%s19 + $0x2d4] sm:$0xf]
  %v6142 = vld [vmem:[%s19 + $0x2d8] sm:$0xff]
  %v6143 = vld [vmem:[%s19 + $0x2e0] sm:$0xff]
  %v6144 = vld [vmem:[%s19 + $0x2e8] sm:$0xff]
  %v6145 = vld [vmem:[%s19 + $0x2f0] sm:$0xf]
  %v6146 = vld [vmem:[%s19 + $0x2f4] sm:$0x77]
  %v6147 = vld [vmem:[%s19 + $0x2fc] sm:$0x77]
  %v6148 = vld [vmem:[%s19 + $0x304] sm:$0x77]
  %v6149 = vld [vmem:[%s19 + $0x30c] sm:$0x7]
  %v6150 = vld [vmem:[%s9 + $0x58] sm:$0x1]
  %6152 = vset.pattern.permute.xlu0 0
  %6153 = vperm.xlu0 %6152, %v6150
  %v6154 = vpop.permute.xlu0 %6153
  %v6268 = vunpack.c.l.b16 %v6038
  %v6269 = vunpack.c.h.b16 %v6038
  %v6270 = vunpack.c.l.b16 %v6039
  %v6271 = vunpack.c.h.b16 %v6039
  %v6272 = vunpack.c.l.b16 %v6040
  %v6273 = vunpack.c.h.b16 %v6040
  %v6274 = vunpack.c.l.b16 %v6041
  %v6275 = vunpack.c.l.b16 %v6042
  %v6276 = vunpack.c.h.b16 %v6042
  %v6277 = vunpack.c.l.b16 %v6043
  %v6278 = vunpack.c.h.b16 %v6043
  %v6279 = vunpack.c.l.b16 %v6044
  %v6280 = vunpack.c.h.b16 %v6044
  %v6281 = vunpack.c.l.b16 %v6045
  %v6282 = vunpack.c.l.b16 %v6046
  %v6283 = vunpack.c.h.b16 %v6046
  %v6284 = vunpack.c.l.b16 %v6047
  %v6285 = vunpack.c.h.b16 %v6047
  %v6286 = vunpack.c.l.b16 %v6048
  %v6287 = vunpack.c.h.b16 %v6048
  %v6288 = vunpack.c.l.b16 %v6049
  %v6289 = vunpack.c.l.b16 %v6050
  %v6290 = vunpack.c.h.b16 %v6050
  %v6291 = vunpack.c.l.b16 %v6051
  %v6292 = vunpack.c.h.b16 %v6051
  %v6293 = vunpack.c.l.b16 %v6052
  %v6294 = vunpack.c.h.b16 %v6052
  %v6295 = vunpack.c.l.b16 %v6053
  %v6296 = vunpack.c.l.b16 %v6054
  %v6297 = vunpack.c.h.b16 %v6054
  %v6298 = vunpack.c.l.b16 %v6055
  %v6299 = vunpack.c.h.b16 %v6055
  %v6300 = vunpack.c.l.b16 %v6056
  %v6301 = vunpack.c.h.b16 %v6056
  %v6302 = vunpack.c.l.b16 %v6057
  %v6303 = vunpack.c.l.b16 %v6058
  %v6304 = vunpack.c.h.b16 %v6058
  %v6305 = vunpack.c.l.b16 %v6059
  %v6306 = vunpack.c.h.b16 %v6059
  %v6307 = vunpack.c.l.b16 %v6060
  %v6308 = vunpack.c.h.b16 %v6060
  %v6309 = vunpack.c.l.b16 %v6061
  %v6310 = vunpack.c.l.b16 %v6062
  %v6311 = vunpack.c.h.b16 %v6062
  %v6312 = vunpack.c.l.b16 %v6063
  %v6313 = vunpack.c.h.b16 %v6063
  %v6314 = vunpack.c.l.b16 %v6064
  %v6315 = vunpack.c.h.b16 %v6064
  %v6316 = vunpack.c.l.b16 %v6065
  %v6317 = vunpack.c.l.b16 %v6066
  %v6318 = vunpack.c.h.b16 %v6066
  %v6319 = vunpack.c.l.b16 %v6067
  %v6320 = vunpack.c.h.b16 %v6067
  %v6321 = vunpack.c.l.b16 %v6068
  %v6322 = vunpack.c.h.b16 %v6068
  %v6323 = vunpack.c.l.b16 %v6069
  %v6324 = vunpack.c.l.b16 %v6070
  %v6325 = vunpack.c.h.b16 %v6070
  %v6326 = vunpack.c.l.b16 %v6071
  %v6327 = vunpack.c.h.b16 %v6071
  %v6328 = vunpack.c.l.b16 %v6072
  %v6329 = vunpack.c.h.b16 %v6072
  %v6330 = vunpack.c.l.b16 %v6073
  %v6331 = vunpack.c.l.b16 %v6074
  %v6332 = vunpack.c.h.b16 %v6074
  %v6333 = vunpack.c.l.b16 %v6075
  %v6334 = vunpack.c.h.b16 %v6075
  %v6335 = vunpack.c.l.b16 %v6076
  %v6336 = vunpack.c.h.b16 %v6076
  %v6337 = vunpack.c.l.b16 %v6077
  %v6338 = vunpack.c.l.b16 %v6078
  %v6339 = vunpack.c.h.b16 %v6078
  %v6340 = vunpack.c.l.b16 %v6079
  %v6341 = vunpack.c.h.b16 %v6079
  %v6342 = vunpack.c.l.b16 %v6080
  %v6343 = vunpack.c.h.b16 %v6080
  %v6344 = vunpack.c.l.b16 %v6081
  %v6345 = vunpack.c.l.b16 %v6082
  %v6346 = vunpack.c.h.b16 %v6082
  %v6347 = vunpack.c.l.b16 %v6083
  %v6348 = vunpack.c.h.b16 %v6083
  %v6349 = vunpack.c.l.b16 %v6084
  %v6350 = vunpack.c.h.b16 %v6084
  %v6351 = vunpack.c.l.b16 %v6085
  %v6352 = vunpack.c.l.b16 %v6086
  %v6353 = vunpack.c.h.b16 %v6086
  %v6354 = vunpack.c.l.b16 %v6087
  %v6355 = vunpack.c.h.b16 %v6087
  %v6356 = vunpack.c.l.b16 %v6088
  %v6357 = vunpack.c.h.b16 %v6088
  %v6358 = vunpack.c.l.b16 %v6089
  %v6359 = vunpack.c.l.b16 %v6090
  %v6360 = vunpack.c.h.b16 %v6090
  %v6361 = vunpack.c.l.b16 %v6091
  %v6362 = vunpack.c.h.b16 %v6091
  %v6363 = vunpack.c.l.b16 %v6092
  %v6364 = vunpack.c.h.b16 %v6092
  %v6365 = vunpack.c.l.b16 %v6093
  %v6366 = vunpack.c.l.b16 %v6094
  %v6367 = vunpack.c.h.b16 %v6094
  %v6368 = vunpack.c.l.b16 %v6095
  %v6369 = vunpack.c.h.b16 %v6095
  %v6370 = vunpack.c.l.b16 %v6096
  %v6371 = vunpack.c.h.b16 %v6096
  %v6372 = vunpack.c.l.b16 %v6097
  %v6373 = vunpack.c.l.b16 %v6098
  %v6374 = vunpack.c.h.b16 %v6098
  %v6375 = vunpack.c.l.b16 %v6099
  %v6376 = vunpack.c.h.b16 %v6099
  %v6377 = vunpack.c.l.b16 %v6100
  %v6378 = vunpack.c.h.b16 %v6100
  %v6379 = vunpack.c.l.b16 %v6101
  %v6380 = vunpack.c.l.b16 %v6102
  %v6381 = vunpack.c.h.b16 %v6102
  %v6382 = vunpack.c.l.b16 %v6103
  %v6383 = vunpack.c.h.b16 %v6103
  %v6384 = vunpack.c.l.b16 %v6104
  %v6385 = vunpack.c.h.b16 %v6104
  %v6386 = vunpack.c.l.b16 %v6105
  %v6387 = vunpack.c.l.b16 %v6106
  %v6388 = vunpack.c.h.b16 %v6106
  %v6389 = vunpack.c.l.b16 %v6107
  %v6390 = vunpack.c.h.b16 %v6107
  %v6391 = vunpack.c.l.b16 %v6108
  %v6392 = vunpack.c.h.b16 %v6108
  %v6393 = vunpack.c.l.b16 %v6109
  %v6394 = vunpack.c.l.b16 %v6110
  %v6395 = vunpack.c.h.b16 %v6110
  %v6396 = vunpack.c.l.b16 %v6111
  %v6397 = vunpack.c.h.b16 %v6111
  %v6398 = vunpack.c.l.b16 %v6112
  %v6399 = vunpack.c.h.b16 %v6112
  %v6400 = vunpack.c.l.b16 %v6113
  %v6401 = vunpack.c.l.b16 %v6114
  %v6402 = vunpack.c.h.b16 %v6114
  %v6403 = vunpack.c.l.b16 %v6115
  %v6404 = vunpack.c.h.b16 %v6115
  %v6405 = vunpack.c.l.b16 %v6116
  %v6406 = vunpack.c.h.b16 %v6116
  %v6407 = vunpack.c.l.b16 %v6117
  %v6408 = vunpack.c.l.b16 %v6118
  %v6409 = vunpack.c.h.b16 %v6118
  %v6410 = vunpack.c.l.b16 %v6119
  %v6411 = vunpack.c.h.b16 %v6119
  %v6412 = vunpack.c.l.b16 %v6120
  %v6413 = vunpack.c.h.b16 %v6120
  %v6414 = vunpack.c.l.b16 %v6121
  %v6415 = vunpack.c.l.b16 %v6122
  %v6416 = vunpack.c.h.b16 %v6122
  %v6417 = vunpack.c.l.b16 %v6123
  %v6418 = vunpack.c.h.b16 %v6123
  %v6419 = vunpack.c.l.b16 %v6124
  %v6420 = vunpack.c.h.b16 %v6124
  %v6421 = vunpack.c.l.b16 %v6125
  %v6422 = vunpack.c.l.b16 %v6126
  %v6423 = vunpack.c.h.b16 %v6126
  %v6424 = vunpack.c.l.b16 %v6127
  %v6425 = vunpack.c.h.b16 %v6127
  %v6426 = vunpack.c.l.b16 %v6128
  %v6427 = vunpack.c.h.b16 %v6128
  %v6428 = vunpack.c.l.b16 %v6129
  %v6429 = vunpack.c.l.b16 %v6130
  %v6430 = vunpack.c.h.b16 %v6130
  %v6431 = vunpack.c.l.b16 %v6131
  %v6432 = vunpack.c.h.b16 %v6131
  %v6433 = vunpack.c.l.b16 %v6132
  %v6434 = vunpack.c.h.b16 %v6132
  %v6435 = vunpack.c.l.b16 %v6133
  %v6436 = vunpack.c.l.b16 %v6134
  %v6437 = vunpack.c.h.b16 %v6134
  %v6438 = vunpack.c.l.b16 %v6135
  %v6439 = vunpack.c.h.b16 %v6135
  %v6440 = vunpack.c.l.b16 %v6136
  %v6441 = vunpack.c.h.b16 %v6136
  %v6442 = vunpack.c.l.b16 %v6137
  %v6443 = vunpack.c.l.b16 %v6138
  %v6444 = vunpack.c.h.b16 %v6138
  %v6445 = vunpack.c.l.b16 %v6139
  %v6446 = vunpack.c.h.b16 %v6139
  %v6447 = vunpack.c.l.b16 %v6140
  %v6448 = vunpack.c.h.b16 %v6140
  %v6449 = vunpack.c.l.b16 %v6141
  %v6450 = vunpack.c.l.b16 %v6142
  %v6451 = vunpack.c.h.b16 %v6142
  %v6452 = vunpack.c.l.b16 %v6143
  %v6453 = vunpack.c.h.b16 %v6143
  %v6454 = vunpack.c.l.b16 %v6144
  %v6455 = vunpack.c.h.b16 %v6144
  %v6456 = vunpack.c.l.b16 %v6145
  %v6457 = vunpack.c.l.b16 %v6146
  %v6458 = vunpack.c.h.b16 %v6146
  %v6459 = vunpack.c.l.b16 %v6147
  %v6460 = vunpack.c.h.b16 %v6147
  %v6461 = vunpack.c.l.b16 %v6148
  %v6462 = vunpack.c.h.b16 %v6148
  %v6463 = vunpack.c.l.b16 %v6149
  %v6464 = vpack.c.b16 %v6275, %v6268
  %v6465 = vpack.c.b16 %v6276, %v6269
  %v6466 = vpack.c.b16 %v6277, %v6270
  %v6467 = vpack.c.b16 %v6278, %v6271
  %v6468 = vpack.c.b16 %v6279, %v6272
  %v6469 = vpack.c.b16 %v6280, %v6273
  %v6470 = vpack.c.b16 %v6281, %v6274
  %v6471 = vpack.c.b16 %v6289, %v6282
  %v6472 = vpack.c.b16 %v6290, %v6283
  %v6473 = vpack.c.b16 %v6291, %v6284
  %v6474 = vpack.c.b16 %v6292, %v6285
  %v6475 = vpack.c.b16 %v6293, %v6286
  %v6476 = vpack.c.b16 %v6294, %v6287
  %v6477 = vpack.c.b16 %v6295, %v6288
  %v6478 = vpack.c.b16 %v6303, %v6296
  %v6479 = vpack.c.b16 %v6304, %v6297
  %v6480 = vpack.c.b16 %v6305, %v6298
  %v6481 = vpack.c.b16 %v6306, %v6299
  %v6482 = vpack.c.b16 %v6307, %v6300
  %v6483 = vpack.c.b16 %v6308, %v6301
  %v6484 = vpack.c.b16 %v6309, %v6302
  %v6485 = vpack.c.b16 %v6317, %v6310
  %v6486 = vpack.c.b16 %v6318, %v6311
  %v6487 = vpack.c.b16 %v6319, %v6312
  %v6488 = vpack.c.b16 %v6320, %v6313
  %v6489 = vpack.c.b16 %v6321, %v6314
  %v6490 = vpack.c.b16 %v6322, %v6315
  %v6491 = vpack.c.b16 %v6323, %v6316
  %v6492 = vpack.c.b16 %v6331, %v6324
  %v6493 = vpack.c.b16 %v6332, %v6325
  %v6494 = vpack.c.b16 %v6333, %v6326
  %v6495 = vpack.c.b16 %v6334, %v6327
  %v6496 = vpack.c.b16 %v6335, %v6328
  %v6497 = vpack.c.b16 %v6336, %v6329
  %v6498 = vpack.c.b16 %v6337, %v6330
  %v6499 = vpack.c.b16 %v6345, %v6338
  %v6500 = vpack.c.b16 %v6346, %v6339
  %v6501 = vpack.c.b16 %v6347, %v6340
  %v6502 = vpack.c.b16 %v6348, %v6341
  %v6503 = vpack.c.b16 %v6349, %v6342
  %v6504 = vpack.c.b16 %v6350, %v6343
  %v6505 = vpack.c.b16 %v6351, %v6344
  %v6506 = vpack.c.b16 %v6359, %v6352
  %v6507 = vpack.c.b16 %v6360, %v6353
  %v6508 = vpack.c.b16 %v6361, %v6354
  %v6509 = vpack.c.b16 %v6362, %v6355
  %v6510 = vpack.c.b16 %v6363, %v6356
  %v6511 = vpack.c.b16 %v6364, %v6357
  %v6512 = vpack.c.b16 %v6365, %v6358
  %v6513 = vpack.c.b16 %v6373, %v6366
  %v6514 = vpack.c.b16 %v6374, %v6367
  %v6515 = vpack.c.b16 %v6375, %v6368
  %v6516 = vpack.c.b16 %v6376, %v6369
  %v6517 = vpack.c.b16 %v6377, %v6370
  %v6518 = vpack.c.b16 %v6378, %v6371
  %v6519 = vpack.c.b16 %v6379, %v6372
  %v6520 = vpack.c.b16 %v6387, %v6380
  %v6521 = vpack.c.b16 %v6388, %v6381
  %v6522 = vpack.c.b16 %v6389, %v6382
  %v6523 = vpack.c.b16 %v6390, %v6383
  %v6524 = vpack.c.b16 %v6391, %v6384
  %v6525 = vpack.c.b16 %v6392, %v6385
  %v6526 = vpack.c.b16 %v6393, %v6386
  %v6527 = vpack.c.b16 %v6401, %v6394
  %v6528 = vpack.c.b16 %v6402, %v6395
  %v6529 = vpack.c.b16 %v6403, %v6396
  %v6530 = vpack.c.b16 %v6404, %v6397
  %v6531 = vpack.c.b16 %v6405, %v6398
  %v6532 = vpack.c.b16 %v6406, %v6399
  %v6533 = vpack.c.b16 %v6407, %v6400
  %v6534 = vpack.c.b16 %v6415, %v6408
  %v6535 = vpack.c.b16 %v6416, %v6409
  %v6536 = vpack.c.b16 %v6417, %v6410
  %v6537 = vpack.c.b16 %v6418, %v6411
  %v6538 = vpack.c.b16 %v6419, %v6412
  %v6539 = vpack.c.b16 %v6420, %v6413
  %v6540 = vpack.c.b16 %v6421, %v6414
  %v6541 = vpack.c.b16 %v6429, %v6422
  %v6542 = vpack.c.b16 %v6430, %v6423
  %v6543 = vpack.c.b16 %v6431, %v6424
  %v6544 = vpack.c.b16 %v6432, %v6425
  %v6545 = vpack.c.b16 %v6433, %v6426
  %v6546 = vpack.c.b16 %v6434, %v6427
  %v6547 = vpack.c.b16 %v6435, %v6428
  %v6548 = vpack.c.b16 %v6443, %v6436
  %v6549 = vpack.c.b16 %v6444, %v6437
  %v6550 = vpack.c.b16 %v6445, %v6438
  %v6551 = vpack.c.b16 %v6446, %v6439
  %v6552 = vpack.c.b16 %v6447, %v6440
  %v6553 = vpack.c.b16 %v6448, %v6441
  %v6554 = vpack.c.b16 %v6449, %v6442
  %v6555 = vpack.c.b16 %v6457, %v6450
  %v6556 = vpack.c.b16 %v6458, %v6451
  %v6557 = vpack.c.b16 %v6459, %v6452
  %v6558 = vpack.c.b16 %v6460, %v6453
  %v6559 = vpack.c.b16 %v6461, %v6454
  %v6560 = vpack.c.b16 %v6462, %v6455
  %v6561 = vpack.c.b16 %v6463, %v6456
  %v6654 = vsel %vm3331, %v6035, 0
  %v6657 = vsel %vm4030, %v6555, 0
  %v6660 = vsel %vm4030, %v6556, 0
  %v6663 = vsel %vm4030, %v6557, 0
  %v6666 = vsel %vm4030, %v6558, 0
  %v6669 = vsel %vm4030, %v6559, 0
  %v6672 = vsel %vm4030, %v6560, 0
  %v6675 = vsel %vm4030, %v6561, 0
  %6677 = vmatprep.subr.bf16.mxu0 %v6514
  %6678 = vmatpush1.bf16.msra.mxu0 %v6513
  %6679 = vmatprep.subr.bf16.mxu0 %v6507
  %6680 = vmatpush1.bf16.msra.mxu0 %v6506
  %6681 = vmatprep.subr.bf16.mxu0 %v6500
  %6682 = vmatpush1.bf16.msra.mxu0 %v6499
  %6683 = vmatprep.subr.bf16.mxu0 %v6493
  %6684 = vmatpush1.bf16.msra.mxu0 %v6492
  %6685 = vmatprep.subr.bf16.mxu0 %v6486
  %6686 = vmatpush1.bf16.msra.mxu0 %v6485
  %6687 = vmatprep.subr.bf16.mxu0 %v6479
  %6688 = vmatpush1.bf16.msra.mxu0 %v6478
  %6689 = vmatprep.subr.bf16.mxu0 %v6472
  %6690 = vmatpush1.bf16.msra.mxu0 %v6471
  %6691 = vmatprep.subr.bf16.mxu0 %v6465
  %6692 = vmatpush1.bf16.msra.mxu0 %v6464
  %6693 = vmatprep.subr.bf16.mxu0 0
  %6694 = vmatpush2.bf16.msra.mxu0 0
  %6695 = vmatprep.subr.bf16.mxu0 0
  %6696 = vmatpush2.bf16.msra.mxu0 0
  %6697 = vmatprep.subr.bf16.mxu0 %v6660
  %6698 = vmatpush2.bf16.msra.mxu0 %v6657
  %6699 = vmatprep.subr.bf16.mxu0 %v6549
  %6700 = vmatpush2.bf16.msra.mxu0 %v6548
  %6701 = vmatprep.subr.bf16.mxu0 %v6542
  %6702 = vmatpush2.bf16.msra.mxu0 %v6541
  %6703 = vmatprep.subr.bf16.mxu0 %v6535
  %6704 = vmatpush2.bf16.msra.mxu0 %v6534
  %6705 = vmatprep.subr.bf16.mxu0 %v6528
  %6706 = vmatpush2.bf16.msra.mxu0 %v6527
  %6707 = vmatprep.subr.bf16.mxu0 %v6521
  %6708 = vmatpush2.bf16.msra.mxu0 %v6520
  %6709 = vmatprep.mubr.bf16.mxu0 %v6654
  %6710 = vmatmul.mubr.bf16.gmra.mxu0 %v6034
  %v6711 = vpop.f32.mrf.mxu0
  %v6712 = vadd.f32 %v6154, %v6711
  %v6713 = vpop.f32.mrf.mxu0
  %v6714 = vadd.f32 %v6154, %v6713
  %v6715 = vpop.f32.mrf.mxu0
  %v6716 = vpop.f32.mrf.mxu0
  %6717 = vdwg.mxu0
  %6718 = vmatprep.subr.bf16.mxu0 %v6516
  %6719 = vmatpush1.bf16.msra.mxu0 %v6515
  %6720 = vmatprep.subr.bf16.mxu0 %v6509
  %6721 = vmatpush1.bf16.msra.mxu0 %v6508
  %6722 = vmatprep.subr.bf16.mxu0 %v6502
  %6723 = vmatpush1.bf16.msra.mxu0 %v6501
  %6724 = vmatprep.subr.bf16.mxu0 %v6495
  %6725 = vmatpush1.bf16.msra.mxu0 %v6494
  %6726 = vmatprep.subr.bf16.mxu0 %v6488
  %6727 = vmatpush1.bf16.msra.mxu0 %v6487
  %6728 = vmatprep.subr.bf16.mxu0 %v6481
  %6729 = vmatpush1.bf16.msra.mxu0 %v6480
  %6730 = vmatprep.subr.bf16.mxu0 %v6474
  %6731 = vmatpush1.bf16.msra.mxu0 %v6473
  %6732 = vmatprep.subr.bf16.mxu0 %v6467
  %6733 = vmatpush1.bf16.msra.mxu0 %v6466
  %6734 = vmatprep.subr.bf16.mxu0 0
  %6735 = vmatpush2.bf16.msra.mxu0 0
  %6736 = vmatprep.subr.bf16.mxu0 0
  %6737 = vmatpush2.bf16.msra.mxu0 0
  %6738 = vmatprep.subr.bf16.mxu0 %v6666
  %6739 = vmatpush2.bf16.msra.mxu0 %v6663
  %6740 = vmatprep.subr.bf16.mxu0 %v6551
  %6741 = vmatpush2.bf16.msra.mxu0 %v6550
  %6742 = vmatprep.subr.bf16.mxu0 %v6544
  %6743 = vmatpush2.bf16.msra.mxu0 %v6543
  %6744 = vmatprep.subr.bf16.mxu0 %v6537
  %6745 = vmatpush2.bf16.msra.mxu0 %v6536
  %6746 = vmatprep.subr.bf16.mxu0 %v6530
  %6747 = vmatpush2.bf16.msra.mxu0 %v6529
  %6748 = vmatprep.subr.bf16.mxu0 %v6523
  %6749 = vmatpush2.bf16.msra.mxu0 %v6522
  %6750 = vmatprep.mubr.bf16.mxu0 %v6654
  %6751 = vmatmul.mubr.bf16.gmra.mxu0 %v6034
  %v6752 = vpop.f32.mrf.mxu0
  %v6753 = vadd.f32 %v6154, %v6752
  %v6754 = vpop.f32.mrf.mxu0
  %v6755 = vadd.f32 %v6154, %v6754
  %v6756 = vpop.f32.mrf.mxu0
  %v6757 = vpop.f32.mrf.mxu0
  %6758 = vdwg.mxu0
  %6759 = vmatprep.subr.bf16.mxu0 %v6518
  %6760 = vmatpush1.bf16.msra.mxu0 %v6517
  %6761 = vmatprep.subr.bf16.mxu0 %v6511
  %6762 = vmatpush1.bf16.msra.mxu0 %v6510
  %6763 = vmatprep.subr.bf16.mxu0 %v6504
  %6764 = vmatpush1.bf16.msra.mxu0 %v6503
  %6765 = vmatprep.subr.bf16.mxu0 %v6497
  %6766 = vmatpush1.bf16.msra.mxu0 %v6496
  %6767 = vmatprep.subr.bf16.mxu0 %v6490
  %6768 = vmatpush1.bf16.msra.mxu0 %v6489
  %6769 = vmatprep.subr.bf16.mxu0 %v6483
  %6770 = vmatpush1.bf16.msra.mxu0 %v6482
  %6771 = vmatprep.subr.bf16.mxu0 %v6476
  %6772 = vmatpush1.bf16.msra.mxu0 %v6475
  %6773 = vmatprep.subr.bf16.mxu0 %v6469
  %6774 = vmatpush1.bf16.msra.mxu0 %v6468
  %6775 = vmatprep.subr.bf16.mxu0 0
  %6776 = vmatpush2.bf16.msra.mxu0 0
  %6777 = vmatprep.subr.bf16.mxu0 0
  %6778 = vmatpush2.bf16.msra.mxu0 0
  %6779 = vmatprep.subr.bf16.mxu0 %v6672
  %6780 = vmatpush2.bf16.msra.mxu0 %v6669
  %6781 = vmatprep.subr.bf16.mxu0 %v6553
  %6782 = vmatpush2.bf16.msra.mxu0 %v6552
  %6783 = vmatprep.subr.bf16.mxu0 %v6546
  %6784 = vmatpush2.bf16.msra.mxu0 %v6545
  %6785 = vmatprep.subr.bf16.mxu0 %v6539
  %6786 = vmatpush2.bf16.msra.mxu0 %v6538
  %6787 = vmatprep.subr.bf16.mxu0 %v6532
  %6788 = vmatpush2.bf16.msra.mxu0 %v6531
  %6789 = vmatprep.subr.bf16.mxu0 %v6525
  %6790 = vmatpush2.bf16.msra.mxu0 %v6524
  %6791 = vmatprep.mubr.bf16.mxu0 %v6654
  %6792 = vmatmul.mubr.bf16.gmra.mxu0 %v6034
  %v6793 = vpop.f32.mrf.mxu0
  %v6794 = vadd.f32 %v6154, %v6793
  %v6795 = vpop.f32.mrf.mxu0
  %v6796 = vadd.f32 %v6154, %v6795
  %v6797 = vpop.f32.mrf.mxu0
  %v6798 = vpop.f32.mrf.mxu0
  %6799 = vdwg.mxu0
  %6800 = vmatprep.subr.bf16.mxu0 0
  %6801 = vmatpush1.bf16.msra.mxu0 %v6519
  %6802 = vmatprep.subr.bf16.mxu0 0
  %6803 = vmatpush1.bf16.msra.mxu0 %v6512
  %6804 = vmatprep.subr.bf16.mxu0 0
  %6805 = vmatpush1.bf16.msra.mxu0 %v6505
  %6806 = vmatprep.subr.bf16.mxu0 0
  %6807 = vmatpush1.bf16.msra.mxu0 %v6498
  %6808 = vmatprep.subr.bf16.mxu0 0
  %6809 = vmatpush1.bf16.msra.mxu0 %v6491
  %6810 = vmatprep.subr.bf16.mxu0 0
  %6811 = vmatpush1.bf16.msra.mxu0 %v6484
  %6812 = vmatprep.subr.bf16.mxu0 0
  %6813 = vmatpush1.bf16.msra.mxu0 %v6477
  %6814 = vmatprep.subr.bf16.mxu0 0
  %6815 = vmatpush1.bf16.msra.mxu0 %v6470
  %6816 = vmatprep.subr.bf16.mxu0 0
  %6817 = vmatpush2.bf16.msra.mxu0 0
  %6818 = vmatprep.subr.bf16.mxu0 0
  %6819 = vmatpush2.bf16.msra.mxu0 0
  %6820 = vmatprep.subr.bf16.mxu0 0
  %6821 = vmatpush2.bf16.msra.mxu0 %v6675
  %6822 = vmatprep.subr.bf16.mxu0 0
  %6823 = vmatpush2.bf16.msra.mxu0 %v6554
  %6824 = vmatprep.subr.bf16.mxu0 0
  %6825 = vmatpush2.bf16.msra.mxu0 %v6547
  %6826 = vmatprep.subr.bf16.mxu0 0
  %6827 = vmatpush2.bf16.msra.mxu0 %v6540
  %6828 = vmatprep.subr.bf16.mxu0 0
  %6829 = vmatpush2.bf16.msra.mxu0 %v6533
  %6830 = vmatprep.subr.bf16.mxu0 0
  %6831 = vmatpush2.bf16.msra.mxu0 %v6526
  %6832 = vmatprep.mubr.bf16.mxu0 %v6654
  %6833 = vmatmul.mubr.bf16.gmra.mxu0 %v6034
  %v6834 = vpop.f32.mrf.mxu0
  %v6835 = vadd.f32 %v6154, %v6834
  %v6836 = vpop.f32.mrf.mxu0
  %v6837 = vpop.f32.mrf.mxu0
  %v6838 = vpop.f32.mrf.mxu0
  %6839 = vdwg.mxu0
  %v6840 = vsub.f32 0.0, %v6712
  %v6841 = vsub.f32 0.0, %v6714
  %v6842 = vsub.f32 0.0, %v6753
  %v6843 = vsub.f32 0.0, %v6755
  %v6844 = vsub.f32 0.0, %v6794
  %v6845 = vsub.f32 0.0, %v6796
  %v6846 = vsub.f32 0.0, %v6835
  %v6847 = vmul.f32 %v6840, 1.442695
  %v6848 = vpow.pop %v6847
  %v6849 = vmul.f32 %v6841, 1.442695
  %v6850 = vpow.pop %v6849
  %v6851 = vmul.f32 %v6842, 1.442695
  %v6852 = vpow.pop %v6851
  %v6853 = vmul.f32 %v6843, 1.442695
  %v6854 = vpow.pop %v6853
  %v6855 = vmul.f32 %v6844, 1.442695
  %v6856 = vpow.pop %v6855
  %v6857 = vmul.f32 %v6845, 1.442695
  %v6858 = vpow.pop %v6857
  %v6859 = vmul.f32 %v6846, 1.442695
  %v6860 = vpow.pop %v6859
  %v6861 = vadd.f32 %v6848, 1.0
  %v6862 = vadd.f32 %v6850, 1.0
  %v6863 = vadd.f32 %v6852, 1.0
  %v6864 = vadd.f32 %v6854, 1.0
  %v6865 = vadd.f32 %v6856, 1.0
  %v6866 = vadd.f32 %v6858, 1.0
  %v6867 = vadd.f32 %v6860, 1.0
  %v6868 = vrcp.pop %v6861
  %v6869 = vmul.f32 1.0, %v6868
  %v6870 = vrcp.pop %v6862
  %v6871 = vmul.f32 1.0, %v6870
  %v6872 = vrcp.pop %v6863
  %v6873 = vmul.f32 1.0, %v6872
  %v6874 = vrcp.pop %v6864
  %v6875 = vmul.f32 1.0, %v6874
  %v6876 = vrcp.pop %v6865
  %v6877 = vmul.f32 1.0, %v6876
  %v6878 = vrcp.pop %v6866
  %v6879 = vmul.f32 1.0, %v6878
  %v6880 = vrcp.pop %v6867
  %v6881 = vmul.f32 1.0, %v6880
  %v6889 = vcombine.low %v6869, %v6871
  %v6890 = vcombine.low %v6873, %v6875
  %v6891 = vcombine.low %v6877, %v6879
  %v6893 = vunpack.c.l.s4 1966171168
  %v6894 = vunpack.c.0.s8 %v6893
  %v6895 = vlaneseq
  %v6896 = vshrl.u32 %v6895, 7
  %v6897 = vsub.s32 %v6894, %v6896
  %v6898 = vrot.slane %v6889, %v6897
  %v6900 = vunpack.c.l.s4 1966171168
  %v6901 = vunpack.c.0.s8 %v6900
  %v6902 = vlaneseq
  %v6903 = vshrl.u32 %v6902, 7
  %v6904 = vsub.s32 %v6901, %v6903
  %v6905 = vrot.slane %v6890, %v6904
  %v6907 = vunpack.c.l.s4 1966171168
  %v6908 = vunpack.c.0.s8 %v6907
  %v6909 = vlaneseq
  %v6910 = vshrl.u32 %v6909, 7
  %v6911 = vsub.s32 %v6908, %v6910
  %v6912 = vrot.slane %v6891, %v6911
  %v6914 = vunpack.c.l.s4 1966171168
  %v6915 = vunpack.c.0.s8 %v6914
  %v6916 = vlaneseq
  %v6917 = vshrl.u32 %v6916, 7
  %v6918 = vsub.s32 %v6915, %v6917
  %v6919 = vrot.slane %v6881, %v6918
  %v6920 = vcombine.low %v6898, %v6905
  %v6921 = vcombine.low %v6912, %v6919
  %v6923 = vunpack.c.l.s4 1966171168
  %v6924 = vunpack.c.0.s8 %v6923
  %v6925 = vlaneseq
  %v6926 = vshrl.u32 %v6925, 7
  %v6927 = vsub.s32 %v6924, %v6926
  %v6928 = vrot.slane %v6920, %v6927
  %v6930 = vunpack.c.l.s4 1966171168
  %v6931 = vunpack.c.0.s8 %v6930
  %v6932 = vlaneseq
  %v6933 = vshrl.u32 %v6932, 7
  %v6934 = vsub.s32 %v6931, %v6933
  %v6935 = vrot.slane %v6921, %v6934
  %v6936 = vcombine.low %v6928, %v6935
  %v6938 = vlaneseq
  %vm6939 = vcmp.ge.s32.totalorder %v6938, 0
  %vm6940 = vcmp.lt.s32.totalorder %v6938, 784
  %vm6941 = vmand %vm6939, %vm6940
  %6942 = vst.msk [vmem:[#allocation8] sm:$0x7f] %vm6941, %v6936
  %v6944 = vsel %vm3331, %v6037, 0
  %6946 = vmatprep.subr.bf16.mxu0 %v6514
  %6947 = vmatpush1.bf16.msra.mxu0 %v6513
  %6948 = vmatprep.subr.bf16.mxu0 %v6507
  %6949 = vmatpush1.bf16.msra.mxu0 %v6506
  %6950 = vmatprep.subr.bf16.mxu0 %v6500
  %6951 = vmatpush1.bf16.msra.mxu0 %v6499
  %6952 = vmatprep.subr.bf16.mxu0 %v6493
  %6953 = vmatpush1.bf16.msra.mxu0 %v6492
  %6954 = vmatprep.subr.bf16.mxu0 %v6486
  %6955 = vmatpush1.bf16.msra.mxu0 %v6485
  %6956 = vmatprep.subr.bf16.mxu0 %v6479
  %6957 = vmatpush1.bf16.msra.mxu0 %v6478
  %6958 = vmatprep.subr.bf16.mxu0 %v6472
  %6959 = vmatpush1.bf16.msra.mxu0 %v6471
  %6960 = vmatprep.subr.bf16.mxu0 %v6465
  %6961 = vmatpush1.bf16.msra.mxu0 %v6464
  %6962 = vmatprep.subr.bf16.mxu0 0
  %6963 = vmatpush2.bf16.msra.mxu0 0
  %6964 = vmatprep.subr.bf16.mxu0 0
  %6965 = vmatpush2.bf16.msra.mxu0 0
  %6966 = vmatprep.subr.bf16.mxu0 %v6660
  %6967 = vmatpush2.bf16.msra.mxu0 %v6657
  %6968 = vmatprep.subr.bf16.mxu0 %v6549
  %6969 = vmatpush2.bf16.msra.mxu0 %v6548
  %6970 = vmatprep.subr.bf16.mxu0 %v6542
  %6971 = vmatpush2.bf16.msra.mxu0 %v6541
  %6972 = vmatprep.subr.bf16.mxu0 %v6535
  %6973 = vmatpush2.bf16.msra.mxu0 %v6534
  %6974 = vmatprep.subr.bf16.mxu0 %v6528
  %6975 = vmatpush2.bf16.msra.mxu0 %v6527
  %6976 = vmatprep.subr.bf16.mxu0 %v6521
  %6977 = vmatpush2.bf16.msra.mxu0 %v6520
  %6978 = vmatprep.mubr.bf16.mxu0 %v6944
  %6979 = vmatmul.mubr.bf16.gmra.mxu0 %v6036
  %v6980 = vpop.f32.mrf.mxu0
  %v6981 = vadd.f32 %v6154, %v6980
  %v6982 = vpop.f32.mrf.mxu0
  %v6983 = vadd.f32 %v6154, %v6982
  %v6984 = vpop.f32.mrf.mxu0
  %v6985 = vpop.f32.mrf.mxu0
  %6986 = vdwg.mxu0
  %6987 = vmatprep.subr.bf16.mxu0 %v6516
  %6988 = vmatpush1.bf16.msra.mxu0 %v6515
  %6989 = vmatprep.subr.bf16.mxu0 %v6509
  %6990 = vmatpush1.bf16.msra.mxu0 %v6508
  %6991 = vmatprep.subr.bf16.mxu0 %v6502
  %6992 = vmatpush1.bf16.msra.mxu0 %v6501
  %6993 = vmatprep.subr.bf16.mxu0 %v6495
  %6994 = vmatpush1.bf16.msra.mxu0 %v6494
  %6995 = vmatprep.subr.bf16.mxu0 %v6488
  %6996 = vmatpush1.bf16.msra.mxu0 %v6487
  %6997 = vmatprep.subr.bf16.mxu0 %v6481
  %6998 = vmatpush1.bf16.msra.mxu0 %v6480
  %6999 = vmatprep.subr.bf16.mxu0 %v6474
  %7000 = vmatpush1.bf16.msra.mxu0 %v6473
  %7001 = vmatprep.subr.bf16.mxu0 %v6467
  %7002 = vmatpush1.bf16.msra.mxu0 %v6466
  %7003 = vmatprep.subr.bf16.mxu0 0
  %7004 = vmatpush2.bf16.msra.mxu0 0
  %7005 = vmatprep.subr.bf16.mxu0 0
  %7006 = vmatpush2.bf16.msra.mxu0 0
  %7007 = vmatprep.subr.bf16.mxu0 %v6666
  %7008 = vmatpush2.bf16.msra.mxu0 %v6663
  %7009 = vmatprep.subr.bf16.mxu0 %v6551
  %7010 = vmatpush2.bf16.msra.mxu0 %v6550
  %7011 = vmatprep.subr.bf16.mxu0 %v6544
  %7012 = vmatpush2.bf16.msra.mxu0 %v6543
  %7013 = vmatprep.subr.bf16.mxu0 %v6537
  %7014 = vmatpush2.bf16.msra.mxu0 %v6536
  %7015 = vmatprep.subr.bf16.mxu0 %v6530
  %7016 = vmatpush2.bf16.msra.mxu0 %v6529
  %7017 = vmatprep.subr.bf16.mxu0 %v6523
  %7018 = vmatpush2.bf16.msra.mxu0 %v6522
  %7019 = vmatprep.mubr.bf16.mxu0 %v6944
  %7020 = vmatmul.mubr.bf16.gmra.mxu0 %v6036
  %v7021 = vpop.f32.mrf.mxu0
  %v7022 = vadd.f32 %v6154, %v7021
  %v7023 = vpop.f32.mrf.mxu0
  %v7024 = vadd.f32 %v6154, %v7023
  %v7025 = vpop.f32.mrf.mxu0
  %v7026 = vpop.f32.mrf.mxu0
  %7027 = vdwg.mxu0
  %7028 = vmatprep.subr.bf16.mxu0 %v6518
  %7029 = vmatpush1.bf16.msra.mxu0 %v6517
  %7030 = vmatprep.subr.bf16.mxu0 %v6511
  %7031 = vmatpush1.bf16.msra.mxu0 %v6510
  %7032 = vmatprep.subr.bf16.mxu0 %v6504
  %7033 = vmatpush1.bf16.msra.mxu0 %v6503
  %7034 = vmatprep.subr.bf16.mxu0 %v6497
  %7035 = vmatpush1.bf16.msra.mxu0 %v6496
  %7036 = vmatprep.subr.bf16.mxu0 %v6490
  %7037 = vmatpush1.bf16.msra.mxu0 %v6489
  %7038 = vmatprep.subr.bf16.mxu0 %v6483
  %7039 = vmatpush1.bf16.msra.mxu0 %v6482
  %7040 = vmatprep.subr.bf16.mxu0 %v6476
  %7041 = vmatpush1.bf16.msra.mxu0 %v6475
  %7042 = vmatprep.subr.bf16.mxu0 %v6469
  %7043 = vmatpush1.bf16.msra.mxu0 %v6468
  %7044 = vmatprep.subr.bf16.mxu0 0
  %7045 = vmatpush2.bf16.msra.mxu0 0
  %7046 = vmatprep.subr.bf16.mxu0 0
  %7047 = vmatpush2.bf16.msra.mxu0 0
  %7048 = vmatprep.subr.bf16.mxu0 %v6672
  %7049 = vmatpush2.bf16.msra.mxu0 %v6669
  %7050 = vmatprep.subr.bf16.mxu0 %v6553
  %7051 = vmatpush2.bf16.msra.mxu0 %v6552
  %7052 = vmatprep.subr.bf16.mxu0 %v6546
  %7053 = vmatpush2.bf16.msra.mxu0 %v6545
  %7054 = vmatprep.subr.bf16.mxu0 %v6539
  %7055 = vmatpush2.bf16.msra.mxu0 %v6538
  %7056 = vmatprep.subr.bf16.mxu0 %v6532
  %7057 = vmatpush2.bf16.msra.mxu0 %v6531
  %7058 = vmatprep.subr.bf16.mxu0 %v6525
  %7059 = vmatpush2.bf16.msra.mxu0 %v6524
  %7060 = vmatprep.mubr.bf16.mxu0 %v6944
  %7061 = vmatmul.mubr.bf16.gmra.mxu0 %v6036
  %v7062 = vpop.f32.mrf.mxu0
  %v7063 = vadd.f32 %v6154, %v7062
  %v7064 = vpop.f32.mrf.mxu0
  %v7065 = vadd.f32 %v6154, %v7064
  %v7066 = vpop.f32.mrf.mxu0
  %v7067 = vpop.f32.mrf.mxu0
  %7068 = vdwg.mxu0
  %7069 = vmatprep.subr.bf16.mxu0 0
  %7070 = vmatpush1.bf16.msra.mxu0 %v6519
  %7071 = vmatprep.subr.bf16.mxu0 0
  %7072 = vmatpush1.bf16.msra.mxu0 %v6512
  %7073 = vmatprep.subr.bf16.mxu0 0
  %7074 = vmatpush1.bf16.msra.mxu0 %v6505
  %7075 = vmatprep.subr.bf16.mxu0 0
  %7076 = vmatpush1.bf16.msra.mxu0 %v6498
  %7077 = vmatprep.subr.bf16.mxu0 0
  %7078 = vmatpush1.bf16.msra.mxu0 %v6491
  %7079 = vmatprep.subr.bf16.mxu0 0
  %7080 = vmatpush1.bf16.msra.mxu0 %v6484
  %7081 = vmatprep.subr.bf16.mxu0 0
  %7082 = vmatpush1.bf16.msra.mxu0 %v6477
  %7083 = vmatprep.subr.bf16.mxu0 0
  %7084 = vmatpush1.bf16.msra.mxu0 %v6470
  %7085 = vmatprep.subr.bf16.mxu0 0
  %7086 = vmatpush2.bf16.msra.mxu0 0
  %7087 = vmatprep.subr.bf16.mxu0 0
  %7088 = vmatpush2.bf16.msra.mxu0 0
  %7089 = vmatprep.subr.bf16.mxu0 0
  %7090 = vmatpush2.bf16.msra.mxu0 %v6675
  %7091 = vmatprep.subr.bf16.mxu0 0
  %7092 = vmatpush2.bf16.msra.mxu0 %v6554
  %7093 = vmatprep.subr.bf16.mxu0 0
  %7094 = vmatpush2.bf16.msra.mxu0 %v6547
  %7095 = vmatprep.subr.bf16.mxu0 0
  %7096 = vmatpush2.bf16.msra.mxu0 %v6540
  %7097 = vmatprep.subr.bf16.mxu0 0
  %7098 = vmatpush2.bf16.msra.mxu0 %v6533
  %7099 = vmatprep.subr.bf16.mxu0 0
  %7100 = vmatpush2.bf16.msra.mxu0 %v6526
  %7101 = vmatprep.mubr.bf16.mxu0 %v6944
  %7102 = vmatmul.mubr.bf16.gmra.mxu0 %v6036
  %v7103 = vpop.f32.mrf.mxu0
  %v7104 = vadd.f32 %v6154, %v7103
  %v7105 = vpop.f32.mrf.mxu0
  %v7106 = vpop.f32.mrf.mxu0
  %v7107 = vpop.f32.mrf.mxu0
  %7108 = vdwg.mxu0
  %v7109 = vsub.f32 0.0, %v6981
  %v7110 = vsub.f32 0.0, %v6983
  %v7111 = vsub.f32 0.0, %v7022
  %v7112 = vsub.f32 0.0, %v7024
  %v7113 = vsub.f32 0.0, %v7063
  %v7114 = vsub.f32 0.0, %v7065
  %v7115 = vsub.f32 0.0, %v7104
  %v7116 = vmul.f32 %v7109, 1.442695
  %v7117 = vpow.pop %v7116
  %v7118 = vmul.f32 %v7110, 1.442695
  %v7119 = vpow.pop %v7118
  %v7120 = vmul.f32 %v7111, 1.442695
  %v7121 = vpow.pop %v7120
  %v7122 = vmul.f32 %v7112, 1.442695
  %v7123 = vpow.pop %v7122
  %v7124 = vmul.f32 %v7113, 1.442695
  %v7125 = vpow.pop %v7124
  %v7126 = vmul.f32 %v7114, 1.442695
  %v7127 = vpow.pop %v7126
  %v7128 = vmul.f32 %v7115, 1.442695
  %v7129 = vpow.pop %v7128
  %v7130 = vadd.f32 %v7117, 1.0
  %v7131 = vadd.f32 %v7119, 1.0
  %v7132 = vadd.f32 %v7121, 1.0
  %v7133 = vadd.f32 %v7123, 1.0
  %v7134 = vadd.f32 %v7125, 1.0
  %v7135 = vadd.f32 %v7127, 1.0
  %v7136 = vadd.f32 %v7129, 1.0
  %v7137 = vrcp.pop %v7130
  %v7138 = vmul.f32 1.0, %v7137
  %v7139 = vrcp.pop %v7131
  %v7140 = vmul.f32 1.0, %v7139
  %v7141 = vrcp.pop %v7132
  %v7142 = vmul.f32 1.0, %v7141
  %v7143 = vrcp.pop %v7133
  %v7144 = vmul.f32 1.0, %v7143
  %v7145 = vrcp.pop %v7134
  %v7146 = vmul.f32 1.0, %v7145
  %v7147 = vrcp.pop %v7135
  %v7148 = vmul.f32 1.0, %v7147
  %v7149 = vrcp.pop %v7136
  %v7150 = vmul.f32 1.0, %v7149
  %v7158 = vcombine.low %v7138, %v7140
  %v7159 = vcombine.low %v7142, %v7144
  %v7160 = vcombine.low %v7146, %v7148
  %v7162 = vunpack.c.l.s4 1966171168
  %v7163 = vunpack.c.0.s8 %v7162
  %v7164 = vlaneseq
  %v7165 = vshrl.u32 %v7164, 7
  %v7166 = vsub.s32 %v7163, %v7165
  %v7167 = vrot.slane %v7158, %v7166
  %v7169 = vunpack.c.l.s4 1966171168
  %v7170 = vunpack.c.0.s8 %v7169
  %v7171 = vlaneseq
  %v7172 = vshrl.u32 %v7171, 7
  %v7173 = vsub.s32 %v7170, %v7172
  %v7174 = vrot.slane %v7159, %v7173
  %v7176 = vunpack.c.l.s4 1966171168
  %v7177 = vunpack.c.0.s8 %v7176
  %v7178 = vlaneseq
  %v7179 = vshrl.u32 %v7178, 7
  %v7180 = vsub.s32 %v7177, %v7179
  %v7181 = vrot.slane %v7160, %v7180
  %v7183 = vunpack.c.l.s4 1966171168
  %v7184 = vunpack.c.0.s8 %v7183
  %v7185 = vlaneseq
  %v7186 = vshrl.u32 %v7185, 7
  %v7187 = vsub.s32 %v7184, %v7186
  %v7188 = vrot.slane %v7150, %v7187
  %v7189 = vcombine.low %v7167, %v7174
  %v7190 = vcombine.low %v7181, %v7188
  %v7192 = vunpack.c.l.s4 1966171168
  %v7193 = vunpack.c.0.s8 %v7192
  %v7194 = vlaneseq
  %v7195 = vshrl.u32 %v7194, 7
  %v7196 = vsub.s32 %v7193, %v7195
  %v7197 = vrot.slane %v7189, %v7196
  %v7199 = vunpack.c.l.s4 1966171168
  %v7200 = vunpack.c.0.s8 %v7199
  %v7201 = vlaneseq
  %v7202 = vshrl.u32 %v7201, 7
  %v7203 = vsub.s32 %v7200, %v7202
  %v7204 = vrot.slane %v7190, %v7203
  %v7205 = vcombine.low %v7197, %v7204
  %7206 = vrot.lane.b32.xlu0 %v7205, 16
  %v7207 = vpop.permute.xlu0 %7206
  %v7208 = vrot.slane %v7207, 7
  %v7209 = vsel %vm3774, %v7208, %v7207
  %vm7211 = vcmp.ge.s32.totalorder %v6938, 16
  %vm7212 = vcmp.lt.s32.totalorder %v6938, 800
  %vm7213 = vmand %vm7211, %vm7212
  %7214 = vst.msk [vmem:[#allocation8 + $0x6] sm:$0x7f] %vm7213, %v7209
  %v7215 = vld [vmem:[#allocation8] sm:$0xff]
  %v7216 = vld [vmem:[#allocation8 + $0x8] sm:$0x1f]
  %7217 = vst [vmem:[%s20] sm:$0xff] %v7215
  %vm7218 = vcmp.lt.s32.totalorder %v6938, 544
  %vm7219 = vmand %vm6939, %vm7218
  %7220 = vst.msk [vmem:[%s20 + $0x8] sm:$0x1f] %vm7219, %v7216
  // Predicated region
  $region82: #{vae_forward.1} parent=0 // pred_check
    _
  $region83: #{vae_forward.1} parent=0 // pred_check_branch
    %7222 = sbr.rel (0) target = $region85
  $region84: #{vae_forward.1} parent=0 // pred_region
    _
  $region85: #{vae_forward.1} parent=0 // pred_fallthru
    _
  // Predicated region
  $region86: #{vae_forward.1} parent=0 // pred_check
    _
  $region87: #{vae_forward.1} parent=0 // pred_check_branch
    %7224 = sbr.rel (0) target = $region89
  $region88: #{vae_forward.1} parent=0 // pred_region
    _
  $region89: #{vae_forward.1} parent=0 // pred_fallthru
    _
  // Predicated region
  $region90: #{vae_forward.1} parent=0 // pred_check
    _
  $region91: #{vae_forward.1} parent=0 // pred_check_branch
    %7226 = sbr.rel (0) target = $region93
  $region92: #{vae_forward.1} parent=0 // pred_region
    _
  $region93: #{vae_forward.1} parent=0 // pred_fallthru
    _
  // Predicated region
  $region94: #{vae_forward.1} parent=0 // pred_check
    _
  $region95: #{vae_forward.1} parent=0 // pred_check_branch
    %7228 = sbr.rel (0) target = $region97
  $region96: #{vae_forward.1} parent=0 // pred_region
    _
  $region97: #{vae_forward.1} parent=0 // pred_fallthru
    _

</llo_original>
